<compile_context>
chip_gen: v7x
topology: tpu7x:2x2x1
jax: 0.10.0
libtpu: 0.0.40
codegen_flags: <defaults>
</compile_context>

<pallas_src>
import jax
import jax.numpy as jnp
from jax import lax
from jax.experimental import pallas as pl
from jax.experimental.pallas import tpu as pltpu

# ---------------------------- padded dimensions -----------------------------

C1_K = 128              # conv1 contraction: 3*5*5 = 75 -> 128
C1_OUT = 128            # conv1 out channels: 20 -> 128 (lane-dense HBM store)
CONV2_CIN = 20          # real conv1 channels consumed by conv2
C2_K = 512              # conv2 contraction: 25*20 = 500 -> 512
C2_OUT = 64             # conv2 out channels: 50 -> 64
_P_SPATIAL = 25         # pooled conv2 spatial positions (5*5)
FC1_OUT = 512           # fc1 hidden: 500 -> 512
FC2_OUT = 128           # fc2 out: 10 -> 128 (lane-dense HBM store)
P2_ROWS = 64            # pooled conv2 rows per pool sub-position: 25*N=50 -> 64

_COMPILER_PARAMS = pltpu.CompilerParams(
    dimension_semantics=("arbitrary",),
    vmem_limit_bytes=32 * 1024 * 1024,
)


def _full_spec(shape):
    nd = len(shape)
    return pl.BlockSpec(shape, lambda i, _nd=nd: (0,) * _nd)


# ------------------------------ Pallas kernels -------------------------------


def conv1_kernel(p_ref, w_ref, b_ref, m_ref, o_ref):
    """conv1 (im2col matmul) -> +bias -> relu -> *mask -> 2x2 maxpool.

    p_ref: [4*M, K]  patches, rows = (pool_subpos, n, ph, pw); K = 128
    w_ref: [K, C1_OUT] conv1 weight (padded), bf16
    b_ref, m_ref: [1, C1_OUT] f32 bias / mask rows
    o_ref: [M, C1_OUT] pooled output, rows = (n, ph, pw), bf16
    """
    m_rows = o_ref.shape[0]                    # N*14*14 (multiple of 8)
    w = w_ref[...]
    bias = b_ref[...]
    mask = m_ref[...]
    out = None
    # One dot per pool sub-position keeps the live f32 intermediate small.
    for s in range(4):
        y = jnp.dot(p_ref[s * m_rows:(s + 1) * m_rows, :], w,
                    preferred_element_type=jnp.float32)
        y = jnp.maximum(y + bias, 0.0) * mask
        out = y if out is None else jnp.maximum(out, y)
    o_ref[...] = out.astype(o_ref.dtype)


def tail_kernel(p_ref, w2_ref, b2_ref, m2_ref, wf1_ref, b3_ref, m3_ref,
                wf2_ref, b4_ref, o_ref, pool_s):
    """conv2 + pool + fc1 + fc2, fully fused; activations stay in VMEM.

    p_ref:   [4*P2_ROWS, C2_K]     conv2 patches, rows = (pool_subpos, (ph,pw), n)
    w2_ref:  [C2_K, C2_OUT]        bf16
    wf1_ref: [25*C2_OUT, FC1_OUT]  bf16, rows ordered (p, c)
    wf2_ref: [FC1_OUT, FC2_OUT]    bf16
    b*/m*:   [1, C] f32 bias / mask rows
    o_ref:   [N, FC2_OUT] f32
    pool_s:  [P2_ROWS, C2_OUT] f32 scratch (pooled conv2 activations, rows (p, n))
    """
    n = o_ref.shape[0]

    # conv2: single matmul covering all 4 pooling sub-positions (K = 512).
    y = jnp.dot(p_ref[...], w2_ref[...], preferred_element_type=jnp.float32)
    y = jnp.maximum(y + b2_ref[...], 0.0) * m2_ref[...]
    pool_s[...] = jnp.maximum(
        jnp.maximum(y[0 * P2_ROWS:1 * P2_ROWS], y[1 * P2_ROWS:2 * P2_ROWS]),
        jnp.maximum(y[2 * P2_ROWS:3 * P2_ROWS], y[3 * P2_ROWS:4 * P2_ROWS]),
    )
    # Padded rows pool_s[25*n:] hold relu(b2)*m2 garbage but are never read.

    # fc1 as 25 accumulating per-position matmuls: no [N, 25*C] repack buffer.
    acc = jnp.zeros((n, FC1_OUT), jnp.float32)
    for p in range(_P_SPATIAL):
        lhs = pool_s[p * n:(p + 1) * n, :].astype(jnp.bfloat16)
        acc = acc + jnp.dot(lhs, wf1_ref[p * C2_OUT:(p + 1) * C2_OUT, :],
                            preferred_element_type=jnp.float32)

    # fc1 epilogue -> fc2
    h = jnp.maximum(acc + b3_ref[...], 0.0) * m3_ref[...]
    out = jnp.dot(h.astype(wf2_ref.dtype), wf2_ref[...],
                  preferred_element_type=jnp.float32) + b4_ref[...]
    o_ref[...] = out


# ------------------------------ Pallas wrappers ------------------------------


def conv1_stage(p1, w1r, b1r, m1r):
    rows = p1.shape[0] // 4
    return pl.pallas_call(
        conv1_kernel,
        grid=(1,),
        in_specs=[_full_spec(p1.shape), _full_spec(w1r.shape),
                  _full_spec(b1r.shape), _full_spec(m1r.shape)],
        out_specs=_full_spec((rows, C1_OUT)),
        out_shape=jax.ShapeDtypeStruct((rows, C1_OUT), jnp.bfloat16),
        compiler_params=_COMPILER_PARAMS,
    )(p1, w1r, b1r, m1r)


def tail_stage(p2, w2r, b2r, m2r, wf1r, b3r, m3r, wf2r, b4r, n):
    return pl.pallas_call(
        tail_kernel,
        grid=(1,),
        in_specs=[_full_spec(p2.shape), _full_spec(w2r.shape),
                  _full_spec(b2r.shape), _full_spec(m2r.shape),
                  _full_spec(wf1r.shape), _full_spec(b3r.shape),
                  _full_spec(m3r.shape), _full_spec(wf2r.shape),
                  _full_spec(b4r.shape)],
        out_specs=_full_spec((n, FC2_OUT)),
        out_shape=jax.ShapeDtypeStruct((n, FC2_OUT), jnp.float32),
        scratch_shapes=[pltpu.VMEM((P2_ROWS, C2_OUT), jnp.float32)],
        compiler_params=_COMPILER_PARAMS,
    )(p2, w2r, b2r, m2r, wf1r, b3r, m3r, wf2r, b4r)


# ------------------------------- glue (JAX) ----------------------------------


def _im2col_pool_conv1(x, k=5):
    """[N,3,32,32] NCHW -> [4*N*14*14, 128] bf16 conv1 patches.

    Rows = (pool_subpos, n, ph, pw); features = (cin, kh, kw) zero-padded
    from 75 to 128 lanes (matches OIHW weight flatten).
    """
    n, c, hh, ww = x.shape
    oh, ow = hh - k + 1, ww - k + 1
    ph, pw = oh // 2, ow // 2
    cols = [x[:, :, kh:kh + oh, kw:kw + ow]
            for kh in range(k) for kw in range(k)]
    p = jnp.stack(cols, axis=2)                   # [N, C, k*k, OH, OW]
    p = p.reshape(n, c * k * k, ph, 2, pw, 2)
    p = jnp.transpose(p, (3, 5, 0, 2, 4, 1))      # [dy, dx, N, PH, PW, F]
    p = p.reshape(4 * n * ph * pw, c * k * k)
    p = jnp.pad(p, ((0, 0), (0, C1_K - c * k * k)))
    return p.astype(jnp.bfloat16)


def _im2col_pool_conv2(y, k=5):
    """[N,14,14,C1_OUT] NHWC -> [4*P2_ROWS, 512] bf16 conv2 patches.

    Only the 20 real conv1 channels are gathered; features = (kh, kw, cin=20)
    = 500, zero-padded to 512 lanes.  Rows = (pool_subpos, (ph,pw), n),
    row-padded from 25*N to P2_ROWS per sub-position.
    """
    y = y[..., :CONV2_CIN]                        # drop the zero-padded lanes
    n, hh, ww, c = y.shape
    oh, ow = hh - k + 1, ww - k + 1
    ph, pw = oh // 2, ow // 2
    cols = [y[:, kh:kh + oh, kw:kw + ow, :]
            for kh in range(k) for kw in range(k)]
    p = jnp.stack(cols, axis=3)                   # [N, OH, OW, k*k, C]
    p = p.reshape(n, ph, 2, pw, 2, k * k * c)
    p = jnp.transpose(p, (2, 4, 1, 3, 0, 5))      # [dy, dx, PH, PW, N, F]
    p = p.reshape(4, ph * pw * n, k * k * c)
    p = jnp.pad(p, ((0, 0), (0, P2_ROWS - ph * pw * n), (0, C2_K - k * k * c)))
    return p.reshape(4 * P2_ROWS, C2_K)


def prepare_params(params):
    """One-time weight layout prep: pad to lane widths, fold flatten order."""
    w1, b1, w2, b2, wf1, bf1, wf2, bf2 = params
    # conv1: OIHW (20,3,5,5) -> [75,20] -> pad [128,128], bf16.
    w1r = jnp.transpose(w1.reshape(20, 75))
    w1r = jnp.pad(w1r, ((0, C1_K - 75), (0, C1_OUT - 20))).astype(jnp.bfloat16)
    b1r = jnp.pad(b1, (0, C1_OUT - 20)).reshape(1, C1_OUT).astype(jnp.float32)
    # conv2: OIHW (50,20,5,5) -> rows (kh,kw,cin=20)=500 pad 512, cols 50->64.
    w2r = jnp.transpose(w2, (2, 3, 1, 0)).reshape(25 * CONV2_CIN, 50)
    w2r = jnp.pad(w2r, ((0, C2_K - 25 * CONV2_CIN),
                        (0, C2_OUT - 50))).astype(jnp.bfloat16)
    b2r = jnp.pad(b2, (0, C2_OUT - 50)).reshape(1, C2_OUT).astype(jnp.float32)
    # fc1: torch flatten order is (c, ph, pw); kernel rows are (p, c_pad64).
    wf1r = jnp.transpose(wf1.reshape(50, _P_SPATIAL, 500), (1, 0, 2))
    wf1r = jnp.pad(wf1r, ((0, 0), (0, C2_OUT - 50), (0, FC1_OUT - 500)))
    wf1r = wf1r.reshape(_P_SPATIAL * C2_OUT, FC1_OUT).astype(jnp.bfloat16)
    b3r = jnp.pad(bf1, (0, FC1_OUT - 500)).reshape(1, FC1_OUT).astype(jnp.float32)
    wf2r = jnp.pad(wf2, ((0, FC1_OUT - 500), (0, FC2_OUT - 10))).astype(jnp.bfloat16)
    b4r = jnp.pad(bf2, (0, FC2_OUT - 10)).reshape(1, FC2_OUT).astype(jnp.float32)
    return (w1r, b1r, w2r, b2r, wf1r, b3r, wf2r, b4r)


def lenet_forward(x, pos, prepped):
    w1r, b1r, w2r, b2r, wf1r, b3r, wf2r, b4r = prepped
    n = x.shape[0]
    if _P_SPATIAL * n > P2_ROWS:
        raise ValueError("batch too large for P2_ROWS row padding; raise P2_ROWS")
    # Padded mask positions must be exactly zero (10*tanh(0)=0) for the
    # zero-padding invariants below to hold.
    mask = 10.0 * jnp.tanh(pos.astype(jnp.float32))
    m1r = jnp.pad(mask[0:20], (0, C1_OUT - 20)).reshape(1, C1_OUT)
    m2r = jnp.pad(mask[20:70], (0, C2_OUT - 50)).reshape(1, C2_OUT)
    m3r = jnp.pad(mask[70:570], (0, FC1_OUT - 500)).reshape(1, FC1_OUT)

    # conv1 -> relu -> *mask -> maxpool(2,2)
    p1 = _im2col_pool_conv1(x)                    # [4*N*196, 128] bf16
    y1 = conv1_stage(p1, w1r, b1r, m1r)           # [N*196, 128]   bf16
    y1 = y1.reshape(n, 14, 14, C1_OUT)            # contiguous -> free reshape

    # conv2 -> relu -> *mask -> maxpool(2,2) -> fc1 -> relu -> *mask -> fc2
    p2 = _im2col_pool_conv2(y1)                   # [256, 512] bf16
    out = tail_stage(p2, w2r, b2r, m2r, wf1r, b3r, m3r, wf2r, b4r, n)
    return out[:, :10]


# ------------------------------ reference (JAX) -------------------------------


def reference_forward(x, pos, params):
    w1, b1, w2, b2, wf1, bf1, wf2, bf2 = params
    m = 10.0 * jnp.tanh(pos)
    m0, m1, m2 = m[:20], m[20:70], m[70:570]
    dn = ("NCHW", "OIHW", "NCHW")

    y = lax.conv_general_dilated(x, w1, (1, 1), "VALID", dimension_numbers=dn)
    y = jnp.maximum(y + b1[None, :, None, None], 0.0) * m0[None, :, None, None]
    y = lax.reduce_window(y, -jnp.inf, lax.max, (1, 1, 2, 2), (1, 1, 2, 2), "VALID")

    y = lax.conv_general_dilated(y, w2, (1, 1), "VALID", dimension_numbers=dn)
    y = jnp.maximum(y + b2[None, :, None, None], 0.0) * m1[None, :, None, None]
    y = lax.reduce_window(y, -jnp.inf, lax.max, (1, 1, 2, 2), (1, 1, 2, 2), "VALID")

    y = y.reshape(y.shape[0], -1)
    y = jnp.maximum(y @ wf1 + bf1, 0.0) * m2
    return y @ wf2 + bf2


# ----------------------------------- main -------------------------------------

if __name__ == "__main__":
    key = jax.random.PRNGKey(0)
    ks = jax.random.split(key, 10)

    def init(k, shape, fan_in):
        return jax.random.normal(k, shape, jnp.float32) / jnp.sqrt(fan_in)

    w1 = init(ks[0], (20, 3, 5, 5), 75.0)
    b1 = 0.01 * jax.random.normal(ks[1], (20,), jnp.float32)
    w2 = init(ks[2], (50, 20, 5, 5), 500.0)
    b2 = 0.01 * jax.random.normal(ks[3], (50,), jnp.float32)
    wf1 = init(ks[4], (5 * 5 * 50, 500), 1250.0)
    bf1 = 0.01 * jax.random.normal(ks[5], (500,), jnp.float32)
    wf2 = init(ks[6], (500, 10), 500.0)
    bf2 = 0.01 * jax.random.normal(ks[7], (10,), jnp.float32)
    params = (w1, b1, w2, b2, wf1, bf1, wf2, bf2)

    # batch=2; spatial must be 32 so the view(-1, 5*5*50) flatten is consistent
    x = jax.random.normal(ks[8], (2, 3, 32, 32), jnp.float32)
    pos = 0.1 * jax.random.normal(ks[9], (570,), jnp.float32)

    prepped = prepare_params(params)
    fwd = jax.jit(lenet_forward)
    out = jax.block_until_ready(fwd(x, pos, prepped))
    ref = jax.block_until_ready(reference_forward(x, pos, params))

    assert out.shape == (2, 10) and out.dtype == jnp.float32
    err = jnp.max(jnp.abs(out - ref))
    assert jnp.allclose(out, ref, rtol=5e-2, atol=5e-2), (
        f"mismatch: max abs err {err}"
    )
    print("KERNEL_OK")
</pallas_src>

<mosaic_0001>
module attributes {stable_mosaic.version = 11 : i64} {
  func.func @conv1_kernel(%arg0: i32, %arg1: memref<1568x128xbf16, #tpu.memory_space<vmem>>, %arg2: memref<128x128xbf16, #tpu.memory_space<vmem>>, %arg3: memref<1x128xf32, #tpu.memory_space<vmem>>, %arg4: memref<1x128xf32, #tpu.memory_space<vmem>>, %arg5: memref<392x128xbf16, #tpu.memory_space<vmem>>) attributes {dimension_semantics = [#tpu.dimension_semantics<arbitrary>], iteration_bounds = array<i64: 1>, scalar_prefetch = 0 : i64, scratch_operands = 0 : i64, tpu.core_type = #tpu.core_type<tc>, window_params = [{pipeline_mode = #tpu.pipeline_mode<synchronous>, transform_indices = @transform_0, window_bounds = array<i64: 1568, 128>}, {pipeline_mode = #tpu.pipeline_mode<synchronous>, transform_indices = @transform_1, window_bounds = array<i64: 128, 128>}, {pipeline_mode = #tpu.pipeline_mode<synchronous>, transform_indices = @transform_2, window_bounds = array<i64: 1, 128>}, {pipeline_mode = #tpu.pipeline_mode<synchronous>, transform_indices = @transform_3, window_bounds = array<i64: 1, 128>}, {pipeline_mode = #tpu.pipeline_mode<synchronous>, transform_indices = @transform_4, window_bounds = array<i64: 392, 128>}]} {
    %c0 = arith.constant 0 : index
    %c0_0 = arith.constant 0 : index
    %0 = vector.load %arg2[%c0, %c0_0] : memref<128x128xbf16, #tpu.memory_space<vmem>>, vector<128x128xbf16>
    %c0_1 = arith.constant 0 : index
    %c0_2 = arith.constant 0 : index
    %1 = vector.load %arg3[%c0_1, %c0_2] : memref<1x128xf32, #tpu.memory_space<vmem>>, vector<1x128xf32>
    %c0_3 = arith.constant 0 : index
    %c0_4 = arith.constant 0 : index
    %2 = vector.load %arg4[%c0_3, %c0_4] : memref<1x128xf32, #tpu.memory_space<vmem>>, vector<1x128xf32>
    %c0_5 = arith.constant 0 : index
    %c0_6 = arith.constant 0 : index
    %3 = vector.load %arg1[%c0_5, %c0_6] : memref<1568x128xbf16, #tpu.memory_space<vmem>>, vector<392x128xbf16>
    %cst = arith.constant dense<0.000000e+00> : vector<392x128xf32>
    %4 = tpu.matmul %3, %0, %cst {dimension_numbers = #tpu.dot_dimension_numbers<[1], [0], [0], [1], [0, 0, 1, 1], [], []>} : vector<392x128xbf16>, vector<128x128xbf16>, vector<392x128xf32> -> vector<392x128xf32>
    %5 = vector.broadcast %1 : vector<1x128xf32> to vector<392x128xf32>
    %6 = arith.addf %4, %5 : vector<392x128xf32>
    %cst_7 = arith.constant 0.000000e+00 : f32
    %7 = vector.broadcast %cst_7 : f32 to vector<392x128xf32>
    %8 = arith.maximumf %6, %7 : vector<392x128xf32>
    %9 = vector.broadcast %2 : vector<1x128xf32> to vector<392x128xf32>
    %10 = arith.mulf %8, %9 : vector<392x128xf32>
    %c392 = arith.constant 392 : index
    %c0_8 = arith.constant 0 : index
    %11 = vector.load %arg1[%c392, %c0_8] : memref<1568x128xbf16, #tpu.memory_space<vmem>>, vector<392x128xbf16>
    %cst_9 = arith.constant dense<0.000000e+00> : vector<392x128xf32>
    %12 = tpu.matmul %11, %0, %cst_9 {dimension_numbers = #tpu.dot_dimension_numbers<[1], [0], [0], [1], [0, 0, 1, 1], [], []>} : vector<392x128xbf16>, vector<128x128xbf16>, vector<392x128xf32> -> vector<392x128xf32>
    %13 = vector.broadcast %1 : vector<1x128xf32> to vector<392x128xf32>
    %14 = arith.addf %12, %13 : vector<392x128xf32>
    %cst_10 = arith.constant 0.000000e+00 : f32
    %15 = vector.broadcast %cst_10 : f32 to vector<392x128xf32>
    %16 = arith.maximumf %14, %15 : vector<392x128xf32>
    %17 = vector.broadcast %2 : vector<1x128xf32> to vector<392x128xf32>
    %18 = arith.mulf %16, %17 : vector<392x128xf32>
    %19 = arith.maximumf %10, %18 : vector<392x128xf32>
    %c784 = arith.constant 784 : index
    %c0_11 = arith.constant 0 : index
    %20 = vector.load %arg1[%c784, %c0_11] : memref<1568x128xbf16, #tpu.memory_space<vmem>>, vector<392x128xbf16>
    %cst_12 = arith.constant dense<0.000000e+00> : vector<392x128xf32>
    %21 = tpu.matmul %20, %0, %cst_12 {dimension_numbers = #tpu.dot_dimension_numbers<[1], [0], [0], [1], [0, 0, 1, 1], [], []>} : vector<392x128xbf16>, vector<128x128xbf16>, vector<392x128xf32> -> vector<392x128xf32>
    %22 = vector.broadcast %1 : vector<1x128xf32> to vector<392x128xf32>
    %23 = arith.addf %21, %22 : vector<392x128xf32>
    %cst_13 = arith.constant 0.000000e+00 : f32
    %24 = vector.broadcast %cst_13 : f32 to vector<392x128xf32>
    %25 = arith.maximumf %23, %24 : vector<392x128xf32>
    %26 = vector.broadcast %2 : vector<1x128xf32> to vector<392x128xf32>
    %27 = arith.mulf %25, %26 : vector<392x128xf32>
    %28 = arith.maximumf %19, %27 : vector<392x128xf32>
    %c1176 = arith.constant 1176 : index
    %c0_14 = arith.constant 0 : index
    %29 = vector.load %arg1[%c1176, %c0_14] : memref<1568x128xbf16, #tpu.memory_space<vmem>>, vector<392x128xbf16>
    %cst_15 = arith.constant dense<0.000000e+00> : vector<392x128xf32>
    %30 = tpu.matmul %29, %0, %cst_15 {dimension_numbers = #tpu.dot_dimension_numbers<[1], [0], [0], [1], [0, 0, 1, 1], [], []>} : vector<392x128xbf16>, vector<128x128xbf16>, vector<392x128xf32> -> vector<392x128xf32>
    %31 = vector.broadcast %1 : vector<1x128xf32> to vector<392x128xf32>
    %32 = arith.addf %30, %31 : vector<392x128xf32>
    %cst_16 = arith.constant 0.000000e+00 : f32
    %33 = vector.broadcast %cst_16 : f32 to vector<392x128xf32>
    %34 = arith.maximumf %32, %33 : vector<392x128xf32>
    %35 = vector.broadcast %2 : vector<1x128xf32> to vector<392x128xf32>
    %36 = arith.mulf %34, %35 : vector<392x128xf32>
    %37 = arith.maximumf %28, %36 : vector<392x128xf32>
    %38 = arith.truncf %37 : vector<392x128xf32> to vector<392x128xbf16>
    %c0_17 = arith.constant 0 : index
    %c0_18 = arith.constant 0 : index
    %39 = vector.load %arg5[%c0_17, %c0_18] : memref<392x128xbf16, #tpu.memory_space<vmem>>, vector<392x128xbf16>
    tpu.vector_store %arg5[%c0_17, %c0_18], %38 {strides = array<i32>} : memref<392x128xbf16, #tpu.memory_space<vmem>>, vector<392x128xbf16>,
    return
  }
  func.func @transform_0(%arg0: i32) -> (i32, i32) {
    %c0_i32 = arith.constant 0 : i32
    %c0_i32_0 = arith.constant 0 : i32
    %c0_i32_1 = arith.constant 0 : i32
    return %c0_i32, %c0_i32_0 : i32, i32
  }
  func.func @transform_1(%arg0: i32) -> (i32, i32) {
    %c0_i32 = arith.constant 0 : i32
    %c0_i32_0 = arith.constant 0 : i32
    %c0_i32_1 = arith.constant 0 : i32
    return %c0_i32, %c0_i32_0 : i32, i32
  }
  func.func @transform_2(%arg0: i32) -> (i32, i32) {
    %c0_i32 = arith.constant 0 : i32
    %c0_i32_0 = arith.constant 0 : i32
    %c0_i32_1 = arith.constant 0 : i32
    return %c0_i32, %c0_i32_0 : i32, i32
  }
  func.func @transform_3(%arg0: i32) -> (i32, i32) {
    %c0_i32 = arith.constant 0 : i32
    %c0_i32_0 = arith.constant 0 : i32
    %c0_i32_1 = arith.constant 0 : i32
    return %c0_i32, %c0_i32_0 : i32, i32
  }
  func.func @transform_4(%arg0: i32) -> (i32, i32) {
    %c0_i32 = arith.constant 0 : i32
    %c0_i32_0 = arith.constant 0 : i32
    %c0_i32_1 = arith.constant 0 : i32
    return %c0_i32, %c0_i32_0 : i32, i32
  }
}

module attributes {stable_mosaic.version = 11 : i64} {
  func.func @tail_kernel(%arg0: i32, %arg1: memref<256x512xbf16, #tpu.memory_space<vmem>>, %arg2: memref<512x64xbf16, #tpu.memory_space<vmem>>, %arg3: memref<1x64xf32, #tpu.memory_space<vmem>>, %arg4: memref<1x64xf32, #tpu.memory_space<vmem>>, %arg5: memref<1600x512xbf16, #tpu.memory_space<vmem>>, %arg6: memref<1x512xf32, #tpu.memory_space<vmem>>, %arg7: memref<1x512xf32, #tpu.memory_space<vmem>>, %arg8: memref<512x128xbf16, #tpu.memory_space<vmem>>, %arg9: memref<1x128xf32, #tpu.memory_space<vmem>>, %arg10: memref<2x128xf32, #tpu.memory_space<vmem>>, %arg11: memref<64x64xf32, #tpu.memory_space<vmem>>) attributes {dimension_semantics = [#tpu.dimension_semantics<arbitrary>], iteration_bounds = array<i64: 1>, scalar_prefetch = 0 : i64, scratch_operands = 1 : i64, tpu.core_type = #tpu.core_type<tc>, window_params = [{pipeline_mode = #tpu.pipeline_mode<synchronous>, transform_indices = @transform_0, window_bounds = array<i64: 256, 512>}, {pipeline_mode = #tpu.pipeline_mode<synchronous>, transform_indices = @transform_1, window_bounds = array<i64: 512, 64>}, {pipeline_mode = #tpu.pipeline_mode<synchronous>, transform_indices = @transform_2, window_bounds = array<i64: 1, 64>}, {pipeline_mode = #tpu.pipeline_mode<synchronous>, transform_indices = @transform_3, window_bounds = array<i64: 1, 64>}, {pipeline_mode = #tpu.pipeline_mode<synchronous>, transform_indices = @transform_4, window_bounds = array<i64: 1600, 512>}, {pipeline_mode = #tpu.pipeline_mode<synchronous>, transform_indices = @transform_5, window_bounds = array<i64: 1, 512>}, {pipeline_mode = #tpu.pipeline_mode<synchronous>, transform_indices = @transform_6, window_bounds = array<i64: 1, 512>}, {pipeline_mode = #tpu.pipeline_mode<synchronous>, transform_indices = @transform_7, window_bounds = array<i64: 512, 128>}, {pipeline_mode = #tpu.pipeline_mode<synchronous>, transform_indices = @transform_8, window_bounds = array<i64: 1, 128>}, {pipeline_mode = #tpu.pipeline_mode<synchronous>, transform_indices = @transform_9, window_bounds = array<i64: 2, 128>}]} {
    %c0 = arith.constant 0 : index
    %c0_0 = arith.constant 0 : index
    %0 = vector.load %arg1[%c0, %c0_0] : memref<256x512xbf16, #tpu.memory_space<vmem>>, vector<256x512xbf16>
    %c0_1 = arith.constant 0 : index
    %c0_2 = arith.constant 0 : index
    %1 = vector.load %arg2[%c0_1, %c0_2] : memref<512x64xbf16, #tpu.memory_space<vmem>>, vector<512x64xbf16>
    %cst = arith.constant dense<0.000000e+00> : vector<256x64xf32>
    %2 = tpu.matmul %0, %1, %cst {dimension_numbers = #tpu.dot_dimension_numbers<[1], [0], [0], [1], [0, 0, 1, 1], [], []>} : vector<256x512xbf16>, vector<512x64xbf16>, vector<256x64xf32> -> vector<256x64xf32>
    %c0_3 = arith.constant 0 : index
    %c0_4 = arith.constant 0 : index
    %3 = vector.load %arg3[%c0_3, %c0_4] : memref<1x64xf32, #tpu.memory_space<vmem>>, vector<1x64xf32>
    %4 = vector.broadcast %3 : vector<1x64xf32> to vector<256x64xf32>
    %5 = arith.addf %2, %4 : vector<256x64xf32>
    %cst_5 = arith.constant 0.000000e+00 : f32
    %6 = vector.broadcast %cst_5 : f32 to vector<256x64xf32>
    %7 = arith.maximumf %5, %6 : vector<256x64xf32>
    %c0_6 = arith.constant 0 : index
    %c0_7 = arith.constant 0 : index
    %8 = vector.load %arg4[%c0_6, %c0_7] : memref<1x64xf32, #tpu.memory_space<vmem>>, vector<1x64xf32>
    %9 = vector.broadcast %8 : vector<1x64xf32> to vector<256x64xf32>
    %10 = arith.mulf %7, %9 : vector<256x64xf32>
    %11 = vector.extract_strided_slice %10 {offsets = [0, 0], sizes = [64, 64], strides = [1, 1]} : vector<256x64xf32> to vector<64x64xf32>
    %12 = vector.extract_strided_slice %10 {offsets = [64, 0], sizes = [64, 64], strides = [1, 1]} : vector<256x64xf32> to vector<64x64xf32>
    %13 = arith.maximumf %11, %12 : vector<64x64xf32>
    %14 = vector.extract_strided_slice %10 {offsets = [128, 0], sizes = [64, 64], strides = [1, 1]} : vector<256x64xf32> to vector<64x64xf32>
    %15 = vector.extract_strided_slice %10 {offsets = [192, 0], sizes = [64, 64], strides = [1, 1]} : vector<256x64xf32> to vector<64x64xf32>
    %16 = arith.maximumf %14, %15 : vector<64x64xf32>
    %17 = arith.maximumf %13, %16 : vector<64x64xf32>
    %c0_8 = arith.constant 0 : index
    %c0_9 = arith.constant 0 : index
    %18 = vector.load %arg11[%c0_8, %c0_9] : memref<64x64xf32, #tpu.memory_space<vmem>>, vector<64x64xf32>
    tpu.vector_store %arg11[%c0_8, %c0_9], %17 {strides = array<i32>} : memref<64x64xf32, #tpu.memory_space<vmem>>, vector<64x64xf32>,
    %cst_10 = arith.constant 0.000000e+00 : f32
    %19 = vector.broadcast %cst_10 : f32 to vector<2x512xf32>
    %c0_11 = arith.constant 0 : index
    %c0_12 = arith.constant 0 : index
    %20 = vector.load %arg11[%c0_11, %c0_12] : memref<64x64xf32, #tpu.memory_space<vmem>>, vector<2x64xf32>
    %21 = arith.truncf %20 : vector<2x64xf32> to vector<2x64xbf16>
    %c0_13 = arith.constant 0 : index
    %c0_14 = arith.constant 0 : index
    %22 = vector.load %arg5[%c0_13, %c0_14] : memref<1600x512xbf16, #tpu.memory_space<vmem>>, vector<64x512xbf16>
    %cst_15 = arith.constant dense<0.000000e+00> : vector<2x512xf32>
    %23 = tpu.matmul %21, %22, %cst_15 {dimension_numbers = #tpu.dot_dimension_numbers<[1], [0], [0], [1], [0, 0, 1, 1], [], []>} : vector<2x64xbf16>, vector<64x512xbf16>, vector<2x512xf32> -> vector<2x512xf32>
    %24 = arith.addf %19, %23 : vector<2x512xf32>
    %c2 = arith.constant 2 : index
    %c0_16 = arith.constant 0 : index
    %25 = vector.load %arg11[%c2, %c0_16] : memref<64x64xf32, #tpu.memory_space<vmem>>, vector<2x64xf32>
    %26 = arith.truncf %25 : vector<2x64xf32> to vector<2x64xbf16>
    %c64 = arith.constant 64 : index
    %c0_17 = arith.constant 0 : index
    %27 = vector.load %arg5[%c64, %c0_17] : memref<1600x512xbf16, #tpu.memory_space<vmem>>, vector<64x512xbf16>
    %cst_18 = arith.constant dense<0.000000e+00> : vector<2x512xf32>
    %28 = tpu.matmul %26, %27, %cst_18 {dimension_numbers = #tpu.dot_dimension_numbers<[1], [0], [0], [1], [0, 0, 1, 1], [], []>} : vector<2x64xbf16>, vector<64x512xbf16>, vector<2x512xf32> -> vector<2x512xf32>
    %29 = arith.addf %24, %28 : vector<2x512xf32>
    %c4 = arith.constant 4 : index
    %c0_19 = arith.constant 0 : index
    %30 = vector.load %arg11[%c4, %c0_19] : memref<64x64xf32, #tpu.memory_space<vmem>>, vector<2x64xf32>
    %31 = arith.truncf %30 : vector<2x64xf32> to vector<2x64xbf16>
    %c128 = arith.constant 128 : index
    %c0_20 = arith.constant 0 : index
    %32 = vector.load %arg5[%c128, %c0_20] : memref<1600x512xbf16, #tpu.memory_space<vmem>>, vector<64x512xbf16>
    %cst_21 = arith.constant dense<0.000000e+00> : vector<2x512xf32>
    %33 = tpu.matmul %31, %32, %cst_21 {dimension_numbers = #tpu.dot_dimension_numbers<[1], [0], [0], [1], [0, 0, 1, 1], [], []>} : vector<2x64xbf16>, vector<64x512xbf16>, vector<2x512xf32> -> vector<2x512xf32>
    %34 = arith.addf %29, %33 : vector<2x512xf32>
    %c6 = arith.constant 6 : index
    %c0_22 = arith.constant 0 : index
    %35 = vector.load %arg11[%c6, %c0_22] : memref<64x64xf32, #tpu.memory_space<vmem>>, vector<2x64xf32>
    %36 = arith.truncf %35 : vector<2x64xf32> to vector<2x64xbf16>
    %c192 = arith.constant 192 : index
    %c0_23 = arith.constant 0 : index
    %37 = vector.load %arg5[%c192, %c0_23] : memref<1600x512xbf16, #tpu.memory_space<vmem>>, vector<64x512xbf16>
    %cst_24 = arith.constant dense<0.000000e+00> : vector<2x512xf32>
    %38 = tpu.matmul %36, %37, %cst_24 {dimension_numbers = #tpu.dot_dimension_numbers<[1], [0], [0], [1], [0, 0, 1, 1], [], []>} : vector<2x64xbf16>, vector<64x512xbf16>, vector<2x512xf32> -> vector<2x512xf32>
    %39 = arith.addf %34, %38 : vector<2x512xf32>
    %c8 = arith.constant 8 : index
    %c0_25 = arith.constant 0 : index
    %40 = vector.load %arg11[%c8, %c0_25] : memref<64x64xf32, #tpu.memory_space<vmem>>, vector<2x64xf32>
    %41 = arith.truncf %40 : vector<2x64xf32> to vector<2x64xbf16>
    %c256 = arith.constant 256 : index
    %c0_26 = arith.constant 0 : index
    %42 = vector.load %arg5[%c256, %c0_26] : memref<1600x512xbf16, #tpu.memory_space<vmem>>, vector<64x512xbf16>
    %cst_27 = arith.constant dense<0.000000e+00> : vector<2x512xf32>
    %43 = tpu.matmul %41, %42, %cst_27 {dimension_numbers = #tpu.dot_dimension_numbers<[1], [0], [0], [1], [0, 0, 1, 1], [], []>} : vector<2x64xbf16>, vector<64x512xbf16>, vector<2x512xf32> -> vector<2x512xf32>
    %44 = arith.addf %39, %43 : vector<2x512xf32>
    %c10 = arith.constant 10 : index
    %c0_28 = arith.constant 0 : index
    %45 = vector.load %arg11[%c10, %c0_28] : memref<64x64xf32, #tpu.memory_space<vmem>>, vector<2x64xf32>
    %46 = arith.truncf %45 : vector<2x64xf32> to vector<2x64xbf16>
    %c320 = arith.constant 320 : index
    %c0_29 = arith.constant 0 : index
    %47 = vector.load %arg5[%c320, %c0_29] : memref<1600x512xbf16, #tpu.memory_space<vmem>>, vector<64x512xbf16>
    %cst_30 = arith.constant dense<0.000000e+00> : vector<2x512xf32>
    %48 = tpu.matmul %46, %47, %cst_30 {dimension_numbers = #tpu.dot_dimension_numbers<[1], [0], [0], [1], [0, 0, 1, 1], [], []>} : vector<2x64xbf16>, vector<64x512xbf16>, vector<2x512xf32> -> vector<2x512xf32>
    %49 = arith.addf %44, %48 : vector<2x512xf32>
    %c12 = arith.constant 12 : index
    %c0_31 = arith.constant 0 : index
    %50 = vector.load %arg11[%c12, %c0_31] : memref<64x64xf32, #tpu.memory_space<vmem>>, vector<2x64xf32>
    %51 = arith.truncf %50 : vector<2x64xf32> to vector<2x64xbf16>
    %c384 = arith.constant 384 : index
    %c0_32 = arith.constant 0 : index
    %52 = vector.load %arg5[%c384, %c0_32] : memref<1600x512xbf16, #tpu.memory_space<vmem>>, vector<64x512xbf16>
    %cst_33 = arith.constant dense<0.000000e+00> : vector<2x512xf32>
    %53 = tpu.matmul %51, %52, %cst_33 {dimension_numbers = #tpu.dot_dimension_numbers<[1], [0], [0], [1], [0, 0, 1, 1], [], []>} : vector<2x64xbf16>, vector<64x512xbf16>, vector<2x512xf32> -> vector<2x512xf32>
    %54 = arith.addf %49, %53 : vector<2x512xf32>
    %c14 = arith.constant 14 : index
    %c0_34 = arith.constant 0 : index
    %55 = vector.load %arg11[%c14, %c0_34] : memref<64x64xf32, #tpu.memory_space<vmem>>, vector<2x64xf32>
    %56 = arith.truncf %55 : vector<2x64xf32> to vector<2x64xbf16>
    %c448 = arith.constant 448 : index
    %c0_35 = arith.constant 0 : index
    %57 = vector.load %arg5[%c448, %c0_35] : memref<1600x512xbf16, #tpu.memory_space<vmem>>, vector<64x512xbf16>
    %cst_36 = arith.constant dense<0.000000e+00> : vector<2x512xf32>
    %58 = tpu.matmul %56, %57, %cst_36 {dimension_numbers = #tpu.dot_dimension_numbers<[1], [0], [0], [1], [0, 0, 1, 1], [], []>} : vector<2x64xbf16>, vector<64x512xbf16>, vector<2x512xf32> -> vector<2x512xf32>
    %59 = arith.addf %54, %58 : vector<2x512xf32>
    %c16 = arith.constant 16 : index
    %c0_37 = arith.constant 0 : index
    %60 = vector.load %arg11[%c16, %c0_37] : memref<64x64xf32, #tpu.memory_space<vmem>>, vector<2x64xf32>
    %61 = arith.truncf %60 : vector<2x64xf32> to vector<2x64xbf16>
    %c512 = arith.constant 512 : index
    %c0_38 = arith.constant 0 : index
    %62 = vector.load %arg5[%c512, %c0_38] : memref<1600x512xbf16, #tpu.memory_space<vmem>>, vector<64x512xbf16>
    %cst_39 = arith.constant dense<0.000000e+00> : vector<2x512xf32>
    %63 = tpu.matmul %61, %62, %cst_39 {dimension_numbers = #tpu.dot_dimension_numbers<[1], [0], [0], [1], [0, 0, 1, 1], [], []>} : vector<2x64xbf16>, vector<64x512xbf16>, vector<2x512xf32> -> vector<2x512xf32>
    %64 = arith.addf %59, %63 : vector<2x512xf32>
    %c18 = arith.constant 18 : index
    %c0_40 = arith.constant 0 : index
    %65 = vector.load %arg11[%c18, %c0_40] : memref<64x64xf32, #tpu.memory_space<vmem>>, vector<2x64xf32>
    %66 = arith.truncf %65 : vector<2x64xf32> to vector<2x64xbf16>
    %c576 = arith.constant 576 : index
    %c0_41 = arith.constant 0 : index
    %67 = vector.load %arg5[%c576, %c0_41] : memref<1600x512xbf16, #tpu.memory_space<vmem>>, vector<64x512xbf16>
    %cst_42 = arith.constant dense<0.000000e+00> : vector<2x512xf32>
    %68 = tpu.matmul %66, %67, %cst_42 {dimension_numbers = #tpu.dot_dimension_numbers<[1], [0], [0], [1], [0, 0, 1, 1], [], []>} : vector<2x64xbf16>, vector<64x512xbf16>, vector<2x512xf32> -> vector<2x512xf32>
    %69 = arith.addf %64, %68 : vector<2x512xf32>
    %c20 = arith.constant 20 : index
    %c0_43 = arith.constant 0 : index
    %70 = vector.load %arg11[%c20, %c0_43] : memref<64x64xf32, #tpu.memory_space<vmem>>, vector<2x64xf32>
    %71 = arith.truncf %70 : vector<2x64xf32> to vector<2x64xbf16>
    %c640 = arith.constant 640 : index
    %c0_44 = arith.constant 0 : index
    %72 = vector.load %arg5[%c640, %c0_44] : memref<1600x512xbf16, #tpu.memory_space<vmem>>, vector<64x512xbf16>
    %cst_45 = arith.constant dense<0.000000e+00> : vector<2x512xf32>
    %73 = tpu.matmul %71, %72, %cst_45 {dimension_numbers = #tpu.dot_dimension_numbers<[1], [0], [0], [1], [0, 0, 1, 1], [], []>} : vector<2x64xbf16>, vector<64x512xbf16>, vector<2x512xf32> -> vector<2x512xf32>
    %74 = arith.addf %69, %73 : vector<2x512xf32>
    %c22 = arith.constant 22 : index
    %c0_46 = arith.constant 0 : index
    %75 = vector.load %arg11[%c22, %c0_46] : memref<64x64xf32, #tpu.memory_space<vmem>>, vector<2x64xf32>
    %76 = arith.truncf %75 : vector<2x64xf32> to vector<2x64xbf16>
    %c704 = arith.constant 704 : index
    %c0_47 = arith.constant 0 : index
    %77 = vector.load %arg5[%c704, %c0_47] : memref<1600x512xbf16, #tpu.memory_space<vmem>>, vector<64x512xbf16>
    %cst_48 = arith.constant dense<0.000000e+00> : vector<2x512xf32>
    %78 = tpu.matmul %76, %77, %cst_48 {dimension_numbers = #tpu.dot_dimension_numbers<[1], [0], [0], [1], [0, 0, 1, 1], [], []>} : vector<2x64xbf16>, vector<64x512xbf16>, vector<2x512xf32> -> vector<2x512xf32>
    %79 = arith.addf %74, %78 : vector<2x512xf32>
    %c24 = arith.constant 24 : index
    %c0_49 = arith.constant 0 : index
    %80 = vector.load %arg11[%c24, %c0_49] : memref<64x64xf32, #tpu.memory_space<vmem>>, vector<2x64xf32>
    %81 = arith.truncf %80 : vector<2x64xf32> to vector<2x64xbf16>
    %c768 = arith.constant 768 : index
    %c0_50 = arith.constant 0 : index
    %82 = vector.load %arg5[%c768, %c0_50] : memref<1600x512xbf16, #tpu.memory_space<vmem>>, vector<64x512xbf16>
    %cst_51 = arith.constant dense<0.000000e+00> : vector<2x512xf32>
    %83 = tpu.matmul %81, %82, %cst_51 {dimension_numbers = #tpu.dot_dimension_numbers<[1], [0], [0], [1], [0, 0, 1, 1], [], []>} : vector<2x64xbf16>, vector<64x512xbf16>, vector<2x512xf32> -> vector<2x512xf32>
    %84 = arith.addf %79, %83 : vector<2x512xf32>
    %c26 = arith.constant 26 : index
    %c0_52 = arith.constant 0 : index
    %85 = vector.load %arg11[%c26, %c0_52] : memref<64x64xf32, #tpu.memory_space<vmem>>, vector<2x64xf32>
    %86 = arith.truncf %85 : vector<2x64xf32> to vector<2x64xbf16>
    %c832 = arith.constant 832 : index
    %c0_53 = arith.constant 0 : index
    %87 = vector.load %arg5[%c832, %c0_53] : memref<1600x512xbf16, #tpu.memory_space<vmem>>, vector<64x512xbf16>
    %cst_54 = arith.constant dense<0.000000e+00> : vector<2x512xf32>
    %88 = tpu.matmul %86, %87, %cst_54 {dimension_numbers = #tpu.dot_dimension_numbers<[1], [0], [0], [1], [0, 0, 1, 1], [], []>} : vector<2x64xbf16>, vector<64x512xbf16>, vector<2x512xf32> -> vector<2x512xf32>
    %89 = arith.addf %84, %88 : vector<2x512xf32>
    %c28 = arith.constant 28 : index
    %c0_55 = arith.constant 0 : index
    %90 = vector.load %arg11[%c28, %c0_55] : memref<64x64xf32, #tpu.memory_space<vmem>>, vector<2x64xf32>
    %91 = arith.truncf %90 : vector<2x64xf32> to vector<2x64xbf16>
    %c896 = arith.constant 896 : index
    %c0_56 = arith.constant 0 : index
    %92 = vector.load %arg5[%c896, %c0_56] : memref<1600x512xbf16, #tpu.memory_space<vmem>>, vector<64x512xbf16>
    %cst_57 = arith.constant dense<0.000000e+00> : vector<2x512xf32>
    %93 = tpu.matmul %91, %92, %cst_57 {dimension_numbers = #tpu.dot_dimension_numbers<[1], [0], [0], [1], [0, 0, 1, 1], [], []>} : vector<2x64xbf16>, vector<64x512xbf16>, vector<2x512xf32> -> vector<2x512xf32>
    %94 = arith.addf %89, %93 : vector<2x512xf32>
    %c30 = arith.constant 30 : index
    %c0_58 = arith.constant 0 : index
    %95 = vector.load %arg11[%c30, %c0_58] : memref<64x64xf32, #tpu.memory_space<vmem>>, vector<2x64xf32>
    %96 = arith.truncf %95 : vector<2x64xf32> to vector<2x64xbf16>
    %c960 = arith.constant 960 : index
    %c0_59 = arith.constant 0 : index
    %97 = vector.load %arg5[%c960, %c0_59] : memref<1600x512xbf16, #tpu.memory_space<vmem>>, vector<64x512xbf16>
    %cst_60 = arith.constant dense<0.000000e+00> : vector<2x512xf32>
    %98 = tpu.matmul %96, %97, %cst_60 {dimension_numbers = #tpu.dot_dimension_numbers<[1], [0], [0], [1], [0, 0, 1, 1], [], []>} : vector<2x64xbf16>, vector<64x512xbf16>, vector<2x512xf32> -> vector<2x512xf32>
    %99 = arith.addf %94, %98 : vector<2x512xf32>
    %c32 = arith.constant 32 : index
    %c0_61 = arith.constant 0 : index
    %100 = vector.load %arg11[%c32, %c0_61] : memref<64x64xf32, #tpu.memory_space<vmem>>, vector<2x64xf32>
    %101 = arith.truncf %100 : vector<2x64xf32> to vector<2x64xbf16>
    %c1024 = arith.constant 1024 : index
    %c0_62 = arith.constant 0 : index
    %102 = vector.load %arg5[%c1024, %c0_62] : memref<1600x512xbf16, #tpu.memory_space<vmem>>, vector<64x512xbf16>
    %cst_63 = arith.constant dense<0.000000e+00> : vector<2x512xf32>
    %103 = tpu.matmul %101, %102, %cst_63 {dimension_numbers = #tpu.dot_dimension_numbers<[1], [0], [0], [1], [0, 0, 1, 1], [], []>} : vector<2x64xbf16>, vector<64x512xbf16>, vector<2x512xf32> -> vector<2x512xf32>
    %104 = arith.addf %99, %103 : vector<2x512xf32>
    %c34 = arith.constant 34 : index
    %c0_64 = arith.constant 0 : index
    %105 = vector.load %arg11[%c34, %c0_64] : memref<64x64xf32, #tpu.memory_space<vmem>>, vector<2x64xf32>
    %106 = arith.truncf %105 : vector<2x64xf32> to vector<2x64xbf16>
    %c1088 = arith.constant 1088 : index
    %c0_65 = arith.constant 0 : index
    %107 = vector.load %arg5[%c1088, %c0_65] : memref<1600x512xbf16, #tpu.memory_space<vmem>>, vector<64x512xbf16>
    %cst_66 = arith.constant dense<0.000000e+00> : vector<2x512xf32>
    %108 = tpu.matmul %106, %107, %cst_66 {dimension_numbers = #tpu.dot_dimension_numbers<[1], [0], [0], [1], [0, 0, 1, 1], [], []>} : vector<2x64xbf16>, vector<64x512xbf16>, vector<2x512xf32> -> vector<2x512xf32>
    %109 = arith.addf %104, %108 : vector<2x512xf32>
    %c36 = arith.constant 36 : index
    %c0_67 = arith.constant 0 : index
    %110 = vector.load %arg11[%c36, %c0_67] : memref<64x64xf32, #tpu.memory_space<vmem>>, vector<2x64xf32>
    %111 = arith.truncf %110 : vector<2x64xf32> to vector<2x64xbf16>
    %c1152 = arith.constant 1152 : index
    %c0_68 = arith.constant 0 : index
    %112 = vector.load %arg5[%c1152, %c0_68] : memref<1600x512xbf16, #tpu.memory_space<vmem>>, vector<64x512xbf16>
    %cst_69 = arith.constant dense<0.000000e+00> : vector<2x512xf32>
    %113 = tpu.matmul %111, %112, %cst_69 {dimension_numbers = #tpu.dot_dimension_numbers<[1], [0], [0], [1], [0, 0, 1, 1], [], []>} : vector<2x64xbf16>, vector<64x512xbf16>, vector<2x512xf32> -> vector<2x512xf32>
    %114 = arith.addf %109, %113 : vector<2x512xf32>
    %c38 = arith.constant 38 : index
    %c0_70 = arith.constant 0 : index
    %115 = vector.load %arg11[%c38, %c0_70] : memref<64x64xf32, #tpu.memory_space<vmem>>, vector<2x64xf32>
    %116 = arith.truncf %115 : vector<2x64xf32> to vector<2x64xbf16>
    %c1216 = arith.constant 1216 : index
    %c0_71 = arith.constant 0 : index
    %117 = vector.load %arg5[%c1216, %c0_71] : memref<1600x512xbf16, #tpu.memory_space<vmem>>, vector<64x512xbf16>
    %cst_72 = arith.constant dense<0.000000e+00> : vector<2x512xf32>
    %118 = tpu.matmul %116, %117, %cst_72 {dimension_numbers = #tpu.dot_dimension_numbers<[1], [0], [0], [1], [0, 0, 1, 1], [], []>} : vector<2x64xbf16>, vector<64x512xbf16>, vector<2x512xf32> -> vector<2x512xf32>
    %119 = arith.addf %114, %118 : vector<2x512xf32>
    %c40 = arith.constant 40 : index
    %c0_73 = arith.constant 0 : index
    %120 = vector.load %arg11[%c40, %c0_73] : memref<64x64xf32, #tpu.memory_space<vmem>>, vector<2x64xf32>
    %121 = arith.truncf %120 : vector<2x64xf32> to vector<2x64xbf16>
    %c1280 = arith.constant 1280 : index
    %c0_74 = arith.constant 0 : index
    %122 = vector.load %arg5[%c1280, %c0_74] : memref<1600x512xbf16, #tpu.memory_space<vmem>>, vector<64x512xbf16>
    %cst_75 = arith.constant dense<0.000000e+00> : vector<2x512xf32>
    %123 = tpu.matmul %121, %122, %cst_75 {dimension_numbers = #tpu.dot_dimension_numbers<[1], [0], [0], [1], [0, 0, 1, 1], [], []>} : vector<2x64xbf16>, vector<64x512xbf16>, vector<2x512xf32> -> vector<2x512xf32>
    %124 = arith.addf %119, %123 : vector<2x512xf32>
    %c42 = arith.constant 42 : index
    %c0_76 = arith.constant 0 : index
    %125 = vector.load %arg11[%c42, %c0_76] : memref<64x64xf32, #tpu.memory_space<vmem>>, vector<2x64xf32>
    %126 = arith.truncf %125 : vector<2x64xf32> to vector<2x64xbf16>
    %c1344 = arith.constant 1344 : index
    %c0_77 = arith.constant 0 : index
    %127 = vector.load %arg5[%c1344, %c0_77] : memref<1600x512xbf16, #tpu.memory_space<vmem>>, vector<64x512xbf16>
    %cst_78 = arith.constant dense<0.000000e+00> : vector<2x512xf32>
    %128 = tpu.matmul %126, %127, %cst_78 {dimension_numbers = #tpu.dot_dimension_numbers<[1], [0], [0], [1], [0, 0, 1, 1], [], []>} : vector<2x64xbf16>, vector<64x512xbf16>, vector<2x512xf32> -> vector<2x512xf32>
    %129 = arith.addf %124, %128 : vector<2x512xf32>
    %c44 = arith.constant 44 : index
    %c0_79 = arith.constant 0 : index
    %130 = vector.load %arg11[%c44, %c0_79] : memref<64x64xf32, #tpu.memory_space<vmem>>, vector<2x64xf32>
    %131 = arith.truncf %130 : vector<2x64xf32> to vector<2x64xbf16>
    %c1408 = arith.constant 1408 : index
    %c0_80 = arith.constant 0 : index
    %132 = vector.load %arg5[%c1408, %c0_80] : memref<1600x512xbf16, #tpu.memory_space<vmem>>, vector<64x512xbf16>
    %cst_81 = arith.constant dense<0.000000e+00> : vector<2x512xf32>
    %133 = tpu.matmul %131, %132, %cst_81 {dimension_numbers = #tpu.dot_dimension_numbers<[1], [0], [0], [1], [0, 0, 1, 1], [], []>} : vector<2x64xbf16>, vector<64x512xbf16>, vector<2x512xf32> -> vector<2x512xf32>
    %134 = arith.addf %129, %133 : vector<2x512xf32>
    %c46 = arith.constant 46 : index
    %c0_82 = arith.constant 0 : index
    %135 = vector.load %arg11[%c46, %c0_82] : memref<64x64xf32, #tpu.memory_space<vmem>>, vector<2x64xf32>
    %136 = arith.truncf %135 : vector<2x64xf32> to vector<2x64xbf16>
    %c1472 = arith.constant 1472 : index
    %c0_83 = arith.constant 0 : index
    %137 = vector.load %arg5[%c1472, %c0_83] : memref<1600x512xbf16, #tpu.memory_space<vmem>>, vector<64x512xbf16>
    %cst_84 = arith.constant dense<0.000000e+00> : vector<2x512xf32>
    %138 = tpu.matmul %136, %137, %cst_84 {dimension_numbers = #tpu.dot_dimension_numbers<[1], [0], [0], [1], [0, 0, 1, 1], [], []>} : vector<2x64xbf16>, vector<64x512xbf16>, vector<2x512xf32> -> vector<2x512xf32>
    %139 = arith.addf %134, %138 : vector<2x512xf32>
    %c48 = arith.constant 48 : index
    %c0_85 = arith.constant 0 : index
    %140 = vector.load %arg11[%c48, %c0_85] : memref<64x64xf32, #tpu.memory_space<vmem>>, vector<2x64xf32>
    %141 = arith.truncf %140 : vector<2x64xf32> to vector<2x64xbf16>
    %c1536 = arith.constant 1536 : index
    %c0_86 = arith.constant 0 : index
    %142 = vector.load %arg5[%c1536, %c0_86] : memref<1600x512xbf16, #tpu.memory_space<vmem>>, vector<64x512xbf16>
    %cst_87 = arith.constant dense<0.000000e+00> : vector<2x512xf32>
    %143 = tpu.matmul %141, %142, %cst_87 {dimension_numbers = #tpu.dot_dimension_numbers<[1], [0], [0], [1], [0, 0, 1, 1], [], []>} : vector<2x64xbf16>, vector<64x512xbf16>, vector<2x512xf32> -> vector<2x512xf32>
    %144 = arith.addf %139, %143 : vector<2x512xf32>
    %c0_88 = arith.constant 0 : index
    %c0_89 = arith.constant 0 : index
    %145 = vector.load %arg6[%c0_88, %c0_89] : memref<1x512xf32, #tpu.memory_space<vmem>>, vector<1x512xf32>
    %146 = vector.broadcast %145 : vector<1x512xf32> to vector<2x512xf32>
    %147 = arith.addf %144, %146 : vector<2x512xf32>
    %cst_90 = arith.constant 0.000000e+00 : f32
    %148 = vector.broadcast %cst_90 : f32 to vector<2x512xf32>
    %149 = arith.maximumf %147, %148 : vector<2x512xf32>
    %c0_91 = arith.constant 0 : index
    %c0_92 = arith.constant 0 : index
    %150 = vector.load %arg7[%c0_91, %c0_92] : memref<1x512xf32, #tpu.memory_space<vmem>>, vector<1x512xf32>
    %151 = vector.broadcast %150 : vector<1x512xf32> to vector<2x512xf32>
    %152 = arith.mulf %149, %151 : vector<2x512xf32>
    %153 = arith.truncf %152 : vector<2x512xf32> to vector<2x512xbf16>
    %c0_93 = arith.constant 0 : index
    %c0_94 = arith.constant 0 : index
    %154 = vector.load %arg8[%c0_93, %c0_94] : memref<512x128xbf16, #tpu.memory_space<vmem>>, vector<512x128xbf16>
    %cst_95 = arith.constant dense<0.000000e+00> : vector<2x128xf32>
    %155 = tpu.matmul %153, %154, %cst_95 {dimension_numbers = #tpu.dot_dimension_numbers<[1], [0], [0], [1], [0, 0, 1, 1], [], []>} : vector<2x512xbf16>, vector<512x128xbf16>, vector<2x128xf32> -> vector<2x128xf32>
    %c0_96 = arith.constant 0 : index
    %c0_97 = arith.constant 0 : index
    %156 = vector.load %arg9[%c0_96, %c0_97] : memref<1x128xf32, #tpu.memory_space<vmem>>, vector<1x128xf32>
    %157 = vector.broadcast %156 : vector<1x128xf32> to vector<2x128xf32>
    %158 = arith.addf %155, %157 : vector<2x128xf32>
    %c0_98 = arith.constant 0 : index
    %c0_99 = arith.constant 0 : index
    %159 = vector.load %arg10[%c0_98, %c0_99] : memref<2x128xf32, #tpu.memory_space<vmem>>, vector<2x128xf32>
    tpu.vector_store %arg10[%c0_98, %c0_99], %158 {strides = array<i32>} : memref<2x128xf32, #tpu.memory_space<vmem>>, vector<2x128xf32>,
    return
  }
  func.func @transform_0(%arg0: i32) -> (i32, i32) {
    %c0_i32 = arith.constant 0 : i32
    %c0_i32_0 = arith.constant 0 : i32
    %c0_i32_1 = arith.constant 0 : i32
    return %c0_i32, %c0_i32_0 : i32, i32
  }
  func.func @transform_1(%arg0: i32) -> (i32, i32) {
    %c0_i32 = arith.constant 0 : i32
    %c0_i32_0 = arith.constant 0 : i32
    %c0_i32_1 = arith.constant 0 : i32
    return %c0_i32, %c0_i32_0 : i32, i32
  }
  func.func @transform_2(%arg0: i32) -> (i32, i32) {
    %c0_i32 = arith.constant 0 : i32
    %c0_i32_0 = arith.constant 0 : i32
    %c0_i32_1 = arith.constant 0 : i32
    return %c0_i32, %c0_i32_0 : i32, i32
  }
  func.func @transform_3(%arg0: i32) -> (i32, i32) {
    %c0_i32 = arith.constant 0 : i32
    %c0_i32_0 = arith.constant 0 : i32
    %c0_i32_1 = arith.constant 0 : i32
    return %c0_i32, %c0_i32_0 : i32, i32
  }
  func.func @transform_4(%arg0: i32) -> (i32, i32) {
    %c0_i32 = arith.constant 0 : i32
    %c0_i32_0 = arith.constant 0 : i32
    %c0_i32_1 = arith.constant 0 : i32
    return %c0_i32, %c0_i32_0 : i32, i32
  }
  func.func @transform_5(%arg0: i32) -> (i32, i32) {
    %c0_i32 = arith.constant 0 : i32
    %c0_i32_0 = arith.constant 0 : i32
    %c0_i32_1 = arith.constant 0 : i32
    return %c0_i32, %c0_i32_0 : i32, i32
  }
  func.func @transform_6(%arg0: i32) -> (i32, i32) {
    %c0_i32 = arith.constant 0 : i32
    %c0_i32_0 = arith.constant 0 : i32
    %c0_i32_1 = arith.constant 0 : i32
    return %c0_i32, %c0_i32_0 : i32, i32
  }
  func.func @transform_7(%arg0: i32) -> (i32, i32) {
    %c0_i32 = arith.constant 0 : i32
    %c0_i32_0 = arith.constant 0 : i32
    %c0_i32_1 = arith.constant 0 : i32
    return %c0_i32, %c0_i32_0 : i32, i32
  }
  func.func @transform_8(%arg0: i32) -> (i32, i32) {
    %c0_i32 = arith.constant 0 : i32
    %c0_i32_0 = arith.constant 0 : i32
    %c0_i32_1 = arith.constant 0 : i32
    return %c0_i32, %c0_i32_0 : i32, i32
  }
  func.func @transform_9(%arg0: i32) -> (i32, i32) {
    %c0_i32 = arith.constant 0 : i32
    %c0_i32_0 = arith.constant 0 : i32
    %c0_i32_1 = arith.constant 0 : i32
    return %c0_i32, %c0_i32_0 : i32, i32
  }
}

</mosaic_0001>

<llo_original>
// kernel: lenet_forward.2
$region0: #{lenet_forward.2}
  #allocation0 [shape = 'u32[]', space=smem, size = 0x4, offset = 0x4, fixed_abs, tag = 'smem constant byte address 0x4 - core index']
  #allocation1 [shape = 'u32[144,128]{1,0:T(1,128)}', space=vmem, size = 0x12000, scoped, tag = 'internal scratch']
  %s0 = inlined_call_operand.vmem [shape: bf16[1568,128], index: 0, kind: input, shape index: {}]
  %s1 = inlined_call_operand.vmem [shape: bf16[128,128], index: 1, kind: input, shape index: {}]
  %s2 = inlined_call_operand.vmem [shape: f32[1,128], index: 2, kind: input, shape index: {}]
  %s3 = inlined_call_operand.vmem [shape: f32[1,128], index: 3, kind: input, shape index: {}]
  %s4 = inlined_call_operand.vmem [shape: bf16[392,128], index: 4, kind: output, shape index: {}]
  %s5 = sld [smem:[#allocation0]]
  $region26: #{lenet_forward.2} parent=0
    _
  %s7 = ssub.s32 1, %s5
  %s8 = scalar_select 0, %s7, %s5
  // Predicated region
  $region2: #{lenet_forward.2} parent=0 // pred_check
    _
  $region3: #{lenet_forward.2} parent=0 // pred_check_branch
    %10 = sbr.rel (0) target = $region5
  $region4: #{lenet_forward.2} parent=0 // pred_region
    _
  $region5: #{lenet_forward.2} parent=0 // pred_fallthru
    _
  // Predicated region
  $region6: #{lenet_forward.2} parent=0 // pred_check
    _
  $region7: #{lenet_forward.2} parent=0 // pred_check_branch
    %12 = sbr.rel (0) target = $region9
  $region8: #{lenet_forward.2} parent=0 // pred_region
    _
  $region9: #{lenet_forward.2} parent=0 // pred_fallthru
    _
  // Predicated region
  $region10: #{lenet_forward.2} parent=0 // pred_check
    _
  $region11: #{lenet_forward.2} parent=0 // pred_check_branch
    %14 = sbr.rel (0) target = $region13
  $region12: #{lenet_forward.2} parent=0 // pred_region
    _
  $region13: #{lenet_forward.2} parent=0 // pred_fallthru
    _
  // Predicated region
  $region14: #{lenet_forward.2} parent=0 // pred_check
    _
  $region15: #{lenet_forward.2} parent=0 // pred_check_branch
    %16 = sbr.rel (0) target = $region17
  $region16: #{lenet_forward.2} parent=0 // pred_region
    _
  $region17: #{lenet_forward.2} parent=0 // pred_fallthru
    _
  %v18 = vld [vmem:[%s1] sm:$0xf]
  %v19 = vld [vmem:[%s1 + $0x4] sm:$0xf]
  %v20 = vld [vmem:[%s1 + $0x8] sm:$0xf]
  %v21 = vld [vmem:[%s1 + $0xc] sm:$0xf]
  %v22 = vld [vmem:[%s1 + $0x10] sm:$0xf]
  %v23 = vld [vmem:[%s1 + $0x14] sm:$0xf]
  %v24 = vld [vmem:[%s1 + $0x18] sm:$0xf]
  %v25 = vld [vmem:[%s1 + $0x1c] sm:$0xf]
  %v26 = vld [vmem:[%s1 + $0x20] sm:$0xf]
  %v27 = vld [vmem:[%s1 + $0x24] sm:$0xf]
  %v28 = vld [vmem:[%s1 + $0x28] sm:$0xf]
  %v29 = vld [vmem:[%s1 + $0x2c] sm:$0xf]
  %v30 = vld [vmem:[%s1 + $0x30] sm:$0xf]
  %v31 = vld [vmem:[%s1 + $0x34] sm:$0xf]
  %v32 = vld [vmem:[%s1 + $0x38] sm:$0xf]
  %v33 = vld [vmem:[%s1 + $0x3c] sm:$0xf]
  %v34 = vld [vmem:[%s2] sm:$0x1]
  %v35 = vld [vmem:[%s3] sm:$0x1]
  %v36 = vld [vmem:[%s0] sm:$0xf]
  %v37 = vld [vmem:[%s0 + $0x4] sm:$0xf]
  %v38 = vld [vmem:[%s0 + $0x8] sm:$0xf]
  %v39 = vld [vmem:[%s0 + $0xc] sm:$0xf]
  %v40 = vld [vmem:[%s0 + $0x10] sm:$0xf]
  %v41 = vld [vmem:[%s0 + $0x14] sm:$0xf]
  %v42 = vld [vmem:[%s0 + $0x18] sm:$0xf]
  %v43 = vld [vmem:[%s0 + $0x1c] sm:$0xf]
  %v44 = vld [vmem:[%s0 + $0x20] sm:$0xf]
  %v45 = vld [vmem:[%s0 + $0x24] sm:$0xf]
  %v46 = vld [vmem:[%s0 + $0x28] sm:$0xf]
  %v47 = vld [vmem:[%s0 + $0x2c] sm:$0xf]
  %v48 = vld [vmem:[%s0 + $0x30] sm:$0xf]
  %v49 = vld [vmem:[%s0 + $0x34] sm:$0xf]
  %v50 = vld [vmem:[%s0 + $0x38] sm:$0xf]
  %v51 = vld [vmem:[%s0 + $0x3c] sm:$0xf]
  %v52 = vld [vmem:[%s0 + $0x40] sm:$0xf]
  %v53 = vld [vmem:[%s0 + $0x44] sm:$0xf]
  %v54 = vld [vmem:[%s0 + $0x48] sm:$0xf]
  %v55 = vld [vmem:[%s0 + $0x4c] sm:$0xf]
  %v56 = vld [vmem:[%s0 + $0x50] sm:$0xf]
  %v57 = vld [vmem:[%s0 + $0x54] sm:$0xf]
  %v58 = vld [vmem:[%s0 + $0x58] sm:$0xf]
  %v59 = vld [vmem:[%s0 + $0x5c] sm:$0xf]
  %v60 = vld [vmem:[%s0 + $0x60] sm:$0xf]
  %v61 = vld [vmem:[%s0 + $0x64] sm:$0xf]
  %v62 = vld [vmem:[%s0 + $0x68] sm:$0xf]
  %v63 = vld [vmem:[%s0 + $0x6c] sm:$0xf]
  %v64 = vld [vmem:[%s0 + $0x70] sm:$0xf]
  %v65 = vld [vmem:[%s0 + $0x74] sm:$0xf]
  %v66 = vld [vmem:[%s0 + $0x78] sm:$0xf]
  %v67 = vld [vmem:[%s0 + $0x7c] sm:$0xf]
  %v68 = vld [vmem:[%s0 + $0x80] sm:$0xf]
  %v69 = vld [vmem:[%s0 + $0x84] sm:$0xf]
  %v70 = vld [vmem:[%s0 + $0x88] sm:$0xf]
  %v71 = vld [vmem:[%s0 + $0x8c] sm:$0xf]
  %v72 = vld [vmem:[%s0 + $0x90] sm:$0xf]
  %v73 = vld [vmem:[%s0 + $0x94] sm:$0xf]
  %v74 = vld [vmem:[%s0 + $0x98] sm:$0xf]
  %v75 = vld [vmem:[%s0 + $0x9c] sm:$0xf]
  %v76 = vld [vmem:[%s0 + $0xa0] sm:$0xf]
  %v77 = vld [vmem:[%s0 + $0xa4] sm:$0xf]
  %v78 = vld [vmem:[%s0 + $0xa8] sm:$0xf]
  %v79 = vld [vmem:[%s0 + $0xac] sm:$0xf]
  %v80 = vld [vmem:[%s0 + $0xb0] sm:$0xf]
  %v81 = vld [vmem:[%s0 + $0xb4] sm:$0xf]
  %v82 = vld [vmem:[%s0 + $0xb8] sm:$0xf]
  %v83 = vld [vmem:[%s0 + $0xbc] sm:$0xf]
  %v84 = vld [vmem:[%s0 + $0xc0] sm:$0xf]
  %v86 = vlaneseq
  %v87 = vshrl.u32 %v86, 7
  %v88 = vsub.s32 0, %v87
  %v89 = vrot.slane %v34, %v88
  %v140 = vunpack.c.l.b16 %v36
  %v141 = vunpack.c.l.b16 %v37
  %v142 = vunpack.c.l.b16 %v38
  %v143 = vunpack.c.l.b16 %v39
  %v144 = vunpack.c.l.b16 %v40
  %v145 = vunpack.c.l.b16 %v41
  %v146 = vunpack.c.l.b16 %v42
  %v147 = vunpack.c.l.b16 %v43
  %v148 = vunpack.c.l.b16 %v44
  %v149 = vunpack.c.l.b16 %v45
  %v150 = vunpack.c.l.b16 %v46
  %v151 = vunpack.c.l.b16 %v47
  %v152 = vunpack.c.l.b16 %v48
  %v153 = vunpack.c.l.b16 %v49
  %v154 = vunpack.c.l.b16 %v50
  %v155 = vunpack.c.l.b16 %v51
  %v156 = vunpack.c.l.b16 %v52
  %v157 = vunpack.c.l.b16 %v53
  %v158 = vunpack.c.l.b16 %v54
  %v159 = vunpack.c.l.b16 %v55
  %v160 = vunpack.c.l.b16 %v56
  %v161 = vunpack.c.l.b16 %v57
  %v162 = vunpack.c.l.b16 %v58
  %v163 = vunpack.c.l.b16 %v59
  %v164 = vunpack.c.l.b16 %v60
  %v165 = vunpack.c.l.b16 %v61
  %v166 = vunpack.c.l.b16 %v62
  %v167 = vunpack.c.l.b16 %v63
  %v168 = vunpack.c.l.b16 %v64
  %v169 = vunpack.c.l.b16 %v65
  %v170 = vunpack.c.l.b16 %v66
  %v171 = vunpack.c.l.b16 %v67
  %v172 = vunpack.c.l.b16 %v68
  %v173 = vunpack.c.l.b16 %v69
  %v174 = vunpack.c.l.b16 %v70
  %v175 = vunpack.c.l.b16 %v71
  %v176 = vunpack.c.l.b16 %v72
  %v177 = vunpack.c.l.b16 %v73
  %v178 = vunpack.c.l.b16 %v74
  %v179 = vunpack.c.l.b16 %v75
  %v180 = vunpack.c.l.b16 %v76
  %v181 = vunpack.c.l.b16 %v77
  %v182 = vunpack.c.l.b16 %v78
  %v183 = vunpack.c.l.b16 %v79
  %v184 = vunpack.c.l.b16 %v80
  %v185 = vunpack.c.l.b16 %v81
  %v186 = vunpack.c.l.b16 %v82
  %v187 = vunpack.c.l.b16 %v83
  %v188 = vunpack.c.l.b16 %v84
  %v189 = vpack.c.b16 %v141, %v140
  %v190 = vpack.c.b16 %v143, %v142
  %v191 = vpack.c.b16 %v145, %v144
  %v192 = vpack.c.b16 %v147, %v146
  %v193 = vpack.c.b16 %v149, %v148
  %v194 = vpack.c.b16 %v151, %v150
  %v195 = vpack.c.b16 %v153, %v152
  %v196 = vpack.c.b16 %v155, %v154
  %v197 = vpack.c.b16 %v157, %v156
  %v198 = vpack.c.b16 %v159, %v158
  %v199 = vpack.c.b16 %v161, %v160
  %v200 = vpack.c.b16 %v163, %v162
  %v201 = vpack.c.b16 %v165, %v164
  %v202 = vpack.c.b16 %v167, %v166
  %v203 = vpack.c.b16 %v169, %v168
  %v204 = vpack.c.b16 %v171, %v170
  %v205 = vpack.c.b16 %v173, %v172
  %v206 = vpack.c.b16 %v175, %v174
  %v207 = vpack.c.b16 %v177, %v176
  %v208 = vpack.c.b16 %v179, %v178
  %v209 = vpack.c.b16 %v181, %v180
  %v210 = vpack.c.b16 %v183, %v182
  %v211 = vpack.c.b16 %v185, %v184
  %v212 = vpack.c.b16 %v187, %v186
  %v213 = vpack.c.b16 %v188, %v188
  %v255 = vunpack.c.l.b16 %v18
  %v256 = vunpack.c.l.b16 %v19
  %v257 = vunpack.c.l.b16 %v20
  %v258 = vunpack.c.l.b16 %v21
  %v259 = vunpack.c.l.b16 %v22
  %v260 = vunpack.c.l.b16 %v23
  %v261 = vunpack.c.l.b16 %v24
  %v262 = vunpack.c.l.b16 %v25
  %v263 = vunpack.c.l.b16 %v26
  %v264 = vunpack.c.l.b16 %v27
  %v265 = vunpack.c.l.b16 %v28
  %v266 = vunpack.c.l.b16 %v29
  %v267 = vunpack.c.l.b16 %v30
  %v268 = vunpack.c.l.b16 %v31
  %v269 = vunpack.c.l.b16 %v32
  %v270 = vunpack.c.l.b16 %v33
  %v271 = vpack.c.b16 %v256, %v255
  %v272 = vpack.c.b16 %v258, %v257
  %v273 = vpack.c.b16 %v260, %v259
  %v274 = vpack.c.b16 %v262, %v261
  %v275 = vpack.c.b16 %v264, %v263
  %v276 = vpack.c.b16 %v266, %v265
  %v277 = vpack.c.b16 %v268, %v267
  %v278 = vpack.c.b16 %v270, %v269
  %287 = vmatprep.subr.bf16.mxu0 0
  %288 = vmatpush1.bf16.msra.mxu0 %v271
  %289 = vmatprep.subr.bf16.mxu0 0
  %290 = vmatpush1.bf16.msra.mxu0 %v272
  %291 = vmatprep.subr.bf16.mxu0 0
  %292 = vmatpush1.bf16.msra.mxu0 %v273
  %293 = vmatprep.subr.bf16.mxu0 0
  %294 = vmatpush1.bf16.msra.mxu0 %v274
  %295 = vmatprep.subr.bf16.mxu0 0
  %296 = vmatpush1.bf16.msra.mxu0 %v275
  %297 = vmatprep.subr.bf16.mxu0 0
  %298 = vmatpush1.bf16.msra.mxu0 %v276
  %299 = vmatprep.subr.bf16.mxu0 0
  %300 = vmatpush1.bf16.msra.mxu0 %v277
  %301 = vmatprep.subr.bf16.mxu0 0
  %302 = vmatpush1.bf16.msra.mxu0 %v278
  %303 = vmatprep.subr.bf16.mxu0 0
  %304 = vmatpush1.bf16.msra.mxu0 0
  %305 = vmatprep.subr.bf16.mxu0 0
  %306 = vmatpush1.bf16.msra.mxu0 0
  %307 = vmatprep.subr.bf16.mxu0 0
  %308 = vmatpush1.bf16.msra.mxu0 0
  %309 = vmatprep.subr.bf16.mxu0 0
  %310 = vmatpush1.bf16.msra.mxu0 0
  %311 = vmatprep.subr.bf16.mxu0 0
  %312 = vmatpush1.bf16.msra.mxu0 0
  %313 = vmatprep.subr.bf16.mxu0 0
  %314 = vmatpush1.bf16.msra.mxu0 0
  %315 = vmatprep.subr.bf16.mxu0 0
  %316 = vmatpush1.bf16.msra.mxu0 0
  %317 = vmatprep.subr.bf16.mxu0 0
  %318 = vmatpush1.bf16.msra.mxu0 0
  %319 = vmatprep.mubr.bf16.mxu0 0
  %320 = vmatmul.mubr.bf16.gmra.mrb[0].mxu0 %v189
  %v321 = vpop.f32.mrb[0].mxu0
  %v322 = vadd.f32 %v89, %v321
  %v323 = vpop.f32.mrb[0].mxu0
  %v324 = vpop.f32.mrb[0].mxu0
  %v325 = vadd.f32 %v89, %v324
  %v326 = vpop.f32.mrb[0].mxu0
  %327 = vmatprep.mubr.bf16.mxu0 0
  %328 = vmatmul.mubr.bf16.gmra.mrb[0].mxu0 %v190
  %v329 = vpop.f32.mrb[0].mxu0
  %v330 = vadd.f32 %v89, %v329
  %v331 = vpop.f32.mrb[0].mxu0
  %v332 = vpop.f32.mrb[0].mxu0
  %v333 = vadd.f32 %v89, %v332
  %v334 = vpop.f32.mrb[0].mxu0
  %335 = vmatprep.mubr.bf16.mxu0 0
  %336 = vmatmul.mubr.bf16.gmra.mrb[0].mxu0 %v191
  %v337 = vpop.f32.mrb[0].mxu0
  %v338 = vadd.f32 %v89, %v337
  %v339 = vpop.f32.mrb[0].mxu0
  %v340 = vpop.f32.mrb[0].mxu0
  %v341 = vadd.f32 %v89, %v340
  %v342 = vpop.f32.mrb[0].mxu0
  %343 = vmatprep.mubr.bf16.mxu0 0
  %344 = vmatmul.mubr.bf16.gmra.mrb[0].mxu0 %v192
  %v345 = vpop.f32.mrb[0].mxu0
  %v346 = vadd.f32 %v89, %v345
  %v347 = vpop.f32.mrb[0].mxu0
  %v348 = vpop.f32.mrb[0].mxu0
  %v349 = vadd.f32 %v89, %v348
  %v350 = vpop.f32.mrb[0].mxu0
  %351 = vmatprep.mubr.bf16.mxu0 0
  %352 = vmatmul.mubr.bf16.gmra.mrb[0].mxu0 %v193
  %v353 = vpop.f32.mrb[0].mxu0
  %v354 = vadd.f32 %v89, %v353
  %v355 = vpop.f32.mrb[0].mxu0
  %v356 = vpop.f32.mrb[0].mxu0
  %v357 = vadd.f32 %v89, %v356
  %v358 = vpop.f32.mrb[0].mxu0
  %359 = vmatprep.mubr.bf16.mxu0 0
  %360 = vmatmul.mubr.bf16.gmra.mrb[0].mxu0 %v194
  %v361 = vpop.f32.mrb[0].mxu0
  %v362 = vadd.f32 %v89, %v361
  %v363 = vpop.f32.mrb[0].mxu0
  %v364 = vpop.f32.mrb[0].mxu0
  %v365 = vadd.f32 %v89, %v364
  %v366 = vpop.f32.mrb[0].mxu0
  %367 = vmatprep.mubr.bf16.mxu0 0
  %368 = vmatmul.mubr.bf16.gmra.mrb[0].mxu0 %v195
  %v369 = vpop.f32.mrb[0].mxu0
  %v370 = vadd.f32 %v89, %v369
  %v371 = vpop.f32.mrb[0].mxu0
  %v372 = vpop.f32.mrb[0].mxu0
  %v373 = vadd.f32 %v89, %v372
  %v374 = vpop.f32.mrb[0].mxu0
  %375 = vmatprep.mubr.bf16.mxu0 0
  %376 = vmatmul.mubr.bf16.gmra.mrb[0].mxu0 %v196
  %v377 = vpop.f32.mrb[0].mxu0
  %v378 = vadd.f32 %v89, %v377
  %v379 = vpop.f32.mrb[0].mxu0
  %v380 = vpop.f32.mrb[0].mxu0
  %v381 = vadd.f32 %v89, %v380
  %v382 = vpop.f32.mrb[0].mxu0
  %383 = vmatprep.mubr.bf16.mxu0 0
  %384 = vmatmul.mubr.bf16.gmra.mrb[0].mxu0 %v197
  %v385 = vpop.f32.mrb[0].mxu0
  %v386 = vadd.f32 %v89, %v385
  %v387 = vpop.f32.mrb[0].mxu0
  %v388 = vpop.f32.mrb[0].mxu0
  %v389 = vadd.f32 %v89, %v388
  %v390 = vpop.f32.mrb[0].mxu0
  %391 = vmatprep.mubr.bf16.mxu0 0
  %392 = vmatmul.mubr.bf16.gmra.mrb[0].mxu0 %v198
  %v393 = vpop.f32.mrb[0].mxu0
  %v394 = vadd.f32 %v89, %v393
  %v395 = vpop.f32.mrb[0].mxu0
  %v396 = vpop.f32.mrb[0].mxu0
  %v397 = vadd.f32 %v89, %v396
  %v398 = vpop.f32.mrb[0].mxu0
  %399 = vmatprep.mubr.bf16.mxu0 0
  %400 = vmatmul.mubr.bf16.gmra.mrb[0].mxu0 %v199
  %v401 = vpop.f32.mrb[0].mxu0
  %v402 = vadd.f32 %v89, %v401
  %v403 = vpop.f32.mrb[0].mxu0
  %v404 = vpop.f32.mrb[0].mxu0
  %v405 = vadd.f32 %v89, %v404
  %v406 = vpop.f32.mrb[0].mxu0
  %407 = vmatprep.mubr.bf16.mxu0 0
  %408 = vmatmul.mubr.bf16.gmra.mrb[0].mxu0 %v200
  %v409 = vpop.f32.mrb[0].mxu0
  %v410 = vadd.f32 %v89, %v409
  %v411 = vpop.f32.mrb[0].mxu0
  %v412 = vpop.f32.mrb[0].mxu0
  %v413 = vadd.f32 %v89, %v412
  %v414 = vpop.f32.mrb[0].mxu0
  %415 = vmatprep.mubr.bf16.mxu0 0
  %416 = vmatmul.mubr.bf16.gmra.mrb[0].mxu0 %v201
  %v417 = vpop.f32.mrb[0].mxu0
  %v418 = vadd.f32 %v89, %v417
  %v419 = vpop.f32.mrb[0].mxu0
  %v420 = vpop.f32.mrb[0].mxu0
  %v421 = vadd.f32 %v89, %v420
  %v422 = vpop.f32.mrb[0].mxu0
  %423 = vmatprep.mubr.bf16.mxu0 0
  %424 = vmatmul.mubr.bf16.gmra.mrb[0].mxu0 %v202
  %v425 = vpop.f32.mrb[0].mxu0
  %v426 = vadd.f32 %v89, %v425
  %v427 = vpop.f32.mrb[0].mxu0
  %v428 = vpop.f32.mrb[0].mxu0
  %v429 = vadd.f32 %v89, %v428
  %v430 = vpop.f32.mrb[0].mxu0
  %431 = vmatprep.mubr.bf16.mxu0 0
  %432 = vmatmul.mubr.bf16.gmra.mrb[0].mxu0 %v203
  %v433 = vpop.f32.mrb[0].mxu0
  %v434 = vadd.f32 %v89, %v433
  %v435 = vpop.f32.mrb[0].mxu0
  %v436 = vpop.f32.mrb[0].mxu0
  %v437 = vadd.f32 %v89, %v436
  %v438 = vpop.f32.mrb[0].mxu0
  %439 = vmatprep.mubr.bf16.mxu0 0
  %440 = vmatmul.mubr.bf16.gmra.mrb[0].mxu0 %v204
  %v441 = vpop.f32.mrb[0].mxu0
  %v442 = vadd.f32 %v89, %v441
  %v443 = vpop.f32.mrb[0].mxu0
  %v444 = vpop.f32.mrb[0].mxu0
  %v445 = vadd.f32 %v89, %v444
  %v446 = vpop.f32.mrb[0].mxu0
  %447 = vmatprep.mubr.bf16.mxu0 0
  %448 = vmatmul.mubr.bf16.gmra.mrb[0].mxu0 %v205
  %v449 = vpop.f32.mrb[0].mxu0
  %v450 = vadd.f32 %v89, %v449
  %v451 = vpop.f32.mrb[0].mxu0
  %v452 = vpop.f32.mrb[0].mxu0
  %v453 = vadd.f32 %v89, %v452
  %v454 = vpop.f32.mrb[0].mxu0
  %455 = vmatprep.mubr.bf16.mxu0 0
  %456 = vmatmul.mubr.bf16.gmra.mrb[0].mxu0 %v206
  %v457 = vpop.f32.mrb[0].mxu0
  %v458 = vadd.f32 %v89, %v457
  %v459 = vpop.f32.mrb[0].mxu0
  %v460 = vpop.f32.mrb[0].mxu0
  %v461 = vadd.f32 %v89, %v460
  %v462 = vpop.f32.mrb[0].mxu0
  %463 = vmatprep.mubr.bf16.mxu0 0
  %464 = vmatmul.mubr.bf16.gmra.mrb[0].mxu0 %v207
  %v465 = vpop.f32.mrb[0].mxu0
  %v466 = vadd.f32 %v89, %v465
  %v467 = vpop.f32.mrb[0].mxu0
  %v468 = vpop.f32.mrb[0].mxu0
  %v469 = vadd.f32 %v89, %v468
  %v470 = vpop.f32.mrb[0].mxu0
  %471 = vmatprep.mubr.bf16.mxu0 0
  %472 = vmatmul.mubr.bf16.gmra.mrb[0].mxu0 %v208
  %v473 = vpop.f32.mrb[0].mxu0
  %v474 = vadd.f32 %v89, %v473
  %v475 = vpop.f32.mrb[0].mxu0
  %v476 = vpop.f32.mrb[0].mxu0
  %v477 = vadd.f32 %v89, %v476
  %v478 = vpop.f32.mrb[0].mxu0
  %479 = vmatprep.mubr.bf16.mxu0 0
  %480 = vmatmul.mubr.bf16.gmra.mrb[0].mxu0 %v209
  %v481 = vpop.f32.mrb[0].mxu0
  %v482 = vadd.f32 %v89, %v481
  %v483 = vpop.f32.mrb[0].mxu0
  %v484 = vpop.f32.mrb[0].mxu0
  %v485 = vadd.f32 %v89, %v484
  %v486 = vpop.f32.mrb[0].mxu0
  %487 = vmatprep.mubr.bf16.mxu0 0
  %488 = vmatmul.mubr.bf16.gmra.mrb[0].mxu0 %v210
  %v489 = vpop.f32.mrb[0].mxu0
  %v490 = vadd.f32 %v89, %v489
  %v491 = vpop.f32.mrb[0].mxu0
  %v492 = vpop.f32.mrb[0].mxu0
  %v493 = vadd.f32 %v89, %v492
  %v494 = vpop.f32.mrb[0].mxu0
  %495 = vmatprep.mubr.bf16.mxu0 0
  %496 = vmatmul.mubr.bf16.gmra.mrb[0].mxu0 %v211
  %v497 = vpop.f32.mrb[0].mxu0
  %v498 = vadd.f32 %v89, %v497
  %v499 = vpop.f32.mrb[0].mxu0
  %v500 = vpop.f32.mrb[0].mxu0
  %v501 = vadd.f32 %v89, %v500
  %v502 = vpop.f32.mrb[0].mxu0
  %503 = vmatprep.mubr.bf16.mxu0 0
  %504 = vmatmul.mubr.bf16.gmra.mrb[0].mxu0 %v212
  %v505 = vpop.f32.mrb[0].mxu0
  %v506 = vadd.f32 %v89, %v505
  %v507 = vpop.f32.mrb[0].mxu0
  %v508 = vpop.f32.mrb[0].mxu0
  %v509 = vadd.f32 %v89, %v508
  %v510 = vpop.f32.mrb[0].mxu0
  %511 = vmatprep.mubr.bf16.mxu0 0
  %512 = vmatmul.mubr.bf16.gmra.mrb[0].mxu0 %v213
  %v513 = vpop.f32.mrb[0].mxu0
  %v514 = vadd.f32 %v89, %v513
  %v515 = vpop.f32.mrb[0].mxu0
  %v516 = vpop.f32.mrb[0].mxu0
  %v517 = vpop.f32.mrb[0].mxu0
  %518 = vdwg.mxu0
  %v519 = vmax.f32 %v322, 0.0
  %v520 = vmax.f32 %v325, 0.0
  %v521 = vmax.f32 %v330, 0.0
  %v522 = vmax.f32 %v333, 0.0
  %v523 = vmax.f32 %v338, 0.0
  %v524 = vmax.f32 %v341, 0.0
  %v525 = vmax.f32 %v346, 0.0
  %v526 = vmax.f32 %v349, 0.0
  %v527 = vmax.f32 %v354, 0.0
  %v528 = vmax.f32 %v357, 0.0
  %v529 = vmax.f32 %v362, 0.0
  %v530 = vmax.f32 %v365, 0.0
  %v531 = vmax.f32 %v370, 0.0
  %v532 = vmax.f32 %v373, 0.0
  %v533 = vmax.f32 %v378, 0.0
  %v534 = vmax.f32 %v381, 0.0
  %v535 = vmax.f32 %v386, 0.0
  %v536 = vmax.f32 %v389, 0.0
  %v537 = vmax.f32 %v394, 0.0
  %v538 = vmax.f32 %v397, 0.0
  %v539 = vmax.f32 %v402, 0.0
  %v540 = vmax.f32 %v405, 0.0
  %v541 = vmax.f32 %v410, 0.0
  %v542 = vmax.f32 %v413, 0.0
  %v543 = vmax.f32 %v418, 0.0
  %v544 = vmax.f32 %v421, 0.0
  %v545 = vmax.f32 %v426, 0.0
  %v546 = vmax.f32 %v429, 0.0
  %v547 = vmax.f32 %v434, 0.0
  %v548 = vmax.f32 %v437, 0.0
  %v549 = vmax.f32 %v442, 0.0
  %v550 = vmax.f32 %v445, 0.0
  %v551 = vmax.f32 %v450, 0.0
  %v552 = vmax.f32 %v453, 0.0
  %v553 = vmax.f32 %v458, 0.0
  %v554 = vmax.f32 %v461, 0.0
  %v555 = vmax.f32 %v466, 0.0
  %v556 = vmax.f32 %v469, 0.0
  %v557 = vmax.f32 %v474, 0.0
  %v558 = vmax.f32 %v477, 0.0
  %v559 = vmax.f32 %v482, 0.0
  %v560 = vmax.f32 %v485, 0.0
  %v561 = vmax.f32 %v490, 0.0
  %v562 = vmax.f32 %v493, 0.0
  %v563 = vmax.f32 %v498, 0.0
  %v564 = vmax.f32 %v501, 0.0
  %v565 = vmax.f32 %v506, 0.0
  %v566 = vmax.f32 %v509, 0.0
  %v567 = vmax.f32 %v514, 0.0
  %v569 = vlaneseq
  %v570 = vshrl.u32 %v569, 7
  %v571 = vsub.s32 0, %v570
  %v572 = vrot.slane %v35, %v571
  %v574 = vmul.f32 %v519, %v572
  %v575 = vmul.f32 %v520, %v572
  %v576 = vmul.f32 %v521, %v572
  %v577 = vmul.f32 %v522, %v572
  %v578 = vmul.f32 %v523, %v572
  %v579 = vmul.f32 %v524, %v572
  %v580 = vmul.f32 %v525, %v572
  %v581 = vmul.f32 %v526, %v572
  %v582 = vmul.f32 %v527, %v572
  %v583 = vmul.f32 %v528, %v572
  %v584 = vmul.f32 %v529, %v572
  %v585 = vmul.f32 %v530, %v572
  %v586 = vmul.f32 %v531, %v572
  %v587 = vmul.f32 %v532, %v572
  %v588 = vmul.f32 %v533, %v572
  %v589 = vmul.f32 %v534, %v572
  %v590 = vmul.f32 %v535, %v572
  %v591 = vmul.f32 %v536, %v572
  %v592 = vmul.f32 %v537, %v572
  %v593 = vmul.f32 %v538, %v572
  %v594 = vmul.f32 %v539, %v572
  %v595 = vmul.f32 %v540, %v572
  %v596 = vmul.f32 %v541, %v572
  %v597 = vmul.f32 %v542, %v572
  %v598 = vmul.f32 %v543, %v572
  %v599 = vmul.f32 %v544, %v572
  %v600 = vmul.f32 %v545, %v572
  %v601 = vmul.f32 %v546, %v572
  %v602 = vmul.f32 %v547, %v572
  %v603 = vmul.f32 %v548, %v572
  %v604 = vmul.f32 %v549, %v572
  %v605 = vmul.f32 %v550, %v572
  %v606 = vmul.f32 %v551, %v572
  %v607 = vmul.f32 %v552, %v572
  %v608 = vmul.f32 %v553, %v572
  %v609 = vmul.f32 %v554, %v572
  %v610 = vmul.f32 %v555, %v572
  %v611 = vmul.f32 %v556, %v572
  %v612 = vmul.f32 %v557, %v572
  %v613 = vmul.f32 %v558, %v572
  %v614 = vmul.f32 %v559, %v572
  %v615 = vmul.f32 %v560, %v572
  %v616 = vmul.f32 %v561, %v572
  %v617 = vmul.f32 %v562, %v572
  %v618 = vmul.f32 %v563, %v572
  %v619 = vmul.f32 %v564, %v572
  %v620 = vmul.f32 %v565, %v572
  %v621 = vmul.f32 %v566, %v572
  %v622 = vmul.f32 %v567, %v572
  %v623 = vld [vmem:[%s0 + $0xc4] sm:$0xf]
  %v624 = vld [vmem:[%s0 + $0xc8] sm:$0xf]
  %v625 = vld [vmem:[%s0 + $0xcc] sm:$0xf]
  %v626 = vld [vmem:[%s0 + $0xd0] sm:$0xf]
  %v627 = vld [vmem:[%s0 + $0xd4] sm:$0xf]
  %v628 = vld [vmem:[%s0 + $0xd8] sm:$0xf]
  %v629 = vld [vmem:[%s0 + $0xdc] sm:$0xf]
  %v630 = vld [vmem:[%s0 + $0xe0] sm:$0xf]
  %v631 = vld [vmem:[%s0 + $0xe4] sm:$0xf]
  %v632 = vld [vmem:[%s0 + $0xe8] sm:$0xf]
  %v633 = vld [vmem:[%s0 + $0xec] sm:$0xf]
  %v634 = vld [vmem:[%s0 + $0xf0] sm:$0xf]
  %v635 = vld [vmem:[%s0 + $0xf4] sm:$0xf]
  %v636 = vld [vmem:[%s0 + $0xf8] sm:$0xf]
  %v637 = vld [vmem:[%s0 + $0xfc] sm:$0xf]
  %v638 = vld [vmem:[%s0 + $0x100] sm:$0xf]
  %v639 = vld [vmem:[%s0 + $0x104] sm:$0xf]
  %v640 = vld [vmem:[%s0 + $0x108] sm:$0xf]
  %v641 = vld [vmem:[%s0 + $0x10c] sm:$0xf]
  %v642 = vld [vmem:[%s0 + $0x110] sm:$0xf]
  %v643 = vld [vmem:[%s0 + $0x114] sm:$0xf]
  %v644 = vld [vmem:[%s0 + $0x118] sm:$0xf]
  %v645 = vld [vmem:[%s0 + $0x11c] sm:$0xf]
  %v646 = vld [vmem:[%s0 + $0x120] sm:$0xf]
  %v647 = vld [vmem:[%s0 + $0x124] sm:$0xf]
  %v648 = vld [vmem:[%s0 + $0x128] sm:$0xf]
  %v649 = vld [vmem:[%s0 + $0x12c] sm:$0xf]
  %v650 = vld [vmem:[%s0 + $0x130] sm:$0xf]
  %v651 = vld [vmem:[%s0 + $0x134] sm:$0xf]
  %v652 = vld [vmem:[%s0 + $0x138] sm:$0xf]
  %v653 = vld [vmem:[%s0 + $0x13c] sm:$0xf]
  %v654 = vld [vmem:[%s0 + $0x140] sm:$0xf]
  %v655 = vld [vmem:[%s0 + $0x144] sm:$0xf]
  %v656 = vld [vmem:[%s0 + $0x148] sm:$0xf]
  %v657 = vld [vmem:[%s0 + $0x14c] sm:$0xf]
  %v658 = vld [vmem:[%s0 + $0x150] sm:$0xf]
  %v659 = vld [vmem:[%s0 + $0x154] sm:$0xf]
  %v660 = vld [vmem:[%s0 + $0x158] sm:$0xf]
  %v661 = vld [vmem:[%s0 + $0x15c] sm:$0xf]
  %v662 = vld [vmem:[%s0 + $0x160] sm:$0xf]
  %v663 = vld [vmem:[%s0 + $0x164] sm:$0xf]
  %v664 = vld [vmem:[%s0 + $0x168] sm:$0xf]
  %v665 = vld [vmem:[%s0 + $0x16c] sm:$0xf]
  %v666 = vld [vmem:[%s0 + $0x170] sm:$0xf]
  %v667 = vld [vmem:[%s0 + $0x174] sm:$0xf]
  %v668 = vld [vmem:[%s0 + $0x178] sm:$0xf]
  %v669 = vld [vmem:[%s0 + $0x17c] sm:$0xf]
  %v670 = vld [vmem:[%s0 + $0x180] sm:$0xf]
  %v671 = vld [vmem:[%s0 + $0x184] sm:$0xf]
  %v721 = vunpack.c.l.b16 %v623
  %v722 = vunpack.c.l.b16 %v624
  %v723 = vunpack.c.l.b16 %v625
  %v724 = vunpack.c.l.b16 %v626
  %v725 = vunpack.c.l.b16 %v627
  %v726 = vunpack.c.l.b16 %v628
  %v727 = vunpack.c.l.b16 %v629
  %v728 = vunpack.c.l.b16 %v630
  %v729 = vunpack.c.l.b16 %v631
  %v730 = vunpack.c.l.b16 %v632
  %v731 = vunpack.c.l.b16 %v633
  %v732 = vunpack.c.l.b16 %v634
  %v733 = vunpack.c.l.b16 %v635
  %v734 = vunpack.c.l.b16 %v636
  %v735 = vunpack.c.l.b16 %v637
  %v736 = vunpack.c.l.b16 %v638
  %v737 = vunpack.c.l.b16 %v639
  %v738 = vunpack.c.l.b16 %v640
  %v739 = vunpack.c.l.b16 %v641
  %v740 = vunpack.c.l.b16 %v642
  %v741 = vunpack.c.l.b16 %v643
  %v742 = vunpack.c.l.b16 %v644
  %v743 = vunpack.c.l.b16 %v645
  %v744 = vunpack.c.l.b16 %v646
  %v745 = vunpack.c.l.b16 %v647
  %v746 = vunpack.c.l.b16 %v648
  %v747 = vunpack.c.l.b16 %v649
  %v748 = vunpack.c.l.b16 %v650
  %v749 = vunpack.c.l.b16 %v651
  %v750 = vunpack.c.l.b16 %v652
  %v751 = vunpack.c.l.b16 %v653
  %v752 = vunpack.c.l.b16 %v654
  %v753 = vunpack.c.l.b16 %v655
  %v754 = vunpack.c.l.b16 %v656
  %v755 = vunpack.c.l.b16 %v657
  %v756 = vunpack.c.l.b16 %v658
  %v757 = vunpack.c.l.b16 %v659
  %v758 = vunpack.c.l.b16 %v660
  %v759 = vunpack.c.l.b16 %v661
  %v760 = vunpack.c.l.b16 %v662
  %v761 = vunpack.c.l.b16 %v663
  %v762 = vunpack.c.l.b16 %v664
  %v763 = vunpack.c.l.b16 %v665
  %v764 = vunpack.c.l.b16 %v666
  %v765 = vunpack.c.l.b16 %v667
  %v766 = vunpack.c.l.b16 %v668
  %v767 = vunpack.c.l.b16 %v669
  %v768 = vunpack.c.l.b16 %v670
  %v769 = vunpack.c.l.b16 %v671
  %v770 = vpack.c.b16 %v722, %v721
  %v771 = vpack.c.b16 %v724, %v723
  %v772 = vpack.c.b16 %v726, %v725
  %v773 = vpack.c.b16 %v728, %v727
  %v774 = vpack.c.b16 %v730, %v729
  %v775 = vpack.c.b16 %v732, %v731
  %v776 = vpack.c.b16 %v734, %v733
  %v777 = vpack.c.b16 %v736, %v735
  %v778 = vpack.c.b16 %v738, %v737
  %v779 = vpack.c.b16 %v740, %v739
  %v780 = vpack.c.b16 %v742, %v741
  %v781 = vpack.c.b16 %v744, %v743
  %v782 = vpack.c.b16 %v746, %v745
  %v783 = vpack.c.b16 %v748, %v747
  %v784 = vpack.c.b16 %v750, %v749
  %v785 = vpack.c.b16 %v752, %v751
  %v786 = vpack.c.b16 %v754, %v753
  %v787 = vpack.c.b16 %v756, %v755
  %v788 = vpack.c.b16 %v758, %v757
  %v789 = vpack.c.b16 %v760, %v759
  %v790 = vpack.c.b16 %v762, %v761
  %v791 = vpack.c.b16 %v764, %v763
  %v792 = vpack.c.b16 %v766, %v765
  %v793 = vpack.c.b16 %v768, %v767
  %v794 = vpack.c.b16 %v769, %v769
  %820 = vmatprep.subr.bf16.mxu0 0
  %821 = vmatpush1.bf16.msra.mxu0 %v271
  %822 = vmatprep.subr.bf16.mxu0 0
  %823 = vmatpush1.bf16.msra.mxu0 %v272
  %824 = vmatprep.subr.bf16.mxu0 0
  %825 = vmatpush1.bf16.msra.mxu0 %v273
  %826 = vmatprep.subr.bf16.mxu0 0
  %827 = vmatpush1.bf16.msra.mxu0 %v274
  %828 = vmatprep.subr.bf16.mxu0 0
  %829 = vmatpush1.bf16.msra.mxu0 %v275
  %830 = vmatprep.subr.bf16.mxu0 0
  %831 = vmatpush1.bf16.msra.mxu0 %v276
  %832 = vmatprep.subr.bf16.mxu0 0
  %833 = vmatpush1.bf16.msra.mxu0 %v277
  %834 = vmatprep.subr.bf16.mxu0 0
  %835 = vmatpush1.bf16.msra.mxu0 %v278
  %836 = vmatprep.subr.bf16.mxu0 0
  %837 = vmatpush1.bf16.msra.mxu0 0
  %838 = vmatprep.subr.bf16.mxu0 0
  %839 = vmatpush1.bf16.msra.mxu0 0
  %840 = vmatprep.subr.bf16.mxu0 0
  %841 = vmatpush1.bf16.msra.mxu0 0
  %842 = vmatprep.subr.bf16.mxu0 0
  %843 = vmatpush1.bf16.msra.mxu0 0
  %844 = vmatprep.subr.bf16.mxu0 0
  %845 = vmatpush1.bf16.msra.mxu0 0
  %846 = vmatprep.subr.bf16.mxu0 0
  %847 = vmatpush1.bf16.msra.mxu0 0
  %848 = vmatprep.subr.bf16.mxu0 0
  %849 = vmatpush1.bf16.msra.mxu0 0
  %850 = vmatprep.subr.bf16.mxu0 0
  %851 = vmatpush1.bf16.msra.mxu0 0
  %852 = vmatprep.mubr.bf16.mxu0 0
  %853 = vmatmul.mubr.bf16.gmra.mrb[0].mxu0 %v770
  %v854 = vpop.f32.mrb[0].mxu0
  %v855 = vadd.f32 %v89, %v854
  %v856 = vpop.f32.mrb[0].mxu0
  %v857 = vpop.f32.mrb[0].mxu0
  %v858 = vadd.f32 %v89, %v857
  %v859 = vpop.f32.mrb[0].mxu0
  %860 = vmatprep.mubr.bf16.mxu0 0
  %861 = vmatmul.mubr.bf16.gmra.mrb[0].mxu0 %v771
  %v862 = vpop.f32.mrb[0].mxu0
  %v863 = vadd.f32 %v89, %v862
  %v864 = vpop.f32.mrb[0].mxu0
  %v865 = vpop.f32.mrb[0].mxu0
  %v866 = vadd.f32 %v89, %v865
  %v867 = vpop.f32.mrb[0].mxu0
  %868 = vmatprep.mubr.bf16.mxu0 0
  %869 = vmatmul.mubr.bf16.gmra.mrb[0].mxu0 %v772
  %v870 = vpop.f32.mrb[0].mxu0
  %v871 = vadd.f32 %v89, %v870
  %v872 = vpop.f32.mrb[0].mxu0
  %v873 = vpop.f32.mrb[0].mxu0
  %v874 = vadd.f32 %v89, %v873
  %v875 = vpop.f32.mrb[0].mxu0
  %876 = vmatprep.mubr.bf16.mxu0 0
  %877 = vmatmul.mubr.bf16.gmra.mrb[0].mxu0 %v773
  %v878 = vpop.f32.mrb[0].mxu0
  %v879 = vadd.f32 %v89, %v878
  %v880 = vpop.f32.mrb[0].mxu0
  %v881 = vpop.f32.mrb[0].mxu0
  %v882 = vadd.f32 %v89, %v881
  %v883 = vpop.f32.mrb[0].mxu0
  %884 = vmatprep.mubr.bf16.mxu0 0
  %885 = vmatmul.mubr.bf16.gmra.mrb[0].mxu0 %v774
  %v886 = vpop.f32.mrb[0].mxu0
  %v887 = vadd.f32 %v89, %v886
  %v888 = vpop.f32.mrb[0].mxu0
  %v889 = vpop.f32.mrb[0].mxu0
  %v890 = vadd.f32 %v89, %v889
  %v891 = vpop.f32.mrb[0].mxu0
  %892 = vmatprep.mubr.bf16.mxu0 0
  %893 = vmatmul.mubr.bf16.gmra.mrb[0].mxu0 %v775
  %v894 = vpop.f32.mrb[0].mxu0
  %v895 = vadd.f32 %v89, %v894
  %v896 = vpop.f32.mrb[0].mxu0
  %v897 = vpop.f32.mrb[0].mxu0
  %v898 = vadd.f32 %v89, %v897
  %v899 = vpop.f32.mrb[0].mxu0
  %900 = vmatprep.mubr.bf16.mxu0 0
  %901 = vmatmul.mubr.bf16.gmra.mrb[0].mxu0 %v776
  %v902 = vpop.f32.mrb[0].mxu0
  %v903 = vadd.f32 %v89, %v902
  %v904 = vpop.f32.mrb[0].mxu0
  %v905 = vpop.f32.mrb[0].mxu0
  %v906 = vadd.f32 %v89, %v905
  %v907 = vpop.f32.mrb[0].mxu0
  %908 = vmatprep.mubr.bf16.mxu0 0
  %909 = vmatmul.mubr.bf16.gmra.mrb[0].mxu0 %v777
  %v910 = vpop.f32.mrb[0].mxu0
  %v911 = vadd.f32 %v89, %v910
  %v912 = vpop.f32.mrb[0].mxu0
  %v913 = vpop.f32.mrb[0].mxu0
  %v914 = vadd.f32 %v89, %v913
  %v915 = vpop.f32.mrb[0].mxu0
  %916 = vmatprep.mubr.bf16.mxu0 0
  %917 = vmatmul.mubr.bf16.gmra.mrb[0].mxu0 %v778
  %v918 = vpop.f32.mrb[0].mxu0
  %v919 = vadd.f32 %v89, %v918
  %v920 = vpop.f32.mrb[0].mxu0
  %v921 = vpop.f32.mrb[0].mxu0
  %v922 = vadd.f32 %v89, %v921
  %v923 = vpop.f32.mrb[0].mxu0
  %924 = vmatprep.mubr.bf16.mxu0 0
  %925 = vmatmul.mubr.bf16.gmra.mrb[0].mxu0 %v779
  %v926 = vpop.f32.mrb[0].mxu0
  %v927 = vadd.f32 %v89, %v926
  %v928 = vpop.f32.mrb[0].mxu0
  %v929 = vpop.f32.mrb[0].mxu0
  %v930 = vadd.f32 %v89, %v929
  %v931 = vpop.f32.mrb[0].mxu0
  %932 = vmatprep.mubr.bf16.mxu0 0
  %933 = vmatmul.mubr.bf16.gmra.mrb[0].mxu0 %v780
  %v934 = vpop.f32.mrb[0].mxu0
  %v935 = vadd.f32 %v89, %v934
  %v936 = vpop.f32.mrb[0].mxu0
  %v937 = vpop.f32.mrb[0].mxu0
  %v938 = vadd.f32 %v89, %v937
  %v939 = vpop.f32.mrb[0].mxu0
  %940 = vmatprep.mubr.bf16.mxu0 0
  %941 = vmatmul.mubr.bf16.gmra.mrb[0].mxu0 %v781
  %v942 = vpop.f32.mrb[0].mxu0
  %v943 = vadd.f32 %v89, %v942
  %v944 = vpop.f32.mrb[0].mxu0
  %v945 = vpop.f32.mrb[0].mxu0
  %v946 = vadd.f32 %v89, %v945
  %v947 = vpop.f32.mrb[0].mxu0
  %948 = vmatprep.mubr.bf16.mxu0 0
  %949 = vmatmul.mubr.bf16.gmra.mrb[0].mxu0 %v782
  %v950 = vpop.f32.mrb[0].mxu0
  %v951 = vadd.f32 %v89, %v950
  %v952 = vpop.f32.mrb[0].mxu0
  %v953 = vpop.f32.mrb[0].mxu0
  %v954 = vadd.f32 %v89, %v953
  %v955 = vpop.f32.mrb[0].mxu0
  %956 = vmatprep.mubr.bf16.mxu0 0
  %957 = vmatmul.mubr.bf16.gmra.mrb[0].mxu0 %v783
  %v958 = vpop.f32.mrb[0].mxu0
  %v959 = vadd.f32 %v89, %v958
  %v960 = vpop.f32.mrb[0].mxu0
  %v961 = vpop.f32.mrb[0].mxu0
  %v962 = vadd.f32 %v89, %v961
  %v963 = vpop.f32.mrb[0].mxu0
  %964 = vmatprep.mubr.bf16.mxu0 0
  %965 = vmatmul.mubr.bf16.gmra.mrb[0].mxu0 %v784
  %v966 = vpop.f32.mrb[0].mxu0
  %v967 = vadd.f32 %v89, %v966
  %v968 = vpop.f32.mrb[0].mxu0
  %v969 = vpop.f32.mrb[0].mxu0
  %v970 = vadd.f32 %v89, %v969
  %v971 = vpop.f32.mrb[0].mxu0
  %972 = vmatprep.mubr.bf16.mxu0 0
  %973 = vmatmul.mubr.bf16.gmra.mrb[0].mxu0 %v785
  %v974 = vpop.f32.mrb[0].mxu0
  %v975 = vadd.f32 %v89, %v974
  %v976 = vpop.f32.mrb[0].mxu0
  %v977 = vpop.f32.mrb[0].mxu0
  %v978 = vadd.f32 %v89, %v977
  %v979 = vpop.f32.mrb[0].mxu0
  %980 = vmatprep.mubr.bf16.mxu0 0
  %981 = vmatmul.mubr.bf16.gmra.mrb[0].mxu0 %v786
  %v982 = vpop.f32.mrb[0].mxu0
  %v983 = vadd.f32 %v89, %v982
  %v984 = vpop.f32.mrb[0].mxu0
  %v985 = vpop.f32.mrb[0].mxu0
  %v986 = vadd.f32 %v89, %v985
  %v987 = vpop.f32.mrb[0].mxu0
  %988 = vmatprep.mubr.bf16.mxu0 0
  %989 = vmatmul.mubr.bf16.gmra.mrb[0].mxu0 %v787
  %v990 = vpop.f32.mrb[0].mxu0
  %v991 = vadd.f32 %v89, %v990
  %v992 = vpop.f32.mrb[0].mxu0
  %v993 = vpop.f32.mrb[0].mxu0
  %v994 = vadd.f32 %v89, %v993
  %v995 = vpop.f32.mrb[0].mxu0
  %996 = vmatprep.mubr.bf16.mxu0 0
  %997 = vmatmul.mubr.bf16.gmra.mrb[0].mxu0 %v788
  %v998 = vpop.f32.mrb[0].mxu0
  %v999 = vadd.f32 %v89, %v998
  %v1000 = vpop.f32.mrb[0].mxu0
  %v1001 = vpop.f32.mrb[0].mxu0
  %v1002 = vadd.f32 %v89, %v1001
  %v1003 = vpop.f32.mrb[0].mxu0
  %1004 = vmatprep.mubr.bf16.mxu0 0
  %1005 = vmatmul.mubr.bf16.gmra.mrb[0].mxu0 %v789
  %v1006 = vpop.f32.mrb[0].mxu0
  %v1007 = vadd.f32 %v89, %v1006
  %v1008 = vpop.f32.mrb[0].mxu0
  %v1009 = vpop.f32.mrb[0].mxu0
  %v1010 = vadd.f32 %v89, %v1009
  %v1011 = vpop.f32.mrb[0].mxu0
  %1012 = vmatprep.mubr.bf16.mxu0 0
  %1013 = vmatmul.mubr.bf16.gmra.mrb[0].mxu0 %v790
  %v1014 = vpop.f32.mrb[0].mxu0
  %v1015 = vadd.f32 %v89, %v1014
  %v1016 = vpop.f32.mrb[0].mxu0
  %v1017 = vpop.f32.mrb[0].mxu0
  %v1018 = vadd.f32 %v89, %v1017
  %v1019 = vpop.f32.mrb[0].mxu0
  %1020 = vmatprep.mubr.bf16.mxu0 0
  %1021 = vmatmul.mubr.bf16.gmra.mrb[0].mxu0 %v791
  %v1022 = vpop.f32.mrb[0].mxu0
  %v1023 = vadd.f32 %v89, %v1022
  %v1024 = vpop.f32.mrb[0].mxu0
  %v1025 = vpop.f32.mrb[0].mxu0
  %v1026 = vadd.f32 %v89, %v1025
  %v1027 = vpop.f32.mrb[0].mxu0
  %1028 = vmatprep.mubr.bf16.mxu0 0
  %1029 = vmatmul.mubr.bf16.gmra.mrb[0].mxu0 %v792
  %v1030 = vpop.f32.mrb[0].mxu0
  %v1031 = vadd.f32 %v89, %v1030
  %v1032 = vpop.f32.mrb[0].mxu0
  %v1033 = vpop.f32.mrb[0].mxu0
  %v1034 = vadd.f32 %v89, %v1033
  %v1035 = vpop.f32.mrb[0].mxu0
  %1036 = vmatprep.mubr.bf16.mxu0 0
  %1037 = vmatmul.mubr.bf16.gmra.mrb[0].mxu0 %v793
  %v1038 = vpop.f32.mrb[0].mxu0
  %v1039 = vadd.f32 %v89, %v1038
  %v1040 = vpop.f32.mrb[0].mxu0
  %v1041 = vpop.f32.mrb[0].mxu0
  %v1042 = vadd.f32 %v89, %v1041
  %v1043 = vpop.f32.mrb[0].mxu0
  %1044 = vmatprep.mubr.bf16.mxu0 0
  %1045 = vmatmul.mubr.bf16.gmra.mrb[0].mxu0 %v794
  %v1046 = vpop.f32.mrb[0].mxu0
  %v1047 = vadd.f32 %v89, %v1046
  %v1048 = vpop.f32.mrb[0].mxu0
  %v1049 = vpop.f32.mrb[0].mxu0
  %v1050 = vpop.f32.mrb[0].mxu0
  %1051 = vdwg.mxu0
  %v1052 = vmax.f32 %v855, 0.0
  %v1053 = vmax.f32 %v858, 0.0
  %v1054 = vmax.f32 %v863, 0.0
  %v1055 = vmax.f32 %v866, 0.0
  %v1056 = vmax.f32 %v871, 0.0
  %v1057 = vmax.f32 %v874, 0.0
  %v1058 = vmax.f32 %v879, 0.0
  %v1059 = vmax.f32 %v882, 0.0
  %v1060 = vmax.f32 %v887, 0.0
  %v1061 = vmax.f32 %v890, 0.0
  %v1062 = vmax.f32 %v895, 0.0
  %v1063 = vmax.f32 %v898, 0.0
  %v1064 = vmax.f32 %v903, 0.0
  %v1065 = vmax.f32 %v906, 0.0
  %v1066 = vmax.f32 %v911, 0.0
  %v1067 = vmax.f32 %v914, 0.0
  %v1068 = vmax.f32 %v919, 0.0
  %v1069 = vmax.f32 %v922, 0.0
  %v1070 = vmax.f32 %v927, 0.0
  %v1071 = vmax.f32 %v930, 0.0
  %v1072 = vmax.f32 %v935, 0.0
  %v1073 = vmax.f32 %v938, 0.0
  %v1074 = vmax.f32 %v943, 0.0
  %v1075 = vmax.f32 %v946, 0.0
  %v1076 = vmax.f32 %v951, 0.0
  %v1077 = vmax.f32 %v954, 0.0
  %v1078 = vmax.f32 %v959, 0.0
  %v1079 = vmax.f32 %v962, 0.0
  %v1080 = vmax.f32 %v967, 0.0
  %v1081 = vmax.f32 %v970, 0.0
  %v1082 = vmax.f32 %v975, 0.0
  %v1083 = vmax.f32 %v978, 0.0
  %v1084 = vmax.f32 %v983, 0.0
  %v1085 = vmax.f32 %v986, 0.0
  %v1086 = vmax.f32 %v991, 0.0
  %v1087 = vmax.f32 %v994, 0.0
  %v1088 = vmax.f32 %v999, 0.0
  %v1089 = vmax.f32 %v1002, 0.0
  %v1090 = vmax.f32 %v1007, 0.0
  %v1091 = vmax.f32 %v1010, 0.0
  %v1092 = vmax.f32 %v1015, 0.0
  %v1093 = vmax.f32 %v1018, 0.0
  %v1094 = vmax.f32 %v1023, 0.0
  %v1095 = vmax.f32 %v1026, 0.0
  %v1096 = vmax.f32 %v1031, 0.0
  %v1097 = vmax.f32 %v1034, 0.0
  %v1098 = vmax.f32 %v1039, 0.0
  %v1099 = vmax.f32 %v1042, 0.0
  %v1100 = vmax.f32 %v1047, 0.0
  %v1101 = vmul.f32 %v1052, %v572
  %v1102 = vmul.f32 %v1053, %v572
  %v1103 = vmul.f32 %v1054, %v572
  %v1104 = vmul.f32 %v1055, %v572
  %v1105 = vmul.f32 %v1056, %v572
  %v1106 = vmul.f32 %v1057, %v572
  %v1107 = vmul.f32 %v1058, %v572
  %v1108 = vmul.f32 %v1059, %v572
  %v1109 = vmul.f32 %v1060, %v572
  %v1110 = vmul.f32 %v1061, %v572
  %v1111 = vmul.f32 %v1062, %v572
  %v1112 = vmul.f32 %v1063, %v572
  %v1113 = vmul.f32 %v1064, %v572
  %v1114 = vmul.f32 %v1065, %v572
  %v1115 = vmul.f32 %v1066, %v572
  %v1116 = vmul.f32 %v1067, %v572
  %v1117 = vmul.f32 %v1068, %v572
  %v1118 = vmul.f32 %v1069, %v572
  %v1119 = vmul.f32 %v1070, %v572
  %v1120 = vmul.f32 %v1071, %v572
  %v1121 = vmul.f32 %v1072, %v572
  %v1122 = vmul.f32 %v1073, %v572
  %v1123 = vmul.f32 %v1074, %v572
  %v1124 = vmul.f32 %v1075, %v572
  %v1125 = vmul.f32 %v1076, %v572
  %v1126 = vmul.f32 %v1077, %v572
  %v1127 = vmul.f32 %v1078, %v572
  %v1128 = vmul.f32 %v1079, %v572
  %v1129 = vmul.f32 %v1080, %v572
  %v1130 = vmul.f32 %v1081, %v572
  %v1131 = vmul.f32 %v1082, %v572
  %v1132 = vmul.f32 %v1083, %v572
  %v1133 = vmul.f32 %v1084, %v572
  %v1134 = vmul.f32 %v1085, %v572
  %v1135 = vmul.f32 %v1086, %v572
  %v1136 = vmul.f32 %v1087, %v572
  %v1137 = vmul.f32 %v1088, %v572
  %v1138 = vmul.f32 %v1089, %v572
  %v1139 = vmul.f32 %v1090, %v572
  %v1140 = vmul.f32 %v1091, %v572
  %v1141 = vmul.f32 %v1092, %v572
  %v1142 = vmul.f32 %v1093, %v572
  %v1143 = vmul.f32 %v1094, %v572
  %v1144 = vmul.f32 %v1095, %v572
  %v1145 = vmul.f32 %v1096, %v572
  %v1146 = vmul.f32 %v1097, %v572
  %v1147 = vmul.f32 %v1098, %v572
  %v1148 = vmul.f32 %v1099, %v572
  %v1149 = vmul.f32 %v1100, %v572
  %v1150 = vmax.f32 %v574, %v1101
  %v1151 = vmax.f32 %v575, %v1102
  %v1152 = vmax.f32 %v576, %v1103
  %v1153 = vmax.f32 %v577, %v1104
  %v1154 = vmax.f32 %v578, %v1105
  %v1155 = vmax.f32 %v579, %v1106
  %v1156 = vmax.f32 %v580, %v1107
  %v1157 = vmax.f32 %v581, %v1108
  %v1158 = vmax.f32 %v582, %v1109
  %v1159 = vmax.f32 %v583, %v1110
  %v1160 = vmax.f32 %v584, %v1111
  %v1161 = vmax.f32 %v585, %v1112
  %v1162 = vmax.f32 %v586, %v1113
  %v1163 = vmax.f32 %v587, %v1114
  %v1164 = vmax.f32 %v588, %v1115
  %v1165 = vmax.f32 %v589, %v1116
  %v1166 = vmax.f32 %v590, %v1117
  %v1167 = vmax.f32 %v591, %v1118
  %v1168 = vmax.f32 %v592, %v1119
  %v1169 = vmax.f32 %v593, %v1120
  %v1170 = vmax.f32 %v594, %v1121
  %v1171 = vmax.f32 %v595, %v1122
  %v1172 = vmax.f32 %v596, %v1123
  %v1173 = vmax.f32 %v597, %v1124
  %v1174 = vmax.f32 %v598, %v1125
  %v1175 = vmax.f32 %v599, %v1126
  %v1176 = vmax.f32 %v600, %v1127
  %v1177 = vmax.f32 %v601, %v1128
  %v1178 = vmax.f32 %v602, %v1129
  %v1179 = vmax.f32 %v603, %v1130
  %v1180 = vmax.f32 %v604, %v1131
  %v1181 = vmax.f32 %v605, %v1132
  %v1182 = vmax.f32 %v606, %v1133
  %v1183 = vmax.f32 %v607, %v1134
  %v1184 = vmax.f32 %v608, %v1135
  %v1185 = vmax.f32 %v609, %v1136
  %v1186 = vmax.f32 %v610, %v1137
  %v1187 = vmax.f32 %v611, %v1138
  %v1188 = vmax.f32 %v612, %v1139
  %v1189 = vmax.f32 %v613, %v1140
  %v1190 = vmax.f32 %v614, %v1141
  %v1191 = vmax.f32 %v615, %v1142
  %v1192 = vmax.f32 %v616, %v1143
  %v1193 = vmax.f32 %v617, %v1144
  %v1194 = vmax.f32 %v618, %v1145
  %v1195 = vmax.f32 %v619, %v1146
  %v1196 = vmax.f32 %v620, %v1147
  %v1197 = vmax.f32 %v621, %v1148
  %v1198 = vmax.f32 %v622, %v1149
  %v1199 = vld [vmem:[%s0 + $0x188] sm:$0xf]
  %v1200 = vld [vmem:[%s0 + $0x18c] sm:$0xf]
  %v1201 = vld [vmem:[%s0 + $0x190] sm:$0xf]
  %v1202 = vld [vmem:[%s0 + $0x194] sm:$0xf]
  %v1203 = vld [vmem:[%s0 + $0x198] sm:$0xf]
  %v1204 = vld [vmem:[%s0 + $0x19c] sm:$0xf]
  %v1205 = vld [vmem:[%s0 + $0x1a0] sm:$0xf]
  %v1206 = vld [vmem:[%s0 + $0x1a4] sm:$0xf]
  %v1207 = vld [vmem:[%s0 + $0x1a8] sm:$0xf]
  %v1208 = vld [vmem:[%s0 + $0x1ac] sm:$0xf]
  %v1209 = vld [vmem:[%s0 + $0x1b0] sm:$0xf]
  %v1210 = vld [vmem:[%s0 + $0x1b4] sm:$0xf]
  %v1211 = vld [vmem:[%s0 + $0x1b8] sm:$0xf]
  %v1212 = vld [vmem:[%s0 + $0x1bc] sm:$0xf]
  %v1213 = vld [vmem:[%s0 + $0x1c0] sm:$0xf]
  %v1214 = vld [vmem:[%s0 + $0x1c4] sm:$0xf]
  %v1215 = vld [vmem:[%s0 + $0x1c8] sm:$0xf]
  %v1216 = vld [vmem:[%s0 + $0x1cc] sm:$0xf]
  %v1217 = vld [vmem:[%s0 + $0x1d0] sm:$0xf]
  %v1218 = vld [vmem:[%s0 + $0x1d4] sm:$0xf]
  %v1219 = vld [vmem:[%s0 + $0x1d8] sm:$0xf]
  %v1220 = vld [vmem:[%s0 + $0x1dc] sm:$0xf]
  %v1221 = vld [vmem:[%s0 + $0x1e0] sm:$0xf]
  %v1222 = vld [vmem:[%s0 + $0x1e4] sm:$0xf]
  %v1223 = vld [vmem:[%s0 + $0x1e8] sm:$0xf]
  %v1224 = vld [vmem:[%s0 + $0x1ec] sm:$0xf]
  %v1225 = vld [vmem:[%s0 + $0x1f0] sm:$0xf]
  %v1226 = vld [vmem:[%s0 + $0x1f4] sm:$0xf]
  %v1227 = vld [vmem:[%s0 + $0x1f8] sm:$0xf]
  %v1228 = vld [vmem:[%s0 + $0x1fc] sm:$0xf]
  %v1229 = vld [vmem:[%s0 + $0x200] sm:$0xf]
  %v1230 = vld [vmem:[%s0 + $0x204] sm:$0xf]
  %v1231 = vld [vmem:[%s0 + $0x208] sm:$0xf]
  %v1232 = vld [vmem:[%s0 + $0x20c] sm:$0xf]
  %v1233 = vld [vmem:[%s0 + $0x210] sm:$0xf]
  %v1234 = vld [vmem:[%s0 + $0x214] sm:$0xf]
  %v1235 = vld [vmem:[%s0 + $0x218] sm:$0xf]
  %v1236 = vld [vmem:[%s0 + $0x21c] sm:$0xf]
  %v1237 = vld [vmem:[%s0 + $0x220] sm:$0xf]
  %v1238 = vld [vmem:[%s0 + $0x224] sm:$0xf]
  %v1239 = vld [vmem:[%s0 + $0x228] sm:$0xf]
  %v1240 = vld [vmem:[%s0 + $0x22c] sm:$0xf]
  %v1241 = vld [vmem:[%s0 + $0x230] sm:$0xf]
  %v1242 = vld [vmem:[%s0 + $0x234] sm:$0xf]
  %v1243 = vld [vmem:[%s0 + $0x238] sm:$0xf]
  %v1244 = vld [vmem:[%s0 + $0x23c] sm:$0xf]
  %v1245 = vld [vmem:[%s0 + $0x240] sm:$0xf]
  %v1246 = vld [vmem:[%s0 + $0x244] sm:$0xf]
  %v1247 = vld [vmem:[%s0 + $0x248] sm:$0xf]
  %v1297 = vunpack.c.l.b16 %v1199
  %v1298 = vunpack.c.l.b16 %v1200
  %v1299 = vunpack.c.l.b16 %v1201
  %v1300 = vunpack.c.l.b16 %v1202
  %v1301 = vunpack.c.l.b16 %v1203
  %v1302 = vunpack.c.l.b16 %v1204
  %v1303 = vunpack.c.l.b16 %v1205
  %v1304 = vunpack.c.l.b16 %v1206
  %v1305 = vunpack.c.l.b16 %v1207
  %v1306 = vunpack.c.l.b16 %v1208
  %v1307 = vunpack.c.l.b16 %v1209
  %v1308 = vunpack.c.l.b16 %v1210
  %v1309 = vunpack.c.l.b16 %v1211
  %v1310 = vunpack.c.l.b16 %v1212
  %v1311 = vunpack.c.l.b16 %v1213
  %v1312 = vunpack.c.l.b16 %v1214
  %v1313 = vunpack.c.l.b16 %v1215
  %v1314 = vunpack.c.l.b16 %v1216
  %v1315 = vunpack.c.l.b16 %v1217
  %v1316 = vunpack.c.l.b16 %v1218
  %v1317 = vunpack.c.l.b16 %v1219
  %v1318 = vunpack.c.l.b16 %v1220
  %v1319 = vunpack.c.l.b16 %v1221
  %v1320 = vunpack.c.l.b16 %v1222
  %v1321 = vunpack.c.l.b16 %v1223
  %v1322 = vunpack.c.l.b16 %v1224
  %v1323 = vunpack.c.l.b16 %v1225
  %v1324 = vunpack.c.l.b16 %v1226
  %v1325 = vunpack.c.l.b16 %v1227
  %v1326 = vunpack.c.l.b16 %v1228
  %v1327 = vunpack.c.l.b16 %v1229
  %v1328 = vunpack.c.l.b16 %v1230
  %v1329 = vunpack.c.l.b16 %v1231
  %v1330 = vunpack.c.l.b16 %v1232
  %v1331 = vunpack.c.l.b16 %v1233
  %v1332 = vunpack.c.l.b16 %v1234
  %v1333 = vunpack.c.l.b16 %v1235
  %v1334 = vunpack.c.l.b16 %v1236
  %v1335 = vunpack.c.l.b16 %v1237
  %v1336 = vunpack.c.l.b16 %v1238
  %v1337 = vunpack.c.l.b16 %v1239
  %v1338 = vunpack.c.l.b16 %v1240
  %v1339 = vunpack.c.l.b16 %v1241
  %v1340 = vunpack.c.l.b16 %v1242
  %v1341 = vunpack.c.l.b16 %v1243
  %v1342 = vunpack.c.l.b16 %v1244
  %v1343 = vunpack.c.l.b16 %v1245
  %v1344 = vunpack.c.l.b16 %v1246
  %v1345 = vunpack.c.l.b16 %v1247
  %v1346 = vpack.c.b16 %v1298, %v1297
  %v1347 = vpack.c.b16 %v1300, %v1299
  %v1348 = vpack.c.b16 %v1302, %v1301
  %v1349 = vpack.c.b16 %v1304, %v1303
  %v1350 = vpack.c.b16 %v1306, %v1305
  %v1351 = vpack.c.b16 %v1308, %v1307
  %v1352 = vpack.c.b16 %v1310, %v1309
  %v1353 = vpack.c.b16 %v1312, %v1311
  %v1354 = vpack.c.b16 %v1314, %v1313
  %v1355 = vpack.c.b16 %v1316, %v1315
  %v1356 = vpack.c.b16 %v1318, %v1317
  %v1357 = vpack.c.b16 %v1320, %v1319
  %v1358 = vpack.c.b16 %v1322, %v1321
  %v1359 = vpack.c.b16 %v1324, %v1323
  %v1360 = vpack.c.b16 %v1326, %v1325
  %v1361 = vpack.c.b16 %v1328, %v1327
  %v1362 = vpack.c.b16 %v1330, %v1329
  %v1363 = vpack.c.b16 %v1332, %v1331
  %v1364 = vpack.c.b16 %v1334, %v1333
  %v1365 = vpack.c.b16 %v1336, %v1335
  %v1366 = vpack.c.b16 %v1338, %v1337
  %v1367 = vpack.c.b16 %v1340, %v1339
  %v1368 = vpack.c.b16 %v1342, %v1341
  %v1369 = vpack.c.b16 %v1344, %v1343
  %v1370 = vpack.c.b16 %v1345, %v1345
  %1396 = vmatprep.subr.bf16.mxu0 0
  %1397 = vmatpush1.bf16.msra.mxu0 %v271
  %1398 = vmatprep.subr.bf16.mxu0 0
  %1399 = vmatpush1.bf16.msra.mxu0 %v272
  %1400 = vmatprep.subr.bf16.mxu0 0
  %1401 = vmatpush1.bf16.msra.mxu0 %v273
  %1402 = vmatprep.subr.bf16.mxu0 0
  %1403 = vmatpush1.bf16.msra.mxu0 %v274
  %1404 = vmatprep.subr.bf16.mxu0 0
  %1405 = vmatpush1.bf16.msra.mxu0 %v275
  %1406 = vmatprep.subr.bf16.mxu0 0
  %1407 = vmatpush1.bf16.msra.mxu0 %v276
  %1408 = vmatprep.subr.bf16.mxu0 0
  %1409 = vmatpush1.bf16.msra.mxu0 %v277
  %1410 = vmatprep.subr.bf16.mxu0 0
  %1411 = vmatpush1.bf16.msra.mxu0 %v278
  %1412 = vmatprep.subr.bf16.mxu0 0
  %1413 = vmatpush1.bf16.msra.mxu0 0
  %1414 = vmatprep.subr.bf16.mxu0 0
  %1415 = vmatpush1.bf16.msra.mxu0 0
  %1416 = vmatprep.subr.bf16.mxu0 0
  %1417 = vmatpush1.bf16.msra.mxu0 0
  %1418 = vmatprep.subr.bf16.mxu0 0
  %1419 = vmatpush1.bf16.msra.mxu0 0
  %1420 = vmatprep.subr.bf16.mxu0 0
  %1421 = vmatpush1.bf16.msra.mxu0 0
  %1422 = vmatprep.subr.bf16.mxu0 0
  %1423 = vmatpush1.bf16.msra.mxu0 0
  %1424 = vmatprep.subr.bf16.mxu0 0
  %1425 = vmatpush1.bf16.msra.mxu0 0
  %1426 = vmatprep.subr.bf16.mxu0 0
  %1427 = vmatpush1.bf16.msra.mxu0 0
  %1428 = vmatprep.mubr.bf16.mxu0 0
  %1429 = vmatmul.mubr.bf16.gmra.mrb[0].mxu0 %v1346
  %v1430 = vpop.f32.mrb[0].mxu0
  %v1431 = vadd.f32 %v89, %v1430
  %v1432 = vpop.f32.mrb[0].mxu0
  %v1433 = vpop.f32.mrb[0].mxu0
  %v1434 = vadd.f32 %v89, %v1433
  %v1435 = vpop.f32.mrb[0].mxu0
  %1436 = vmatprep.mubr.bf16.mxu0 0
  %1437 = vmatmul.mubr.bf16.gmra.mrb[0].mxu0 %v1347
  %v1438 = vpop.f32.mrb[0].mxu0
  %v1439 = vadd.f32 %v89, %v1438
  %v1440 = vpop.f32.mrb[0].mxu0
  %v1441 = vpop.f32.mrb[0].mxu0
  %v1442 = vadd.f32 %v89, %v1441
  %v1443 = vpop.f32.mrb[0].mxu0
  %1444 = vmatprep.mubr.bf16.mxu0 0
  %1445 = vmatmul.mubr.bf16.gmra.mrb[0].mxu0 %v1348
  %v1446 = vpop.f32.mrb[0].mxu0
  %v1447 = vadd.f32 %v89, %v1446
  %v1448 = vpop.f32.mrb[0].mxu0
  %v1449 = vpop.f32.mrb[0].mxu0
  %v1450 = vadd.f32 %v89, %v1449
  %v1451 = vpop.f32.mrb[0].mxu0
  %1452 = vmatprep.mubr.bf16.mxu0 0
  %1453 = vmatmul.mubr.bf16.gmra.mrb[0].mxu0 %v1349
  %v1454 = vpop.f32.mrb[0].mxu0
  %v1455 = vadd.f32 %v89, %v1454
  %v1456 = vpop.f32.mrb[0].mxu0
  %v1457 = vpop.f32.mrb[0].mxu0
  %v1458 = vadd.f32 %v89, %v1457
  %v1459 = vpop.f32.mrb[0].mxu0
  %1460 = vmatprep.mubr.bf16.mxu0 0
  %1461 = vmatmul.mubr.bf16.gmra.mrb[0].mxu0 %v1350
  %v1462 = vpop.f32.mrb[0].mxu0
  %v1463 = vadd.f32 %v89, %v1462
  %v1464 = vpop.f32.mrb[0].mxu0
  %v1465 = vpop.f32.mrb[0].mxu0
  %v1466 = vadd.f32 %v89, %v1465
  %v1467 = vpop.f32.mrb[0].mxu0
  %1468 = vmatprep.mubr.bf16.mxu0 0
  %1469 = vmatmul.mubr.bf16.gmra.mrb[0].mxu0 %v1351
  %v1470 = vpop.f32.mrb[0].mxu0
  %v1471 = vadd.f32 %v89, %v1470
  %v1472 = vpop.f32.mrb[0].mxu0
  %v1473 = vpop.f32.mrb[0].mxu0
  %v1474 = vadd.f32 %v89, %v1473
  %v1475 = vpop.f32.mrb[0].mxu0
  %1476 = vmatprep.mubr.bf16.mxu0 0
  %1477 = vmatmul.mubr.bf16.gmra.mrb[0].mxu0 %v1352
  %v1478 = vpop.f32.mrb[0].mxu0
  %v1479 = vadd.f32 %v89, %v1478
  %v1480 = vpop.f32.mrb[0].mxu0
  %v1481 = vpop.f32.mrb[0].mxu0
  %v1482 = vadd.f32 %v89, %v1481
  %v1483 = vpop.f32.mrb[0].mxu0
  %1484 = vmatprep.mubr.bf16.mxu0 0
  %1485 = vmatmul.mubr.bf16.gmra.mrb[0].mxu0 %v1353
  %v1486 = vpop.f32.mrb[0].mxu0
  %v1487 = vadd.f32 %v89, %v1486
  %v1488 = vpop.f32.mrb[0].mxu0
  %v1489 = vpop.f32.mrb[0].mxu0
  %v1490 = vadd.f32 %v89, %v1489
  %v1491 = vpop.f32.mrb[0].mxu0
  %1492 = vmatprep.mubr.bf16.mxu0 0
  %1493 = vmatmul.mubr.bf16.gmra.mrb[0].mxu0 %v1354
  %v1494 = vpop.f32.mrb[0].mxu0
  %v1495 = vadd.f32 %v89, %v1494
  %v1496 = vpop.f32.mrb[0].mxu0
  %v1497 = vpop.f32.mrb[0].mxu0
  %v1498 = vadd.f32 %v89, %v1497
  %v1499 = vpop.f32.mrb[0].mxu0
  %1500 = vmatprep.mubr.bf16.mxu0 0
  %1501 = vmatmul.mubr.bf16.gmra.mrb[0].mxu0 %v1355
  %v1502 = vpop.f32.mrb[0].mxu0
  %v1503 = vadd.f32 %v89, %v1502
  %v1504 = vpop.f32.mrb[0].mxu0
  %v1505 = vpop.f32.mrb[0].mxu0
  %v1506 = vadd.f32 %v89, %v1505
  %v1507 = vpop.f32.mrb[0].mxu0
  %1508 = vmatprep.mubr.bf16.mxu0 0
  %1509 = vmatmul.mubr.bf16.gmra.mrb[0].mxu0 %v1356
  %v1510 = vpop.f32.mrb[0].mxu0
  %v1511 = vadd.f32 %v89, %v1510
  %v1512 = vpop.f32.mrb[0].mxu0
  %v1513 = vpop.f32.mrb[0].mxu0
  %v1514 = vadd.f32 %v89, %v1513
  %v1515 = vpop.f32.mrb[0].mxu0
  %1516 = vmatprep.mubr.bf16.mxu0 0
  %1517 = vmatmul.mubr.bf16.gmra.mrb[0].mxu0 %v1357
  %v1518 = vpop.f32.mrb[0].mxu0
  %v1519 = vadd.f32 %v89, %v1518
  %v1520 = vpop.f32.mrb[0].mxu0
  %v1521 = vpop.f32.mrb[0].mxu0
  %v1522 = vadd.f32 %v89, %v1521
  %v1523 = vpop.f32.mrb[0].mxu0
  %1524 = vmatprep.mubr.bf16.mxu0 0
  %1525 = vmatmul.mubr.bf16.gmra.mrb[0].mxu0 %v1358
  %v1526 = vpop.f32.mrb[0].mxu0
  %v1527 = vadd.f32 %v89, %v1526
  %v1528 = vpop.f32.mrb[0].mxu0
  %v1529 = vpop.f32.mrb[0].mxu0
  %v1530 = vadd.f32 %v89, %v1529
  %v1531 = vpop.f32.mrb[0].mxu0
  %1532 = vmatprep.mubr.bf16.mxu0 0
  %1533 = vmatmul.mubr.bf16.gmra.mrb[0].mxu0 %v1359
  %v1534 = vpop.f32.mrb[0].mxu0
  %v1535 = vadd.f32 %v89, %v1534
  %v1536 = vpop.f32.mrb[0].mxu0
  %v1537 = vpop.f32.mrb[0].mxu0
  %v1538 = vadd.f32 %v89, %v1537
  %v1539 = vpop.f32.mrb[0].mxu0
  %1540 = vmatprep.mubr.bf16.mxu0 0
  %1541 = vmatmul.mubr.bf16.gmra.mrb[0].mxu0 %v1360
  %v1542 = vpop.f32.mrb[0].mxu0
  %v1543 = vadd.f32 %v89, %v1542
  %v1544 = vpop.f32.mrb[0].mxu0
  %v1545 = vpop.f32.mrb[0].mxu0
  %v1546 = vadd.f32 %v89, %v1545
  %v1547 = vpop.f32.mrb[0].mxu0
  %1548 = vmatprep.mubr.bf16.mxu0 0
  %1549 = vmatmul.mubr.bf16.gmra.mrb[0].mxu0 %v1361
  %v1550 = vpop.f32.mrb[0].mxu0
  %v1551 = vadd.f32 %v89, %v1550
  %v1552 = vpop.f32.mrb[0].mxu0
  %v1553 = vpop.f32.mrb[0].mxu0
  %v1554 = vadd.f32 %v89, %v1553
  %v1555 = vpop.f32.mrb[0].mxu0
  %1556 = vmatprep.mubr.bf16.mxu0 0
  %1557 = vmatmul.mubr.bf16.gmra.mrb[0].mxu0 %v1362
  %v1558 = vpop.f32.mrb[0].mxu0
  %v1559 = vadd.f32 %v89, %v1558
  %v1560 = vpop.f32.mrb[0].mxu0
  %v1561 = vpop.f32.mrb[0].mxu0
  %v1562 = vadd.f32 %v89, %v1561
  %v1563 = vpop.f32.mrb[0].mxu0
  %1564 = vmatprep.mubr.bf16.mxu0 0
  %1565 = vmatmul.mubr.bf16.gmra.mrb[0].mxu0 %v1363
  %v1566 = vpop.f32.mrb[0].mxu0
  %v1567 = vadd.f32 %v89, %v1566
  %v1568 = vpop.f32.mrb[0].mxu0
  %v1569 = vpop.f32.mrb[0].mxu0
  %v1570 = vadd.f32 %v89, %v1569
  %v1571 = vpop.f32.mrb[0].mxu0
  %1572 = vmatprep.mubr.bf16.mxu0 0
  %1573 = vmatmul.mubr.bf16.gmra.mrb[0].mxu0 %v1364
  %v1574 = vpop.f32.mrb[0].mxu0
  %v1575 = vadd.f32 %v89, %v1574
  %v1576 = vpop.f32.mrb[0].mxu0
  %v1577 = vpop.f32.mrb[0].mxu0
  %v1578 = vadd.f32 %v89, %v1577
  %v1579 = vpop.f32.mrb[0].mxu0
  %1580 = vmatprep.mubr.bf16.mxu0 0
  %1581 = vmatmul.mubr.bf16.gmra.mrb[0].mxu0 %v1365
  %v1582 = vpop.f32.mrb[0].mxu0
  %v1583 = vadd.f32 %v89, %v1582
  %v1584 = vpop.f32.mrb[0].mxu0
  %v1585 = vpop.f32.mrb[0].mxu0
  %v1586 = vadd.f32 %v89, %v1585
  %v1587 = vpop.f32.mrb[0].mxu0
  %1588 = vmatprep.mubr.bf16.mxu0 0
  %1589 = vmatmul.mubr.bf16.gmra.mrb[0].mxu0 %v1366
  %v1590 = vpop.f32.mrb[0].mxu0
  %v1591 = vadd.f32 %v89, %v1590
  %v1592 = vpop.f32.mrb[0].mxu0
  %v1593 = vpop.f32.mrb[0].mxu0
  %v1594 = vadd.f32 %v89, %v1593
  %v1595 = vpop.f32.mrb[0].mxu0
  %1596 = vmatprep.mubr.bf16.mxu0 0
  %1597 = vmatmul.mubr.bf16.gmra.mrb[0].mxu0 %v1367
  %v1598 = vpop.f32.mrb[0].mxu0
  %v1599 = vadd.f32 %v89, %v1598
  %v1600 = vpop.f32.mrb[0].mxu0
  %v1601 = vpop.f32.mrb[0].mxu0
  %v1602 = vadd.f32 %v89, %v1601
  %v1603 = vpop.f32.mrb[0].mxu0
  %1604 = vmatprep.mubr.bf16.mxu0 0
  %1605 = vmatmul.mubr.bf16.gmra.mrb[0].mxu0 %v1368
  %v1606 = vpop.f32.mrb[0].mxu0
  %v1607 = vadd.f32 %v89, %v1606
  %v1608 = vpop.f32.mrb[0].mxu0
  %v1609 = vpop.f32.mrb[0].mxu0
  %v1610 = vadd.f32 %v89, %v1609
  %v1611 = vpop.f32.mrb[0].mxu0
  %1612 = vmatprep.mubr.bf16.mxu0 0
  %1613 = vmatmul.mubr.bf16.gmra.mrb[0].mxu0 %v1369
  %v1614 = vpop.f32.mrb[0].mxu0
  %v1615 = vadd.f32 %v89, %v1614
  %v1616 = vpop.f32.mrb[0].mxu0
  %v1617 = vpop.f32.mrb[0].mxu0
  %v1618 = vadd.f32 %v89, %v1617
  %v1619 = vpop.f32.mrb[0].mxu0
  %1620 = vmatprep.mubr.bf16.mxu0 0
  %1621 = vmatmul.mubr.bf16.gmra.mrb[0].mxu0 %v1370
  %v1622 = vpop.f32.mrb[0].mxu0
  %v1623 = vadd.f32 %v89, %v1622
  %v1624 = vpop.f32.mrb[0].mxu0
  %v1625 = vpop.f32.mrb[0].mxu0
  %v1626 = vpop.f32.mrb[0].mxu0
  %1627 = vdwg.mxu0
  %v1628 = vmax.f32 %v1431, 0.0
  %v1629 = vmax.f32 %v1434, 0.0
  %v1630 = vmax.f32 %v1439, 0.0
  %v1631 = vmax.f32 %v1442, 0.0
  %v1632 = vmax.f32 %v1447, 0.0
  %v1633 = vmax.f32 %v1450, 0.0
  %v1634 = vmax.f32 %v1455, 0.0
  %v1635 = vmax.f32 %v1458, 0.0
  %v1636 = vmax.f32 %v1463, 0.0
  %v1637 = vmax.f32 %v1466, 0.0
  %v1638 = vmax.f32 %v1471, 0.0
  %v1639 = vmax.f32 %v1474, 0.0
  %v1640 = vmax.f32 %v1479, 0.0
  %v1641 = vmax.f32 %v1482, 0.0
  %v1642 = vmax.f32 %v1487, 0.0
  %v1643 = vmax.f32 %v1490, 0.0
  %v1644 = vmax.f32 %v1495, 0.0
  %v1645 = vmax.f32 %v1498, 0.0
  %v1646 = vmax.f32 %v1503, 0.0
  %v1647 = vmax.f32 %v1506, 0.0
  %v1648 = vmax.f32 %v1511, 0.0
  %v1649 = vmax.f32 %v1514, 0.0
  %v1650 = vmax.f32 %v1519, 0.0
  %v1651 = vmax.f32 %v1522, 0.0
  %v1652 = vmax.f32 %v1527, 0.0
  %v1653 = vmax.f32 %v1530, 0.0
  %v1654 = vmax.f32 %v1535, 0.0
  %v1655 = vmax.f32 %v1538, 0.0
  %v1656 = vmax.f32 %v1543, 0.0
  %v1657 = vmax.f32 %v1546, 0.0
  %v1658 = vmax.f32 %v1551, 0.0
  %v1659 = vmax.f32 %v1554, 0.0
  %v1660 = vmax.f32 %v1559, 0.0
  %v1661 = vmax.f32 %v1562, 0.0
  %v1662 = vmax.f32 %v1567, 0.0
  %v1663 = vmax.f32 %v1570, 0.0
  %v1664 = vmax.f32 %v1575, 0.0
  %v1665 = vmax.f32 %v1578, 0.0
  %v1666 = vmax.f32 %v1583, 0.0
  %v1667 = vmax.f32 %v1586, 0.0
  %v1668 = vmax.f32 %v1591, 0.0
  %v1669 = vmax.f32 %v1594, 0.0
  %v1670 = vmax.f32 %v1599, 0.0
  %v1671 = vmax.f32 %v1602, 0.0
  %v1672 = vmax.f32 %v1607, 0.0
  %v1673 = vmax.f32 %v1610, 0.0
  %v1674 = vmax.f32 %v1615, 0.0
  %v1675 = vmax.f32 %v1618, 0.0
  %v1676 = vmax.f32 %v1623, 0.0
  %v1677 = vmul.f32 %v1628, %v572
  %v1678 = vmul.f32 %v1629, %v572
  %v1679 = vmul.f32 %v1630, %v572
  %v1680 = vmul.f32 %v1631, %v572
  %v1681 = vmul.f32 %v1632, %v572
  %v1682 = vmul.f32 %v1633, %v572
  %v1683 = vmul.f32 %v1634, %v572
  %v1684 = vmul.f32 %v1635, %v572
  %v1685 = vmul.f32 %v1636, %v572
  %v1686 = vmul.f32 %v1637, %v572
  %v1687 = vmul.f32 %v1638, %v572
  %v1688 = vmul.f32 %v1639, %v572
  %v1689 = vmul.f32 %v1640, %v572
  %v1690 = vmul.f32 %v1641, %v572
  %v1691 = vmul.f32 %v1642, %v572
  %v1692 = vmul.f32 %v1643, %v572
  %v1693 = vmul.f32 %v1644, %v572
  %v1694 = vmul.f32 %v1645, %v572
  %v1695 = vmul.f32 %v1646, %v572
  %v1696 = vmul.f32 %v1647, %v572
  %v1697 = vmul.f32 %v1648, %v572
  %v1698 = vmul.f32 %v1649, %v572
  %v1699 = vmul.f32 %v1650, %v572
  %v1700 = vmul.f32 %v1651, %v572
  %v1701 = vmul.f32 %v1652, %v572
  %v1702 = vmul.f32 %v1653, %v572
  %v1703 = vmul.f32 %v1654, %v572
  %v1704 = vmul.f32 %v1655, %v572
  %v1705 = vmul.f32 %v1656, %v572
  %v1706 = vmul.f32 %v1657, %v572
  %v1707 = vmul.f32 %v1658, %v572
  %v1708 = vmul.f32 %v1659, %v572
  %v1709 = vmul.f32 %v1660, %v572
  %v1710 = vmul.f32 %v1661, %v572
  %v1711 = vmul.f32 %v1662, %v572
  %v1712 = vmul.f32 %v1663, %v572
  %v1713 = vmul.f32 %v1664, %v572
  %v1714 = vmul.f32 %v1665, %v572
  %v1715 = vmul.f32 %v1666, %v572
  %v1716 = vmul.f32 %v1667, %v572
  %v1717 = vmul.f32 %v1668, %v572
  %v1718 = vmul.f32 %v1669, %v572
  %v1719 = vmul.f32 %v1670, %v572
  %v1720 = vmul.f32 %v1671, %v572
  %v1721 = vmul.f32 %v1672, %v572
  %v1722 = vmul.f32 %v1673, %v572
  %v1723 = vmul.f32 %v1674, %v572
  %v1724 = vmul.f32 %v1675, %v572
  %v1725 = vmul.f32 %v1676, %v572
  %v1726 = vmax.f32 %v1150, %v1677
  %v1727 = vmax.f32 %v1151, %v1678
  %v1728 = vmax.f32 %v1152, %v1679
  %v1729 = vmax.f32 %v1153, %v1680
  %v1730 = vmax.f32 %v1154, %v1681
  %v1731 = vmax.f32 %v1155, %v1682
  %v1732 = vmax.f32 %v1156, %v1683
  %v1733 = vmax.f32 %v1157, %v1684
  %v1734 = vmax.f32 %v1158, %v1685
  %v1735 = vmax.f32 %v1159, %v1686
  %v1736 = vmax.f32 %v1160, %v1687
  %v1737 = vmax.f32 %v1161, %v1688
  %v1738 = vmax.f32 %v1162, %v1689
  %v1739 = vmax.f32 %v1163, %v1690
  %v1740 = vmax.f32 %v1164, %v1691
  %v1741 = vmax.f32 %v1165, %v1692
  %v1742 = vmax.f32 %v1166, %v1693
  %v1743 = vmax.f32 %v1167, %v1694
  %v1744 = vmax.f32 %v1168, %v1695
  %v1745 = vmax.f32 %v1169, %v1696
  %v1746 = vmax.f32 %v1170, %v1697
  %v1747 = vmax.f32 %v1171, %v1698
  %v1748 = vmax.f32 %v1172, %v1699
  %v1749 = vmax.f32 %v1173, %v1700
  %v1750 = vmax.f32 %v1174, %v1701
  %v1751 = vmax.f32 %v1175, %v1702
  %v1752 = vmax.f32 %v1176, %v1703
  %v1753 = vmax.f32 %v1177, %v1704
  %v1754 = vmax.f32 %v1178, %v1705
  %v1755 = vmax.f32 %v1179, %v1706
  %v1756 = vmax.f32 %v1180, %v1707
  %v1757 = vmax.f32 %v1181, %v1708
  %v1758 = vmax.f32 %v1182, %v1709
  %v1759 = vmax.f32 %v1183, %v1710
  %v1760 = vmax.f32 %v1184, %v1711
  %v1761 = vmax.f32 %v1185, %v1712
  %v1762 = vmax.f32 %v1186, %v1713
  %v1763 = vmax.f32 %v1187, %v1714
  %v1764 = vmax.f32 %v1188, %v1715
  %v1765 = vmax.f32 %v1189, %v1716
  %v1766 = vmax.f32 %v1190, %v1717
  %v1767 = vmax.f32 %v1191, %v1718
  %v1768 = vmax.f32 %v1192, %v1719
  %v1769 = vmax.f32 %v1193, %v1720
  %v1770 = vmax.f32 %v1194, %v1721
  %v1771 = vmax.f32 %v1195, %v1722
  %v1772 = vmax.f32 %v1196, %v1723
  %v1773 = vmax.f32 %v1197, %v1724
  %v1774 = vmax.f32 %v1198, %v1725
  %v1775 = vld [vmem:[%s0 + $0x24c] sm:$0xf]
  %v1776 = vld [vmem:[%s0 + $0x250] sm:$0xf]
  %v1777 = vld [vmem:[%s0 + $0x254] sm:$0xf]
  %v1778 = vld [vmem:[%s0 + $0x258] sm:$0xf]
  %v1779 = vld [vmem:[%s0 + $0x25c] sm:$0xf]
  %v1780 = vld [vmem:[%s0 + $0x260] sm:$0xf]
  %v1781 = vld [vmem:[%s0 + $0x264] sm:$0xf]
  %v1782 = vld [vmem:[%s0 + $0x268] sm:$0xf]
  %v1783 = vld [vmem:[%s0 + $0x26c] sm:$0xf]
  %v1784 = vld [vmem:[%s0 + $0x270] sm:$0xf]
  %v1785 = vld [vmem:[%s0 + $0x274] sm:$0xf]
  %v1786 = vld [vmem:[%s0 + $0x278] sm:$0xf]
  %v1787 = vld [vmem:[%s0 + $0x27c] sm:$0xf]
  %v1788 = vld [vmem:[%s0 + $0x280] sm:$0xf]
  %v1789 = vld [vmem:[%s0 + $0x284] sm:$0xf]
  %v1790 = vld [vmem:[%s0 + $0x288] sm:$0xf]
  %v1791 = vld [vmem:[%s0 + $0x28c] sm:$0xf]
  %v1792 = vld [vmem:[%s0 + $0x290] sm:$0xf]
  %v1793 = vld [vmem:[%s0 + $0x294] sm:$0xf]
  %v1794 = vld [vmem:[%s0 + $0x298] sm:$0xf]
  %v1795 = vld [vmem:[%s0 + $0x29c] sm:$0xf]
  %v1796 = vld [vmem:[%s0 + $0x2a0] sm:$0xf]
  %v1797 = vld [vmem:[%s0 + $0x2a4] sm:$0xf]
  %v1798 = vld [vmem:[%s0 + $0x2a8] sm:$0xf]
  %v1799 = vld [vmem:[%s0 + $0x2ac] sm:$0xf]
  %v1800 = vld [vmem:[%s0 + $0x2b0] sm:$0xf]
  %v1801 = vld [vmem:[%s0 + $0x2b4] sm:$0xf]
  %v1802 = vld [vmem:[%s0 + $0x2b8] sm:$0xf]
  %v1803 = vld [vmem:[%s0 + $0x2bc] sm:$0xf]
  %v1804 = vld [vmem:[%s0 + $0x2c0] sm:$0xf]
  %v1805 = vld [vmem:[%s0 + $0x2c4] sm:$0xf]
  %v1806 = vld [vmem:[%s0 + $0x2c8] sm:$0xf]
  %v1807 = vld [vmem:[%s0 + $0x2cc] sm:$0xf]
  %v1808 = vld [vmem:[%s0 + $0x2d0] sm:$0xf]
  %v1809 = vld [vmem:[%s0 + $0x2d4] sm:$0xf]
  %v1810 = vld [vmem:[%s0 + $0x2d8] sm:$0xf]
  %v1811 = vld [vmem:[%s0 + $0x2dc] sm:$0xf]
  %v1812 = vld [vmem:[%s0 + $0x2e0] sm:$0xf]
  %v1813 = vld [vmem:[%s0 + $0x2e4] sm:$0xf]
  %v1814 = vld [vmem:[%s0 + $0x2e8] sm:$0xf]
  %v1815 = vld [vmem:[%s0 + $0x2ec] sm:$0xf]
  %v1816 = vld [vmem:[%s0 + $0x2f0] sm:$0xf]
  %v1817 = vld [vmem:[%s0 + $0x2f4] sm:$0xf]
  %v1818 = vld [vmem:[%s0 + $0x2f8] sm:$0xf]
  %v1819 = vld [vmem:[%s0 + $0x2fc] sm:$0xf]
  %v1820 = vld [vmem:[%s0 + $0x300] sm:$0xf]
  %v1821 = vld [vmem:[%s0 + $0x304] sm:$0xf]
  %v1822 = vld [vmem:[%s0 + $0x308] sm:$0xf]
  %v1823 = vld [vmem:[%s0 + $0x30c] sm:$0xf]
  %v1873 = vunpack.c.l.b16 %v1775
  %v1874 = vunpack.c.l.b16 %v1776
  %v1875 = vunpack.c.l.b16 %v1777
  %v1876 = vunpack.c.l.b16 %v1778
  %v1877 = vunpack.c.l.b16 %v1779
  %v1878 = vunpack.c.l.b16 %v1780
  %v1879 = vunpack.c.l.b16 %v1781
  %v1880 = vunpack.c.l.b16 %v1782
  %v1881 = vunpack.c.l.b16 %v1783
  %v1882 = vunpack.c.l.b16 %v1784
  %v1883 = vunpack.c.l.b16 %v1785
  %v1884 = vunpack.c.l.b16 %v1786
  %v1885 = vunpack.c.l.b16 %v1787
  %v1886 = vunpack.c.l.b16 %v1788
  %v1887 = vunpack.c.l.b16 %v1789
  %v1888 = vunpack.c.l.b16 %v1790
  %v1889 = vunpack.c.l.b16 %v1791
  %v1890 = vunpack.c.l.b16 %v1792
  %v1891 = vunpack.c.l.b16 %v1793
  %v1892 = vunpack.c.l.b16 %v1794
  %v1893 = vunpack.c.l.b16 %v1795
  %v1894 = vunpack.c.l.b16 %v1796
  %v1895 = vunpack.c.l.b16 %v1797
  %v1896 = vunpack.c.l.b16 %v1798
  %v1897 = vunpack.c.l.b16 %v1799
  %v1898 = vunpack.c.l.b16 %v1800
  %v1899 = vunpack.c.l.b16 %v1801
  %v1900 = vunpack.c.l.b16 %v1802
  %v1901 = vunpack.c.l.b16 %v1803
  %v1902 = vunpack.c.l.b16 %v1804
  %v1903 = vunpack.c.l.b16 %v1805
  %v1904 = vunpack.c.l.b16 %v1806
  %v1905 = vunpack.c.l.b16 %v1807
  %v1906 = vunpack.c.l.b16 %v1808
  %v1907 = vunpack.c.l.b16 %v1809
  %v1908 = vunpack.c.l.b16 %v1810
  %v1909 = vunpack.c.l.b16 %v1811
  %v1910 = vunpack.c.l.b16 %v1812
  %v1911 = vunpack.c.l.b16 %v1813
  %v1912 = vunpack.c.l.b16 %v1814
  %v1913 = vunpack.c.l.b16 %v1815
  %v1914 = vunpack.c.l.b16 %v1816
  %v1915 = vunpack.c.l.b16 %v1817
  %v1916 = vunpack.c.l.b16 %v1818
  %v1917 = vunpack.c.l.b16 %v1819
  %v1918 = vunpack.c.l.b16 %v1820
  %v1919 = vunpack.c.l.b16 %v1821
  %v1920 = vunpack.c.l.b16 %v1822
  %v1921 = vunpack.c.l.b16 %v1823
  %v1922 = vpack.c.b16 %v1874, %v1873
  %v1923 = vpack.c.b16 %v1876, %v1875
  %v1924 = vpack.c.b16 %v1878, %v1877
  %v1925 = vpack.c.b16 %v1880, %v1879
  %v1926 = vpack.c.b16 %v1882, %v1881
  %v1927 = vpack.c.b16 %v1884, %v1883
  %v1928 = vpack.c.b16 %v1886, %v1885
  %v1929 = vpack.c.b16 %v1888, %v1887
  %v1930 = vpack.c.b16 %v1890, %v1889
  %v1931 = vpack.c.b16 %v1892, %v1891
  %v1932 = vpack.c.b16 %v1894, %v1893
  %v1933 = vpack.c.b16 %v1896, %v1895
  %v1934 = vpack.c.b16 %v1898, %v1897
  %v1935 = vpack.c.b16 %v1900, %v1899
  %v1936 = vpack.c.b16 %v1902, %v1901
  %v1937 = vpack.c.b16 %v1904, %v1903
  %v1938 = vpack.c.b16 %v1906, %v1905
  %v1939 = vpack.c.b16 %v1908, %v1907
  %v1940 = vpack.c.b16 %v1910, %v1909
  %v1941 = vpack.c.b16 %v1912, %v1911
  %v1942 = vpack.c.b16 %v1914, %v1913
  %v1943 = vpack.c.b16 %v1916, %v1915
  %v1944 = vpack.c.b16 %v1918, %v1917
  %v1945 = vpack.c.b16 %v1920, %v1919
  %v1946 = vpack.c.b16 %v1921, %v1921
  %1972 = vmatprep.subr.bf16.mxu0 0
  %1973 = vmatpush1.bf16.msra.mxu0 %v271
  %1974 = vmatprep.subr.bf16.mxu0 0
  %1975 = vmatpush1.bf16.msra.mxu0 %v272
  %1976 = vmatprep.subr.bf16.mxu0 0
  %1977 = vmatpush1.bf16.msra.mxu0 %v273
  %1978 = vmatprep.subr.bf16.mxu0 0
  %1979 = vmatpush1.bf16.msra.mxu0 %v274
  %1980 = vmatprep.subr.bf16.mxu0 0
  %1981 = vmatpush1.bf16.msra.mxu0 %v275
  %1982 = vmatprep.subr.bf16.mxu0 0
  %1983 = vmatpush1.bf16.msra.mxu0 %v276
  %1984 = vmatprep.subr.bf16.mxu0 0
  %1985 = vmatpush1.bf16.msra.mxu0 %v277
  %1986 = vmatprep.subr.bf16.mxu0 0
  %1987 = vmatpush1.bf16.msra.mxu0 %v278
  %1988 = vmatprep.subr.bf16.mxu0 0
  %1989 = vmatpush1.bf16.msra.mxu0 0
  %1990 = vmatprep.subr.bf16.mxu0 0
  %1991 = vmatpush1.bf16.msra.mxu0 0
  %1992 = vmatprep.subr.bf16.mxu0 0
  %1993 = vmatpush1.bf16.msra.mxu0 0
  %1994 = vmatprep.subr.bf16.mxu0 0
  %1995 = vmatpush1.bf16.msra.mxu0 0
  %1996 = vmatprep.subr.bf16.mxu0 0
  %1997 = vmatpush1.bf16.msra.mxu0 0
  %1998 = vmatprep.subr.bf16.mxu0 0
  %1999 = vmatpush1.bf16.msra.mxu0 0
  %2000 = vmatprep.subr.bf16.mxu0 0
  %2001 = vmatpush1.bf16.msra.mxu0 0
  %2002 = vmatprep.subr.bf16.mxu0 0
  %2003 = vmatpush1.bf16.msra.mxu0 0
  %2004 = vmatprep.mubr.bf16.mxu0 0
  %2005 = vmatmul.mubr.bf16.gmra.mrb[0].mxu0 %v1922
  %v2006 = vpop.f32.mrb[0].mxu0
  %v2007 = vadd.f32 %v89, %v2006
  %v2008 = vpop.f32.mrb[0].mxu0
  %v2009 = vpop.f32.mrb[0].mxu0
  %v2010 = vadd.f32 %v89, %v2009
  %v2011 = vpop.f32.mrb[0].mxu0
  %2012 = vmatprep.mubr.bf16.mxu0 0
  %2013 = vmatmul.mubr.bf16.gmra.mrb[0].mxu0 %v1923
  %v2014 = vpop.f32.mrb[0].mxu0
  %v2015 = vadd.f32 %v89, %v2014
  %v2016 = vpop.f32.mrb[0].mxu0
  %v2017 = vpop.f32.mrb[0].mxu0
  %v2018 = vadd.f32 %v89, %v2017
  %v2019 = vpop.f32.mrb[0].mxu0
  %2020 = vmatprep.mubr.bf16.mxu0 0
  %2021 = vmatmul.mubr.bf16.gmra.mrb[0].mxu0 %v1924
  %v2022 = vpop.f32.mrb[0].mxu0
  %v2023 = vadd.f32 %v89, %v2022
  %v2024 = vpop.f32.mrb[0].mxu0
  %v2025 = vpop.f32.mrb[0].mxu0
  %v2026 = vadd.f32 %v89, %v2025
  %v2027 = vpop.f32.mrb[0].mxu0
  %2028 = vmatprep.mubr.bf16.mxu0 0
  %2029 = vmatmul.mubr.bf16.gmra.mrb[0].mxu0 %v1925
  %v2030 = vpop.f32.mrb[0].mxu0
  %v2031 = vadd.f32 %v89, %v2030
  %v2032 = vpop.f32.mrb[0].mxu0
  %v2033 = vpop.f32.mrb[0].mxu0
  %v2034 = vadd.f32 %v89, %v2033
  %v2035 = vpop.f32.mrb[0].mxu0
  %2036 = vmatprep.mubr.bf16.mxu0 0
  %2037 = vmatmul.mubr.bf16.gmra.mrb[0].mxu0 %v1926
  %v2038 = vpop.f32.mrb[0].mxu0
  %v2039 = vadd.f32 %v89, %v2038
  %v2040 = vpop.f32.mrb[0].mxu0
  %v2041 = vpop.f32.mrb[0].mxu0
  %v2042 = vadd.f32 %v89, %v2041
  %v2043 = vpop.f32.mrb[0].mxu0
  %2044 = vmatprep.mubr.bf16.mxu0 0
  %2045 = vmatmul.mubr.bf16.gmra.mrb[0].mxu0 %v1927
  %v2046 = vpop.f32.mrb[0].mxu0
  %v2047 = vadd.f32 %v89, %v2046
  %v2048 = vpop.f32.mrb[0].mxu0
  %v2049 = vpop.f32.mrb[0].mxu0
  %v2050 = vadd.f32 %v89, %v2049
  %v2051 = vpop.f32.mrb[0].mxu0
  %2052 = vmatprep.mubr.bf16.mxu0 0
  %2053 = vmatmul.mubr.bf16.gmra.mrb[0].mxu0 %v1928
  %v2054 = vpop.f32.mrb[0].mxu0
  %v2055 = vadd.f32 %v89, %v2054
  %v2056 = vpop.f32.mrb[0].mxu0
  %v2057 = vpop.f32.mrb[0].mxu0
  %v2058 = vadd.f32 %v89, %v2057
  %v2059 = vpop.f32.mrb[0].mxu0
  %2060 = vmatprep.mubr.bf16.mxu0 0
  %2061 = vmatmul.mubr.bf16.gmra.mrb[0].mxu0 %v1929
  %v2062 = vpop.f32.mrb[0].mxu0
  %v2063 = vadd.f32 %v89, %v2062
  %v2064 = vpop.f32.mrb[0].mxu0
  %v2065 = vpop.f32.mrb[0].mxu0
  %v2066 = vadd.f32 %v89, %v2065
  %v2067 = vpop.f32.mrb[0].mxu0
  %2068 = vmatprep.mubr.bf16.mxu0 0
  %2069 = vmatmul.mubr.bf16.gmra.mrb[0].mxu0 %v1930
  %v2070 = vpop.f32.mrb[0].mxu0
  %v2071 = vadd.f32 %v89, %v2070
  %v2072 = vpop.f32.mrb[0].mxu0
  %v2073 = vpop.f32.mrb[0].mxu0
  %v2074 = vadd.f32 %v89, %v2073
  %v2075 = vpop.f32.mrb[0].mxu0
  %2076 = vmatprep.mubr.bf16.mxu0 0
  %2077 = vmatmul.mubr.bf16.gmra.mrb[0].mxu0 %v1931
  %v2078 = vpop.f32.mrb[0].mxu0
  %v2079 = vadd.f32 %v89, %v2078
  %v2080 = vpop.f32.mrb[0].mxu0
  %v2081 = vpop.f32.mrb[0].mxu0
  %v2082 = vadd.f32 %v89, %v2081
  %v2083 = vpop.f32.mrb[0].mxu0
  %2084 = vmatprep.mubr.bf16.mxu0 0
  %2085 = vmatmul.mubr.bf16.gmra.mrb[0].mxu0 %v1932
  %v2086 = vpop.f32.mrb[0].mxu0
  %v2087 = vadd.f32 %v89, %v2086
  %v2088 = vpop.f32.mrb[0].mxu0
  %v2089 = vpop.f32.mrb[0].mxu0
  %v2090 = vadd.f32 %v89, %v2089
  %v2091 = vpop.f32.mrb[0].mxu0
  %2092 = vmatprep.mubr.bf16.mxu0 0
  %2093 = vmatmul.mubr.bf16.gmra.mrb[0].mxu0 %v1933
  %v2094 = vpop.f32.mrb[0].mxu0
  %v2095 = vadd.f32 %v89, %v2094
  %v2096 = vpop.f32.mrb[0].mxu0
  %v2097 = vpop.f32.mrb[0].mxu0
  %v2098 = vadd.f32 %v89, %v2097
  %v2099 = vpop.f32.mrb[0].mxu0
  %2100 = vmatprep.mubr.bf16.mxu0 0
  %2101 = vmatmul.mubr.bf16.gmra.mrb[0].mxu0 %v1934
  %v2102 = vpop.f32.mrb[0].mxu0
  %v2103 = vadd.f32 %v89, %v2102
  %v2104 = vpop.f32.mrb[0].mxu0
  %v2105 = vpop.f32.mrb[0].mxu0
  %v2106 = vadd.f32 %v89, %v2105
  %v2107 = vpop.f32.mrb[0].mxu0
  %2108 = vmatprep.mubr.bf16.mxu0 0
  %2109 = vmatmul.mubr.bf16.gmra.mrb[0].mxu0 %v1935
  %v2110 = vpop.f32.mrb[0].mxu0
  %v2111 = vadd.f32 %v89, %v2110
  %v2112 = vpop.f32.mrb[0].mxu0
  %v2113 = vpop.f32.mrb[0].mxu0
  %v2114 = vadd.f32 %v89, %v2113
  %v2115 = vpop.f32.mrb[0].mxu0
  %2116 = vmatprep.mubr.bf16.mxu0 0
  %2117 = vmatmul.mubr.bf16.gmra.mrb[0].mxu0 %v1936
  %v2118 = vpop.f32.mrb[0].mxu0
  %v2119 = vadd.f32 %v89, %v2118
  %v2120 = vpop.f32.mrb[0].mxu0
  %v2121 = vpop.f32.mrb[0].mxu0
  %v2122 = vadd.f32 %v89, %v2121
  %v2123 = vpop.f32.mrb[0].mxu0
  %2124 = vmatprep.mubr.bf16.mxu0 0
  %2125 = vmatmul.mubr.bf16.gmra.mrb[0].mxu0 %v1937
  %v2126 = vpop.f32.mrb[0].mxu0
  %v2127 = vadd.f32 %v89, %v2126
  %v2128 = vpop.f32.mrb[0].mxu0
  %v2129 = vpop.f32.mrb[0].mxu0
  %v2130 = vadd.f32 %v89, %v2129
  %v2131 = vpop.f32.mrb[0].mxu0
  %2132 = vmatprep.mubr.bf16.mxu0 0
  %2133 = vmatmul.mubr.bf16.gmra.mrb[0].mxu0 %v1938
  %v2134 = vpop.f32.mrb[0].mxu0
  %v2135 = vadd.f32 %v89, %v2134
  %v2136 = vpop.f32.mrb[0].mxu0
  %v2137 = vpop.f32.mrb[0].mxu0
  %v2138 = vadd.f32 %v89, %v2137
  %v2139 = vpop.f32.mrb[0].mxu0
  %2140 = vmatprep.mubr.bf16.mxu0 0
  %2141 = vmatmul.mubr.bf16.gmra.mrb[0].mxu0 %v1939
  %v2142 = vpop.f32.mrb[0].mxu0
  %v2143 = vadd.f32 %v89, %v2142
  %v2144 = vpop.f32.mrb[0].mxu0
  %v2145 = vpop.f32.mrb[0].mxu0
  %v2146 = vadd.f32 %v89, %v2145
  %v2147 = vpop.f32.mrb[0].mxu0
  %2148 = vmatprep.mubr.bf16.mxu0 0
  %2149 = vmatmul.mubr.bf16.gmra.mrb[0].mxu0 %v1940
  %v2150 = vpop.f32.mrb[0].mxu0
  %v2151 = vadd.f32 %v89, %v2150
  %v2152 = vpop.f32.mrb[0].mxu0
  %v2153 = vpop.f32.mrb[0].mxu0
  %v2154 = vadd.f32 %v89, %v2153
  %v2155 = vpop.f32.mrb[0].mxu0
  %2156 = vmatprep.mubr.bf16.mxu0 0
  %2157 = vmatmul.mubr.bf16.gmra.mrb[0].mxu0 %v1941
  %v2158 = vpop.f32.mrb[0].mxu0
  %v2159 = vadd.f32 %v89, %v2158
  %v2160 = vpop.f32.mrb[0].mxu0
  %v2161 = vpop.f32.mrb[0].mxu0
  %v2162 = vadd.f32 %v89, %v2161
  %v2163 = vpop.f32.mrb[0].mxu0
  %2164 = vmatprep.mubr.bf16.mxu0 0
  %2165 = vmatmul.mubr.bf16.gmra.mrb[0].mxu0 %v1942
  %v2166 = vpop.f32.mrb[0].mxu0
  %v2167 = vadd.f32 %v89, %v2166
  %v2168 = vpop.f32.mrb[0].mxu0
  %v2169 = vpop.f32.mrb[0].mxu0
  %v2170 = vadd.f32 %v89, %v2169
  %v2171 = vpop.f32.mrb[0].mxu0
  %2172 = vmatprep.mubr.bf16.mxu0 0
  %2173 = vmatmul.mubr.bf16.gmra.mrb[0].mxu0 %v1943
  %v2174 = vpop.f32.mrb[0].mxu0
  %v2175 = vadd.f32 %v89, %v2174
  %v2176 = vpop.f32.mrb[0].mxu0
  %v2177 = vpop.f32.mrb[0].mxu0
  %v2178 = vadd.f32 %v89, %v2177
  %v2179 = vpop.f32.mrb[0].mxu0
  %2180 = vmatprep.mubr.bf16.mxu0 0
  %2181 = vmatmul.mubr.bf16.gmra.mrb[0].mxu0 %v1944
  %v2182 = vpop.f32.mrb[0].mxu0
  %v2183 = vadd.f32 %v89, %v2182
  %v2184 = vpop.f32.mrb[0].mxu0
  %v2185 = vpop.f32.mrb[0].mxu0
  %v2186 = vadd.f32 %v89, %v2185
  %v2187 = vpop.f32.mrb[0].mxu0
  %2188 = vmatprep.mubr.bf16.mxu0 0
  %2189 = vmatmul.mubr.bf16.gmra.mrb[0].mxu0 %v1945
  %v2190 = vpop.f32.mrb[0].mxu0
  %v2191 = vadd.f32 %v89, %v2190
  %v2192 = vpop.f32.mrb[0].mxu0
  %v2193 = vpop.f32.mrb[0].mxu0
  %v2194 = vadd.f32 %v89, %v2193
  %v2195 = vpop.f32.mrb[0].mxu0
  %2196 = vmatprep.mubr.bf16.mxu0 0
  %2197 = vmatmul.mubr.bf16.gmra.mrb[0].mxu0 %v1946
  %v2198 = vpop.f32.mrb[0].mxu0
  %v2199 = vadd.f32 %v89, %v2198
  %v2200 = vpop.f32.mrb[0].mxu0
  %v2201 = vpop.f32.mrb[0].mxu0
  %v2202 = vpop.f32.mrb[0].mxu0
  %2203 = vdwg.mxu0
  %v2204 = vmax.f32 %v2007, 0.0
  %v2205 = vmax.f32 %v2010, 0.0
  %v2206 = vmax.f32 %v2015, 0.0
  %v2207 = vmax.f32 %v2018, 0.0
  %v2208 = vmax.f32 %v2023, 0.0
  %v2209 = vmax.f32 %v2026, 0.0
  %v2210 = vmax.f32 %v2031, 0.0
  %v2211 = vmax.f32 %v2034, 0.0
  %v2212 = vmax.f32 %v2039, 0.0
  %v2213 = vmax.f32 %v2042, 0.0
  %v2214 = vmax.f32 %v2047, 0.0
  %v2215 = vmax.f32 %v2050, 0.0
  %v2216 = vmax.f32 %v2055, 0.0
  %v2217 = vmax.f32 %v2058, 0.0
  %v2218 = vmax.f32 %v2063, 0.0
  %v2219 = vmax.f32 %v2066, 0.0
  %v2220 = vmax.f32 %v2071, 0.0
  %v2221 = vmax.f32 %v2074, 0.0
  %v2222 = vmax.f32 %v2079, 0.0
  %v2223 = vmax.f32 %v2082, 0.0
  %v2224 = vmax.f32 %v2087, 0.0
  %v2225 = vmax.f32 %v2090, 0.0
  %v2226 = vmax.f32 %v2095, 0.0
  %v2227 = vmax.f32 %v2098, 0.0
  %v2228 = vmax.f32 %v2103, 0.0
  %v2229 = vmax.f32 %v2106, 0.0
  %v2230 = vmax.f32 %v2111, 0.0
  %v2231 = vmax.f32 %v2114, 0.0
  %v2232 = vmax.f32 %v2119, 0.0
  %v2233 = vmax.f32 %v2122, 0.0
  %v2234 = vmax.f32 %v2127, 0.0
  %v2235 = vmax.f32 %v2130, 0.0
  %v2236 = vmax.f32 %v2135, 0.0
  %v2237 = vmax.f32 %v2138, 0.0
  %v2238 = vmax.f32 %v2143, 0.0
  %v2239 = vmax.f32 %v2146, 0.0
  %v2240 = vmax.f32 %v2151, 0.0
  %v2241 = vmax.f32 %v2154, 0.0
  %v2242 = vmax.f32 %v2159, 0.0
  %v2243 = vmax.f32 %v2162, 0.0
  %v2244 = vmax.f32 %v2167, 0.0
  %v2245 = vmax.f32 %v2170, 0.0
  %v2246 = vmax.f32 %v2175, 0.0
  %v2247 = vmax.f32 %v2178, 0.0
  %v2248 = vmax.f32 %v2183, 0.0
  %v2249 = vmax.f32 %v2186, 0.0
  %v2250 = vmax.f32 %v2191, 0.0
  %v2251 = vmax.f32 %v2194, 0.0
  %v2252 = vmax.f32 %v2199, 0.0
  %v2253 = vmul.f32 %v2204, %v572
  %v2254 = vmul.f32 %v2205, %v572
  %v2255 = vmul.f32 %v2206, %v572
  %v2256 = vmul.f32 %v2207, %v572
  %v2257 = vmul.f32 %v2208, %v572
  %v2258 = vmul.f32 %v2209, %v572
  %v2259 = vmul.f32 %v2210, %v572
  %v2260 = vmul.f32 %v2211, %v572
  %v2261 = vmul.f32 %v2212, %v572
  %v2262 = vmul.f32 %v2213, %v572
  %v2263 = vmul.f32 %v2214, %v572
  %v2264 = vmul.f32 %v2215, %v572
  %v2265 = vmul.f32 %v2216, %v572
  %v2266 = vmul.f32 %v2217, %v572
  %v2267 = vmul.f32 %v2218, %v572
  %v2268 = vmul.f32 %v2219, %v572
  %v2269 = vmul.f32 %v2220, %v572
  %v2270 = vmul.f32 %v2221, %v572
  %v2271 = vmul.f32 %v2222, %v572
  %v2272 = vmul.f32 %v2223, %v572
  %v2273 = vmul.f32 %v2224, %v572
  %v2274 = vmul.f32 %v2225, %v572
  %v2275 = vmul.f32 %v2226, %v572
  %v2276 = vmul.f32 %v2227, %v572
  %v2277 = vmul.f32 %v2228, %v572
  %v2278 = vmul.f32 %v2229, %v572
  %v2279 = vmul.f32 %v2230, %v572
  %v2280 = vmul.f32 %v2231, %v572
  %v2281 = vmul.f32 %v2232, %v572
  %v2282 = vmul.f32 %v2233, %v572
  %v2283 = vmul.f32 %v2234, %v572
  %v2284 = vmul.f32 %v2235, %v572
  %v2285 = vmul.f32 %v2236, %v572
  %v2286 = vmul.f32 %v2237, %v572
  %v2287 = vmul.f32 %v2238, %v572
  %v2288 = vmul.f32 %v2239, %v572
  %v2289 = vmul.f32 %v2240, %v572
  %v2290 = vmul.f32 %v2241, %v572
  %v2291 = vmul.f32 %v2242, %v572
  %v2292 = vmul.f32 %v2243, %v572
  %v2293 = vmul.f32 %v2244, %v572
  %v2294 = vmul.f32 %v2245, %v572
  %v2295 = vmul.f32 %v2246, %v572
  %v2296 = vmul.f32 %v2247, %v572
  %v2297 = vmul.f32 %v2248, %v572
  %v2298 = vmul.f32 %v2249, %v572
  %v2299 = vmul.f32 %v2250, %v572
  %v2300 = vmul.f32 %v2251, %v572
  %v2301 = vmul.f32 %v2252, %v572
  %v2302 = vmax.f32 %v1726, %v2253
  %v2303 = vmax.f32 %v1727, %v2254
  %v2304 = vmax.f32 %v1728, %v2255
  %v2305 = vmax.f32 %v1729, %v2256
  %v2306 = vmax.f32 %v1730, %v2257
  %v2307 = vmax.f32 %v1731, %v2258
  %v2308 = vmax.f32 %v1732, %v2259
  %v2309 = vmax.f32 %v1733, %v2260
  %v2310 = vmax.f32 %v1734, %v2261
  %v2311 = vmax.f32 %v1735, %v2262
  %v2312 = vmax.f32 %v1736, %v2263
  %v2313 = vmax.f32 %v1737, %v2264
  %v2314 = vmax.f32 %v1738, %v2265
  %v2315 = vmax.f32 %v1739, %v2266
  %v2316 = vmax.f32 %v1740, %v2267
  %v2317 = vmax.f32 %v1741, %v2268
  %v2318 = vmax.f32 %v1742, %v2269
  %v2319 = vmax.f32 %v1743, %v2270
  %v2320 = vmax.f32 %v1744, %v2271
  %v2321 = vmax.f32 %v1745, %v2272
  %v2322 = vmax.f32 %v1746, %v2273
  %v2323 = vmax.f32 %v1747, %v2274
  %v2324 = vmax.f32 %v1748, %v2275
  %v2325 = vmax.f32 %v1749, %v2276
  %v2326 = vmax.f32 %v1750, %v2277
  %v2327 = vmax.f32 %v1751, %v2278
  %v2328 = vmax.f32 %v1752, %v2279
  %v2329 = vmax.f32 %v1753, %v2280
  %v2330 = vmax.f32 %v1754, %v2281
  %v2331 = vmax.f32 %v1755, %v2282
  %v2332 = vmax.f32 %v1756, %v2283
  %v2333 = vmax.f32 %v1757, %v2284
  %v2334 = vmax.f32 %v1758, %v2285
  %v2335 = vmax.f32 %v1759, %v2286
  %v2336 = vmax.f32 %v1760, %v2287
  %v2337 = vmax.f32 %v1761, %v2288
  %v2338 = vmax.f32 %v1762, %v2289
  %v2339 = vmax.f32 %v1763, %v2290
  %v2340 = vmax.f32 %v1764, %v2291
  %v2341 = vmax.f32 %v1765, %v2292
  %v2342 = vmax.f32 %v1766, %v2293
  %v2343 = vmax.f32 %v1767, %v2294
  %v2344 = vmax.f32 %v1768, %v2295
  %v2345 = vmax.f32 %v1769, %v2296
  %v2346 = vmax.f32 %v1770, %v2297
  %v2347 = vmax.f32 %v1771, %v2298
  %v2348 = vmax.f32 %v1772, %v2299
  %v2349 = vmax.f32 %v1773, %v2300
  %v2350 = vmax.f32 %v1774, %v2301
  %v2351 = vpack.c.bf16 %v2303, %v2302
  %v2352 = vpack.c.bf16 %v2305, %v2304
  %v2353 = vpack.c.bf16 %v2307, %v2306
  %v2354 = vpack.c.bf16 %v2309, %v2308
  %v2355 = vpack.c.bf16 %v2311, %v2310
  %v2356 = vpack.c.bf16 %v2313, %v2312
  %v2357 = vpack.c.bf16 %v2315, %v2314
  %v2358 = vpack.c.bf16 %v2317, %v2316
  %v2359 = vpack.c.bf16 %v2319, %v2318
  %v2360 = vpack.c.bf16 %v2321, %v2320
  %v2361 = vpack.c.bf16 %v2323, %v2322
  %v2362 = vpack.c.bf16 %v2325, %v2324
  %v2363 = vpack.c.bf16 %v2327, %v2326
  %v2364 = vpack.c.bf16 %v2329, %v2328
  %v2365 = vpack.c.bf16 %v2331, %v2330
  %v2366 = vpack.c.bf16 %v2333, %v2332
  %v2367 = vpack.c.bf16 %v2335, %v2334
  %v2368 = vpack.c.bf16 %v2337, %v2336
  %v2369 = vpack.c.bf16 %v2339, %v2338
  %v2370 = vpack.c.bf16 %v2341, %v2340
  %v2371 = vpack.c.bf16 %v2343, %v2342
  %v2372 = vpack.c.bf16 %v2345, %v2344
  %v2373 = vpack.c.bf16 %v2347, %v2346
  %v2374 = vpack.c.bf16 %v2349, %v2348
  %v2375 = vpack.c.bf16 %v2350, %v2350
  %v2401 = vunpack.c.l.b16 %v2351
  %v2402 = vunpack.c.h.b16 %v2351
  %v2403 = vunpack.c.l.b16 %v2352
  %v2404 = vunpack.c.h.b16 %v2352
  %v2405 = vunpack.c.l.b16 %v2353
  %v2406 = vunpack.c.h.b16 %v2353
  %v2407 = vunpack.c.l.b16 %v2354
  %v2408 = vunpack.c.h.b16 %v2354
  %v2409 = vunpack.c.l.b16 %v2355
  %v2410 = vunpack.c.h.b16 %v2355
  %v2411 = vunpack.c.l.b16 %v2356
  %v2412 = vunpack.c.h.b16 %v2356
  %v2413 = vunpack.c.l.b16 %v2357
  %v2414 = vunpack.c.h.b16 %v2357
  %v2415 = vunpack.c.l.b16 %v2358
  %v2416 = vunpack.c.h.b16 %v2358
  %v2417 = vunpack.c.l.b16 %v2359
  %v2418 = vunpack.c.h.b16 %v2359
  %v2419 = vunpack.c.l.b16 %v2360
  %v2420 = vunpack.c.h.b16 %v2360
  %v2421 = vunpack.c.l.b16 %v2361
  %v2422 = vunpack.c.h.b16 %v2361
  %v2423 = vunpack.c.l.b16 %v2362
  %v2424 = vunpack.c.h.b16 %v2362
  %v2425 = vunpack.c.l.b16 %v2363
  %v2426 = vunpack.c.h.b16 %v2363
  %v2427 = vunpack.c.l.b16 %v2364
  %v2428 = vunpack.c.h.b16 %v2364
  %v2429 = vunpack.c.l.b16 %v2365
  %v2430 = vunpack.c.h.b16 %v2365
  %v2431 = vunpack.c.l.b16 %v2366
  %v2432 = vunpack.c.h.b16 %v2366
  %v2433 = vunpack.c.l.b16 %v2367
  %v2434 = vunpack.c.h.b16 %v2367
  %v2435 = vunpack.c.l.b16 %v2368
  %v2436 = vunpack.c.h.b16 %v2368
  %v2437 = vunpack.c.l.b16 %v2369
  %v2438 = vunpack.c.h.b16 %v2369
  %v2439 = vunpack.c.l.b16 %v2370
  %v2440 = vunpack.c.h.b16 %v2370
  %v2441 = vunpack.c.l.b16 %v2371
  %v2442 = vunpack.c.h.b16 %v2371
  %v2443 = vunpack.c.l.b16 %v2372
  %v2444 = vunpack.c.h.b16 %v2372
  %v2445 = vunpack.c.l.b16 %v2373
  %v2446 = vunpack.c.h.b16 %v2373
  %v2447 = vunpack.c.l.b16 %v2374
  %v2448 = vunpack.c.h.b16 %v2374
  %v2449 = vunpack.c.l.b16 %v2375
  %v2450 = vpack.c.b16 %v2401, %v2401
  %v2451 = vpack.c.b16 %v2402, %v2402
  %v2452 = vpack.c.b16 %v2403, %v2403
  %v2453 = vpack.c.b16 %v2404, %v2404
  %v2454 = vpack.c.b16 %v2405, %v2405
  %v2455 = vpack.c.b16 %v2406, %v2406
  %v2456 = vpack.c.b16 %v2407, %v2407
  %v2457 = vpack.c.b16 %v2408, %v2408
  %v2458 = vpack.c.b16 %v2409, %v2409
  %v2459 = vpack.c.b16 %v2410, %v2410
  %v2460 = vpack.c.b16 %v2411, %v2411
  %v2461 = vpack.c.b16 %v2412, %v2412
  %v2462 = vpack.c.b16 %v2413, %v2413
  %v2463 = vpack.c.b16 %v2414, %v2414
  %v2464 = vpack.c.b16 %v2415, %v2415
  %v2465 = vpack.c.b16 %v2416, %v2416
  %v2466 = vpack.c.b16 %v2417, %v2417
  %v2467 = vpack.c.b16 %v2418, %v2418
  %v2468 = vpack.c.b16 %v2419, %v2419
  %v2469 = vpack.c.b16 %v2420, %v2420
  %v2470 = vpack.c.b16 %v2421, %v2421
  %v2471 = vpack.c.b16 %v2422, %v2422
  %v2472 = vpack.c.b16 %v2423, %v2423
  %v2473 = vpack.c.b16 %v2424, %v2424
  %v2474 = vpack.c.b16 %v2425, %v2425
  %v2475 = vpack.c.b16 %v2426, %v2426
  %v2476 = vpack.c.b16 %v2427, %v2427
  %v2477 = vpack.c.b16 %v2428, %v2428
  %v2478 = vpack.c.b16 %v2429, %v2429
  %v2479 = vpack.c.b16 %v2430, %v2430
  %v2480 = vpack.c.b16 %v2431, %v2431
  %v2481 = vpack.c.b16 %v2432, %v2432
  %v2482 = vpack.c.b16 %v2433, %v2433
  %v2483 = vpack.c.b16 %v2434, %v2434
  %v2484 = vpack.c.b16 %v2435, %v2435
  %v2485 = vpack.c.b16 %v2436, %v2436
  %v2486 = vpack.c.b16 %v2437, %v2437
  %v2487 = vpack.c.b16 %v2438, %v2438
  %v2488 = vpack.c.b16 %v2439, %v2439
  %v2489 = vpack.c.b16 %v2440, %v2440
  %v2490 = vpack.c.b16 %v2441, %v2441
  %v2491 = vpack.c.b16 %v2442, %v2442
  %v2492 = vpack.c.b16 %v2443, %v2443
  %v2493 = vpack.c.b16 %v2444, %v2444
  %v2494 = vpack.c.b16 %v2445, %v2445
  %v2495 = vpack.c.b16 %v2446, %v2446
  %v2496 = vpack.c.b16 %v2447, %v2447
  %v2497 = vpack.c.b16 %v2448, %v2448
  %v2498 = vpack.c.b16 %v2449, %v2449
  %2548 = vst [vmem:[%s4] sm:$0xf] %v2450
  %2549 = vst [vmem:[%s4 + $0x4] sm:$0xf] %v2451
  %2550 = vst [vmem:[%s4 + $0x8] sm:$0xf] %v2452
  %2551 = vst [vmem:[%s4 + $0xc] sm:$0xf] %v2453
  %2552 = vst [vmem:[%s4 + $0x10] sm:$0xf] %v2454
  %2553 = vst [vmem:[%s4 + $0x14] sm:$0xf] %v2455
  %2554 = vst [vmem:[%s4 + $0x18] sm:$0xf] %v2456
  %2555 = vst [vmem:[%s4 + $0x1c] sm:$0xf] %v2457
  %2556 = vst [vmem:[%s4 + $0x20] sm:$0xf] %v2458
  %2557 = vst [vmem:[%s4 + $0x24] sm:$0xf] %v2459
  %2558 = vst [vmem:[%s4 + $0x28] sm:$0xf] %v2460
  %2559 = vst [vmem:[%s4 + $0x2c] sm:$0xf] %v2461
  %2560 = vst [vmem:[%s4 + $0x30] sm:$0xf] %v2462
  %2561 = vst [vmem:[%s4 + $0x34] sm:$0xf] %v2463
  %2562 = vst [vmem:[%s4 + $0x38] sm:$0xf] %v2464
  %2563 = vst [vmem:[%s4 + $0x3c] sm:$0xf] %v2465
  %2564 = vst [vmem:[%s4 + $0x40] sm:$0xf] %v2466
  %2565 = vst [vmem:[%s4 + $0x44] sm:$0xf] %v2467
  %2566 = vst [vmem:[%s4 + $0x48] sm:$0xf] %v2468
  %2567 = vst [vmem:[%s4 + $0x4c] sm:$0xf] %v2469
  %2568 = vst [vmem:[%s4 + $0x50] sm:$0xf] %v2470
  %2569 = vst [vmem:[%s4 + $0x54] sm:$0xf] %v2471
  %2570 = vst [vmem:[%s4 + $0x58] sm:$0xf] %v2472
  %2571 = vst [vmem:[%s4 + $0x5c] sm:$0xf] %v2473
  %2572 = vst [vmem:[%s4 + $0x60] sm:$0xf] %v2474
  %2573 = vst [vmem:[%s4 + $0x64] sm:$0xf] %v2475
  %2574 = vst [vmem:[%s4 + $0x68] sm:$0xf] %v2476
  %2575 = vst [vmem:[%s4 + $0x6c] sm:$0xf] %v2477
  %2576 = vst [vmem:[%s4 + $0x70] sm:$0xf] %v2478
  %2577 = vst [vmem:[%s4 + $0x74] sm:$0xf] %v2479
  %2578 = vst [vmem:[%s4 + $0x78] sm:$0xf] %v2480
  %2579 = vst [vmem:[%s4 + $0x7c] sm:$0xf] %v2481
  %2580 = vst [vmem:[%s4 + $0x80] sm:$0xf] %v2482
  %2581 = vst [vmem:[%s4 + $0x84] sm:$0xf] %v2483
  %2582 = vst [vmem:[%s4 + $0x88] sm:$0xf] %v2484
  %2583 = vst [vmem:[%s4 + $0x8c] sm:$0xf] %v2485
  %2584 = vst [vmem:[%s4 + $0x90] sm:$0xf] %v2486
  %2585 = vst [vmem:[%s4 + $0x94] sm:$0xf] %v2487
  %2586 = vst [vmem:[%s4 + $0x98] sm:$0xf] %v2488
  %2587 = vst [vmem:[%s4 + $0x9c] sm:$0xf] %v2489
  %2588 = vst [vmem:[%s4 + $0xa0] sm:$0xf] %v2490
  %2589 = vst [vmem:[%s4 + $0xa4] sm:$0xf] %v2491
  %2590 = vst [vmem:[%s4 + $0xa8] sm:$0xf] %v2492
  %2591 = vst [vmem:[%s4 + $0xac] sm:$0xf] %v2493
  %2592 = vst [vmem:[%s4 + $0xb0] sm:$0xf] %v2494
  %2593 = vst [vmem:[%s4 + $0xb4] sm:$0xf] %v2495
  %2594 = vst [vmem:[%s4 + $0xb8] sm:$0xf] %v2496
  %2595 = vst [vmem:[%s4 + $0xbc] sm:$0xf] %v2497
  %2596 = vst [vmem:[%s4 + $0xc0] sm:$0xf] %v2498
  // Predicated region
  $region18: #{lenet_forward.2} parent=0 // pred_check
    _
  $region19: #{lenet_forward.2} parent=0 // pred_check_branch
    %2598 = sbr.rel (0) target = $region21
  $region20: #{lenet_forward.2} parent=0 // pred_region
    _
  $region21: #{lenet_forward.2} parent=0 // pred_fallthru
    _
  // Predicated region
  $region22: #{lenet_forward.2} parent=0 // pred_check
    _
  $region23: #{lenet_forward.2} parent=0 // pred_check_branch
    %2600 = sbr.rel (0) target = $region25
  $region24: #{lenet_forward.2} parent=0 // pred_region
    _
  $region25: #{lenet_forward.2} parent=0 // pred_fallthru
    _

// kernel: lenet_forward.3
$region0: #{lenet_forward.3}
  #allocation0 [shape = 'u32[]', space=smem, size = 0x4, offset = 0x4, fixed_abs, tag = 'smem constant byte address 0x4 - core index']
  #allocation1 [shape = 'u32[144,128]{1,0:T(1,128)}', space=vmem, size = 0x12000, scoped, tag = 'internal scratch']
  #allocation2 [shape = 'f32[64,64]{1,0:T(8,128)}', space=vmem, size = 0x8000, scoped, tag = 'scratch operand']
  %s0 = inlined_call_operand.vmem [shape: bf16[256,512], index: 0, kind: input, shape index: {}]
  %s1 = inlined_call_operand.vmem [shape: bf16[512,64], index: 1, kind: input, shape index: {}]
  %s2 = inlined_call_operand.vmem [shape: f32[1,64], index: 2, kind: input, shape index: {}]
  %s3 = inlined_call_operand.vmem [shape: f32[1,64], index: 3, kind: input, shape index: {}]
  %s4 = inlined_call_operand.vmem [shape: bf16[1600,512], index: 4, kind: input, shape index: {}]
  %s5 = inlined_call_operand.vmem [shape: f32[1,512], index: 5, kind: input, shape index: {}]
  %s6 = inlined_call_operand.vmem [shape: f32[1,512], index: 6, kind: input, shape index: {}]
  %s7 = inlined_call_operand.vmem [shape: bf16[512,128], index: 7, kind: input, shape index: {}]
  %s8 = inlined_call_operand.vmem [shape: f32[1,128], index: 8, kind: input, shape index: {}]
  %s9 = inlined_call_operand.hbm [shape: f32[2,128], index: 9, kind: output, shape index: {}]
  %s10 = sld [smem:[#allocation0]]
  $region46: #{lenet_forward.3} parent=0
    _
  %s12 = ssub.s32 1, %s10
  %s13 = scalar_select 0, %s12, %s10
  $region1: #{lenet_forward.3} parent=0
    #allocation3 [shape = 'u8[1024]{0}', space=vmem, size = 0x400, scoped, tag = 'output window, operand 0, single buffered']
    #allocation4 [shape = 's32[1]{0}', space=sflag, size = 0x4, scoped, tag = 'scoped memory for lenet_forward.3']
    %14 = vsyncpa [#allocation4], 0
    // Predicated region
    $region2: #{lenet_forward.3} parent=1 // pred_check
      _
    $region3: #{lenet_forward.3} parent=1 // pred_check_branch
      %16 = sbr.rel (0) target = $region5
    $region4: #{lenet_forward.3} parent=1 // pred_region
      _
    $region5: #{lenet_forward.3} parent=1 // pred_fallthru
      _
    // Predicated region
    $region6: #{lenet_forward.3} parent=1 // pred_check
      _
    $region7: #{lenet_forward.3} parent=1 // pred_check_branch
      %18 = sbr.rel (0) target = $region9
    $region8: #{lenet_forward.3} parent=1 // pred_region
      _
    $region9: #{lenet_forward.3} parent=1 // pred_fallthru
      _
    // Predicated region
    $region10: #{lenet_forward.3} parent=1 // pred_check
      _
    $region11: #{lenet_forward.3} parent=1 // pred_check_branch
      %20 = sbr.rel (0) target = $region13
    $region12: #{lenet_forward.3} parent=1 // pred_region
      _
    $region13: #{lenet_forward.3} parent=1 // pred_fallthru
      _
    // Predicated region
    $region14: #{lenet_forward.3} parent=1 // pred_check
      _
    $region15: #{lenet_forward.3} parent=1 // pred_check_branch
      %22 = sbr.rel (0) target = $region17
    $region16: #{lenet_forward.3} parent=1 // pred_region
      _
    $region17: #{lenet_forward.3} parent=1 // pred_fallthru
      _
    // Predicated region
    $region18: #{lenet_forward.3} parent=1 // pred_check
      _
    $region19: #{lenet_forward.3} parent=1 // pred_check_branch
      %24 = sbr.rel (0) target = $region21
    $region20: #{lenet_forward.3} parent=1 // pred_region
      _
    $region21: #{lenet_forward.3} parent=1 // pred_fallthru
      _
    // Predicated region
    $region22: #{lenet_forward.3} parent=1 // pred_check
      _
    $region23: #{lenet_forward.3} parent=1 // pred_check_branch
      %26 = sbr.rel (0) target = $region25
    $region24: #{lenet_forward.3} parent=1 // pred_region
      _
    $region25: #{lenet_forward.3} parent=1 // pred_fallthru
      _
    // Predicated region
    $region26: #{lenet_forward.3} parent=1 // pred_check
      _
    $region27: #{lenet_forward.3} parent=1 // pred_check_branch
      %28 = sbr.rel (0) target = $region29
    $region28: #{lenet_forward.3} parent=1 // pred_region
      _
    $region29: #{lenet_forward.3} parent=1 // pred_fallthru
      _
    // Predicated region
    $region30: #{lenet_forward.3} parent=1 // pred_check
      _
    $region31: #{lenet_forward.3} parent=1 // pred_check_branch
      %30 = sbr.rel (0) target = $region33
    $region32: #{lenet_forward.3} parent=1 // pred_region
      _
    $region33: #{lenet_forward.3} parent=1 // pred_fallthru
      _
    // Predicated region
    $region34: #{lenet_forward.3} parent=1 // pred_check
      _
    $region35: #{lenet_forward.3} parent=1 // pred_check_branch
      %32 = sbr.rel (0) target = $region37
    $region36: #{lenet_forward.3} parent=1 // pred_region
      _
    $region37: #{lenet_forward.3} parent=1 // pred_fallthru
      _
    %v34 = vld [vmem:[%s0] sm:$0xff]
    %v35 = vld [vmem:[%s0 + $0x8] sm:$0xff]
    %v36 = vld [vmem:[%s0 + $0x10] sm:$0xff]
    %v37 = vld [vmem:[%s0 + $0x18] sm:$0xff]
    %v38 = vld [vmem:[%s0 + $0x20] sm:$0xff]
    %v39 = vld [vmem:[%s0 + $0x28] sm:$0xff]
    %v40 = vld [vmem:[%s0 + $0x30] sm:$0xff]
    %v41 = vld [vmem:[%s0 + $0x38] sm:$0xff]
    %v42 = vld [vmem:[%s0 + $0x40] sm:$0xff]
    %v43 = vld [vmem:[%s0 + $0x48] sm:$0xff]
    %v44 = vld [vmem:[%s0 + $0x50] sm:$0xff]
    %v45 = vld [vmem:[%s0 + $0x58] sm:$0xff]
    %v46 = vld [vmem:[%s0 + $0x60] sm:$0xff]
    %v47 = vld [vmem:[%s0 + $0x68] sm:$0xff]
    %v48 = vld [vmem:[%s0 + $0x70] sm:$0xff]
    %v49 = vld [vmem:[%s0 + $0x78] sm:$0xff]
    %v50 = vld [vmem:[%s0 + $0x80] sm:$0xff]
    %v51 = vld [vmem:[%s0 + $0x88] sm:$0xff]
    %v52 = vld [vmem:[%s0 + $0x90] sm:$0xff]
    %v53 = vld [vmem:[%s0 + $0x98] sm:$0xff]
    %v54 = vld [vmem:[%s0 + $0xa0] sm:$0xff]
    %v55 = vld [vmem:[%s0 + $0xa8] sm:$0xff]
    %v56 = vld [vmem:[%s0 + $0xb0] sm:$0xff]
    %v57 = vld [vmem:[%s0 + $0xb8] sm:$0xff]
    %v58 = vld [vmem:[%s0 + $0xc0] sm:$0xff]
    %v59 = vld [vmem:[%s0 + $0xc8] sm:$0xff]
    %v60 = vld [vmem:[%s0 + $0xd0] sm:$0xff]
    %v61 = vld [vmem:[%s0 + $0xd8] sm:$0xff]
    %v62 = vld [vmem:[%s0 + $0xe0] sm:$0xff]
    %v63 = vld [vmem:[%s0 + $0xe8] sm:$0xff]
    %v64 = vld [vmem:[%s0 + $0xf0] sm:$0xff]
    %v65 = vld [vmem:[%s0 + $0xf8] sm:$0xff]
    %v66 = vld [vmem:[%s0 + $0x100] sm:$0xff]
    %v67 = vld [vmem:[%s0 + $0x108] sm:$0xff]
    %v68 = vld [vmem:[%s0 + $0x110] sm:$0xff]
    %v69 = vld [vmem:[%s0 + $0x118] sm:$0xff]
    %v70 = vld [vmem:[%s0 + $0x120] sm:$0xff]
    %v71 = vld [vmem:[%s0 + $0x128] sm:$0xff]
    %v72 = vld [vmem:[%s0 + $0x130] sm:$0xff]
    %v73 = vld [vmem:[%s0 + $0x138] sm:$0xff]
    %v74 = vld [vmem:[%s0 + $0x140] sm:$0xff]
    %v75 = vld [vmem:[%s0 + $0x148] sm:$0xff]
    %v76 = vld [vmem:[%s0 + $0x150] sm:$0xff]
    %v77 = vld [vmem:[%s0 + $0x158] sm:$0xff]
    %v78 = vld [vmem:[%s0 + $0x160] sm:$0xff]
    %v79 = vld [vmem:[%s0 + $0x168] sm:$0xff]
    %v80 = vld [vmem:[%s0 + $0x170] sm:$0xff]
    %v81 = vld [vmem:[%s0 + $0x178] sm:$0xff]
    %v82 = vld [vmem:[%s0 + $0x180] sm:$0xff]
    %v83 = vld [vmem:[%s0 + $0x188] sm:$0xff]
    %v84 = vld [vmem:[%s0 + $0x190] sm:$0xff]
    %v85 = vld [vmem:[%s0 + $0x198] sm:$0xff]
    %v86 = vld [vmem:[%s0 + $0x1a0] sm:$0xff]
    %v87 = vld [vmem:[%s0 + $0x1a8] sm:$0xff]
    %v88 = vld [vmem:[%s0 + $0x1b0] sm:$0xff]
    %v89 = vld [vmem:[%s0 + $0x1b8] sm:$0xff]
    %v90 = vld [vmem:[%s0 + $0x1c0] sm:$0xff]
    %v91 = vld [vmem:[%s0 + $0x1c8] sm:$0xff]
    %v92 = vld [vmem:[%s0 + $0x1d0] sm:$0xff]
    %v93 = vld [vmem:[%s0 + $0x1d8] sm:$0xff]
    %v94 = vld [vmem:[%s0 + $0x1e0] sm:$0xff]
    %v95 = vld [vmem:[%s0 + $0x1e8] sm:$0xff]
    %v96 = vld [vmem:[%s0 + $0x1f0] sm:$0xff]
    %v97 = vld [vmem:[%s0 + $0x1f8] sm:$0xff]
    %v98 = vld [vmem:[%s1] sm:$0xf]
    %v99 = vld [vmem:[%s1 + $0x4] sm:$0xf]
    %v100 = vld [vmem:[%s1 + $0x8] sm:$0xf]
    %v101 = vld [vmem:[%s1 + $0xc] sm:$0xf]
    %v102 = vld [vmem:[%s1 + $0x10] sm:$0xf]
    %v103 = vld [vmem:[%s1 + $0x14] sm:$0xf]
    %v104 = vld [vmem:[%s1 + $0x18] sm:$0xf]
    %v105 = vld [vmem:[%s1 + $0x1c] sm:$0xf]
    %v106 = vld [vmem:[%s1 + $0x20] sm:$0xf]
    %v107 = vld [vmem:[%s1 + $0x24] sm:$0xf]
    %v108 = vld [vmem:[%s1 + $0x28] sm:$0xf]
    %v109 = vld [vmem:[%s1 + $0x2c] sm:$0xf]
    %v110 = vld [vmem:[%s1 + $0x30] sm:$0xf]
    %v111 = vld [vmem:[%s1 + $0x34] sm:$0xf]
    %v112 = vld [vmem:[%s1 + $0x38] sm:$0xf]
    %v113 = vld [vmem:[%s1 + $0x3c] sm:$0xf]
    %v114 = vld [vmem:[%s1 + $0x40] sm:$0xf]
    %v115 = vld [vmem:[%s1 + $0x44] sm:$0xf]
    %v116 = vld [vmem:[%s1 + $0x48] sm:$0xf]
    %v117 = vld [vmem:[%s1 + $0x4c] sm:$0xf]
    %v118 = vld [vmem:[%s1 + $0x50] sm:$0xf]
    %v119 = vld [vmem:[%s1 + $0x54] sm:$0xf]
    %v120 = vld [vmem:[%s1 + $0x58] sm:$0xf]
    %v121 = vld [vmem:[%s1 + $0x5c] sm:$0xf]
    %v122 = vld [vmem:[%s1 + $0x60] sm:$0xf]
    %v123 = vld [vmem:[%s1 + $0x64] sm:$0xf]
    %v124 = vld [vmem:[%s1 + $0x68] sm:$0xf]
    %v125 = vld [vmem:[%s1 + $0x6c] sm:$0xf]
    %v126 = vld [vmem:[%s1 + $0x70] sm:$0xf]
    %v127 = vld [vmem:[%s1 + $0x74] sm:$0xf]
    %v128 = vld [vmem:[%s1 + $0x78] sm:$0xf]
    %v129 = vld [vmem:[%s1 + $0x7c] sm:$0xf]
    %v130 = vld [vmem:[%s1 + $0x80] sm:$0xf]
    %v131 = vld [vmem:[%s1 + $0x84] sm:$0xf]
    %v132 = vld [vmem:[%s1 + $0x88] sm:$0xf]
    %v133 = vld [vmem:[%s1 + $0x8c] sm:$0xf]
    %v134 = vld [vmem:[%s1 + $0x90] sm:$0xf]
    %v135 = vld [vmem:[%s1 + $0x94] sm:$0xf]
    %v136 = vld [vmem:[%s1 + $0x98] sm:$0xf]
    %v137 = vld [vmem:[%s1 + $0x9c] sm:$0xf]
    %v138 = vld [vmem:[%s1 + $0xa0] sm:$0xf]
    %v139 = vld [vmem:[%s1 + $0xa4] sm:$0xf]
    %v140 = vld [vmem:[%s1 + $0xa8] sm:$0xf]
    %v141 = vld [vmem:[%s1 + $0xac] sm:$0xf]
    %v142 = vld [vmem:[%s1 + $0xb0] sm:$0xf]
    %v143 = vld [vmem:[%s1 + $0xb4] sm:$0xf]
    %v144 = vld [vmem:[%s1 + $0xb8] sm:$0xf]
    %v145 = vld [vmem:[%s1 + $0xbc] sm:$0xf]
    %v146 = vld [vmem:[%s1 + $0xc0] sm:$0xf]
    %v147 = vld [vmem:[%s1 + $0xc4] sm:$0xf]
    %v148 = vld [vmem:[%s1 + $0xc8] sm:$0xf]
    %v149 = vld [vmem:[%s1 + $0xcc] sm:$0xf]
    %v150 = vld [vmem:[%s1 + $0xd0] sm:$0xf]
    %v151 = vld [vmem:[%s1 + $0xd4] sm:$0xf]
    %v152 = vld [vmem:[%s1 + $0xd8] sm:$0xf]
    %v153 = vld [vmem:[%s1 + $0xdc] sm:$0xf]
    %v154 = vld [vmem:[%s1 + $0xe0] sm:$0xf]
    %v155 = vld [vmem:[%s1 + $0xe4] sm:$0xf]
    %v156 = vld [vmem:[%s1 + $0xe8] sm:$0xf]
    %v157 = vld [vmem:[%s1 + $0xec] sm:$0xf]
    %v158 = vld [vmem:[%s1 + $0xf0] sm:$0xf]
    %v159 = vld [vmem:[%s1 + $0xf4] sm:$0xf]
    %v160 = vld [vmem:[%s1 + $0xf8] sm:$0xf]
    %v161 = vld [vmem:[%s1 + $0xfc] sm:$0xf]
    %v162 = vld [vmem:[%s2] sm:$0x1]
    %v164 = vlaneseq
    %v165 = vshrl.u32 %v164, 7
    %v166 = vsub.s32 0, %v165
    %v167 = vrot.slane %v162, %v166
    %v233 = vunpack.c.l.b16 %v34
    %v234 = vunpack.c.h.b16 %v34
    %v235 = vunpack.c.l.b16 %v35
    %v236 = vunpack.c.h.b16 %v35
    %v237 = vunpack.c.l.b16 %v36
    %v238 = vunpack.c.h.b16 %v36
    %v239 = vunpack.c.l.b16 %v37
    %v240 = vunpack.c.h.b16 %v37
    %v241 = vunpack.c.l.b16 %v38
    %v242 = vunpack.c.h.b16 %v38
    %v243 = vunpack.c.l.b16 %v39
    %v244 = vunpack.c.h.b16 %v39
    %v245 = vunpack.c.l.b16 %v40
    %v246 = vunpack.c.h.b16 %v40
    %v247 = vunpack.c.l.b16 %v41
    %v248 = vunpack.c.h.b16 %v41
    %v249 = vunpack.c.l.b16 %v42
    %v250 = vunpack.c.h.b16 %v42
    %v251 = vunpack.c.l.b16 %v43
    %v252 = vunpack.c.h.b16 %v43
    %v253 = vunpack.c.l.b16 %v44
    %v254 = vunpack.c.h.b16 %v44
    %v255 = vunpack.c.l.b16 %v45
    %v256 = vunpack.c.h.b16 %v45
    %v257 = vunpack.c.l.b16 %v46
    %v258 = vunpack.c.h.b16 %v46
    %v259 = vunpack.c.l.b16 %v47
    %v260 = vunpack.c.h.b16 %v47
    %v261 = vunpack.c.l.b16 %v48
    %v262 = vunpack.c.h.b16 %v48
    %v263 = vunpack.c.l.b16 %v49
    %v264 = vunpack.c.h.b16 %v49
    %v265 = vunpack.c.l.b16 %v50
    %v266 = vunpack.c.h.b16 %v50
    %v267 = vunpack.c.l.b16 %v51
    %v268 = vunpack.c.h.b16 %v51
    %v269 = vunpack.c.l.b16 %v52
    %v270 = vunpack.c.h.b16 %v52
    %v271 = vunpack.c.l.b16 %v53
    %v272 = vunpack.c.h.b16 %v53
    %v273 = vunpack.c.l.b16 %v54
    %v274 = vunpack.c.h.b16 %v54
    %v275 = vunpack.c.l.b16 %v55
    %v276 = vunpack.c.h.b16 %v55
    %v277 = vunpack.c.l.b16 %v56
    %v278 = vunpack.c.h.b16 %v56
    %v279 = vunpack.c.l.b16 %v57
    %v280 = vunpack.c.h.b16 %v57
    %v281 = vunpack.c.l.b16 %v58
    %v282 = vunpack.c.h.b16 %v58
    %v283 = vunpack.c.l.b16 %v59
    %v284 = vunpack.c.h.b16 %v59
    %v285 = vunpack.c.l.b16 %v60
    %v286 = vunpack.c.h.b16 %v60
    %v287 = vunpack.c.l.b16 %v61
    %v288 = vunpack.c.h.b16 %v61
    %v289 = vunpack.c.l.b16 %v62
    %v290 = vunpack.c.h.b16 %v62
    %v291 = vunpack.c.l.b16 %v63
    %v292 = vunpack.c.h.b16 %v63
    %v293 = vunpack.c.l.b16 %v64
    %v294 = vunpack.c.h.b16 %v64
    %v295 = vunpack.c.l.b16 %v65
    %v296 = vunpack.c.h.b16 %v65
    %v297 = vunpack.c.l.b16 %v66
    %v298 = vunpack.c.h.b16 %v66
    %v299 = vunpack.c.l.b16 %v67
    %v300 = vunpack.c.h.b16 %v67
    %v301 = vunpack.c.l.b16 %v68
    %v302 = vunpack.c.h.b16 %v68
    %v303 = vunpack.c.l.b16 %v69
    %v304 = vunpack.c.h.b16 %v69
    %v305 = vunpack.c.l.b16 %v70
    %v306 = vunpack.c.h.b16 %v70
    %v307 = vunpack.c.l.b16 %v71
    %v308 = vunpack.c.h.b16 %v71
    %v309 = vunpack.c.l.b16 %v72
    %v310 = vunpack.c.h.b16 %v72
    %v311 = vunpack.c.l.b16 %v73
    %v312 = vunpack.c.h.b16 %v73
    %v313 = vunpack.c.l.b16 %v74
    %v314 = vunpack.c.h.b16 %v74
    %v315 = vunpack.c.l.b16 %v75
    %v316 = vunpack.c.h.b16 %v75
    %v317 = vunpack.c.l.b16 %v76
    %v318 = vunpack.c.h.b16 %v76
    %v319 = vunpack.c.l.b16 %v77
    %v320 = vunpack.c.h.b16 %v77
    %v321 = vunpack.c.l.b16 %v78
    %v322 = vunpack.c.h.b16 %v78
    %v323 = vunpack.c.l.b16 %v79
    %v324 = vunpack.c.h.b16 %v79
    %v325 = vunpack.c.l.b16 %v80
    %v326 = vunpack.c.h.b16 %v80
    %v327 = vunpack.c.l.b16 %v81
    %v328 = vunpack.c.h.b16 %v81
    %v329 = vunpack.c.l.b16 %v82
    %v330 = vunpack.c.h.b16 %v82
    %v331 = vunpack.c.l.b16 %v83
    %v332 = vunpack.c.h.b16 %v83
    %v333 = vunpack.c.l.b16 %v84
    %v334 = vunpack.c.h.b16 %v84
    %v335 = vunpack.c.l.b16 %v85
    %v336 = vunpack.c.h.b16 %v85
    %v337 = vunpack.c.l.b16 %v86
    %v338 = vunpack.c.h.b16 %v86
    %v339 = vunpack.c.l.b16 %v87
    %v340 = vunpack.c.h.b16 %v87
    %v341 = vunpack.c.l.b16 %v88
    %v342 = vunpack.c.h.b16 %v88
    %v343 = vunpack.c.l.b16 %v89
    %v344 = vunpack.c.h.b16 %v89
    %v345 = vunpack.c.l.b16 %v90
    %v346 = vunpack.c.h.b16 %v90
    %v347 = vunpack.c.l.b16 %v91
    %v348 = vunpack.c.h.b16 %v91
    %v349 = vunpack.c.l.b16 %v92
    %v350 = vunpack.c.h.b16 %v92
    %v351 = vunpack.c.l.b16 %v93
    %v352 = vunpack.c.h.b16 %v93
    %v353 = vunpack.c.l.b16 %v94
    %v354 = vunpack.c.h.b16 %v94
    %v355 = vunpack.c.l.b16 %v95
    %v356 = vunpack.c.h.b16 %v95
    %v357 = vunpack.c.l.b16 %v96
    %v358 = vunpack.c.h.b16 %v96
    %v359 = vunpack.c.l.b16 %v97
    %v360 = vunpack.c.h.b16 %v97
    %v361 = vpack.c.b16 %v237, %v233
    %v362 = vpack.c.b16 %v238, %v234
    %v363 = vpack.c.b16 %v239, %v235
    %v364 = vpack.c.b16 %v240, %v236
    %v365 = vpack.c.b16 %v245, %v241
    %v366 = vpack.c.b16 %v246, %v242
    %v367 = vpack.c.b16 %v247, %v243
    %v368 = vpack.c.b16 %v248, %v244
    %v369 = vpack.c.b16 %v253, %v249
    %v370 = vpack.c.b16 %v254, %v250
    %v371 = vpack.c.b16 %v255, %v251
    %v372 = vpack.c.b16 %v256, %v252
    %v373 = vpack.c.b16 %v261, %v257
    %v374 = vpack.c.b16 %v262, %v258
    %v375 = vpack.c.b16 %v263, %v259
    %v376 = vpack.c.b16 %v264, %v260
    %v377 = vpack.c.b16 %v269, %v265
    %v378 = vpack.c.b16 %v270, %v266
    %v379 = vpack.c.b16 %v271, %v267
    %v380 = vpack.c.b16 %v272, %v268
    %v381 = vpack.c.b16 %v277, %v273
    %v382 = vpack.c.b16 %v278, %v274
    %v383 = vpack.c.b16 %v279, %v275
    %v384 = vpack.c.b16 %v280, %v276
    %v385 = vpack.c.b16 %v285, %v281
    %v386 = vpack.c.b16 %v286, %v282
    %v387 = vpack.c.b16 %v287, %v283
    %v388 = vpack.c.b16 %v288, %v284
    %v389 = vpack.c.b16 %v293, %v289
    %v390 = vpack.c.b16 %v294, %v290
    %v391 = vpack.c.b16 %v295, %v291
    %v392 = vpack.c.b16 %v296, %v292
    %v393 = vpack.c.b16 %v301, %v297
    %v394 = vpack.c.b16 %v302, %v298
    %v395 = vpack.c.b16 %v303, %v299
    %v396 = vpack.c.b16 %v304, %v300
    %v397 = vpack.c.b16 %v309, %v305
    %v398 = vpack.c.b16 %v310, %v306
    %v399 = vpack.c.b16 %v311, %v307
    %v400 = vpack.c.b16 %v312, %v308
    %v401 = vpack.c.b16 %v317, %v313
    %v402 = vpack.c.b16 %v318, %v314
    %v403 = vpack.c.b16 %v319, %v315
    %v404 = vpack.c.b16 %v320, %v316
    %v405 = vpack.c.b16 %v325, %v321
    %v406 = vpack.c.b16 %v326, %v322
    %v407 = vpack.c.b16 %v327, %v323
    %v408 = vpack.c.b16 %v328, %v324
    %v409 = vpack.c.b16 %v333, %v329
    %v410 = vpack.c.b16 %v334, %v330
    %v411 = vpack.c.b16 %v335, %v331
    %v412 = vpack.c.b16 %v336, %v332
    %v413 = vpack.c.b16 %v341, %v337
    %v414 = vpack.c.b16 %v342, %v338
    %v415 = vpack.c.b16 %v343, %v339
    %v416 = vpack.c.b16 %v344, %v340
    %v417 = vpack.c.b16 %v349, %v345
    %v418 = vpack.c.b16 %v350, %v346
    %v419 = vpack.c.b16 %v351, %v347
    %v420 = vpack.c.b16 %v352, %v348
    %v421 = vpack.c.b16 %v357, %v353
    %v422 = vpack.c.b16 %v358, %v354
    %v423 = vpack.c.b16 %v359, %v355
    %v424 = vpack.c.b16 %v360, %v356
    %v553 = vunpack.c.l.b16 %v98
    %v554 = vunpack.c.l.b16 %v99
    %v555 = vunpack.c.l.b16 %v100
    %v556 = vunpack.c.l.b16 %v101
    %v557 = vunpack.c.l.b16 %v102
    %v558 = vunpack.c.l.b16 %v103
    %v559 = vunpack.c.l.b16 %v104
    %v560 = vunpack.c.l.b16 %v105
    %v561 = vunpack.c.l.b16 %v106
    %v562 = vunpack.c.l.b16 %v107
    %v563 = vunpack.c.l.b16 %v108
    %v564 = vunpack.c.l.b16 %v109
    %v565 = vunpack.c.l.b16 %v110
    %v566 = vunpack.c.l.b16 %v111
    %v567 = vunpack.c.l.b16 %v112
    %v568 = vunpack.c.l.b16 %v113
    %v569 = vunpack.c.l.b16 %v114
    %v570 = vunpack.c.l.b16 %v115
    %v571 = vunpack.c.l.b16 %v116
    %v572 = vunpack.c.l.b16 %v117
    %v573 = vunpack.c.l.b16 %v118
    %v574 = vunpack.c.l.b16 %v119
    %v575 = vunpack.c.l.b16 %v120
    %v576 = vunpack.c.l.b16 %v121
    %v577 = vunpack.c.l.b16 %v122
    %v578 = vunpack.c.l.b16 %v123
    %v579 = vunpack.c.l.b16 %v124
    %v580 = vunpack.c.l.b16 %v125
    %v581 = vunpack.c.l.b16 %v126
    %v582 = vunpack.c.l.b16 %v127
    %v583 = vunpack.c.l.b16 %v128
    %v584 = vunpack.c.l.b16 %v129
    %v585 = vunpack.c.l.b16 %v130
    %v586 = vunpack.c.l.b16 %v131
    %v587 = vunpack.c.l.b16 %v132
    %v588 = vunpack.c.l.b16 %v133
    %v589 = vunpack.c.l.b16 %v134
    %v590 = vunpack.c.l.b16 %v135
    %v591 = vunpack.c.l.b16 %v136
    %v592 = vunpack.c.l.b16 %v137
    %v593 = vunpack.c.l.b16 %v138
    %v594 = vunpack.c.l.b16 %v139
    %v595 = vunpack.c.l.b16 %v140
    %v596 = vunpack.c.l.b16 %v141
    %v597 = vunpack.c.l.b16 %v142
    %v598 = vunpack.c.l.b16 %v143
    %v599 = vunpack.c.l.b16 %v144
    %v600 = vunpack.c.l.b16 %v145
    %v601 = vunpack.c.l.b16 %v146
    %v602 = vunpack.c.l.b16 %v147
    %v603 = vunpack.c.l.b16 %v148
    %v604 = vunpack.c.l.b16 %v149
    %v605 = vunpack.c.l.b16 %v150
    %v606 = vunpack.c.l.b16 %v151
    %v607 = vunpack.c.l.b16 %v152
    %v608 = vunpack.c.l.b16 %v153
    %v609 = vunpack.c.l.b16 %v154
    %v610 = vunpack.c.l.b16 %v155
    %v611 = vunpack.c.l.b16 %v156
    %v612 = vunpack.c.l.b16 %v157
    %v613 = vunpack.c.l.b16 %v158
    %v614 = vunpack.c.l.b16 %v159
    %v615 = vunpack.c.l.b16 %v160
    %v616 = vunpack.c.l.b16 %v161
    %v617 = vpack.c.b16 %v554, %v553
    %v618 = vpack.c.b16 %v556, %v555
    %v619 = vpack.c.b16 %v558, %v557
    %v620 = vpack.c.b16 %v560, %v559
    %v621 = vpack.c.b16 %v562, %v561
    %v622 = vpack.c.b16 %v564, %v563
    %v623 = vpack.c.b16 %v566, %v565
    %v624 = vpack.c.b16 %v568, %v567
    %v625 = vpack.c.b16 %v570, %v569
    %v626 = vpack.c.b16 %v572, %v571
    %v627 = vpack.c.b16 %v574, %v573
    %v628 = vpack.c.b16 %v576, %v575
    %v629 = vpack.c.b16 %v578, %v577
    %v630 = vpack.c.b16 %v580, %v579
    %v631 = vpack.c.b16 %v582, %v581
    %v632 = vpack.c.b16 %v584, %v583
    %v633 = vpack.c.b16 %v586, %v585
    %v634 = vpack.c.b16 %v588, %v587
    %v635 = vpack.c.b16 %v590, %v589
    %v636 = vpack.c.b16 %v592, %v591
    %v637 = vpack.c.b16 %v594, %v593
    %v638 = vpack.c.b16 %v596, %v595
    %v639 = vpack.c.b16 %v598, %v597
    %v640 = vpack.c.b16 %v600, %v599
    %v641 = vpack.c.b16 %v602, %v601
    %v642 = vpack.c.b16 %v604, %v603
    %v643 = vpack.c.b16 %v606, %v605
    %v644 = vpack.c.b16 %v608, %v607
    %v645 = vpack.c.b16 %v610, %v609
    %v646 = vpack.c.b16 %v612, %v611
    %v647 = vpack.c.b16 %v614, %v613
    %v648 = vpack.c.b16 %v616, %v615
    %681 = vmatprep.subr.bf16.mxu0 0
    %682 = vmatpush1.bf16.msra.mxu0 %v617
    %683 = vmatprep.subr.bf16.mxu0 0
    %684 = vmatpush1.bf16.msra.mxu0 %v618
    %685 = vmatprep.subr.bf16.mxu0 0
    %686 = vmatpush1.bf16.msra.mxu0 %v619
    %687 = vmatprep.subr.bf16.mxu0 0
    %688 = vmatpush1.bf16.msra.mxu0 %v620
    %689 = vmatprep.subr.bf16.mxu0 0
    %690 = vmatpush1.bf16.msra.mxu0 %v621
    %691 = vmatprep.subr.bf16.mxu0 0
    %692 = vmatpush1.bf16.msra.mxu0 %v622
    %693 = vmatprep.subr.bf16.mxu0 0
    %694 = vmatpush1.bf16.msra.mxu0 %v623
    %695 = vmatprep.subr.bf16.mxu0 0
    %696 = vmatpush1.bf16.msra.mxu0 %v624
    %697 = vmatprep.subr.bf16.mxu0 0
    %698 = vmatpush1.bf16.msra.mxu0 %v625
    %699 = vmatprep.subr.bf16.mxu0 0
    %700 = vmatpush1.bf16.msra.mxu0 %v626
    %701 = vmatprep.subr.bf16.mxu0 0
    %702 = vmatpush1.bf16.msra.mxu0 %v627
    %703 = vmatprep.subr.bf16.mxu0 0
    %704 = vmatpush1.bf16.msra.mxu0 %v628
    %705 = vmatprep.subr.bf16.mxu0 0
    %706 = vmatpush1.bf16.msra.mxu0 %v629
    %707 = vmatprep.subr.bf16.mxu0 0
    %708 = vmatpush1.bf16.msra.mxu0 %v630
    %709 = vmatprep.subr.bf16.mxu0 0
    %710 = vmatpush1.bf16.msra.mxu0 %v631
    %711 = vmatprep.subr.bf16.mxu0 0
    %712 = vmatpush1.bf16.msra.mxu0 %v632
    %713 = vmatprep.mubr.bf16.mxu0 %v362
    %714 = vmatmul.mubr.bf16.gmra.mrb[0].mxu0 %v361
    %v715 = vpop.f32.mrb[0].mxu0
    %v716 = vadd.f32 %v167, %v715
    %v717 = vpop.f32.mrb[0].mxu0
    %v718 = vpop.f32.mrb[0].mxu0
    %v719 = vadd.f32 %v167, %v718
    %v720 = vpop.f32.mrb[0].mxu0
    %721 = vmatprep.mubr.bf16.mxu0 %v366
    %722 = vmatmul.mubr.bf16.gmra.mrb[0].mxu0 %v365
    %v723 = vpop.f32.mrb[0].mxu0
    %v724 = vadd.f32 %v167, %v723
    %v725 = vpop.f32.mrb[0].mxu0
    %v726 = vpop.f32.mrb[0].mxu0
    %v727 = vadd.f32 %v167, %v726
    %v728 = vpop.f32.mrb[0].mxu0
    %729 = vmatprep.mubr.bf16.mxu0 %v370
    %730 = vmatmul.mubr.bf16.gmra.mrb[0].mxu0 %v369
    %v731 = vpop.f32.mrb[0].mxu0
    %v732 = vadd.f32 %v167, %v731
    %v733 = vpop.f32.mrb[0].mxu0
    %v734 = vpop.f32.mrb[0].mxu0
    %v735 = vadd.f32 %v167, %v734
    %v736 = vpop.f32.mrb[0].mxu0
    %737 = vmatprep.mubr.bf16.mxu0 %v374
    %738 = vmatmul.mubr.bf16.gmra.mrb[0].mxu0 %v373
    %v739 = vpop.f32.mrb[0].mxu0
    %v740 = vadd.f32 %v167, %v739
    %v741 = vpop.f32.mrb[0].mxu0
    %v742 = vpop.f32.mrb[0].mxu0
    %v743 = vadd.f32 %v167, %v742
    %v744 = vpop.f32.mrb[0].mxu0
    %745 = vmatprep.mubr.bf16.mxu0 %v378
    %746 = vmatmul.mubr.bf16.gmra.mrb[0].mxu0 %v377
    %v747 = vpop.f32.mrb[0].mxu0
    %v748 = vadd.f32 %v167, %v747
    %v749 = vpop.f32.mrb[0].mxu0
    %v750 = vpop.f32.mrb[0].mxu0
    %v751 = vadd.f32 %v167, %v750
    %v752 = vpop.f32.mrb[0].mxu0
    %753 = vmatprep.mubr.bf16.mxu0 %v382
    %754 = vmatmul.mubr.bf16.gmra.mrb[0].mxu0 %v381
    %v755 = vpop.f32.mrb[0].mxu0
    %v756 = vadd.f32 %v167, %v755
    %v757 = vpop.f32.mrb[0].mxu0
    %v758 = vpop.f32.mrb[0].mxu0
    %v759 = vadd.f32 %v167, %v758
    %v760 = vpop.f32.mrb[0].mxu0
    %761 = vmatprep.mubr.bf16.mxu0 %v386
    %762 = vmatmul.mubr.bf16.gmra.mrb[0].mxu0 %v385
    %v763 = vpop.f32.mrb[0].mxu0
    %v764 = vadd.f32 %v167, %v763
    %v765 = vpop.f32.mrb[0].mxu0
    %v766 = vpop.f32.mrb[0].mxu0
    %v767 = vadd.f32 %v167, %v766
    %v768 = vpop.f32.mrb[0].mxu0
    %769 = vmatprep.mubr.bf16.mxu0 %v390
    %770 = vmatmul.mubr.bf16.gmra.mrb[0].mxu0 %v389
    %v771 = vpop.f32.mrb[0].mxu0
    %v772 = vadd.f32 %v167, %v771
    %v773 = vpop.f32.mrb[0].mxu0
    %v774 = vpop.f32.mrb[0].mxu0
    %v775 = vadd.f32 %v167, %v774
    %v776 = vpop.f32.mrb[0].mxu0
    %777 = vmatprep.mubr.bf16.mxu0 %v394
    %778 = vmatmul.mubr.bf16.gmra.mrb[0].mxu0 %v393
    %v779 = vpop.f32.mrb[0].mxu0
    %v780 = vadd.f32 %v167, %v779
    %v781 = vpop.f32.mrb[0].mxu0
    %v782 = vpop.f32.mrb[0].mxu0
    %v783 = vadd.f32 %v167, %v782
    %v784 = vpop.f32.mrb[0].mxu0
    %785 = vmatprep.mubr.bf16.mxu0 %v398
    %786 = vmatmul.mubr.bf16.gmra.mrb[0].mxu0 %v397
    %v787 = vpop.f32.mrb[0].mxu0
    %v788 = vadd.f32 %v167, %v787
    %v789 = vpop.f32.mrb[0].mxu0
    %v790 = vpop.f32.mrb[0].mxu0
    %v791 = vadd.f32 %v167, %v790
    %v792 = vpop.f32.mrb[0].mxu0
    %793 = vmatprep.mubr.bf16.mxu0 %v402
    %794 = vmatmul.mubr.bf16.gmra.mrb[0].mxu0 %v401
    %v795 = vpop.f32.mrb[0].mxu0
    %v796 = vadd.f32 %v167, %v795
    %v797 = vpop.f32.mrb[0].mxu0
    %v798 = vpop.f32.mrb[0].mxu0
    %v799 = vadd.f32 %v167, %v798
    %v800 = vpop.f32.mrb[0].mxu0
    %801 = vmatprep.mubr.bf16.mxu0 %v406
    %802 = vmatmul.mubr.bf16.gmra.mrb[0].mxu0 %v405
    %v803 = vpop.f32.mrb[0].mxu0
    %v804 = vadd.f32 %v167, %v803
    %v805 = vpop.f32.mrb[0].mxu0
    %v806 = vpop.f32.mrb[0].mxu0
    %v807 = vadd.f32 %v167, %v806
    %v808 = vpop.f32.mrb[0].mxu0
    %809 = vmatprep.mubr.bf16.mxu0 %v410
    %810 = vmatmul.mubr.bf16.gmra.mrb[0].mxu0 %v409
    %v811 = vpop.f32.mrb[0].mxu0
    %v812 = vadd.f32 %v167, %v811
    %v813 = vpop.f32.mrb[0].mxu0
    %v814 = vpop.f32.mrb[0].mxu0
    %v815 = vadd.f32 %v167, %v814
    %v816 = vpop.f32.mrb[0].mxu0
    %817 = vmatprep.mubr.bf16.mxu0 %v414
    %818 = vmatmul.mubr.bf16.gmra.mrb[0].mxu0 %v413
    %v819 = vpop.f32.mrb[0].mxu0
    %v820 = vadd.f32 %v167, %v819
    %v821 = vpop.f32.mrb[0].mxu0
    %v822 = vpop.f32.mrb[0].mxu0
    %v823 = vadd.f32 %v167, %v822
    %v824 = vpop.f32.mrb[0].mxu0
    %825 = vmatprep.mubr.bf16.mxu0 %v418
    %826 = vmatmul.mubr.bf16.gmra.mrb[0].mxu0 %v417
    %v827 = vpop.f32.mrb[0].mxu0
    %v828 = vadd.f32 %v167, %v827
    %v829 = vpop.f32.mrb[0].mxu0
    %v830 = vpop.f32.mrb[0].mxu0
    %v831 = vadd.f32 %v167, %v830
    %v832 = vpop.f32.mrb[0].mxu0
    %833 = vmatprep.mubr.bf16.mxu0 %v422
    %834 = vmatmul.mubr.bf16.gmra.mrb[0].mxu0 %v421
    %v835 = vpop.f32.mrb[0].mxu0
    %v836 = vadd.f32 %v167, %v835
    %v837 = vpop.f32.mrb[0].mxu0
    %v838 = vpop.f32.mrb[0].mxu0
    %v839 = vadd.f32 %v167, %v838
    %v840 = vpop.f32.mrb[0].mxu0
    %841 = vdwg.mxu0
    %842 = vmatprep.subr.bf16.mxu0 0
    %843 = vmatpush1.bf16.msra.mxu0 %v633
    %844 = vmatprep.subr.bf16.mxu0 0
    %845 = vmatpush1.bf16.msra.mxu0 %v634
    %846 = vmatprep.subr.bf16.mxu0 0
    %847 = vmatpush1.bf16.msra.mxu0 %v635
    %848 = vmatprep.subr.bf16.mxu0 0
    %849 = vmatpush1.bf16.msra.mxu0 %v636
    %850 = vmatprep.subr.bf16.mxu0 0
    %851 = vmatpush1.bf16.msra.mxu0 %v637
    %852 = vmatprep.subr.bf16.mxu0 0
    %853 = vmatpush1.bf16.msra.mxu0 %v638
    %854 = vmatprep.subr.bf16.mxu0 0
    %855 = vmatpush1.bf16.msra.mxu0 %v639
    %856 = vmatprep.subr.bf16.mxu0 0
    %857 = vmatpush1.bf16.msra.mxu0 %v640
    %858 = vmatprep.subr.bf16.mxu0 0
    %859 = vmatpush1.bf16.msra.mxu0 %v641
    %860 = vmatprep.subr.bf16.mxu0 0
    %861 = vmatpush1.bf16.msra.mxu0 %v642
    %862 = vmatprep.subr.bf16.mxu0 0
    %863 = vmatpush1.bf16.msra.mxu0 %v643
    %864 = vmatprep.subr.bf16.mxu0 0
    %865 = vmatpush1.bf16.msra.mxu0 %v644
    %866 = vmatprep.subr.bf16.mxu0 0
    %867 = vmatpush1.bf16.msra.mxu0 %v645
    %868 = vmatprep.subr.bf16.mxu0 0
    %869 = vmatpush1.bf16.msra.mxu0 %v646
    %870 = vmatprep.subr.bf16.mxu0 0
    %871 = vmatpush1.bf16.msra.mxu0 %v647
    %872 = vmatprep.subr.bf16.mxu0 0
    %873 = vmatpush1.bf16.msra.mxu0 %v648
    %874 = vmatprep.mubr.bf16.mxu0 %v364
    %875 = vmatmul.mubr.bf16.gmra.mrb[0].mxu0 %v363
    %v876 = vpop.f32.mrb[0].mxu0
    %v877 = vadd.f32 %v716, %v876
    %v878 = vpop.f32.mrb[0].mxu0
    %v879 = vpop.f32.mrb[0].mxu0
    %v880 = vadd.f32 %v719, %v879
    %v881 = vpop.f32.mrb[0].mxu0
    %882 = vmatprep.mubr.bf16.mxu0 %v368
    %883 = vmatmul.mubr.bf16.gmra.mrb[0].mxu0 %v367
    %v884 = vpop.f32.mrb[0].mxu0
    %v885 = vadd.f32 %v724, %v884
    %v886 = vpop.f32.mrb[0].mxu0
    %v887 = vpop.f32.mrb[0].mxu0
    %v888 = vadd.f32 %v727, %v887
    %v889 = vpop.f32.mrb[0].mxu0
    %890 = vmatprep.mubr.bf16.mxu0 %v372
    %891 = vmatmul.mubr.bf16.gmra.mrb[0].mxu0 %v371
    %v892 = vpop.f32.mrb[0].mxu0
    %v893 = vadd.f32 %v732, %v892
    %v894 = vpop.f32.mrb[0].mxu0
    %v895 = vpop.f32.mrb[0].mxu0
    %v896 = vadd.f32 %v735, %v895
    %v897 = vpop.f32.mrb[0].mxu0
    %898 = vmatprep.mubr.bf16.mxu0 %v376
    %899 = vmatmul.mubr.bf16.gmra.mrb[0].mxu0 %v375
    %v900 = vpop.f32.mrb[0].mxu0
    %v901 = vadd.f32 %v740, %v900
    %v902 = vpop.f32.mrb[0].mxu0
    %v903 = vpop.f32.mrb[0].mxu0
    %v904 = vadd.f32 %v743, %v903
    %v905 = vpop.f32.mrb[0].mxu0
    %906 = vmatprep.mubr.bf16.mxu0 %v380
    %907 = vmatmul.mubr.bf16.gmra.mrb[0].mxu0 %v379
    %v908 = vpop.f32.mrb[0].mxu0
    %v909 = vadd.f32 %v748, %v908
    %v910 = vpop.f32.mrb[0].mxu0
    %v911 = vpop.f32.mrb[0].mxu0
    %v912 = vadd.f32 %v751, %v911
    %v913 = vpop.f32.mrb[0].mxu0
    %914 = vmatprep.mubr.bf16.mxu0 %v384
    %915 = vmatmul.mubr.bf16.gmra.mrb[0].mxu0 %v383
    %v916 = vpop.f32.mrb[0].mxu0
    %v917 = vadd.f32 %v756, %v916
    %v918 = vpop.f32.mrb[0].mxu0
    %v919 = vpop.f32.mrb[0].mxu0
    %v920 = vadd.f32 %v759, %v919
    %v921 = vpop.f32.mrb[0].mxu0
    %922 = vmatprep.mubr.bf16.mxu0 %v388
    %923 = vmatmul.mubr.bf16.gmra.mrb[0].mxu0 %v387
    %v924 = vpop.f32.mrb[0].mxu0
    %v925 = vadd.f32 %v764, %v924
    %v926 = vpop.f32.mrb[0].mxu0
    %v927 = vpop.f32.mrb[0].mxu0
    %v928 = vadd.f32 %v767, %v927
    %v929 = vpop.f32.mrb[0].mxu0
    %930 = vmatprep.mubr.bf16.mxu0 %v392
    %931 = vmatmul.mubr.bf16.gmra.mrb[0].mxu0 %v391
    %v932 = vpop.f32.mrb[0].mxu0
    %v933 = vadd.f32 %v772, %v932
    %v934 = vpop.f32.mrb[0].mxu0
    %v935 = vpop.f32.mrb[0].mxu0
    %v936 = vadd.f32 %v775, %v935
    %v937 = vpop.f32.mrb[0].mxu0
    %938 = vmatprep.mubr.bf16.mxu0 %v396
    %939 = vmatmul.mubr.bf16.gmra.mrb[0].mxu0 %v395
    %v940 = vpop.f32.mrb[0].mxu0
    %v941 = vadd.f32 %v780, %v940
    %v942 = vpop.f32.mrb[0].mxu0
    %v943 = vpop.f32.mrb[0].mxu0
    %v944 = vadd.f32 %v783, %v943
    %v945 = vpop.f32.mrb[0].mxu0
    %946 = vmatprep.mubr.bf16.mxu0 %v400
    %947 = vmatmul.mubr.bf16.gmra.mrb[0].mxu0 %v399
    %v948 = vpop.f32.mrb[0].mxu0
    %v949 = vadd.f32 %v788, %v948
    %v950 = vpop.f32.mrb[0].mxu0
    %v951 = vpop.f32.mrb[0].mxu0
    %v952 = vadd.f32 %v791, %v951
    %v953 = vpop.f32.mrb[0].mxu0
    %954 = vmatprep.mubr.bf16.mxu0 %v404
    %955 = vmatmul.mubr.bf16.gmra.mrb[0].mxu0 %v403
    %v956 = vpop.f32.mrb[0].mxu0
    %v957 = vadd.f32 %v796, %v956
    %v958 = vpop.f32.mrb[0].mxu0
    %v959 = vpop.f32.mrb[0].mxu0
    %v960 = vadd.f32 %v799, %v959
    %v961 = vpop.f32.mrb[0].mxu0
    %962 = vmatprep.mubr.bf16.mxu0 %v408
    %963 = vmatmul.mubr.bf16.gmra.mrb[0].mxu0 %v407
    %v964 = vpop.f32.mrb[0].mxu0
    %v965 = vadd.f32 %v804, %v964
    %v966 = vpop.f32.mrb[0].mxu0
    %v967 = vpop.f32.mrb[0].mxu0
    %v968 = vadd.f32 %v807, %v967
    %v969 = vpop.f32.mrb[0].mxu0
    %970 = vmatprep.mubr.bf16.mxu0 %v412
    %971 = vmatmul.mubr.bf16.gmra.mrb[0].mxu0 %v411
    %v972 = vpop.f32.mrb[0].mxu0
    %v973 = vadd.f32 %v812, %v972
    %v974 = vpop.f32.mrb[0].mxu0
    %v975 = vpop.f32.mrb[0].mxu0
    %v976 = vadd.f32 %v815, %v975
    %v977 = vpop.f32.mrb[0].mxu0
    %978 = vmatprep.mubr.bf16.mxu0 %v416
    %979 = vmatmul.mubr.bf16.gmra.mrb[0].mxu0 %v415
    %v980 = vpop.f32.mrb[0].mxu0
    %v981 = vadd.f32 %v820, %v980
    %v982 = vpop.f32.mrb[0].mxu0
    %v983 = vpop.f32.mrb[0].mxu0
    %v984 = vadd.f32 %v823, %v983
    %v985 = vpop.f32.mrb[0].mxu0
    %986 = vmatprep.mubr.bf16.mxu0 %v420
    %987 = vmatmul.mubr.bf16.gmra.mrb[0].mxu0 %v419
    %v988 = vpop.f32.mrb[0].mxu0
    %v989 = vadd.f32 %v828, %v988
    %v990 = vpop.f32.mrb[0].mxu0
    %v991 = vpop.f32.mrb[0].mxu0
    %v992 = vadd.f32 %v831, %v991
    %v993 = vpop.f32.mrb[0].mxu0
    %994 = vmatprep.mubr.bf16.mxu0 %v424
    %995 = vmatmul.mubr.bf16.gmra.mrb[0].mxu0 %v423
    %v996 = vpop.f32.mrb[0].mxu0
    %v997 = vadd.f32 %v836, %v996
    %v998 = vpop.f32.mrb[0].mxu0
    %v999 = vpop.f32.mrb[0].mxu0
    %v1000 = vadd.f32 %v839, %v999
    %v1001 = vpop.f32.mrb[0].mxu0
    %1002 = vdwg.mxu0
    %v1003 = vmax.f32 %v877, 0.0
    %v1004 = vmax.f32 %v880, 0.0
    %v1005 = vmax.f32 %v885, 0.0
    %v1006 = vmax.f32 %v888, 0.0
    %v1007 = vmax.f32 %v893, 0.0
    %v1008 = vmax.f32 %v896, 0.0
    %v1009 = vmax.f32 %v901, 0.0
    %v1010 = vmax.f32 %v904, 0.0
    %v1011 = vmax.f32 %v909, 0.0
    %v1012 = vmax.f32 %v912, 0.0
    %v1013 = vmax.f32 %v917, 0.0
    %v1014 = vmax.f32 %v920, 0.0
    %v1015 = vmax.f32 %v925, 0.0
    %v1016 = vmax.f32 %v928, 0.0
    %v1017 = vmax.f32 %v933, 0.0
    %v1018 = vmax.f32 %v936, 0.0
    %v1019 = vmax.f32 %v941, 0.0
    %v1020 = vmax.f32 %v944, 0.0
    %v1021 = vmax.f32 %v949, 0.0
    %v1022 = vmax.f32 %v952, 0.0
    %v1023 = vmax.f32 %v957, 0.0
    %v1024 = vmax.f32 %v960, 0.0
    %v1025 = vmax.f32 %v965, 0.0
    %v1026 = vmax.f32 %v968, 0.0
    %v1027 = vmax.f32 %v973, 0.0
    %v1028 = vmax.f32 %v976, 0.0
    %v1029 = vmax.f32 %v981, 0.0
    %v1030 = vmax.f32 %v984, 0.0
    %v1031 = vmax.f32 %v989, 0.0
    %v1032 = vmax.f32 %v992, 0.0
    %v1033 = vmax.f32 %v997, 0.0
    %v1034 = vmax.f32 %v1000, 0.0
    %v1035 = vld [vmem:[%s3] sm:$0x1]
    %v1037 = vlaneseq
    %v1038 = vshrl.u32 %v1037, 7
    %v1039 = vsub.s32 0, %v1038
    %v1040 = vrot.slane %v1035, %v1039
    %v1042 = vmul.f32 %v1003, %v1040
    %v1043 = vmul.f32 %v1004, %v1040
    %v1044 = vmul.f32 %v1005, %v1040
    %v1045 = vmul.f32 %v1006, %v1040
    %v1046 = vmul.f32 %v1007, %v1040
    %v1047 = vmul.f32 %v1008, %v1040
    %v1048 = vmul.f32 %v1009, %v1040
    %v1049 = vmul.f32 %v1010, %v1040
    %v1050 = vmul.f32 %v1011, %v1040
    %v1051 = vmul.f32 %v1012, %v1040
    %v1052 = vmul.f32 %v1013, %v1040
    %v1053 = vmul.f32 %v1014, %v1040
    %v1054 = vmul.f32 %v1015, %v1040
    %v1055 = vmul.f32 %v1016, %v1040
    %v1056 = vmul.f32 %v1017, %v1040
    %v1057 = vmul.f32 %v1018, %v1040
    %v1058 = vmul.f32 %v1019, %v1040
    %v1059 = vmul.f32 %v1020, %v1040
    %v1060 = vmul.f32 %v1021, %v1040
    %v1061 = vmul.f32 %v1022, %v1040
    %v1062 = vmul.f32 %v1023, %v1040
    %v1063 = vmul.f32 %v1024, %v1040
    %v1064 = vmul.f32 %v1025, %v1040
    %v1065 = vmul.f32 %v1026, %v1040
    %v1066 = vmul.f32 %v1027, %v1040
    %v1067 = vmul.f32 %v1028, %v1040
    %v1068 = vmul.f32 %v1029, %v1040
    %v1069 = vmul.f32 %v1030, %v1040
    %v1070 = vmul.f32 %v1031, %v1040
    %v1071 = vmul.f32 %v1032, %v1040
    %v1072 = vmul.f32 %v1033, %v1040
    %v1073 = vmul.f32 %v1034, %v1040
    %v1074 = vmax.f32 %v1042, %v1050
    %v1075 = vmax.f32 %v1043, %v1051
    %v1076 = vmax.f32 %v1044, %v1052
    %v1077 = vmax.f32 %v1045, %v1053
    %v1078 = vmax.f32 %v1046, %v1054
    %v1079 = vmax.f32 %v1047, %v1055
    %v1080 = vmax.f32 %v1048, %v1056
    %v1081 = vmax.f32 %v1049, %v1057
    %v1082 = vmax.f32 %v1058, %v1066
    %v1083 = vmax.f32 %v1059, %v1067
    %v1084 = vmax.f32 %v1060, %v1068
    %v1085 = vmax.f32 %v1061, %v1069
    %v1086 = vmax.f32 %v1062, %v1070
    %v1087 = vmax.f32 %v1063, %v1071
    %v1088 = vmax.f32 %v1064, %v1072
    %v1089 = vmax.f32 %v1065, %v1073
    %v1090 = vmax.f32 %v1074, %v1082
    %v1091 = vmax.f32 %v1075, %v1083
    %v1092 = vmax.f32 %v1076, %v1084
    %v1093 = vmax.f32 %v1077, %v1085
    %v1094 = vmax.f32 %v1078, %v1086
    %v1095 = vmax.f32 %v1079, %v1087
    %v1096 = vmax.f32 %v1080, %v1088
    %v1097 = vmax.f32 %v1081, %v1089
    %vm1098 = vcmask 523264
    %1099 = vst.msk [vmem:[#allocation2] sm:$0xff] %vm1098, %v1090
    %1100 = vst.msk [vmem:[#allocation2 + $0x8] sm:$0xff] %vm1098, %v1091
    %1101 = vst.msk [vmem:[#allocation2 + $0x10] sm:$0xff] %vm1098, %v1092
    %1102 = vst.msk [vmem:[#allocation2 + $0x18] sm:$0xff] %vm1098, %v1093
    %1103 = vst.msk [vmem:[#allocation2 + $0x20] sm:$0xff] %vm1098, %v1094
    %1104 = vst.msk [vmem:[#allocation2 + $0x28] sm:$0xff] %vm1098, %v1095
    %1105 = vst.msk [vmem:[#allocation2 + $0x30] sm:$0xff] %vm1098, %v1096
    %1106 = vst.msk [vmem:[#allocation2 + $0x38] sm:$0xff] %vm1098, %v1097
    %v1107 = vld [vmem:[#allocation2] sm:$0x3]
    %v1108 = vpack.c.bf16 %v1107, %v1107
    %v1109 = vld [vmem:[%s4] sm:$0xff]
    %v1110 = vld [vmem:[%s4 + $0x8] sm:$0xff]
    %v1111 = vld [vmem:[%s4 + $0x10] sm:$0xff]
    %v1112 = vld [vmem:[%s4 + $0x18] sm:$0xff]
    %v1113 = vld [vmem:[%s4 + $0x20] sm:$0xff]
    %v1114 = vld [vmem:[%s4 + $0x28] sm:$0xff]
    %v1115 = vld [vmem:[%s4 + $0x30] sm:$0xff]
    %v1116 = vld [vmem:[%s4 + $0x38] sm:$0xff]
    %v1117 = vld [vmem:[%s4 + $0x40] sm:$0xff]
    %v1118 = vld [vmem:[%s4 + $0x48] sm:$0xff]
    %v1119 = vld [vmem:[%s4 + $0x50] sm:$0xff]
    %v1120 = vld [vmem:[%s4 + $0x58] sm:$0xff]
    %v1121 = vld [vmem:[%s4 + $0x60] sm:$0xff]
    %v1122 = vld [vmem:[%s4 + $0x68] sm:$0xff]
    %v1123 = vld [vmem:[%s4 + $0x70] sm:$0xff]
    %v1124 = vld [vmem:[%s4 + $0x78] sm:$0xff]
    %v1125 = vld [vmem:[#allocation2 + $0x2] sm:$0x3]
    %v1126 = vpack.c.bf16 %v1125, %v1125
    %v1127 = vld [vmem:[%s4 + $0x80] sm:$0xff]
    %v1128 = vld [vmem:[%s4 + $0x88] sm:$0xff]
    %v1129 = vld [vmem:[%s4 + $0x90] sm:$0xff]
    %v1130 = vld [vmem:[%s4 + $0x98] sm:$0xff]
    %v1131 = vld [vmem:[%s4 + $0xa0] sm:$0xff]
    %v1132 = vld [vmem:[%s4 + $0xa8] sm:$0xff]
    %v1133 = vld [vmem:[%s4 + $0xb0] sm:$0xff]
    %v1134 = vld [vmem:[%s4 + $0xb8] sm:$0xff]
    %v1135 = vld [vmem:[%s4 + $0xc0] sm:$0xff]
    %v1136 = vld [vmem:[%s4 + $0xc8] sm:$0xff]
    %v1137 = vld [vmem:[%s4 + $0xd0] sm:$0xff]
    %v1138 = vld [vmem:[%s4 + $0xd8] sm:$0xff]
    %v1139 = vld [vmem:[%s4 + $0xe0] sm:$0xff]
    %v1140 = vld [vmem:[%s4 + $0xe8] sm:$0xff]
    %v1141 = vld [vmem:[%s4 + $0xf0] sm:$0xff]
    %v1142 = vld [vmem:[%s4 + $0xf8] sm:$0xff]
    %v1159 = vunpack.c.l.b16 %v1127
    %v1160 = vunpack.c.h.b16 %v1127
    %v1161 = vunpack.c.l.b16 %v1128
    %v1162 = vunpack.c.h.b16 %v1128
    %v1163 = vunpack.c.l.b16 %v1129
    %v1164 = vunpack.c.h.b16 %v1129
    %v1165 = vunpack.c.l.b16 %v1130
    %v1166 = vunpack.c.h.b16 %v1130
    %v1167 = vunpack.c.l.b16 %v1131
    %v1168 = vunpack.c.h.b16 %v1131
    %v1169 = vunpack.c.l.b16 %v1132
    %v1170 = vunpack.c.h.b16 %v1132
    %v1171 = vunpack.c.l.b16 %v1133
    %v1172 = vunpack.c.h.b16 %v1133
    %v1173 = vunpack.c.l.b16 %v1134
    %v1174 = vunpack.c.h.b16 %v1134
    %v1175 = vunpack.c.l.b16 %v1135
    %v1176 = vunpack.c.h.b16 %v1135
    %v1177 = vunpack.c.l.b16 %v1136
    %v1178 = vunpack.c.h.b16 %v1136
    %v1179 = vunpack.c.l.b16 %v1137
    %v1180 = vunpack.c.h.b16 %v1137
    %v1181 = vunpack.c.l.b16 %v1138
    %v1182 = vunpack.c.h.b16 %v1138
    %v1183 = vunpack.c.l.b16 %v1139
    %v1184 = vunpack.c.h.b16 %v1139
    %v1185 = vunpack.c.l.b16 %v1140
    %v1186 = vunpack.c.h.b16 %v1140
    %v1187 = vunpack.c.l.b16 %v1141
    %v1188 = vunpack.c.h.b16 %v1141
    %v1189 = vunpack.c.l.b16 %v1142
    %v1190 = vunpack.c.h.b16 %v1142
    %v1191 = vpack.c.b16 %v1163, %v1159
    %v1192 = vpack.c.b16 %v1164, %v1160
    %v1193 = vpack.c.b16 %v1165, %v1161
    %v1194 = vpack.c.b16 %v1166, %v1162
    %v1195 = vpack.c.b16 %v1171, %v1167
    %v1196 = vpack.c.b16 %v1172, %v1168
    %v1197 = vpack.c.b16 %v1173, %v1169
    %v1198 = vpack.c.b16 %v1174, %v1170
    %v1199 = vpack.c.b16 %v1179, %v1175
    %v1200 = vpack.c.b16 %v1180, %v1176
    %v1201 = vpack.c.b16 %v1181, %v1177
    %v1202 = vpack.c.b16 %v1182, %v1178
    %v1203 = vpack.c.b16 %v1187, %v1183
    %v1204 = vpack.c.b16 %v1188, %v1184
    %v1205 = vpack.c.b16 %v1189, %v1185
    %v1206 = vpack.c.b16 %v1190, %v1186
    %v1224 = vsel %vm1098, %v1126, 0
    %1226 = vmatprep.subr.bf16.mxu0 %v1192
    %1227 = vmatpush1.bf16.msra.mxu0 %v1191
    %1228 = vmatprep.subr.bf16.mxu0 %v1196
    %1229 = vmatpush1.bf16.msra.mxu0 %v1195
    %1230 = vmatprep.subr.bf16.mxu0 %v1200
    %1231 = vmatpush1.bf16.msra.mxu0 %v1199
    %1232 = vmatprep.subr.bf16.mxu0 %v1204
    %1233 = vmatpush1.bf16.msra.mxu0 %v1203
    %1234 = vmatprep.subr.bf16.mxu0 0
    %1235 = vmatpush1.bf16.msra.mxu0 0
    %1236 = vmatprep.subr.bf16.mxu0 0
    %1237 = vmatpush1.bf16.msra.mxu0 0
    %1238 = vmatprep.subr.bf16.mxu0 0
    %1239 = vmatpush1.bf16.msra.mxu0 0
    %1240 = vmatprep.subr.bf16.mxu0 0
    %1241 = vmatpush1.bf16.msra.mxu0 0
    %1242 = vmatprep.subr.bf16.mxu0 0
    %1243 = vmatpush1.bf16.msra.mxu0 0
    %1244 = vmatprep.subr.bf16.mxu0 0
    %1245 = vmatpush1.bf16.msra.mxu0 0
    %1246 = vmatprep.subr.bf16.mxu0 0
    %1247 = vmatpush1.bf16.msra.mxu0 0
    %1248 = vmatprep.subr.bf16.mxu0 0
    %1249 = vmatpush1.bf16.msra.mxu0 0
    %1250 = vmatprep.subr.bf16.mxu0 0
    %1251 = vmatpush1.bf16.msra.mxu0 0
    %1252 = vmatprep.subr.bf16.mxu0 0
    %1253 = vmatpush1.bf16.msra.mxu0 0
    %1254 = vmatprep.subr.bf16.mxu0 0
    %1255 = vmatpush1.bf16.msra.mxu0 0
    %1256 = vmatprep.subr.bf16.mxu0 0
    %1257 = vmatpush1.bf16.msra.mxu0 0
    %1258 = vmatprep.mubr.bf16.mxu0 0
    %1259 = vmatmul.mubr.bf16.gmra.mrb[0].mxu0 %v1224
    %v1260 = vpop.f32.mrb[0].mxu0
    %v1261 = vadd.f32 0.0, %v1260
    %v1262 = vpop.f32.mrb[0].mxu0
    %v1263 = vadd.f32 0.0, %v1262
    %v1264 = vpop.f32.mrb[0].mxu0
    %v1265 = vpop.f32.mrb[0].mxu0
    %1266 = vdwg.mxu0
    %1267 = vmatprep.subr.bf16.mxu0 %v1194
    %1268 = vmatpush1.bf16.msra.mxu0 %v1193
    %1269 = vmatprep.subr.bf16.mxu0 %v1198
    %1270 = vmatpush1.bf16.msra.mxu0 %v1197
    %1271 = vmatprep.subr.bf16.mxu0 %v1202
    %1272 = vmatpush1.bf16.msra.mxu0 %v1201
    %1273 = vmatprep.subr.bf16.mxu0 %v1206
    %1274 = vmatpush1.bf16.msra.mxu0 %v1205
    %1275 = vmatprep.subr.bf16.mxu0 0
    %1276 = vmatpush1.bf16.msra.mxu0 0
    %1277 = vmatprep.subr.bf16.mxu0 0
    %1278 = vmatpush1.bf16.msra.mxu0 0
    %1279 = vmatprep.subr.bf16.mxu0 0
    %1280 = vmatpush1.bf16.msra.mxu0 0
    %1281 = vmatprep.subr.bf16.mxu0 0
    %1282 = vmatpush1.bf16.msra.mxu0 0
    %1283 = vmatprep.subr.bf16.mxu0 0
    %1284 = vmatpush1.bf16.msra.mxu0 0
    %1285 = vmatprep.subr.bf16.mxu0 0
    %1286 = vmatpush1.bf16.msra.mxu0 0
    %1287 = vmatprep.subr.bf16.mxu0 0
    %1288 = vmatpush1.bf16.msra.mxu0 0
    %1289 = vmatprep.subr.bf16.mxu0 0
    %1290 = vmatpush1.bf16.msra.mxu0 0
    %1291 = vmatprep.subr.bf16.mxu0 0
    %1292 = vmatpush1.bf16.msra.mxu0 0
    %1293 = vmatprep.subr.bf16.mxu0 0
    %1294 = vmatpush1.bf16.msra.mxu0 0
    %1295 = vmatprep.subr.bf16.mxu0 0
    %1296 = vmatpush1.bf16.msra.mxu0 0
    %1297 = vmatprep.subr.bf16.mxu0 0
    %1298 = vmatpush1.bf16.msra.mxu0 0
    %1299 = vmatprep.mubr.bf16.mxu0 0
    %1300 = vmatmul.mubr.bf16.gmra.mrb[0].mxu0 %v1224
    %v1301 = vpop.f32.mrb[0].mxu0
    %v1302 = vadd.f32 0.0, %v1301
    %v1303 = vpop.f32.mrb[0].mxu0
    %v1304 = vadd.f32 0.0, %v1303
    %v1305 = vpop.f32.mrb[0].mxu0
    %v1306 = vpop.f32.mrb[0].mxu0
    %1307 = vdwg.mxu0
    %v1324 = vunpack.c.l.b16 %v1109
    %v1325 = vunpack.c.h.b16 %v1109
    %v1326 = vunpack.c.l.b16 %v1110
    %v1327 = vunpack.c.h.b16 %v1110
    %v1328 = vunpack.c.l.b16 %v1111
    %v1329 = vunpack.c.h.b16 %v1111
    %v1330 = vunpack.c.l.b16 %v1112
    %v1331 = vunpack.c.h.b16 %v1112
    %v1332 = vunpack.c.l.b16 %v1113
    %v1333 = vunpack.c.h.b16 %v1113
    %v1334 = vunpack.c.l.b16 %v1114
    %v1335 = vunpack.c.h.b16 %v1114
    %v1336 = vunpack.c.l.b16 %v1115
    %v1337 = vunpack.c.h.b16 %v1115
    %v1338 = vunpack.c.l.b16 %v1116
    %v1339 = vunpack.c.h.b16 %v1116
    %v1340 = vunpack.c.l.b16 %v1117
    %v1341 = vunpack.c.h.b16 %v1117
    %v1342 = vunpack.c.l.b16 %v1118
    %v1343 = vunpack.c.h.b16 %v1118
    %v1344 = vunpack.c.l.b16 %v1119
    %v1345 = vunpack.c.h.b16 %v1119
    %v1346 = vunpack.c.l.b16 %v1120
    %v1347 = vunpack.c.h.b16 %v1120
    %v1348 = vunpack.c.l.b16 %v1121
    %v1349 = vunpack.c.h.b16 %v1121
    %v1350 = vunpack.c.l.b16 %v1122
    %v1351 = vunpack.c.h.b16 %v1122
    %v1352 = vunpack.c.l.b16 %v1123
    %v1353 = vunpack.c.h.b16 %v1123
    %v1354 = vunpack.c.l.b16 %v1124
    %v1355 = vunpack.c.h.b16 %v1124
    %v1356 = vpack.c.b16 %v1328, %v1324
    %v1357 = vpack.c.b16 %v1329, %v1325
    %v1358 = vpack.c.b16 %v1330, %v1326
    %v1359 = vpack.c.b16 %v1331, %v1327
    %v1360 = vpack.c.b16 %v1336, %v1332
    %v1361 = vpack.c.b16 %v1337, %v1333
    %v1362 = vpack.c.b16 %v1338, %v1334
    %v1363 = vpack.c.b16 %v1339, %v1335
    %v1364 = vpack.c.b16 %v1344, %v1340
    %v1365 = vpack.c.b16 %v1345, %v1341
    %v1366 = vpack.c.b16 %v1346, %v1342
    %v1367 = vpack.c.b16 %v1347, %v1343
    %v1368 = vpack.c.b16 %v1352, %v1348
    %v1369 = vpack.c.b16 %v1353, %v1349
    %v1370 = vpack.c.b16 %v1354, %v1350
    %v1371 = vpack.c.b16 %v1355, %v1351
    %v1389 = vsel %vm1098, %v1108, 0
    %1391 = vmatprep.subr.bf16.mxu0 %v1357
    %1392 = vmatpush1.bf16.msra.mxu0 %v1356
    %1393 = vmatprep.subr.bf16.mxu0 %v1361
    %1394 = vmatpush1.bf16.msra.mxu0 %v1360
    %1395 = vmatprep.subr.bf16.mxu0 %v1365
    %1396 = vmatpush1.bf16.msra.mxu0 %v1364
    %1397 = vmatprep.subr.bf16.mxu0 %v1369
    %1398 = vmatpush1.bf16.msra.mxu0 %v1368
    %1399 = vmatprep.subr.bf16.mxu0 0
    %1400 = vmatpush1.bf16.msra.mxu0 0
    %1401 = vmatprep.subr.bf16.mxu0 0
    %1402 = vmatpush1.bf16.msra.mxu0 0
    %1403 = vmatprep.subr.bf16.mxu0 0
    %1404 = vmatpush1.bf16.msra.mxu0 0
    %1405 = vmatprep.subr.bf16.mxu0 0
    %1406 = vmatpush1.bf16.msra.mxu0 0
    %1407 = vmatprep.subr.bf16.mxu0 0
    %1408 = vmatpush1.bf16.msra.mxu0 0
    %1409 = vmatprep.subr.bf16.mxu0 0
    %1410 = vmatpush1.bf16.msra.mxu0 0
    %1411 = vmatprep.subr.bf16.mxu0 0
    %1412 = vmatpush1.bf16.msra.mxu0 0
    %1413 = vmatprep.subr.bf16.mxu0 0
    %1414 = vmatpush1.bf16.msra.mxu0 0
    %1415 = vmatprep.subr.bf16.mxu0 0
    %1416 = vmatpush1.bf16.msra.mxu0 0
    %1417 = vmatprep.subr.bf16.mxu0 0
    %1418 = vmatpush1.bf16.msra.mxu0 0
    %1419 = vmatprep.subr.bf16.mxu0 0
    %1420 = vmatpush1.bf16.msra.mxu0 0
    %1421 = vmatprep.subr.bf16.mxu0 0
    %1422 = vmatpush1.bf16.msra.mxu0 0
    %1423 = vmatprep.mubr.bf16.mxu0 0
    %1424 = vmatmul.mubr.bf16.gmra.mrb[0].mxu0 %v1389
    %v1425 = vpop.f32.mrb[0].mxu0
    %v1426 = vadd.f32 %v1261, %v1425
    %v1427 = vpop.f32.mrb[0].mxu0
    %v1428 = vadd.f32 %v1263, %v1427
    %v1429 = vpop.f32.mrb[0].mxu0
    %v1430 = vpop.f32.mrb[0].mxu0
    %1431 = vdwg.mxu0
    %1432 = vmatprep.subr.bf16.mxu0 %v1359
    %1433 = vmatpush1.bf16.msra.mxu0 %v1358
    %1434 = vmatprep.subr.bf16.mxu0 %v1363
    %1435 = vmatpush1.bf16.msra.mxu0 %v1362
    %1436 = vmatprep.subr.bf16.mxu0 %v1367
    %1437 = vmatpush1.bf16.msra.mxu0 %v1366
    %1438 = vmatprep.subr.bf16.mxu0 %v1371
    %1439 = vmatpush1.bf16.msra.mxu0 %v1370
    %1440 = vmatprep.subr.bf16.mxu0 0
    %1441 = vmatpush1.bf16.msra.mxu0 0
    %1442 = vmatprep.subr.bf16.mxu0 0
    %1443 = vmatpush1.bf16.msra.mxu0 0
    %1444 = vmatprep.subr.bf16.mxu0 0
    %1445 = vmatpush1.bf16.msra.mxu0 0
    %1446 = vmatprep.subr.bf16.mxu0 0
    %1447 = vmatpush1.bf16.msra.mxu0 0
    %1448 = vmatprep.subr.bf16.mxu0 0
    %1449 = vmatpush1.bf16.msra.mxu0 0
    %1450 = vmatprep.subr.bf16.mxu0 0
    %1451 = vmatpush1.bf16.msra.mxu0 0
    %1452 = vmatprep.subr.bf16.mxu0 0
    %1453 = vmatpush1.bf16.msra.mxu0 0
    %1454 = vmatprep.subr.bf16.mxu0 0
    %1455 = vmatpush1.bf16.msra.mxu0 0
    %1456 = vmatprep.subr.bf16.mxu0 0
    %1457 = vmatpush1.bf16.msra.mxu0 0
    %1458 = vmatprep.subr.bf16.mxu0 0
    %1459 = vmatpush1.bf16.msra.mxu0 0
    %1460 = vmatprep.subr.bf16.mxu0 0
    %1461 = vmatpush1.bf16.msra.mxu0 0
    %1462 = vmatprep.subr.bf16.mxu0 0
    %1463 = vmatpush1.bf16.msra.mxu0 0
    %1464 = vmatprep.mubr.bf16.mxu0 0
    %1465 = vmatmul.mubr.bf16.gmra.mrb[0].mxu0 %v1389
    %v1466 = vpop.f32.mrb[0].mxu0
    %v1467 = vadd.f32 %v1302, %v1466
    %v1468 = vpop.f32.mrb[0].mxu0
    %v1469 = vadd.f32 %v1304, %v1468
    %v1470 = vpop.f32.mrb[0].mxu0
    %v1471 = vpop.f32.mrb[0].mxu0
    %1472 = vdwg.mxu0
    %v1473 = vld [vmem:[#allocation2 + $0x4] sm:$0x3]
    %v1474 = vpack.c.bf16 %v1473, %v1473
    %v1475 = vld [vmem:[%s4 + $0x100] sm:$0xff]
    %v1476 = vld [vmem:[%s4 + $0x108] sm:$0xff]
    %v1477 = vld [vmem:[%s4 + $0x110] sm:$0xff]
    %v1478 = vld [vmem:[%s4 + $0x118] sm:$0xff]
    %v1479 = vld [vmem:[%s4 + $0x120] sm:$0xff]
    %v1480 = vld [vmem:[%s4 + $0x128] sm:$0xff]
    %v1481 = vld [vmem:[%s4 + $0x130] sm:$0xff]
    %v1482 = vld [vmem:[%s4 + $0x138] sm:$0xff]
    %v1483 = vld [vmem:[%s4 + $0x140] sm:$0xff]
    %v1484 = vld [vmem:[%s4 + $0x148] sm:$0xff]
    %v1485 = vld [vmem:[%s4 + $0x150] sm:$0xff]
    %v1486 = vld [vmem:[%s4 + $0x158] sm:$0xff]
    %v1487 = vld [vmem:[%s4 + $0x160] sm:$0xff]
    %v1488 = vld [vmem:[%s4 + $0x168] sm:$0xff]
    %v1489 = vld [vmem:[%s4 + $0x170] sm:$0xff]
    %v1490 = vld [vmem:[%s4 + $0x178] sm:$0xff]
    %v1507 = vunpack.c.l.b16 %v1475
    %v1508 = vunpack.c.h.b16 %v1475
    %v1509 = vunpack.c.l.b16 %v1476
    %v1510 = vunpack.c.h.b16 %v1476
    %v1511 = vunpack.c.l.b16 %v1477
    %v1512 = vunpack.c.h.b16 %v1477
    %v1513 = vunpack.c.l.b16 %v1478
    %v1514 = vunpack.c.h.b16 %v1478
    %v1515 = vunpack.c.l.b16 %v1479
    %v1516 = vunpack.c.h.b16 %v1479
    %v1517 = vunpack.c.l.b16 %v1480
    %v1518 = vunpack.c.h.b16 %v1480
    %v1519 = vunpack.c.l.b16 %v1481
    %v1520 = vunpack.c.h.b16 %v1481
    %v1521 = vunpack.c.l.b16 %v1482
    %v1522 = vunpack.c.h.b16 %v1482
    %v1523 = vunpack.c.l.b16 %v1483
    %v1524 = vunpack.c.h.b16 %v1483
    %v1525 = vunpack.c.l.b16 %v1484
    %v1526 = vunpack.c.h.b16 %v1484
    %v1527 = vunpack.c.l.b16 %v1485
    %v1528 = vunpack.c.h.b16 %v1485
    %v1529 = vunpack.c.l.b16 %v1486
    %v1530 = vunpack.c.h.b16 %v1486
    %v1531 = vunpack.c.l.b16 %v1487
    %v1532 = vunpack.c.h.b16 %v1487
    %v1533 = vunpack.c.l.b16 %v1488
    %v1534 = vunpack.c.h.b16 %v1488
    %v1535 = vunpack.c.l.b16 %v1489
    %v1536 = vunpack.c.h.b16 %v1489
    %v1537 = vunpack.c.l.b16 %v1490
    %v1538 = vunpack.c.h.b16 %v1490
    %v1539 = vpack.c.b16 %v1511, %v1507
    %v1540 = vpack.c.b16 %v1512, %v1508
    %v1541 = vpack.c.b16 %v1513, %v1509
    %v1542 = vpack.c.b16 %v1514, %v1510
    %v1543 = vpack.c.b16 %v1519, %v1515
    %v1544 = vpack.c.b16 %v1520, %v1516
    %v1545 = vpack.c.b16 %v1521, %v1517
    %v1546 = vpack.c.b16 %v1522, %v1518
    %v1547 = vpack.c.b16 %v1527, %v1523
    %v1548 = vpack.c.b16 %v1528, %v1524
    %v1549 = vpack.c.b16 %v1529, %v1525
    %v1550 = vpack.c.b16 %v1530, %v1526
    %v1551 = vpack.c.b16 %v1535, %v1531
    %v1552 = vpack.c.b16 %v1536, %v1532
    %v1553 = vpack.c.b16 %v1537, %v1533
    %v1554 = vpack.c.b16 %v1538, %v1534
    %v1572 = vsel %vm1098, %v1474, 0
    %1574 = vmatprep.subr.bf16.mxu0 %v1540
    %1575 = vmatpush1.bf16.msra.mxu0 %v1539
    %1576 = vmatprep.subr.bf16.mxu0 %v1544
    %1577 = vmatpush1.bf16.msra.mxu0 %v1543
    %1578 = vmatprep.subr.bf16.mxu0 %v1548
    %1579 = vmatpush1.bf16.msra.mxu0 %v1547
    %1580 = vmatprep.subr.bf16.mxu0 %v1552
    %1581 = vmatpush1.bf16.msra.mxu0 %v1551
    %1582 = vmatprep.subr.bf16.mxu0 0
    %1583 = vmatpush1.bf16.msra.mxu0 0
    %1584 = vmatprep.subr.bf16.mxu0 0
    %1585 = vmatpush1.bf16.msra.mxu0 0
    %1586 = vmatprep.subr.bf16.mxu0 0
    %1587 = vmatpush1.bf16.msra.mxu0 0
    %1588 = vmatprep.subr.bf16.mxu0 0
    %1589 = vmatpush1.bf16.msra.mxu0 0
    %1590 = vmatprep.subr.bf16.mxu0 0
    %1591 = vmatpush1.bf16.msra.mxu0 0
    %1592 = vmatprep.subr.bf16.mxu0 0
    %1593 = vmatpush1.bf16.msra.mxu0 0
    %1594 = vmatprep.subr.bf16.mxu0 0
    %1595 = vmatpush1.bf16.msra.mxu0 0
    %1596 = vmatprep.subr.bf16.mxu0 0
    %1597 = vmatpush1.bf16.msra.mxu0 0
    %1598 = vmatprep.subr.bf16.mxu0 0
    %1599 = vmatpush1.bf16.msra.mxu0 0
    %1600 = vmatprep.subr.bf16.mxu0 0
    %1601 = vmatpush1.bf16.msra.mxu0 0
    %1602 = vmatprep.subr.bf16.mxu0 0
    %1603 = vmatpush1.bf16.msra.mxu0 0
    %1604 = vmatprep.subr.bf16.mxu0 0
    %1605 = vmatpush1.bf16.msra.mxu0 0
    %1606 = vmatprep.mubr.bf16.mxu0 0
    %1607 = vmatmul.mubr.bf16.gmra.mrb[0].mxu0 %v1572
    %v1608 = vpop.f32.mrb[0].mxu0
    %v1609 = vadd.f32 0.0, %v1608
    %v1610 = vpop.f32.mrb[0].mxu0
    %v1611 = vadd.f32 0.0, %v1610
    %v1612 = vpop.f32.mrb[0].mxu0
    %v1613 = vpop.f32.mrb[0].mxu0
    %1614 = vdwg.mxu0
    %1615 = vmatprep.subr.bf16.mxu0 %v1542
    %1616 = vmatpush1.bf16.msra.mxu0 %v1541
    %1617 = vmatprep.subr.bf16.mxu0 %v1546
    %1618 = vmatpush1.bf16.msra.mxu0 %v1545
    %1619 = vmatprep.subr.bf16.mxu0 %v1550
    %1620 = vmatpush1.bf16.msra.mxu0 %v1549
    %1621 = vmatprep.subr.bf16.mxu0 %v1554
    %1622 = vmatpush1.bf16.msra.mxu0 %v1553
    %1623 = vmatprep.subr.bf16.mxu0 0
    %1624 = vmatpush1.bf16.msra.mxu0 0
    %1625 = vmatprep.subr.bf16.mxu0 0
    %1626 = vmatpush1.bf16.msra.mxu0 0
    %1627 = vmatprep.subr.bf16.mxu0 0
    %1628 = vmatpush1.bf16.msra.mxu0 0
    %1629 = vmatprep.subr.bf16.mxu0 0
    %1630 = vmatpush1.bf16.msra.mxu0 0
    %1631 = vmatprep.subr.bf16.mxu0 0
    %1632 = vmatpush1.bf16.msra.mxu0 0
    %1633 = vmatprep.subr.bf16.mxu0 0
    %1634 = vmatpush1.bf16.msra.mxu0 0
    %1635 = vmatprep.subr.bf16.mxu0 0
    %1636 = vmatpush1.bf16.msra.mxu0 0
    %1637 = vmatprep.subr.bf16.mxu0 0
    %1638 = vmatpush1.bf16.msra.mxu0 0
    %1639 = vmatprep.subr.bf16.mxu0 0
    %1640 = vmatpush1.bf16.msra.mxu0 0
    %1641 = vmatprep.subr.bf16.mxu0 0
    %1642 = vmatpush1.bf16.msra.mxu0 0
    %1643 = vmatprep.subr.bf16.mxu0 0
    %1644 = vmatpush1.bf16.msra.mxu0 0
    %1645 = vmatprep.subr.bf16.mxu0 0
    %1646 = vmatpush1.bf16.msra.mxu0 0
    %1647 = vmatprep.mubr.bf16.mxu0 0
    %1648 = vmatmul.mubr.bf16.gmra.mrb[0].mxu0 %v1572
    %v1649 = vpop.f32.mrb[0].mxu0
    %v1650 = vadd.f32 0.0, %v1649
    %v1651 = vpop.f32.mrb[0].mxu0
    %v1652 = vadd.f32 0.0, %v1651
    %v1653 = vpop.f32.mrb[0].mxu0
    %v1654 = vpop.f32.mrb[0].mxu0
    %1655 = vdwg.mxu0
    %v1656 = vadd.f32 %v1426, %v1609
    %v1657 = vadd.f32 %v1428, %v1611
    %v1658 = vadd.f32 %v1467, %v1650
    %v1659 = vadd.f32 %v1469, %v1652
    %v1660 = vld [vmem:[#allocation2 + $0x6] sm:$0x3]
    %v1661 = vpack.c.bf16 %v1660, %v1660
    %v1662 = vld [vmem:[%s4 + $0x180] sm:$0xff]
    %v1663 = vld [vmem:[%s4 + $0x188] sm:$0xff]
    %v1664 = vld [vmem:[%s4 + $0x190] sm:$0xff]
    %v1665 = vld [vmem:[%s4 + $0x198] sm:$0xff]
    %v1666 = vld [vmem:[%s4 + $0x1a0] sm:$0xff]
    %v1667 = vld [vmem:[%s4 + $0x1a8] sm:$0xff]
    %v1668 = vld [vmem:[%s4 + $0x1b0] sm:$0xff]
    %v1669 = vld [vmem:[%s4 + $0x1b8] sm:$0xff]
    %v1670 = vld [vmem:[%s4 + $0x1c0] sm:$0xff]
    %v1671 = vld [vmem:[%s4 + $0x1c8] sm:$0xff]
    %v1672 = vld [vmem:[%s4 + $0x1d0] sm:$0xff]
    %v1673 = vld [vmem:[%s4 + $0x1d8] sm:$0xff]
    %v1674 = vld [vmem:[%s4 + $0x1e0] sm:$0xff]
    %v1675 = vld [vmem:[%s4 + $0x1e8] sm:$0xff]
    %v1676 = vld [vmem:[%s4 + $0x1f0] sm:$0xff]
    %v1677 = vld [vmem:[%s4 + $0x1f8] sm:$0xff]
    %v1694 = vunpack.c.l.b16 %v1662
    %v1695 = vunpack.c.h.b16 %v1662
    %v1696 = vunpack.c.l.b16 %v1663
    %v1697 = vunpack.c.h.b16 %v1663
    %v1698 = vunpack.c.l.b16 %v1664
    %v1699 = vunpack.c.h.b16 %v1664
    %v1700 = vunpack.c.l.b16 %v1665
    %v1701 = vunpack.c.h.b16 %v1665
    %v1702 = vunpack.c.l.b16 %v1666
    %v1703 = vunpack.c.h.b16 %v1666
    %v1704 = vunpack.c.l.b16 %v1667
    %v1705 = vunpack.c.h.b16 %v1667
    %v1706 = vunpack.c.l.b16 %v1668
    %v1707 = vunpack.c.h.b16 %v1668
    %v1708 = vunpack.c.l.b16 %v1669
    %v1709 = vunpack.c.h.b16 %v1669
    %v1710 = vunpack.c.l.b16 %v1670
    %v1711 = vunpack.c.h.b16 %v1670
    %v1712 = vunpack.c.l.b16 %v1671
    %v1713 = vunpack.c.h.b16 %v1671
    %v1714 = vunpack.c.l.b16 %v1672
    %v1715 = vunpack.c.h.b16 %v1672
    %v1716 = vunpack.c.l.b16 %v1673
    %v1717 = vunpack.c.h.b16 %v1673
    %v1718 = vunpack.c.l.b16 %v1674
    %v1719 = vunpack.c.h.b16 %v1674
    %v1720 = vunpack.c.l.b16 %v1675
    %v1721 = vunpack.c.h.b16 %v1675
    %v1722 = vunpack.c.l.b16 %v1676
    %v1723 = vunpack.c.h.b16 %v1676
    %v1724 = vunpack.c.l.b16 %v1677
    %v1725 = vunpack.c.h.b16 %v1677
    %v1726 = vpack.c.b16 %v1698, %v1694
    %v1727 = vpack.c.b16 %v1699, %v1695
    %v1728 = vpack.c.b16 %v1700, %v1696
    %v1729 = vpack.c.b16 %v1701, %v1697
    %v1730 = vpack.c.b16 %v1706, %v1702
    %v1731 = vpack.c.b16 %v1707, %v1703
    %v1732 = vpack.c.b16 %v1708, %v1704
    %v1733 = vpack.c.b16 %v1709, %v1705
    %v1734 = vpack.c.b16 %v1714, %v1710
    %v1735 = vpack.c.b16 %v1715, %v1711
    %v1736 = vpack.c.b16 %v1716, %v1712
    %v1737 = vpack.c.b16 %v1717, %v1713
    %v1738 = vpack.c.b16 %v1722, %v1718
    %v1739 = vpack.c.b16 %v1723, %v1719
    %v1740 = vpack.c.b16 %v1724, %v1720
    %v1741 = vpack.c.b16 %v1725, %v1721
    %v1759 = vsel %vm1098, %v1661, 0
    %1761 = vmatprep.subr.bf16.mxu0 %v1727
    %1762 = vmatpush1.bf16.msra.mxu0 %v1726
    %1763 = vmatprep.subr.bf16.mxu0 %v1731
    %1764 = vmatpush1.bf16.msra.mxu0 %v1730
    %1765 = vmatprep.subr.bf16.mxu0 %v1735
    %1766 = vmatpush1.bf16.msra.mxu0 %v1734
    %1767 = vmatprep.subr.bf16.mxu0 %v1739
    %1768 = vmatpush1.bf16.msra.mxu0 %v1738
    %1769 = vmatprep.subr.bf16.mxu0 0
    %1770 = vmatpush1.bf16.msra.mxu0 0
    %1771 = vmatprep.subr.bf16.mxu0 0
    %1772 = vmatpush1.bf16.msra.mxu0 0
    %1773 = vmatprep.subr.bf16.mxu0 0
    %1774 = vmatpush1.bf16.msra.mxu0 0
    %1775 = vmatprep.subr.bf16.mxu0 0
    %1776 = vmatpush1.bf16.msra.mxu0 0
    %1777 = vmatprep.subr.bf16.mxu0 0
    %1778 = vmatpush1.bf16.msra.mxu0 0
    %1779 = vmatprep.subr.bf16.mxu0 0
    %1780 = vmatpush1.bf16.msra.mxu0 0
    %1781 = vmatprep.subr.bf16.mxu0 0
    %1782 = vmatpush1.bf16.msra.mxu0 0
    %1783 = vmatprep.subr.bf16.mxu0 0
    %1784 = vmatpush1.bf16.msra.mxu0 0
    %1785 = vmatprep.subr.bf16.mxu0 0
    %1786 = vmatpush1.bf16.msra.mxu0 0
    %1787 = vmatprep.subr.bf16.mxu0 0
    %1788 = vmatpush1.bf16.msra.mxu0 0
    %1789 = vmatprep.subr.bf16.mxu0 0
    %1790 = vmatpush1.bf16.msra.mxu0 0
    %1791 = vmatprep.subr.bf16.mxu0 0
    %1792 = vmatpush1.bf16.msra.mxu0 0
    %1793 = vmatprep.mubr.bf16.mxu0 0
    %1794 = vmatmul.mubr.bf16.gmra.mrb[0].mxu0 %v1759
    %v1795 = vpop.f32.mrb[0].mxu0
    %v1796 = vadd.f32 0.0, %v1795
    %v1797 = vpop.f32.mrb[0].mxu0
    %v1798 = vadd.f32 0.0, %v1797
    %v1799 = vpop.f32.mrb[0].mxu0
    %v1800 = vpop.f32.mrb[0].mxu0
    %1801 = vdwg.mxu0
    %1802 = vmatprep.subr.bf16.mxu0 %v1729
    %1803 = vmatpush1.bf16.msra.mxu0 %v1728
    %1804 = vmatprep.subr.bf16.mxu0 %v1733
    %1805 = vmatpush1.bf16.msra.mxu0 %v1732
    %1806 = vmatprep.subr.bf16.mxu0 %v1737
    %1807 = vmatpush1.bf16.msra.mxu0 %v1736
    %1808 = vmatprep.subr.bf16.mxu0 %v1741
    %1809 = vmatpush1.bf16.msra.mxu0 %v1740
    %1810 = vmatprep.subr.bf16.mxu0 0
    %1811 = vmatpush1.bf16.msra.mxu0 0
    %1812 = vmatprep.subr.bf16.mxu0 0
    %1813 = vmatpush1.bf16.msra.mxu0 0
    %1814 = vmatprep.subr.bf16.mxu0 0
    %1815 = vmatpush1.bf16.msra.mxu0 0
    %1816 = vmatprep.subr.bf16.mxu0 0
    %1817 = vmatpush1.bf16.msra.mxu0 0
    %1818 = vmatprep.subr.bf16.mxu0 0
    %1819 = vmatpush1.bf16.msra.mxu0 0
    %1820 = vmatprep.subr.bf16.mxu0 0
    %1821 = vmatpush1.bf16.msra.mxu0 0
    %1822 = vmatprep.subr.bf16.mxu0 0
    %1823 = vmatpush1.bf16.msra.mxu0 0
    %1824 = vmatprep.subr.bf16.mxu0 0
    %1825 = vmatpush1.bf16.msra.mxu0 0
    %1826 = vmatprep.subr.bf16.mxu0 0
    %1827 = vmatpush1.bf16.msra.mxu0 0
    %1828 = vmatprep.subr.bf16.mxu0 0
    %1829 = vmatpush1.bf16.msra.mxu0 0
    %1830 = vmatprep.subr.bf16.mxu0 0
    %1831 = vmatpush1.bf16.msra.mxu0 0
    %1832 = vmatprep.subr.bf16.mxu0 0
    %1833 = vmatpush1.bf16.msra.mxu0 0
    %1834 = vmatprep.mubr.bf16.mxu0 0
    %1835 = vmatmul.mubr.bf16.gmra.mrb[0].mxu0 %v1759
    %v1836 = vpop.f32.mrb[0].mxu0
    %v1837 = vadd.f32 0.0, %v1836
    %v1838 = vpop.f32.mrb[0].mxu0
    %v1839 = vadd.f32 0.0, %v1838
    %v1840 = vpop.f32.mrb[0].mxu0
    %v1841 = vpop.f32.mrb[0].mxu0
    %1842 = vdwg.mxu0
    %v1843 = vadd.f32 %v1656, %v1796
    %v1844 = vadd.f32 %v1657, %v1798
    %v1845 = vadd.f32 %v1658, %v1837
    %v1846 = vadd.f32 %v1659, %v1839
    %v1847 = vld [vmem:[#allocation2 + $0x8] sm:$0x3]
    %v1848 = vpack.c.bf16 %v1847, %v1847
    %v1849 = vld [vmem:[%s4 + $0x200] sm:$0xff]
    %v1850 = vld [vmem:[%s4 + $0x208] sm:$0xff]
    %v1851 = vld [vmem:[%s4 + $0x210] sm:$0xff]
    %v1852 = vld [vmem:[%s4 + $0x218] sm:$0xff]
    %v1853 = vld [vmem:[%s4 + $0x220] sm:$0xff]
    %v1854 = vld [vmem:[%s4 + $0x228] sm:$0xff]
    %v1855 = vld [vmem:[%s4 + $0x230] sm:$0xff]
    %v1856 = vld [vmem:[%s4 + $0x238] sm:$0xff]
    %v1857 = vld [vmem:[%s4 + $0x240] sm:$0xff]
    %v1858 = vld [vmem:[%s4 + $0x248] sm:$0xff]
    %v1859 = vld [vmem:[%s4 + $0x250] sm:$0xff]
    %v1860 = vld [vmem:[%s4 + $0x258] sm:$0xff]
    %v1861 = vld [vmem:[%s4 + $0x260] sm:$0xff]
    %v1862 = vld [vmem:[%s4 + $0x268] sm:$0xff]
    %v1863 = vld [vmem:[%s4 + $0x270] sm:$0xff]
    %v1864 = vld [vmem:[%s4 + $0x278] sm:$0xff]
    %v1881 = vunpack.c.l.b16 %v1849
    %v1882 = vunpack.c.h.b16 %v1849
    %v1883 = vunpack.c.l.b16 %v1850
    %v1884 = vunpack.c.h.b16 %v1850
    %v1885 = vunpack.c.l.b16 %v1851
    %v1886 = vunpack.c.h.b16 %v1851
    %v1887 = vunpack.c.l.b16 %v1852
    %v1888 = vunpack.c.h.b16 %v1852
    %v1889 = vunpack.c.l.b16 %v1853
    %v1890 = vunpack.c.h.b16 %v1853
    %v1891 = vunpack.c.l.b16 %v1854
    %v1892 = vunpack.c.h.b16 %v1854
    %v1893 = vunpack.c.l.b16 %v1855
    %v1894 = vunpack.c.h.b16 %v1855
    %v1895 = vunpack.c.l.b16 %v1856
    %v1896 = vunpack.c.h.b16 %v1856
    %v1897 = vunpack.c.l.b16 %v1857
    %v1898 = vunpack.c.h.b16 %v1857
    %v1899 = vunpack.c.l.b16 %v1858
    %v1900 = vunpack.c.h.b16 %v1858
    %v1901 = vunpack.c.l.b16 %v1859
    %v1902 = vunpack.c.h.b16 %v1859
    %v1903 = vunpack.c.l.b16 %v1860
    %v1904 = vunpack.c.h.b16 %v1860
    %v1905 = vunpack.c.l.b16 %v1861
    %v1906 = vunpack.c.h.b16 %v1861
    %v1907 = vunpack.c.l.b16 %v1862
    %v1908 = vunpack.c.h.b16 %v1862
    %v1909 = vunpack.c.l.b16 %v1863
    %v1910 = vunpack.c.h.b16 %v1863
    %v1911 = vunpack.c.l.b16 %v1864
    %v1912 = vunpack.c.h.b16 %v1864
    %v1913 = vpack.c.b16 %v1885, %v1881
    %v1914 = vpack.c.b16 %v1886, %v1882
    %v1915 = vpack.c.b16 %v1887, %v1883
    %v1916 = vpack.c.b16 %v1888, %v1884
    %v1917 = vpack.c.b16 %v1893, %v1889
    %v1918 = vpack.c.b16 %v1894, %v1890
    %v1919 = vpack.c.b16 %v1895, %v1891
    %v1920 = vpack.c.b16 %v1896, %v1892
    %v1921 = vpack.c.b16 %v1901, %v1897
    %v1922 = vpack.c.b16 %v1902, %v1898
    %v1923 = vpack.c.b16 %v1903, %v1899
    %v1924 = vpack.c.b16 %v1904, %v1900
    %v1925 = vpack.c.b16 %v1909, %v1905
    %v1926 = vpack.c.b16 %v1910, %v1906
    %v1927 = vpack.c.b16 %v1911, %v1907
    %v1928 = vpack.c.b16 %v1912, %v1908
    %v1946 = vsel %vm1098, %v1848, 0
    %1948 = vmatprep.subr.bf16.mxu0 %v1914
    %1949 = vmatpush1.bf16.msra.mxu0 %v1913
    %1950 = vmatprep.subr.bf16.mxu0 %v1918
    %1951 = vmatpush1.bf16.msra.mxu0 %v1917
    %1952 = vmatprep.subr.bf16.mxu0 %v1922
    %1953 = vmatpush1.bf16.msra.mxu0 %v1921
    %1954 = vmatprep.subr.bf16.mxu0 %v1926
    %1955 = vmatpush1.bf16.msra.mxu0 %v1925
    %1956 = vmatprep.subr.bf16.mxu0 0
    %1957 = vmatpush1.bf16.msra.mxu0 0
    %1958 = vmatprep.subr.bf16.mxu0 0
    %1959 = vmatpush1.bf16.msra.mxu0 0
    %1960 = vmatprep.subr.bf16.mxu0 0
    %1961 = vmatpush1.bf16.msra.mxu0 0
    %1962 = vmatprep.subr.bf16.mxu0 0
    %1963 = vmatpush1.bf16.msra.mxu0 0
    %1964 = vmatprep.subr.bf16.mxu0 0
    %1965 = vmatpush1.bf16.msra.mxu0 0
    %1966 = vmatprep.subr.bf16.mxu0 0
    %1967 = vmatpush1.bf16.msra.mxu0 0
    %1968 = vmatprep.subr.bf16.mxu0 0
    %1969 = vmatpush1.bf16.msra.mxu0 0
    %1970 = vmatprep.subr.bf16.mxu0 0
    %1971 = vmatpush1.bf16.msra.mxu0 0
    %1972 = vmatprep.subr.bf16.mxu0 0
    %1973 = vmatpush1.bf16.msra.mxu0 0
    %1974 = vmatprep.subr.bf16.mxu0 0
    %1975 = vmatpush1.bf16.msra.mxu0 0
    %1976 = vmatprep.subr.bf16.mxu0 0
    %1977 = vmatpush1.bf16.msra.mxu0 0
    %1978 = vmatprep.subr.bf16.mxu0 0
    %1979 = vmatpush1.bf16.msra.mxu0 0
    %1980 = vmatprep.mubr.bf16.mxu0 0
    %1981 = vmatmul.mubr.bf16.gmra.mrb[0].mxu0 %v1946
    %v1982 = vpop.f32.mrb[0].mxu0
    %v1983 = vadd.f32 0.0, %v1982
    %v1984 = vpop.f32.mrb[0].mxu0
    %v1985 = vadd.f32 0.0, %v1984
    %v1986 = vpop.f32.mrb[0].mxu0
    %v1987 = vpop.f32.mrb[0].mxu0
    %1988 = vdwg.mxu0
    %1989 = vmatprep.subr.bf16.mxu0 %v1916
    %1990 = vmatpush1.bf16.msra.mxu0 %v1915
    %1991 = vmatprep.subr.bf16.mxu0 %v1920
    %1992 = vmatpush1.bf16.msra.mxu0 %v1919
    %1993 = vmatprep.subr.bf16.mxu0 %v1924
    %1994 = vmatpush1.bf16.msra.mxu0 %v1923
    %1995 = vmatprep.subr.bf16.mxu0 %v1928
    %1996 = vmatpush1.bf16.msra.mxu0 %v1927
    %1997 = vmatprep.subr.bf16.mxu0 0
    %1998 = vmatpush1.bf16.msra.mxu0 0
    %1999 = vmatprep.subr.bf16.mxu0 0
    %2000 = vmatpush1.bf16.msra.mxu0 0
    %2001 = vmatprep.subr.bf16.mxu0 0
    %2002 = vmatpush1.bf16.msra.mxu0 0
    %2003 = vmatprep.subr.bf16.mxu0 0
    %2004 = vmatpush1.bf16.msra.mxu0 0
    %2005 = vmatprep.subr.bf16.mxu0 0
    %2006 = vmatpush1.bf16.msra.mxu0 0
    %2007 = vmatprep.subr.bf16.mxu0 0
    %2008 = vmatpush1.bf16.msra.mxu0 0
    %2009 = vmatprep.subr.bf16.mxu0 0
    %2010 = vmatpush1.bf16.msra.mxu0 0
    %2011 = vmatprep.subr.bf16.mxu0 0
    %2012 = vmatpush1.bf16.msra.mxu0 0
    %2013 = vmatprep.subr.bf16.mxu0 0
    %2014 = vmatpush1.bf16.msra.mxu0 0
    %2015 = vmatprep.subr.bf16.mxu0 0
    %2016 = vmatpush1.bf16.msra.mxu0 0
    %2017 = vmatprep.subr.bf16.mxu0 0
    %2018 = vmatpush1.bf16.msra.mxu0 0
    %2019 = vmatprep.subr.bf16.mxu0 0
    %2020 = vmatpush1.bf16.msra.mxu0 0
    %2021 = vmatprep.mubr.bf16.mxu0 0
    %2022 = vmatmul.mubr.bf16.gmra.mrb[0].mxu0 %v1946
    %v2023 = vpop.f32.mrb[0].mxu0
    %v2024 = vadd.f32 0.0, %v2023
    %v2025 = vpop.f32.mrb[0].mxu0
    %v2026 = vadd.f32 0.0, %v2025
    %v2027 = vpop.f32.mrb[0].mxu0
    %v2028 = vpop.f32.mrb[0].mxu0
    %2029 = vdwg.mxu0
    %v2030 = vadd.f32 %v1843, %v1983
    %v2031 = vadd.f32 %v1844, %v1985
    %v2032 = vadd.f32 %v1845, %v2024
    %v2033 = vadd.f32 %v1846, %v2026
    %v2034 = vld [vmem:[#allocation2 + $0xa] sm:$0x3]
    %v2035 = vpack.c.bf16 %v2034, %v2034
    %v2036 = vld [vmem:[%s4 + $0x280] sm:$0xff]
    %v2037 = vld [vmem:[%s4 + $0x288] sm:$0xff]
    %v2038 = vld [vmem:[%s4 + $0x290] sm:$0xff]
    %v2039 = vld [vmem:[%s4 + $0x298] sm:$0xff]
    %v2040 = vld [vmem:[%s4 + $0x2a0] sm:$0xff]
    %v2041 = vld [vmem:[%s4 + $0x2a8] sm:$0xff]
    %v2042 = vld [vmem:[%s4 + $0x2b0] sm:$0xff]
    %v2043 = vld [vmem:[%s4 + $0x2b8] sm:$0xff]
    %v2044 = vld [vmem:[%s4 + $0x2c0] sm:$0xff]
    %v2045 = vld [vmem:[%s4 + $0x2c8] sm:$0xff]
    %v2046 = vld [vmem:[%s4 + $0x2d0] sm:$0xff]
    %v2047 = vld [vmem:[%s4 + $0x2d8] sm:$0xff]
    %v2048 = vld [vmem:[%s4 + $0x2e0] sm:$0xff]
    %v2049 = vld [vmem:[%s4 + $0x2e8] sm:$0xff]
    %v2050 = vld [vmem:[%s4 + $0x2f0] sm:$0xff]
    %v2051 = vld [vmem:[%s4 + $0x2f8] sm:$0xff]
    %v2068 = vunpack.c.l.b16 %v2036
    %v2069 = vunpack.c.h.b16 %v2036
    %v2070 = vunpack.c.l.b16 %v2037
    %v2071 = vunpack.c.h.b16 %v2037
    %v2072 = vunpack.c.l.b16 %v2038
    %v2073 = vunpack.c.h.b16 %v2038
    %v2074 = vunpack.c.l.b16 %v2039
    %v2075 = vunpack.c.h.b16 %v2039
    %v2076 = vunpack.c.l.b16 %v2040
    %v2077 = vunpack.c.h.b16 %v2040
    %v2078 = vunpack.c.l.b16 %v2041
    %v2079 = vunpack.c.h.b16 %v2041
    %v2080 = vunpack.c.l.b16 %v2042
    %v2081 = vunpack.c.h.b16 %v2042
    %v2082 = vunpack.c.l.b16 %v2043
    %v2083 = vunpack.c.h.b16 %v2043
    %v2084 = vunpack.c.l.b16 %v2044
    %v2085 = vunpack.c.h.b16 %v2044
    %v2086 = vunpack.c.l.b16 %v2045
    %v2087 = vunpack.c.h.b16 %v2045
    %v2088 = vunpack.c.l.b16 %v2046
    %v2089 = vunpack.c.h.b16 %v2046
    %v2090 = vunpack.c.l.b16 %v2047
    %v2091 = vunpack.c.h.b16 %v2047
    %v2092 = vunpack.c.l.b16 %v2048
    %v2093 = vunpack.c.h.b16 %v2048
    %v2094 = vunpack.c.l.b16 %v2049
    %v2095 = vunpack.c.h.b16 %v2049
    %v2096 = vunpack.c.l.b16 %v2050
    %v2097 = vunpack.c.h.b16 %v2050
    %v2098 = vunpack.c.l.b16 %v2051
    %v2099 = vunpack.c.h.b16 %v2051
    %v2100 = vpack.c.b16 %v2072, %v2068
    %v2101 = vpack.c.b16 %v2073, %v2069
    %v2102 = vpack.c.b16 %v2074, %v2070
    %v2103 = vpack.c.b16 %v2075, %v2071
    %v2104 = vpack.c.b16 %v2080, %v2076
    %v2105 = vpack.c.b16 %v2081, %v2077
    %v2106 = vpack.c.b16 %v2082, %v2078
    %v2107 = vpack.c.b16 %v2083, %v2079
    %v2108 = vpack.c.b16 %v2088, %v2084
    %v2109 = vpack.c.b16 %v2089, %v2085
    %v2110 = vpack.c.b16 %v2090, %v2086
    %v2111 = vpack.c.b16 %v2091, %v2087
    %v2112 = vpack.c.b16 %v2096, %v2092
    %v2113 = vpack.c.b16 %v2097, %v2093
    %v2114 = vpack.c.b16 %v2098, %v2094
    %v2115 = vpack.c.b16 %v2099, %v2095
    %v2133 = vsel %vm1098, %v2035, 0
    %2135 = vmatprep.subr.bf16.mxu0 %v2101
    %2136 = vmatpush1.bf16.msra.mxu0 %v2100
    %2137 = vmatprep.subr.bf16.mxu0 %v2105
    %2138 = vmatpush1.bf16.msra.mxu0 %v2104
    %2139 = vmatprep.subr.bf16.mxu0 %v2109
    %2140 = vmatpush1.bf16.msra.mxu0 %v2108
    %2141 = vmatprep.subr.bf16.mxu0 %v2113
    %2142 = vmatpush1.bf16.msra.mxu0 %v2112
    %2143 = vmatprep.subr.bf16.mxu0 0
    %2144 = vmatpush1.bf16.msra.mxu0 0
    %2145 = vmatprep.subr.bf16.mxu0 0
    %2146 = vmatpush1.bf16.msra.mxu0 0
    %2147 = vmatprep.subr.bf16.mxu0 0
    %2148 = vmatpush1.bf16.msra.mxu0 0
    %2149 = vmatprep.subr.bf16.mxu0 0
    %2150 = vmatpush1.bf16.msra.mxu0 0
    %2151 = vmatprep.subr.bf16.mxu0 0
    %2152 = vmatpush1.bf16.msra.mxu0 0
    %2153 = vmatprep.subr.bf16.mxu0 0
    %2154 = vmatpush1.bf16.msra.mxu0 0
    %2155 = vmatprep.subr.bf16.mxu0 0
    %2156 = vmatpush1.bf16.msra.mxu0 0
    %2157 = vmatprep.subr.bf16.mxu0 0
    %2158 = vmatpush1.bf16.msra.mxu0 0
    %2159 = vmatprep.subr.bf16.mxu0 0
    %2160 = vmatpush1.bf16.msra.mxu0 0
    %2161 = vmatprep.subr.bf16.mxu0 0
    %2162 = vmatpush1.bf16.msra.mxu0 0
    %2163 = vmatprep.subr.bf16.mxu0 0
    %2164 = vmatpush1.bf16.msra.mxu0 0
    %2165 = vmatprep.subr.bf16.mxu0 0
    %2166 = vmatpush1.bf16.msra.mxu0 0
    %2167 = vmatprep.mubr.bf16.mxu0 0
    %2168 = vmatmul.mubr.bf16.gmra.mrb[0].mxu0 %v2133
    %v2169 = vpop.f32.mrb[0].mxu0
    %v2170 = vadd.f32 0.0, %v2169
    %v2171 = vpop.f32.mrb[0].mxu0
    %v2172 = vadd.f32 0.0, %v2171
    %v2173 = vpop.f32.mrb[0].mxu0
    %v2174 = vpop.f32.mrb[0].mxu0
    %2175 = vdwg.mxu0
    %2176 = vmatprep.subr.bf16.mxu0 %v2103
    %2177 = vmatpush1.bf16.msra.mxu0 %v2102
    %2178 = vmatprep.subr.bf16.mxu0 %v2107
    %2179 = vmatpush1.bf16.msra.mxu0 %v2106
    %2180 = vmatprep.subr.bf16.mxu0 %v2111
    %2181 = vmatpush1.bf16.msra.mxu0 %v2110
    %2182 = vmatprep.subr.bf16.mxu0 %v2115
    %2183 = vmatpush1.bf16.msra.mxu0 %v2114
    %2184 = vmatprep.subr.bf16.mxu0 0
    %2185 = vmatpush1.bf16.msra.mxu0 0
    %2186 = vmatprep.subr.bf16.mxu0 0
    %2187 = vmatpush1.bf16.msra.mxu0 0
    %2188 = vmatprep.subr.bf16.mxu0 0
    %2189 = vmatpush1.bf16.msra.mxu0 0
    %2190 = vmatprep.subr.bf16.mxu0 0
    %2191 = vmatpush1.bf16.msra.mxu0 0
    %2192 = vmatprep.subr.bf16.mxu0 0
    %2193 = vmatpush1.bf16.msra.mxu0 0
    %2194 = vmatprep.subr.bf16.mxu0 0
    %2195 = vmatpush1.bf16.msra.mxu0 0
    %2196 = vmatprep.subr.bf16.mxu0 0
    %2197 = vmatpush1.bf16.msra.mxu0 0
    %2198 = vmatprep.subr.bf16.mxu0 0
    %2199 = vmatpush1.bf16.msra.mxu0 0
    %2200 = vmatprep.subr.bf16.mxu0 0
    %2201 = vmatpush1.bf16.msra.mxu0 0
    %2202 = vmatprep.subr.bf16.mxu0 0
    %2203 = vmatpush1.bf16.msra.mxu0 0
    %2204 = vmatprep.subr.bf16.mxu0 0
    %2205 = vmatpush1.bf16.msra.mxu0 0
    %2206 = vmatprep.subr.bf16.mxu0 0
    %2207 = vmatpush1.bf16.msra.mxu0 0
    %2208 = vmatprep.mubr.bf16.mxu0 0
    %2209 = vmatmul.mubr.bf16.gmra.mrb[0].mxu0 %v2133
    %v2210 = vpop.f32.mrb[0].mxu0
    %v2211 = vadd.f32 0.0, %v2210
    %v2212 = vpop.f32.mrb[0].mxu0
    %v2213 = vadd.f32 0.0, %v2212
    %v2214 = vpop.f32.mrb[0].mxu0
    %v2215 = vpop.f32.mrb[0].mxu0
    %2216 = vdwg.mxu0
    %v2217 = vadd.f32 %v2030, %v2170
    %v2218 = vadd.f32 %v2031, %v2172
    %v2219 = vadd.f32 %v2032, %v2211
    %v2220 = vadd.f32 %v2033, %v2213
    %v2221 = vld [vmem:[#allocation2 + $0xc] sm:$0x3]
    %v2222 = vpack.c.bf16 %v2221, %v2221
    %v2223 = vld [vmem:[%s4 + $0x300] sm:$0xff]
    %v2224 = vld [vmem:[%s4 + $0x308] sm:$0xff]
    %v2225 = vld [vmem:[%s4 + $0x310] sm:$0xff]
    %v2226 = vld [vmem:[%s4 + $0x318] sm:$0xff]
    %v2227 = vld [vmem:[%s4 + $0x320] sm:$0xff]
    %v2228 = vld [vmem:[%s4 + $0x328] sm:$0xff]
    %v2229 = vld [vmem:[%s4 + $0x330] sm:$0xff]
    %v2230 = vld [vmem:[%s4 + $0x338] sm:$0xff]
    %v2231 = vld [vmem:[%s4 + $0x340] sm:$0xff]
    %v2232 = vld [vmem:[%s4 + $0x348] sm:$0xff]
    %v2233 = vld [vmem:[%s4 + $0x350] sm:$0xff]
    %v2234 = vld [vmem:[%s4 + $0x358] sm:$0xff]
    %v2235 = vld [vmem:[%s4 + $0x360] sm:$0xff]
    %v2236 = vld [vmem:[%s4 + $0x368] sm:$0xff]
    %v2237 = vld [vmem:[%s4 + $0x370] sm:$0xff]
    %v2238 = vld [vmem:[%s4 + $0x378] sm:$0xff]
    %v2255 = vunpack.c.l.b16 %v2223
    %v2256 = vunpack.c.h.b16 %v2223
    %v2257 = vunpack.c.l.b16 %v2224
    %v2258 = vunpack.c.h.b16 %v2224
    %v2259 = vunpack.c.l.b16 %v2225
    %v2260 = vunpack.c.h.b16 %v2225
    %v2261 = vunpack.c.l.b16 %v2226
    %v2262 = vunpack.c.h.b16 %v2226
    %v2263 = vunpack.c.l.b16 %v2227
    %v2264 = vunpack.c.h.b16 %v2227
    %v2265 = vunpack.c.l.b16 %v2228
    %v2266 = vunpack.c.h.b16 %v2228
    %v2267 = vunpack.c.l.b16 %v2229
    %v2268 = vunpack.c.h.b16 %v2229
    %v2269 = vunpack.c.l.b16 %v2230
    %v2270 = vunpack.c.h.b16 %v2230
    %v2271 = vunpack.c.l.b16 %v2231
    %v2272 = vunpack.c.h.b16 %v2231
    %v2273 = vunpack.c.l.b16 %v2232
    %v2274 = vunpack.c.h.b16 %v2232
    %v2275 = vunpack.c.l.b16 %v2233
    %v2276 = vunpack.c.h.b16 %v2233
    %v2277 = vunpack.c.l.b16 %v2234
    %v2278 = vunpack.c.h.b16 %v2234
    %v2279 = vunpack.c.l.b16 %v2235
    %v2280 = vunpack.c.h.b16 %v2235
    %v2281 = vunpack.c.l.b16 %v2236
    %v2282 = vunpack.c.h.b16 %v2236
    %v2283 = vunpack.c.l.b16 %v2237
    %v2284 = vunpack.c.h.b16 %v2237
    %v2285 = vunpack.c.l.b16 %v2238
    %v2286 = vunpack.c.h.b16 %v2238
    %v2287 = vpack.c.b16 %v2259, %v2255
    %v2288 = vpack.c.b16 %v2260, %v2256
    %v2289 = vpack.c.b16 %v2261, %v2257
    %v2290 = vpack.c.b16 %v2262, %v2258
    %v2291 = vpack.c.b16 %v2267, %v2263
    %v2292 = vpack.c.b16 %v2268, %v2264
    %v2293 = vpack.c.b16 %v2269, %v2265
    %v2294 = vpack.c.b16 %v2270, %v2266
    %v2295 = vpack.c.b16 %v2275, %v2271
    %v2296 = vpack.c.b16 %v2276, %v2272
    %v2297 = vpack.c.b16 %v2277, %v2273
    %v2298 = vpack.c.b16 %v2278, %v2274
    %v2299 = vpack.c.b16 %v2283, %v2279
    %v2300 = vpack.c.b16 %v2284, %v2280
    %v2301 = vpack.c.b16 %v2285, %v2281
    %v2302 = vpack.c.b16 %v2286, %v2282
    %v2320 = vsel %vm1098, %v2222, 0
    %2322 = vmatprep.subr.bf16.mxu0 %v2288
    %2323 = vmatpush1.bf16.msra.mxu0 %v2287
    %2324 = vmatprep.subr.bf16.mxu0 %v2292
    %2325 = vmatpush1.bf16.msra.mxu0 %v2291
    %2326 = vmatprep.subr.bf16.mxu0 %v2296
    %2327 = vmatpush1.bf16.msra.mxu0 %v2295
    %2328 = vmatprep.subr.bf16.mxu0 %v2300
    %2329 = vmatpush1.bf16.msra.mxu0 %v2299
    %2330 = vmatprep.subr.bf16.mxu0 0
    %2331 = vmatpush1.bf16.msra.mxu0 0
    %2332 = vmatprep.subr.bf16.mxu0 0
    %2333 = vmatpush1.bf16.msra.mxu0 0
    %2334 = vmatprep.subr.bf16.mxu0 0
    %2335 = vmatpush1.bf16.msra.mxu0 0
    %2336 = vmatprep.subr.bf16.mxu0 0
    %2337 = vmatpush1.bf16.msra.mxu0 0
    %2338 = vmatprep.subr.bf16.mxu0 0
    %2339 = vmatpush1.bf16.msra.mxu0 0
    %2340 = vmatprep.subr.bf16.mxu0 0
    %2341 = vmatpush1.bf16.msra.mxu0 0
    %2342 = vmatprep.subr.bf16.mxu0 0
    %2343 = vmatpush1.bf16.msra.mxu0 0
    %2344 = vmatprep.subr.bf16.mxu0 0
    %2345 = vmatpush1.bf16.msra.mxu0 0
    %2346 = vmatprep.subr.bf16.mxu0 0
    %2347 = vmatpush1.bf16.msra.mxu0 0
    %2348 = vmatprep.subr.bf16.mxu0 0
    %2349 = vmatpush1.bf16.msra.mxu0 0
    %2350 = vmatprep.subr.bf16.mxu0 0
    %2351 = vmatpush1.bf16.msra.mxu0 0
    %2352 = vmatprep.subr.bf16.mxu0 0
    %2353 = vmatpush1.bf16.msra.mxu0 0
    %2354 = vmatprep.mubr.bf16.mxu0 0
    %2355 = vmatmul.mubr.bf16.gmra.mrb[0].mxu0 %v2320
    %v2356 = vpop.f32.mrb[0].mxu0
    %v2357 = vadd.f32 0.0, %v2356
    %v2358 = vpop.f32.mrb[0].mxu0
    %v2359 = vadd.f32 0.0, %v2358
    %v2360 = vpop.f32.mrb[0].mxu0
    %v2361 = vpop.f32.mrb[0].mxu0
    %2362 = vdwg.mxu0
    %2363 = vmatprep.subr.bf16.mxu0 %v2290
    %2364 = vmatpush1.bf16.msra.mxu0 %v2289
    %2365 = vmatprep.subr.bf16.mxu0 %v2294
    %2366 = vmatpush1.bf16.msra.mxu0 %v2293
    %2367 = vmatprep.subr.bf16.mxu0 %v2298
    %2368 = vmatpush1.bf16.msra.mxu0 %v2297
    %2369 = vmatprep.subr.bf16.mxu0 %v2302
    %2370 = vmatpush1.bf16.msra.mxu0 %v2301
    %2371 = vmatprep.subr.bf16.mxu0 0
    %2372 = vmatpush1.bf16.msra.mxu0 0
    %2373 = vmatprep.subr.bf16.mxu0 0
    %2374 = vmatpush1.bf16.msra.mxu0 0
    %2375 = vmatprep.subr.bf16.mxu0 0
    %2376 = vmatpush1.bf16.msra.mxu0 0
    %2377 = vmatprep.subr.bf16.mxu0 0
    %2378 = vmatpush1.bf16.msra.mxu0 0
    %2379 = vmatprep.subr.bf16.mxu0 0
    %2380 = vmatpush1.bf16.msra.mxu0 0
    %2381 = vmatprep.subr.bf16.mxu0 0
    %2382 = vmatpush1.bf16.msra.mxu0 0
    %2383 = vmatprep.subr.bf16.mxu0 0
    %2384 = vmatpush1.bf16.msra.mxu0 0
    %2385 = vmatprep.subr.bf16.mxu0 0
    %2386 = vmatpush1.bf16.msra.mxu0 0
    %2387 = vmatprep.subr.bf16.mxu0 0
    %2388 = vmatpush1.bf16.msra.mxu0 0
    %2389 = vmatprep.subr.bf16.mxu0 0
    %2390 = vmatpush1.bf16.msra.mxu0 0
    %2391 = vmatprep.subr.bf16.mxu0 0
    %2392 = vmatpush1.bf16.msra.mxu0 0
    %2393 = vmatprep.subr.bf16.mxu0 0
    %2394 = vmatpush1.bf16.msra.mxu0 0
    %2395 = vmatprep.mubr.bf16.mxu0 0
    %2396 = vmatmul.mubr.bf16.gmra.mrb[0].mxu0 %v2320
    %v2397 = vpop.f32.mrb[0].mxu0
    %v2398 = vadd.f32 0.0, %v2397
    %v2399 = vpop.f32.mrb[0].mxu0
    %v2400 = vadd.f32 0.0, %v2399
    %v2401 = vpop.f32.mrb[0].mxu0
    %v2402 = vpop.f32.mrb[0].mxu0
    %2403 = vdwg.mxu0
    %v2404 = vadd.f32 %v2217, %v2357
    %v2405 = vadd.f32 %v2218, %v2359
    %v2406 = vadd.f32 %v2219, %v2398
    %v2407 = vadd.f32 %v2220, %v2400
    %v2408 = vld [vmem:[#allocation2 + $0xe] sm:$0x3]
    %v2409 = vpack.c.bf16 %v2408, %v2408
    %v2410 = vld [vmem:[%s4 + $0x380] sm:$0xff]
    %v2411 = vld [vmem:[%s4 + $0x388] sm:$0xff]
    %v2412 = vld [vmem:[%s4 + $0x390] sm:$0xff]
    %v2413 = vld [vmem:[%s4 + $0x398] sm:$0xff]
    %v2414 = vld [vmem:[%s4 + $0x3a0] sm:$0xff]
    %v2415 = vld [vmem:[%s4 + $0x3a8] sm:$0xff]
    %v2416 = vld [vmem:[%s4 + $0x3b0] sm:$0xff]
    %v2417 = vld [vmem:[%s4 + $0x3b8] sm:$0xff]
    %v2418 = vld [vmem:[%s4 + $0x3c0] sm:$0xff]
    %v2419 = vld [vmem:[%s4 + $0x3c8] sm:$0xff]
    %v2420 = vld [vmem:[%s4 + $0x3d0] sm:$0xff]
    %v2421 = vld [vmem:[%s4 + $0x3d8] sm:$0xff]
    %v2422 = vld [vmem:[%s4 + $0x3e0] sm:$0xff]
    %v2423 = vld [vmem:[%s4 + $0x3e8] sm:$0xff]
    %v2424 = vld [vmem:[%s4 + $0x3f0] sm:$0xff]
    %v2425 = vld [vmem:[%s4 + $0x3f8] sm:$0xff]
    %v2442 = vunpack.c.l.b16 %v2410
    %v2443 = vunpack.c.h.b16 %v2410
    %v2444 = vunpack.c.l.b16 %v2411
    %v2445 = vunpack.c.h.b16 %v2411
    %v2446 = vunpack.c.l.b16 %v2412
    %v2447 = vunpack.c.h.b16 %v2412
    %v2448 = vunpack.c.l.b16 %v2413
    %v2449 = vunpack.c.h.b16 %v2413
    %v2450 = vunpack.c.l.b16 %v2414
    %v2451 = vunpack.c.h.b16 %v2414
    %v2452 = vunpack.c.l.b16 %v2415
    %v2453 = vunpack.c.h.b16 %v2415
    %v2454 = vunpack.c.l.b16 %v2416
    %v2455 = vunpack.c.h.b16 %v2416
    %v2456 = vunpack.c.l.b16 %v2417
    %v2457 = vunpack.c.h.b16 %v2417
    %v2458 = vunpack.c.l.b16 %v2418
    %v2459 = vunpack.c.h.b16 %v2418
    %v2460 = vunpack.c.l.b16 %v2419
    %v2461 = vunpack.c.h.b16 %v2419
    %v2462 = vunpack.c.l.b16 %v2420
    %v2463 = vunpack.c.h.b16 %v2420
    %v2464 = vunpack.c.l.b16 %v2421
    %v2465 = vunpack.c.h.b16 %v2421
    %v2466 = vunpack.c.l.b16 %v2422
    %v2467 = vunpack.c.h.b16 %v2422
    %v2468 = vunpack.c.l.b16 %v2423
    %v2469 = vunpack.c.h.b16 %v2423
    %v2470 = vunpack.c.l.b16 %v2424
    %v2471 = vunpack.c.h.b16 %v2424
    %v2472 = vunpack.c.l.b16 %v2425
    %v2473 = vunpack.c.h.b16 %v2425
    %v2474 = vpack.c.b16 %v2446, %v2442
    %v2475 = vpack.c.b16 %v2447, %v2443
    %v2476 = vpack.c.b16 %v2448, %v2444
    %v2477 = vpack.c.b16 %v2449, %v2445
    %v2478 = vpack.c.b16 %v2454, %v2450
    %v2479 = vpack.c.b16 %v2455, %v2451
    %v2480 = vpack.c.b16 %v2456, %v2452
    %v2481 = vpack.c.b16 %v2457, %v2453
    %v2482 = vpack.c.b16 %v2462, %v2458
    %v2483 = vpack.c.b16 %v2463, %v2459
    %v2484 = vpack.c.b16 %v2464, %v2460
    %v2485 = vpack.c.b16 %v2465, %v2461
    %v2486 = vpack.c.b16 %v2470, %v2466
    %v2487 = vpack.c.b16 %v2471, %v2467
    %v2488 = vpack.c.b16 %v2472, %v2468
    %v2489 = vpack.c.b16 %v2473, %v2469
    %v2507 = vsel %vm1098, %v2409, 0
    %2509 = vmatprep.subr.bf16.mxu0 %v2475
    %2510 = vmatpush1.bf16.msra.mxu0 %v2474
    %2511 = vmatprep.subr.bf16.mxu0 %v2479
    %2512 = vmatpush1.bf16.msra.mxu0 %v2478
    %2513 = vmatprep.subr.bf16.mxu0 %v2483
    %2514 = vmatpush1.bf16.msra.mxu0 %v2482
    %2515 = vmatprep.subr.bf16.mxu0 %v2487
    %2516 = vmatpush1.bf16.msra.mxu0 %v2486
    %2517 = vmatprep.subr.bf16.mxu0 0
    %2518 = vmatpush1.bf16.msra.mxu0 0
    %2519 = vmatprep.subr.bf16.mxu0 0
    %2520 = vmatpush1.bf16.msra.mxu0 0
    %2521 = vmatprep.subr.bf16.mxu0 0
    %2522 = vmatpush1.bf16.msra.mxu0 0
    %2523 = vmatprep.subr.bf16.mxu0 0
    %2524 = vmatpush1.bf16.msra.mxu0 0
    %2525 = vmatprep.subr.bf16.mxu0 0
    %2526 = vmatpush1.bf16.msra.mxu0 0
    %2527 = vmatprep.subr.bf16.mxu0 0
    %2528 = vmatpush1.bf16.msra.mxu0 0
    %2529 = vmatprep.subr.bf16.mxu0 0
    %2530 = vmatpush1.bf16.msra.mxu0 0
    %2531 = vmatprep.subr.bf16.mxu0 0
    %2532 = vmatpush1.bf16.msra.mxu0 0
    %2533 = vmatprep.subr.bf16.mxu0 0
    %2534 = vmatpush1.bf16.msra.mxu0 0
    %2535 = vmatprep.subr.bf16.mxu0 0
    %2536 = vmatpush1.bf16.msra.mxu0 0
    %2537 = vmatprep.subr.bf16.mxu0 0
    %2538 = vmatpush1.bf16.msra.mxu0 0
    %2539 = vmatprep.subr.bf16.mxu0 0
    %2540 = vmatpush1.bf16.msra.mxu0 0
    %2541 = vmatprep.mubr.bf16.mxu0 0
    %2542 = vmatmul.mubr.bf16.gmra.mrb[0].mxu0 %v2507
    %v2543 = vpop.f32.mrb[0].mxu0
    %v2544 = vadd.f32 0.0, %v2543
    %v2545 = vpop.f32.mrb[0].mxu0
    %v2546 = vadd.f32 0.0, %v2545
    %v2547 = vpop.f32.mrb[0].mxu0
    %v2548 = vpop.f32.mrb[0].mxu0
    %2549 = vdwg.mxu0
    %2550 = vmatprep.subr.bf16.mxu0 %v2477
    %2551 = vmatpush1.bf16.msra.mxu0 %v2476
    %2552 = vmatprep.subr.bf16.mxu0 %v2481
    %2553 = vmatpush1.bf16.msra.mxu0 %v2480
    %2554 = vmatprep.subr.bf16.mxu0 %v2485
    %2555 = vmatpush1.bf16.msra.mxu0 %v2484
    %2556 = vmatprep.subr.bf16.mxu0 %v2489
    %2557 = vmatpush1.bf16.msra.mxu0 %v2488
    %2558 = vmatprep.subr.bf16.mxu0 0
    %2559 = vmatpush1.bf16.msra.mxu0 0
    %2560 = vmatprep.subr.bf16.mxu0 0
    %2561 = vmatpush1.bf16.msra.mxu0 0
    %2562 = vmatprep.subr.bf16.mxu0 0
    %2563 = vmatpush1.bf16.msra.mxu0 0
    %2564 = vmatprep.subr.bf16.mxu0 0
    %2565 = vmatpush1.bf16.msra.mxu0 0
    %2566 = vmatprep.subr.bf16.mxu0 0
    %2567 = vmatpush1.bf16.msra.mxu0 0
    %2568 = vmatprep.subr.bf16.mxu0 0
    %2569 = vmatpush1.bf16.msra.mxu0 0
    %2570 = vmatprep.subr.bf16.mxu0 0
    %2571 = vmatpush1.bf16.msra.mxu0 0
    %2572 = vmatprep.subr.bf16.mxu0 0
    %2573 = vmatpush1.bf16.msra.mxu0 0
    %2574 = vmatprep.subr.bf16.mxu0 0
    %2575 = vmatpush1.bf16.msra.mxu0 0
    %2576 = vmatprep.subr.bf16.mxu0 0
    %2577 = vmatpush1.bf16.msra.mxu0 0
    %2578 = vmatprep.subr.bf16.mxu0 0
    %2579 = vmatpush1.bf16.msra.mxu0 0
    %2580 = vmatprep.subr.bf16.mxu0 0
    %2581 = vmatpush1.bf16.msra.mxu0 0
    %2582 = vmatprep.mubr.bf16.mxu0 0
    %2583 = vmatmul.mubr.bf16.gmra.mrb[0].mxu0 %v2507
    %v2584 = vpop.f32.mrb[0].mxu0
    %v2585 = vadd.f32 0.0, %v2584
    %v2586 = vpop.f32.mrb[0].mxu0
    %v2587 = vadd.f32 0.0, %v2586
    %v2588 = vpop.f32.mrb[0].mxu0
    %v2589 = vpop.f32.mrb[0].mxu0
    %2590 = vdwg.mxu0
    %v2591 = vadd.f32 %v2404, %v2544
    %v2592 = vadd.f32 %v2405, %v2546
    %v2593 = vadd.f32 %v2406, %v2585
    %v2594 = vadd.f32 %v2407, %v2587
    %v2595 = vld [vmem:[#allocation2 + $0x10] sm:$0x3]
    %v2596 = vpack.c.bf16 %v2595, %v2595
    %v2597 = vld [vmem:[%s4 + $0x400] sm:$0xff]
    %v2598 = vld [vmem:[%s4 + $0x408] sm:$0xff]
    %v2599 = vld [vmem:[%s4 + $0x410] sm:$0xff]
    %v2600 = vld [vmem:[%s4 + $0x418] sm:$0xff]
    %v2601 = vld [vmem:[%s4 + $0x420] sm:$0xff]
    %v2602 = vld [vmem:[%s4 + $0x428] sm:$0xff]
    %v2603 = vld [vmem:[%s4 + $0x430] sm:$0xff]
    %v2604 = vld [vmem:[%s4 + $0x438] sm:$0xff]
    %v2605 = vld [vmem:[%s4 + $0x440] sm:$0xff]
    %v2606 = vld [vmem:[%s4 + $0x448] sm:$0xff]
    %v2607 = vld [vmem:[%s4 + $0x450] sm:$0xff]
    %v2608 = vld [vmem:[%s4 + $0x458] sm:$0xff]
    %v2609 = vld [vmem:[%s4 + $0x460] sm:$0xff]
    %v2610 = vld [vmem:[%s4 + $0x468] sm:$0xff]
    %v2611 = vld [vmem:[%s4 + $0x470] sm:$0xff]
    %v2612 = vld [vmem:[%s4 + $0x478] sm:$0xff]
    %v2629 = vunpack.c.l.b16 %v2597
    %v2630 = vunpack.c.h.b16 %v2597
    %v2631 = vunpack.c.l.b16 %v2598
    %v2632 = vunpack.c.h.b16 %v2598
    %v2633 = vunpack.c.l.b16 %v2599
    %v2634 = vunpack.c.h.b16 %v2599
    %v2635 = vunpack.c.l.b16 %v2600
    %v2636 = vunpack.c.h.b16 %v2600
    %v2637 = vunpack.c.l.b16 %v2601
    %v2638 = vunpack.c.h.b16 %v2601
    %v2639 = vunpack.c.l.b16 %v2602
    %v2640 = vunpack.c.h.b16 %v2602
    %v2641 = vunpack.c.l.b16 %v2603
    %v2642 = vunpack.c.h.b16 %v2603
    %v2643 = vunpack.c.l.b16 %v2604
    %v2644 = vunpack.c.h.b16 %v2604
    %v2645 = vunpack.c.l.b16 %v2605
    %v2646 = vunpack.c.h.b16 %v2605
    %v2647 = vunpack.c.l.b16 %v2606
    %v2648 = vunpack.c.h.b16 %v2606
    %v2649 = vunpack.c.l.b16 %v2607
    %v2650 = vunpack.c.h.b16 %v2607
    %v2651 = vunpack.c.l.b16 %v2608
    %v2652 = vunpack.c.h.b16 %v2608
    %v2653 = vunpack.c.l.b16 %v2609
    %v2654 = vunpack.c.h.b16 %v2609
    %v2655 = vunpack.c.l.b16 %v2610
    %v2656 = vunpack.c.h.b16 %v2610
    %v2657 = vunpack.c.l.b16 %v2611
    %v2658 = vunpack.c.h.b16 %v2611
    %v2659 = vunpack.c.l.b16 %v2612
    %v2660 = vunpack.c.h.b16 %v2612
    %v2661 = vpack.c.b16 %v2633, %v2629
    %v2662 = vpack.c.b16 %v2634, %v2630
    %v2663 = vpack.c.b16 %v2635, %v2631
    %v2664 = vpack.c.b16 %v2636, %v2632
    %v2665 = vpack.c.b16 %v2641, %v2637
    %v2666 = vpack.c.b16 %v2642, %v2638
    %v2667 = vpack.c.b16 %v2643, %v2639
    %v2668 = vpack.c.b16 %v2644, %v2640
    %v2669 = vpack.c.b16 %v2649, %v2645
    %v2670 = vpack.c.b16 %v2650, %v2646
    %v2671 = vpack.c.b16 %v2651, %v2647
    %v2672 = vpack.c.b16 %v2652, %v2648
    %v2673 = vpack.c.b16 %v2657, %v2653
    %v2674 = vpack.c.b16 %v2658, %v2654
    %v2675 = vpack.c.b16 %v2659, %v2655
    %v2676 = vpack.c.b16 %v2660, %v2656
    %v2694 = vsel %vm1098, %v2596, 0
    %2696 = vmatprep.subr.bf16.mxu0 %v2662
    %2697 = vmatpush1.bf16.msra.mxu0 %v2661
    %2698 = vmatprep.subr.bf16.mxu0 %v2666
    %2699 = vmatpush1.bf16.msra.mxu0 %v2665
    %2700 = vmatprep.subr.bf16.mxu0 %v2670
    %2701 = vmatpush1.bf16.msra.mxu0 %v2669
    %2702 = vmatprep.subr.bf16.mxu0 %v2674
    %2703 = vmatpush1.bf16.msra.mxu0 %v2673
    %2704 = vmatprep.subr.bf16.mxu0 0
    %2705 = vmatpush1.bf16.msra.mxu0 0
    %2706 = vmatprep.subr.bf16.mxu0 0
    %2707 = vmatpush1.bf16.msra.mxu0 0
    %2708 = vmatprep.subr.bf16.mxu0 0
    %2709 = vmatpush1.bf16.msra.mxu0 0
    %2710 = vmatprep.subr.bf16.mxu0 0
    %2711 = vmatpush1.bf16.msra.mxu0 0
    %2712 = vmatprep.subr.bf16.mxu0 0
    %2713 = vmatpush1.bf16.msra.mxu0 0
    %2714 = vmatprep.subr.bf16.mxu0 0
    %2715 = vmatpush1.bf16.msra.mxu0 0
    %2716 = vmatprep.subr.bf16.mxu0 0
    %2717 = vmatpush1.bf16.msra.mxu0 0
    %2718 = vmatprep.subr.bf16.mxu0 0
    %2719 = vmatpush1.bf16.msra.mxu0 0
    %2720 = vmatprep.subr.bf16.mxu0 0
    %2721 = vmatpush1.bf16.msra.mxu0 0
    %2722 = vmatprep.subr.bf16.mxu0 0
    %2723 = vmatpush1.bf16.msra.mxu0 0
    %2724 = vmatprep.subr.bf16.mxu0 0
    %2725 = vmatpush1.bf16.msra.mxu0 0
    %2726 = vmatprep.subr.bf16.mxu0 0
    %2727 = vmatpush1.bf16.msra.mxu0 0
    %2728 = vmatprep.mubr.bf16.mxu0 0
    %2729 = vmatmul.mubr.bf16.gmra.mrb[0].mxu0 %v2694
    %v2730 = vpop.f32.mrb[0].mxu0
    %v2731 = vadd.f32 0.0, %v2730
    %v2732 = vpop.f32.mrb[0].mxu0
    %v2733 = vadd.f32 0.0, %v2732
    %v2734 = vpop.f32.mrb[0].mxu0
    %v2735 = vpop.f32.mrb[0].mxu0
    %2736 = vdwg.mxu0
    %2737 = vmatprep.subr.bf16.mxu0 %v2664
    %2738 = vmatpush1.bf16.msra.mxu0 %v2663
    %2739 = vmatprep.subr.bf16.mxu0 %v2668
    %2740 = vmatpush1.bf16.msra.mxu0 %v2667
    %2741 = vmatprep.subr.bf16.mxu0 %v2672
    %2742 = vmatpush1.bf16.msra.mxu0 %v2671
    %2743 = vmatprep.subr.bf16.mxu0 %v2676
    %2744 = vmatpush1.bf16.msra.mxu0 %v2675
    %2745 = vmatprep.subr.bf16.mxu0 0
    %2746 = vmatpush1.bf16.msra.mxu0 0
    %2747 = vmatprep.subr.bf16.mxu0 0
    %2748 = vmatpush1.bf16.msra.mxu0 0
    %2749 = vmatprep.subr.bf16.mxu0 0
    %2750 = vmatpush1.bf16.msra.mxu0 0
    %2751 = vmatprep.subr.bf16.mxu0 0
    %2752 = vmatpush1.bf16.msra.mxu0 0
    %2753 = vmatprep.subr.bf16.mxu0 0
    %2754 = vmatpush1.bf16.msra.mxu0 0
    %2755 = vmatprep.subr.bf16.mxu0 0
    %2756 = vmatpush1.bf16.msra.mxu0 0
    %2757 = vmatprep.subr.bf16.mxu0 0
    %2758 = vmatpush1.bf16.msra.mxu0 0
    %2759 = vmatprep.subr.bf16.mxu0 0
    %2760 = vmatpush1.bf16.msra.mxu0 0
    %2761 = vmatprep.subr.bf16.mxu0 0
    %2762 = vmatpush1.bf16.msra.mxu0 0
    %2763 = vmatprep.subr.bf16.mxu0 0
    %2764 = vmatpush1.bf16.msra.mxu0 0
    %2765 = vmatprep.subr.bf16.mxu0 0
    %2766 = vmatpush1.bf16.msra.mxu0 0
    %2767 = vmatprep.subr.bf16.mxu0 0
    %2768 = vmatpush1.bf16.msra.mxu0 0
    %2769 = vmatprep.mubr.bf16.mxu0 0
    %2770 = vmatmul.mubr.bf16.gmra.mrb[0].mxu0 %v2694
    %v2771 = vpop.f32.mrb[0].mxu0
    %v2772 = vadd.f32 0.0, %v2771
    %v2773 = vpop.f32.mrb[0].mxu0
    %v2774 = vadd.f32 0.0, %v2773
    %v2775 = vpop.f32.mrb[0].mxu0
    %v2776 = vpop.f32.mrb[0].mxu0
    %2777 = vdwg.mxu0
    %v2778 = vadd.f32 %v2591, %v2731
    %v2779 = vadd.f32 %v2592, %v2733
    %v2780 = vadd.f32 %v2593, %v2772
    %v2781 = vadd.f32 %v2594, %v2774
    %v2782 = vld [vmem:[#allocation2 + $0x12] sm:$0x3]
    %v2783 = vpack.c.bf16 %v2782, %v2782
    %v2784 = vld [vmem:[%s4 + $0x480] sm:$0xff]
    %v2785 = vld [vmem:[%s4 + $0x488] sm:$0xff]
    %v2786 = vld [vmem:[%s4 + $0x490] sm:$0xff]
    %v2787 = vld [vmem:[%s4 + $0x498] sm:$0xff]
    %v2788 = vld [vmem:[%s4 + $0x4a0] sm:$0xff]
    %v2789 = vld [vmem:[%s4 + $0x4a8] sm:$0xff]
    %v2790 = vld [vmem:[%s4 + $0x4b0] sm:$0xff]
    %v2791 = vld [vmem:[%s4 + $0x4b8] sm:$0xff]
    %v2792 = vld [vmem:[%s4 + $0x4c0] sm:$0xff]
    %v2793 = vld [vmem:[%s4 + $0x4c8] sm:$0xff]
    %v2794 = vld [vmem:[%s4 + $0x4d0] sm:$0xff]
    %v2795 = vld [vmem:[%s4 + $0x4d8] sm:$0xff]
    %v2796 = vld [vmem:[%s4 + $0x4e0] sm:$0xff]
    %v2797 = vld [vmem:[%s4 + $0x4e8] sm:$0xff]
    %v2798 = vld [vmem:[%s4 + $0x4f0] sm:$0xff]
    %v2799 = vld [vmem:[%s4 + $0x4f8] sm:$0xff]
    %v2816 = vunpack.c.l.b16 %v2784
    %v2817 = vunpack.c.h.b16 %v2784
    %v2818 = vunpack.c.l.b16 %v2785
    %v2819 = vunpack.c.h.b16 %v2785
    %v2820 = vunpack.c.l.b16 %v2786
    %v2821 = vunpack.c.h.b16 %v2786
    %v2822 = vunpack.c.l.b16 %v2787
    %v2823 = vunpack.c.h.b16 %v2787
    %v2824 = vunpack.c.l.b16 %v2788
    %v2825 = vunpack.c.h.b16 %v2788
    %v2826 = vunpack.c.l.b16 %v2789
    %v2827 = vunpack.c.h.b16 %v2789
    %v2828 = vunpack.c.l.b16 %v2790
    %v2829 = vunpack.c.h.b16 %v2790
    %v2830 = vunpack.c.l.b16 %v2791
    %v2831 = vunpack.c.h.b16 %v2791
    %v2832 = vunpack.c.l.b16 %v2792
    %v2833 = vunpack.c.h.b16 %v2792
    %v2834 = vunpack.c.l.b16 %v2793
    %v2835 = vunpack.c.h.b16 %v2793
    %v2836 = vunpack.c.l.b16 %v2794
    %v2837 = vunpack.c.h.b16 %v2794
    %v2838 = vunpack.c.l.b16 %v2795
    %v2839 = vunpack.c.h.b16 %v2795
    %v2840 = vunpack.c.l.b16 %v2796
    %v2841 = vunpack.c.h.b16 %v2796
    %v2842 = vunpack.c.l.b16 %v2797
    %v2843 = vunpack.c.h.b16 %v2797
    %v2844 = vunpack.c.l.b16 %v2798
    %v2845 = vunpack.c.h.b16 %v2798
    %v2846 = vunpack.c.l.b16 %v2799
    %v2847 = vunpack.c.h.b16 %v2799
    %v2848 = vpack.c.b16 %v2820, %v2816
    %v2849 = vpack.c.b16 %v2821, %v2817
    %v2850 = vpack.c.b16 %v2822, %v2818
    %v2851 = vpack.c.b16 %v2823, %v2819
    %v2852 = vpack.c.b16 %v2828, %v2824
    %v2853 = vpack.c.b16 %v2829, %v2825
    %v2854 = vpack.c.b16 %v2830, %v2826
    %v2855 = vpack.c.b16 %v2831, %v2827
    %v2856 = vpack.c.b16 %v2836, %v2832
    %v2857 = vpack.c.b16 %v2837, %v2833
    %v2858 = vpack.c.b16 %v2838, %v2834
    %v2859 = vpack.c.b16 %v2839, %v2835
    %v2860 = vpack.c.b16 %v2844, %v2840
    %v2861 = vpack.c.b16 %v2845, %v2841
    %v2862 = vpack.c.b16 %v2846, %v2842
    %v2863 = vpack.c.b16 %v2847, %v2843
    %v2881 = vsel %vm1098, %v2783, 0
    %2883 = vmatprep.subr.bf16.mxu0 %v2849
    %2884 = vmatpush1.bf16.msra.mxu0 %v2848
    %2885 = vmatprep.subr.bf16.mxu0 %v2853
    %2886 = vmatpush1.bf16.msra.mxu0 %v2852
    %2887 = vmatprep.subr.bf16.mxu0 %v2857
    %2888 = vmatpush1.bf16.msra.mxu0 %v2856
    %2889 = vmatprep.subr.bf16.mxu0 %v2861
    %2890 = vmatpush1.bf16.msra.mxu0 %v2860
    %2891 = vmatprep.subr.bf16.mxu0 0
    %2892 = vmatpush1.bf16.msra.mxu0 0
    %2893 = vmatprep.subr.bf16.mxu0 0
    %2894 = vmatpush1.bf16.msra.mxu0 0
    %2895 = vmatprep.subr.bf16.mxu0 0
    %2896 = vmatpush1.bf16.msra.mxu0 0
    %2897 = vmatprep.subr.bf16.mxu0 0
    %2898 = vmatpush1.bf16.msra.mxu0 0
    %2899 = vmatprep.subr.bf16.mxu0 0
    %2900 = vmatpush1.bf16.msra.mxu0 0
    %2901 = vmatprep.subr.bf16.mxu0 0
    %2902 = vmatpush1.bf16.msra.mxu0 0
    %2903 = vmatprep.subr.bf16.mxu0 0
    %2904 = vmatpush1.bf16.msra.mxu0 0
    %2905 = vmatprep.subr.bf16.mxu0 0
    %2906 = vmatpush1.bf16.msra.mxu0 0
    %2907 = vmatprep.subr.bf16.mxu0 0
    %2908 = vmatpush1.bf16.msra.mxu0 0
    %2909 = vmatprep.subr.bf16.mxu0 0
    %2910 = vmatpush1.bf16.msra.mxu0 0
    %2911 = vmatprep.subr.bf16.mxu0 0
    %2912 = vmatpush1.bf16.msra.mxu0 0
    %2913 = vmatprep.subr.bf16.mxu0 0
    %2914 = vmatpush1.bf16.msra.mxu0 0
    %2915 = vmatprep.mubr.bf16.mxu0 0
    %2916 = vmatmul.mubr.bf16.gmra.mrb[0].mxu0 %v2881
    %v2917 = vpop.f32.mrb[0].mxu0
    %v2918 = vadd.f32 0.0, %v2917
    %v2919 = vpop.f32.mrb[0].mxu0
    %v2920 = vadd.f32 0.0, %v2919
    %v2921 = vpop.f32.mrb[0].mxu0
    %v2922 = vpop.f32.mrb[0].mxu0
    %2923 = vdwg.mxu0
    %2924 = vmatprep.subr.bf16.mxu0 %v2851
    %2925 = vmatpush1.bf16.msra.mxu0 %v2850
    %2926 = vmatprep.subr.bf16.mxu0 %v2855
    %2927 = vmatpush1.bf16.msra.mxu0 %v2854
    %2928 = vmatprep.subr.bf16.mxu0 %v2859
    %2929 = vmatpush1.bf16.msra.mxu0 %v2858
    %2930 = vmatprep.subr.bf16.mxu0 %v2863
    %2931 = vmatpush1.bf16.msra.mxu0 %v2862
    %2932 = vmatprep.subr.bf16.mxu0 0
    %2933 = vmatpush1.bf16.msra.mxu0 0
    %2934 = vmatprep.subr.bf16.mxu0 0
    %2935 = vmatpush1.bf16.msra.mxu0 0
    %2936 = vmatprep.subr.bf16.mxu0 0
    %2937 = vmatpush1.bf16.msra.mxu0 0
    %2938 = vmatprep.subr.bf16.mxu0 0
    %2939 = vmatpush1.bf16.msra.mxu0 0
    %2940 = vmatprep.subr.bf16.mxu0 0
    %2941 = vmatpush1.bf16.msra.mxu0 0
    %2942 = vmatprep.subr.bf16.mxu0 0
    %2943 = vmatpush1.bf16.msra.mxu0 0
    %2944 = vmatprep.subr.bf16.mxu0 0
    %2945 = vmatpush1.bf16.msra.mxu0 0
    %2946 = vmatprep.subr.bf16.mxu0 0
    %2947 = vmatpush1.bf16.msra.mxu0 0
    %2948 = vmatprep.subr.bf16.mxu0 0
    %2949 = vmatpush1.bf16.msra.mxu0 0
    %2950 = vmatprep.subr.bf16.mxu0 0
    %2951 = vmatpush1.bf16.msra.mxu0 0
    %2952 = vmatprep.subr.bf16.mxu0 0
    %2953 = vmatpush1.bf16.msra.mxu0 0
    %2954 = vmatprep.subr.bf16.mxu0 0
    %2955 = vmatpush1.bf16.msra.mxu0 0
    %2956 = vmatprep.mubr.bf16.mxu0 0
    %2957 = vmatmul.mubr.bf16.gmra.mrb[0].mxu0 %v2881
    %v2958 = vpop.f32.mrb[0].mxu0
    %v2959 = vadd.f32 0.0, %v2958
    %v2960 = vpop.f32.mrb[0].mxu0
    %v2961 = vadd.f32 0.0, %v2960
    %v2962 = vpop.f32.mrb[0].mxu0
    %v2963 = vpop.f32.mrb[0].mxu0
    %2964 = vdwg.mxu0
    %v2965 = vadd.f32 %v2778, %v2918
    %v2966 = vadd.f32 %v2779, %v2920
    %v2967 = vadd.f32 %v2780, %v2959
    %v2968 = vadd.f32 %v2781, %v2961
    %v2969 = vld [vmem:[#allocation2 + $0x14] sm:$0x3]
    %v2970 = vpack.c.bf16 %v2969, %v2969
    %v2971 = vld [vmem:[%s4 + $0x500] sm:$0xff]
    %v2972 = vld [vmem:[%s4 + $0x508] sm:$0xff]
    %v2973 = vld [vmem:[%s4 + $0x510] sm:$0xff]
    %v2974 = vld [vmem:[%s4 + $0x518] sm:$0xff]
    %v2975 = vld [vmem:[%s4 + $0x520] sm:$0xff]
    %v2976 = vld [vmem:[%s4 + $0x528] sm:$0xff]
    %v2977 = vld [vmem:[%s4 + $0x530] sm:$0xff]
    %v2978 = vld [vmem:[%s4 + $0x538] sm:$0xff]
    %v2979 = vld [vmem:[%s4 + $0x540] sm:$0xff]
    %v2980 = vld [vmem:[%s4 + $0x548] sm:$0xff]
    %v2981 = vld [vmem:[%s4 + $0x550] sm:$0xff]
    %v2982 = vld [vmem:[%s4 + $0x558] sm:$0xff]
    %v2983 = vld [vmem:[%s4 + $0x560] sm:$0xff]
    %v2984 = vld [vmem:[%s4 + $0x568] sm:$0xff]
    %v2985 = vld [vmem:[%s4 + $0x570] sm:$0xff]
    %v2986 = vld [vmem:[%s4 + $0x578] sm:$0xff]
    %v3003 = vunpack.c.l.b16 %v2971
    %v3004 = vunpack.c.h.b16 %v2971
    %v3005 = vunpack.c.l.b16 %v2972
    %v3006 = vunpack.c.h.b16 %v2972
    %v3007 = vunpack.c.l.b16 %v2973
    %v3008 = vunpack.c.h.b16 %v2973
    %v3009 = vunpack.c.l.b16 %v2974
    %v3010 = vunpack.c.h.b16 %v2974
    %v3011 = vunpack.c.l.b16 %v2975
    %v3012 = vunpack.c.h.b16 %v2975
    %v3013 = vunpack.c.l.b16 %v2976
    %v3014 = vunpack.c.h.b16 %v2976
    %v3015 = vunpack.c.l.b16 %v2977
    %v3016 = vunpack.c.h.b16 %v2977
    %v3017 = vunpack.c.l.b16 %v2978
    %v3018 = vunpack.c.h.b16 %v2978
    %v3019 = vunpack.c.l.b16 %v2979
    %v3020 = vunpack.c.h.b16 %v2979
    %v3021 = vunpack.c.l.b16 %v2980
    %v3022 = vunpack.c.h.b16 %v2980
    %v3023 = vunpack.c.l.b16 %v2981
    %v3024 = vunpack.c.h.b16 %v2981
    %v3025 = vunpack.c.l.b16 %v2982
    %v3026 = vunpack.c.h.b16 %v2982
    %v3027 = vunpack.c.l.b16 %v2983
    %v3028 = vunpack.c.h.b16 %v2983
    %v3029 = vunpack.c.l.b16 %v2984
    %v3030 = vunpack.c.h.b16 %v2984
    %v3031 = vunpack.c.l.b16 %v2985
    %v3032 = vunpack.c.h.b16 %v2985
    %v3033 = vunpack.c.l.b16 %v2986
    %v3034 = vunpack.c.h.b16 %v2986
    %v3035 = vpack.c.b16 %v3007, %v3003
    %v3036 = vpack.c.b16 %v3008, %v3004
    %v3037 = vpack.c.b16 %v3009, %v3005
    %v3038 = vpack.c.b16 %v3010, %v3006
    %v3039 = vpack.c.b16 %v3015, %v3011
    %v3040 = vpack.c.b16 %v3016, %v3012
    %v3041 = vpack.c.b16 %v3017, %v3013
    %v3042 = vpack.c.b16 %v3018, %v3014
    %v3043 = vpack.c.b16 %v3023, %v3019
    %v3044 = vpack.c.b16 %v3024, %v3020
    %v3045 = vpack.c.b16 %v3025, %v3021
    %v3046 = vpack.c.b16 %v3026, %v3022
    %v3047 = vpack.c.b16 %v3031, %v3027
    %v3048 = vpack.c.b16 %v3032, %v3028
    %v3049 = vpack.c.b16 %v3033, %v3029
    %v3050 = vpack.c.b16 %v3034, %v3030
    %v3068 = vsel %vm1098, %v2970, 0
    %3070 = vmatprep.subr.bf16.mxu0 %v3036
    %3071 = vmatpush1.bf16.msra.mxu0 %v3035
    %3072 = vmatprep.subr.bf16.mxu0 %v3040
    %3073 = vmatpush1.bf16.msra.mxu0 %v3039
    %3074 = vmatprep.subr.bf16.mxu0 %v3044
    %3075 = vmatpush1.bf16.msra.mxu0 %v3043
    %3076 = vmatprep.subr.bf16.mxu0 %v3048
    %3077 = vmatpush1.bf16.msra.mxu0 %v3047
    %3078 = vmatprep.subr.bf16.mxu0 0
    %3079 = vmatpush1.bf16.msra.mxu0 0
    %3080 = vmatprep.subr.bf16.mxu0 0
    %3081 = vmatpush1.bf16.msra.mxu0 0
    %3082 = vmatprep.subr.bf16.mxu0 0
    %3083 = vmatpush1.bf16.msra.mxu0 0
    %3084 = vmatprep.subr.bf16.mxu0 0
    %3085 = vmatpush1.bf16.msra.mxu0 0
    %3086 = vmatprep.subr.bf16.mxu0 0
    %3087 = vmatpush1.bf16.msra.mxu0 0
    %3088 = vmatprep.subr.bf16.mxu0 0
    %3089 = vmatpush1.bf16.msra.mxu0 0
    %3090 = vmatprep.subr.bf16.mxu0 0
    %3091 = vmatpush1.bf16.msra.mxu0 0
    %3092 = vmatprep.subr.bf16.mxu0 0
    %3093 = vmatpush1.bf16.msra.mxu0 0
    %3094 = vmatprep.subr.bf16.mxu0 0
    %3095 = vmatpush1.bf16.msra.mxu0 0
    %3096 = vmatprep.subr.bf16.mxu0 0
    %3097 = vmatpush1.bf16.msra.mxu0 0
    %3098 = vmatprep.subr.bf16.mxu0 0
    %3099 = vmatpush1.bf16.msra.mxu0 0
    %3100 = vmatprep.subr.bf16.mxu0 0
    %3101 = vmatpush1.bf16.msra.mxu0 0
    %3102 = vmatprep.mubr.bf16.mxu0 0
    %3103 = vmatmul.mubr.bf16.gmra.mrb[0].mxu0 %v3068
    %v3104 = vpop.f32.mrb[0].mxu0
    %v3105 = vadd.f32 0.0, %v3104
    %v3106 = vpop.f32.mrb[0].mxu0
    %v3107 = vadd.f32 0.0, %v3106
    %v3108 = vpop.f32.mrb[0].mxu0
    %v3109 = vpop.f32.mrb[0].mxu0
    %3110 = vdwg.mxu0
    %3111 = vmatprep.subr.bf16.mxu0 %v3038
    %3112 = vmatpush1.bf16.msra.mxu0 %v3037
    %3113 = vmatprep.subr.bf16.mxu0 %v3042
    %3114 = vmatpush1.bf16.msra.mxu0 %v3041
    %3115 = vmatprep.subr.bf16.mxu0 %v3046
    %3116 = vmatpush1.bf16.msra.mxu0 %v3045
    %3117 = vmatprep.subr.bf16.mxu0 %v3050
    %3118 = vmatpush1.bf16.msra.mxu0 %v3049
    %3119 = vmatprep.subr.bf16.mxu0 0
    %3120 = vmatpush1.bf16.msra.mxu0 0
    %3121 = vmatprep.subr.bf16.mxu0 0
    %3122 = vmatpush1.bf16.msra.mxu0 0
    %3123 = vmatprep.subr.bf16.mxu0 0
    %3124 = vmatpush1.bf16.msra.mxu0 0
    %3125 = vmatprep.subr.bf16.mxu0 0
    %3126 = vmatpush1.bf16.msra.mxu0 0
    %3127 = vmatprep.subr.bf16.mxu0 0
    %3128 = vmatpush1.bf16.msra.mxu0 0
    %3129 = vmatprep.subr.bf16.mxu0 0
    %3130 = vmatpush1.bf16.msra.mxu0 0
    %3131 = vmatprep.subr.bf16.mxu0 0
    %3132 = vmatpush1.bf16.msra.mxu0 0
    %3133 = vmatprep.subr.bf16.mxu0 0
    %3134 = vmatpush1.bf16.msra.mxu0 0
    %3135 = vmatprep.subr.bf16.mxu0 0
    %3136 = vmatpush1.bf16.msra.mxu0 0
    %3137 = vmatprep.subr.bf16.mxu0 0
    %3138 = vmatpush1.bf16.msra.mxu0 0
    %3139 = vmatprep.subr.bf16.mxu0 0
    %3140 = vmatpush1.bf16.msra.mxu0 0
    %3141 = vmatprep.subr.bf16.mxu0 0
    %3142 = vmatpush1.bf16.msra.mxu0 0
    %3143 = vmatprep.mubr.bf16.mxu0 0
    %3144 = vmatmul.mubr.bf16.gmra.mrb[0].mxu0 %v3068
    %v3145 = vpop.f32.mrb[0].mxu0
    %v3146 = vadd.f32 0.0, %v3145
    %v3147 = vpop.f32.mrb[0].mxu0
    %v3148 = vadd.f32 0.0, %v3147
    %v3149 = vpop.f32.mrb[0].mxu0
    %v3150 = vpop.f32.mrb[0].mxu0
    %3151 = vdwg.mxu0
    %v3152 = vadd.f32 %v2965, %v3105
    %v3153 = vadd.f32 %v2966, %v3107
    %v3154 = vadd.f32 %v2967, %v3146
    %v3155 = vadd.f32 %v2968, %v3148
    %v3156 = vld [vmem:[#allocation2 + $0x16] sm:$0x3]
    %v3157 = vpack.c.bf16 %v3156, %v3156
    %v3158 = vld [vmem:[%s4 + $0x580] sm:$0xff]
    %v3159 = vld [vmem:[%s4 + $0x588] sm:$0xff]
    %v3160 = vld [vmem:[%s4 + $0x590] sm:$0xff]
    %v3161 = vld [vmem:[%s4 + $0x598] sm:$0xff]
    %v3162 = vld [vmem:[%s4 + $0x5a0] sm:$0xff]
    %v3163 = vld [vmem:[%s4 + $0x5a8] sm:$0xff]
    %v3164 = vld [vmem:[%s4 + $0x5b0] sm:$0xff]
    %v3165 = vld [vmem:[%s4 + $0x5b8] sm:$0xff]
    %v3166 = vld [vmem:[%s4 + $0x5c0] sm:$0xff]
    %v3167 = vld [vmem:[%s4 + $0x5c8] sm:$0xff]
    %v3168 = vld [vmem:[%s4 + $0x5d0] sm:$0xff]
    %v3169 = vld [vmem:[%s4 + $0x5d8] sm:$0xff]
    %v3170 = vld [vmem:[%s4 + $0x5e0] sm:$0xff]
    %v3171 = vld [vmem:[%s4 + $0x5e8] sm:$0xff]
    %v3172 = vld [vmem:[%s4 + $0x5f0] sm:$0xff]
    %v3173 = vld [vmem:[%s4 + $0x5f8] sm:$0xff]
    %v3190 = vunpack.c.l.b16 %v3158
    %v3191 = vunpack.c.h.b16 %v3158
    %v3192 = vunpack.c.l.b16 %v3159
    %v3193 = vunpack.c.h.b16 %v3159
    %v3194 = vunpack.c.l.b16 %v3160
    %v3195 = vunpack.c.h.b16 %v3160
    %v3196 = vunpack.c.l.b16 %v3161
    %v3197 = vunpack.c.h.b16 %v3161
    %v3198 = vunpack.c.l.b16 %v3162
    %v3199 = vunpack.c.h.b16 %v3162
    %v3200 = vunpack.c.l.b16 %v3163
    %v3201 = vunpack.c.h.b16 %v3163
    %v3202 = vunpack.c.l.b16 %v3164
    %v3203 = vunpack.c.h.b16 %v3164
    %v3204 = vunpack.c.l.b16 %v3165
    %v3205 = vunpack.c.h.b16 %v3165
    %v3206 = vunpack.c.l.b16 %v3166
    %v3207 = vunpack.c.h.b16 %v3166
    %v3208 = vunpack.c.l.b16 %v3167
    %v3209 = vunpack.c.h.b16 %v3167
    %v3210 = vunpack.c.l.b16 %v3168
    %v3211 = vunpack.c.h.b16 %v3168
    %v3212 = vunpack.c.l.b16 %v3169
    %v3213 = vunpack.c.h.b16 %v3169
    %v3214 = vunpack.c.l.b16 %v3170
    %v3215 = vunpack.c.h.b16 %v3170
    %v3216 = vunpack.c.l.b16 %v3171
    %v3217 = vunpack.c.h.b16 %v3171
    %v3218 = vunpack.c.l.b16 %v3172
    %v3219 = vunpack.c.h.b16 %v3172
    %v3220 = vunpack.c.l.b16 %v3173
    %v3221 = vunpack.c.h.b16 %v3173
    %v3222 = vpack.c.b16 %v3194, %v3190
    %v3223 = vpack.c.b16 %v3195, %v3191
    %v3224 = vpack.c.b16 %v3196, %v3192
    %v3225 = vpack.c.b16 %v3197, %v3193
    %v3226 = vpack.c.b16 %v3202, %v3198
    %v3227 = vpack.c.b16 %v3203, %v3199
    %v3228 = vpack.c.b16 %v3204, %v3200
    %v3229 = vpack.c.b16 %v3205, %v3201
    %v3230 = vpack.c.b16 %v3210, %v3206
    %v3231 = vpack.c.b16 %v3211, %v3207
    %v3232 = vpack.c.b16 %v3212, %v3208
    %v3233 = vpack.c.b16 %v3213, %v3209
    %v3234 = vpack.c.b16 %v3218, %v3214
    %v3235 = vpack.c.b16 %v3219, %v3215
    %v3236 = vpack.c.b16 %v3220, %v3216
    %v3237 = vpack.c.b16 %v3221, %v3217
    %v3255 = vsel %vm1098, %v3157, 0
    %3257 = vmatprep.subr.bf16.mxu0 %v3223
    %3258 = vmatpush1.bf16.msra.mxu0 %v3222
    %3259 = vmatprep.subr.bf16.mxu0 %v3227
    %3260 = vmatpush1.bf16.msra.mxu0 %v3226
    %3261 = vmatprep.subr.bf16.mxu0 %v3231
    %3262 = vmatpush1.bf16.msra.mxu0 %v3230
    %3263 = vmatprep.subr.bf16.mxu0 %v3235
    %3264 = vmatpush1.bf16.msra.mxu0 %v3234
    %3265 = vmatprep.subr.bf16.mxu0 0
    %3266 = vmatpush1.bf16.msra.mxu0 0
    %3267 = vmatprep.subr.bf16.mxu0 0
    %3268 = vmatpush1.bf16.msra.mxu0 0
    %3269 = vmatprep.subr.bf16.mxu0 0
    %3270 = vmatpush1.bf16.msra.mxu0 0
    %3271 = vmatprep.subr.bf16.mxu0 0
    %3272 = vmatpush1.bf16.msra.mxu0 0
    %3273 = vmatprep.subr.bf16.mxu0 0
    %3274 = vmatpush1.bf16.msra.mxu0 0
    %3275 = vmatprep.subr.bf16.mxu0 0
    %3276 = vmatpush1.bf16.msra.mxu0 0
    %3277 = vmatprep.subr.bf16.mxu0 0
    %3278 = vmatpush1.bf16.msra.mxu0 0
    %3279 = vmatprep.subr.bf16.mxu0 0
    %3280 = vmatpush1.bf16.msra.mxu0 0
    %3281 = vmatprep.subr.bf16.mxu0 0
    %3282 = vmatpush1.bf16.msra.mxu0 0
    %3283 = vmatprep.subr.bf16.mxu0 0
    %3284 = vmatpush1.bf16.msra.mxu0 0
    %3285 = vmatprep.subr.bf16.mxu0 0
    %3286 = vmatpush1.bf16.msra.mxu0 0
    %3287 = vmatprep.subr.bf16.mxu0 0
    %3288 = vmatpush1.bf16.msra.mxu0 0
    %3289 = vmatprep.mubr.bf16.mxu0 0
    %3290 = vmatmul.mubr.bf16.gmra.mrb[0].mxu0 %v3255
    %v3291 = vpop.f32.mrb[0].mxu0
    %v3292 = vadd.f32 0.0, %v3291
    %v3293 = vpop.f32.mrb[0].mxu0
    %v3294 = vadd.f32 0.0, %v3293
    %v3295 = vpop.f32.mrb[0].mxu0
    %v3296 = vpop.f32.mrb[0].mxu0
    %3297 = vdwg.mxu0
    %3298 = vmatprep.subr.bf16.mxu0 %v3225
    %3299 = vmatpush1.bf16.msra.mxu0 %v3224
    %3300 = vmatprep.subr.bf16.mxu0 %v3229
    %3301 = vmatpush1.bf16.msra.mxu0 %v3228
    %3302 = vmatprep.subr.bf16.mxu0 %v3233
    %3303 = vmatpush1.bf16.msra.mxu0 %v3232
    %3304 = vmatprep.subr.bf16.mxu0 %v3237
    %3305 = vmatpush1.bf16.msra.mxu0 %v3236
    %3306 = vmatprep.subr.bf16.mxu0 0
    %3307 = vmatpush1.bf16.msra.mxu0 0
    %3308 = vmatprep.subr.bf16.mxu0 0
    %3309 = vmatpush1.bf16.msra.mxu0 0
    %3310 = vmatprep.subr.bf16.mxu0 0
    %3311 = vmatpush1.bf16.msra.mxu0 0
    %3312 = vmatprep.subr.bf16.mxu0 0
    %3313 = vmatpush1.bf16.msra.mxu0 0
    %3314 = vmatprep.subr.bf16.mxu0 0
    %3315 = vmatpush1.bf16.msra.mxu0 0
    %3316 = vmatprep.subr.bf16.mxu0 0
    %3317 = vmatpush1.bf16.msra.mxu0 0
    %3318 = vmatprep.subr.bf16.mxu0 0
    %3319 = vmatpush1.bf16.msra.mxu0 0
    %3320 = vmatprep.subr.bf16.mxu0 0
    %3321 = vmatpush1.bf16.msra.mxu0 0
    %3322 = vmatprep.subr.bf16.mxu0 0
    %3323 = vmatpush1.bf16.msra.mxu0 0
    %3324 = vmatprep.subr.bf16.mxu0 0
    %3325 = vmatpush1.bf16.msra.mxu0 0
    %3326 = vmatprep.subr.bf16.mxu0 0
    %3327 = vmatpush1.bf16.msra.mxu0 0
    %3328 = vmatprep.subr.bf16.mxu0 0
    %3329 = vmatpush1.bf16.msra.mxu0 0
    %3330 = vmatprep.mubr.bf16.mxu0 0
    %3331 = vmatmul.mubr.bf16.gmra.mrb[0].mxu0 %v3255
    %v3332 = vpop.f32.mrb[0].mxu0
    %v3333 = vadd.f32 0.0, %v3332
    %v3334 = vpop.f32.mrb[0].mxu0
    %v3335 = vadd.f32 0.0, %v3334
    %v3336 = vpop.f32.mrb[0].mxu0
    %v3337 = vpop.f32.mrb[0].mxu0
    %3338 = vdwg.mxu0
    %v3339 = vadd.f32 %v3152, %v3292
    %v3340 = vadd.f32 %v3153, %v3294
    %v3341 = vadd.f32 %v3154, %v3333
    %v3342 = vadd.f32 %v3155, %v3335
    %v3343 = vld [vmem:[#allocation2 + $0x18] sm:$0x3]
    %v3344 = vpack.c.bf16 %v3343, %v3343
    %v3345 = vld [vmem:[%s4 + $0x600] sm:$0xff]
    %v3346 = vld [vmem:[%s4 + $0x608] sm:$0xff]
    %v3347 = vld [vmem:[%s4 + $0x610] sm:$0xff]
    %v3348 = vld [vmem:[%s4 + $0x618] sm:$0xff]
    %v3349 = vld [vmem:[%s4 + $0x620] sm:$0xff]
    %v3350 = vld [vmem:[%s4 + $0x628] sm:$0xff]
    %v3351 = vld [vmem:[%s4 + $0x630] sm:$0xff]
    %v3352 = vld [vmem:[%s4 + $0x638] sm:$0xff]
    %v3353 = vld [vmem:[%s4 + $0x640] sm:$0xff]
    %v3354 = vld [vmem:[%s4 + $0x648] sm:$0xff]
    %v3355 = vld [vmem:[%s4 + $0x650] sm:$0xff]
    %v3356 = vld [vmem:[%s4 + $0x658] sm:$0xff]
    %v3357 = vld [vmem:[%s4 + $0x660] sm:$0xff]
    %v3358 = vld [vmem:[%s4 + $0x668] sm:$0xff]
    %v3359 = vld [vmem:[%s4 + $0x670] sm:$0xff]
    %v3360 = vld [vmem:[%s4 + $0x678] sm:$0xff]
    %v3377 = vunpack.c.l.b16 %v3345
    %v3378 = vunpack.c.h.b16 %v3345
    %v3379 = vunpack.c.l.b16 %v3346
    %v3380 = vunpack.c.h.b16 %v3346
    %v3381 = vunpack.c.l.b16 %v3347
    %v3382 = vunpack.c.h.b16 %v3347
    %v3383 = vunpack.c.l.b16 %v3348
    %v3384 = vunpack.c.h.b16 %v3348
    %v3385 = vunpack.c.l.b16 %v3349
    %v3386 = vunpack.c.h.b16 %v3349
    %v3387 = vunpack.c.l.b16 %v3350
    %v3388 = vunpack.c.h.b16 %v3350
    %v3389 = vunpack.c.l.b16 %v3351
    %v3390 = vunpack.c.h.b16 %v3351
    %v3391 = vunpack.c.l.b16 %v3352
    %v3392 = vunpack.c.h.b16 %v3352
    %v3393 = vunpack.c.l.b16 %v3353
    %v3394 = vunpack.c.h.b16 %v3353
    %v3395 = vunpack.c.l.b16 %v3354
    %v3396 = vunpack.c.h.b16 %v3354
    %v3397 = vunpack.c.l.b16 %v3355
    %v3398 = vunpack.c.h.b16 %v3355
    %v3399 = vunpack.c.l.b16 %v3356
    %v3400 = vunpack.c.h.b16 %v3356
    %v3401 = vunpack.c.l.b16 %v3357
    %v3402 = vunpack.c.h.b16 %v3357
    %v3403 = vunpack.c.l.b16 %v3358
    %v3404 = vunpack.c.h.b16 %v3358
    %v3405 = vunpack.c.l.b16 %v3359
    %v3406 = vunpack.c.h.b16 %v3359
    %v3407 = vunpack.c.l.b16 %v3360
    %v3408 = vunpack.c.h.b16 %v3360
    %v3409 = vpack.c.b16 %v3381, %v3377
    %v3410 = vpack.c.b16 %v3382, %v3378
    %v3411 = vpack.c.b16 %v3383, %v3379
    %v3412 = vpack.c.b16 %v3384, %v3380
    %v3413 = vpack.c.b16 %v3389, %v3385
    %v3414 = vpack.c.b16 %v3390, %v3386
    %v3415 = vpack.c.b16 %v3391, %v3387
    %v3416 = vpack.c.b16 %v3392, %v3388
    %v3417 = vpack.c.b16 %v3397, %v3393
    %v3418 = vpack.c.b16 %v3398, %v3394
    %v3419 = vpack.c.b16 %v3399, %v3395
    %v3420 = vpack.c.b16 %v3400, %v3396
    %v3421 = vpack.c.b16 %v3405, %v3401
    %v3422 = vpack.c.b16 %v3406, %v3402
    %v3423 = vpack.c.b16 %v3407, %v3403
    %v3424 = vpack.c.b16 %v3408, %v3404
    %v3442 = vsel %vm1098, %v3344, 0
    %3444 = vmatprep.subr.bf16.mxu0 %v3410
    %3445 = vmatpush1.bf16.msra.mxu0 %v3409
    %3446 = vmatprep.subr.bf16.mxu0 %v3414
    %3447 = vmatpush1.bf16.msra.mxu0 %v3413
    %3448 = vmatprep.subr.bf16.mxu0 %v3418
    %3449 = vmatpush1.bf16.msra.mxu0 %v3417
    %3450 = vmatprep.subr.bf16.mxu0 %v3422
    %3451 = vmatpush1.bf16.msra.mxu0 %v3421
    %3452 = vmatprep.subr.bf16.mxu0 0
    %3453 = vmatpush1.bf16.msra.mxu0 0
    %3454 = vmatprep.subr.bf16.mxu0 0
    %3455 = vmatpush1.bf16.msra.mxu0 0
    %3456 = vmatprep.subr.bf16.mxu0 0
    %3457 = vmatpush1.bf16.msra.mxu0 0
    %3458 = vmatprep.subr.bf16.mxu0 0
    %3459 = vmatpush1.bf16.msra.mxu0 0
    %3460 = vmatprep.subr.bf16.mxu0 0
    %3461 = vmatpush1.bf16.msra.mxu0 0
    %3462 = vmatprep.subr.bf16.mxu0 0
    %3463 = vmatpush1.bf16.msra.mxu0 0
    %3464 = vmatprep.subr.bf16.mxu0 0
    %3465 = vmatpush1.bf16.msra.mxu0 0
    %3466 = vmatprep.subr.bf16.mxu0 0
    %3467 = vmatpush1.bf16.msra.mxu0 0
    %3468 = vmatprep.subr.bf16.mxu0 0
    %3469 = vmatpush1.bf16.msra.mxu0 0
    %3470 = vmatprep.subr.bf16.mxu0 0
    %3471 = vmatpush1.bf16.msra.mxu0 0
    %3472 = vmatprep.subr.bf16.mxu0 0
    %3473 = vmatpush1.bf16.msra.mxu0 0
    %3474 = vmatprep.subr.bf16.mxu0 0
    %3475 = vmatpush1.bf16.msra.mxu0 0
    %3476 = vmatprep.mubr.bf16.mxu0 0
    %3477 = vmatmul.mubr.bf16.gmra.mrb[0].mxu0 %v3442
    %v3478 = vpop.f32.mrb[0].mxu0
    %v3479 = vadd.f32 0.0, %v3478
    %v3480 = vpop.f32.mrb[0].mxu0
    %v3481 = vadd.f32 0.0, %v3480
    %v3482 = vpop.f32.mrb[0].mxu0
    %v3483 = vpop.f32.mrb[0].mxu0
    %3484 = vdwg.mxu0
    %3485 = vmatprep.subr.bf16.mxu0 %v3412
    %3486 = vmatpush1.bf16.msra.mxu0 %v3411
    %3487 = vmatprep.subr.bf16.mxu0 %v3416
    %3488 = vmatpush1.bf16.msra.mxu0 %v3415
    %3489 = vmatprep.subr.bf16.mxu0 %v3420
    %3490 = vmatpush1.bf16.msra.mxu0 %v3419
    %3491 = vmatprep.subr.bf16.mxu0 %v3424
    %3492 = vmatpush1.bf16.msra.mxu0 %v3423
    %3493 = vmatprep.subr.bf16.mxu0 0
    %3494 = vmatpush1.bf16.msra.mxu0 0
    %3495 = vmatprep.subr.bf16.mxu0 0
    %3496 = vmatpush1.bf16.msra.mxu0 0
    %3497 = vmatprep.subr.bf16.mxu0 0
    %3498 = vmatpush1.bf16.msra.mxu0 0
    %3499 = vmatprep.subr.bf16.mxu0 0
    %3500 = vmatpush1.bf16.msra.mxu0 0
    %3501 = vmatprep.subr.bf16.mxu0 0
    %3502 = vmatpush1.bf16.msra.mxu0 0
    %3503 = vmatprep.subr.bf16.mxu0 0
    %3504 = vmatpush1.bf16.msra.mxu0 0
    %3505 = vmatprep.subr.bf16.mxu0 0
    %3506 = vmatpush1.bf16.msra.mxu0 0
    %3507 = vmatprep.subr.bf16.mxu0 0
    %3508 = vmatpush1.bf16.msra.mxu0 0
    %3509 = vmatprep.subr.bf16.mxu0 0
    %3510 = vmatpush1.bf16.msra.mxu0 0
    %3511 = vmatprep.subr.bf16.mxu0 0
    %3512 = vmatpush1.bf16.msra.mxu0 0
    %3513 = vmatprep.subr.bf16.mxu0 0
    %3514 = vmatpush1.bf16.msra.mxu0 0
    %3515 = vmatprep.subr.bf16.mxu0 0
    %3516 = vmatpush1.bf16.msra.mxu0 0
    %3517 = vmatprep.mubr.bf16.mxu0 0
    %3518 = vmatmul.mubr.bf16.gmra.mrb[0].mxu0 %v3442
    %v3519 = vpop.f32.mrb[0].mxu0
    %v3520 = vadd.f32 0.0, %v3519
    %v3521 = vpop.f32.mrb[0].mxu0
    %v3522 = vadd.f32 0.0, %v3521
    %v3523 = vpop.f32.mrb[0].mxu0
    %v3524 = vpop.f32.mrb[0].mxu0
    %3525 = vdwg.mxu0
    %v3526 = vadd.f32 %v3339, %v3479
    %v3527 = vadd.f32 %v3340, %v3481
    %v3528 = vadd.f32 %v3341, %v3520
    %v3529 = vadd.f32 %v3342, %v3522
    %v3530 = vld [vmem:[#allocation2 + $0x1a] sm:$0x3]
    %v3531 = vpack.c.bf16 %v3530, %v3530
    %v3532 = vld [vmem:[%s4 + $0x680] sm:$0xff]
    %v3533 = vld [vmem:[%s4 + $0x688] sm:$0xff]
    %v3534 = vld [vmem:[%s4 + $0x690] sm:$0xff]
    %v3535 = vld [vmem:[%s4 + $0x698] sm:$0xff]
    %v3536 = vld [vmem:[%s4 + $0x6a0] sm:$0xff]
    %v3537 = vld [vmem:[%s4 + $0x6a8] sm:$0xff]
    %v3538 = vld [vmem:[%s4 + $0x6b0] sm:$0xff]
    %v3539 = vld [vmem:[%s4 + $0x6b8] sm:$0xff]
    %v3540 = vld [vmem:[%s4 + $0x6c0] sm:$0xff]
    %v3541 = vld [vmem:[%s4 + $0x6c8] sm:$0xff]
    %v3542 = vld [vmem:[%s4 + $0x6d0] sm:$0xff]
    %v3543 = vld [vmem:[%s4 + $0x6d8] sm:$0xff]
    %v3544 = vld [vmem:[%s4 + $0x6e0] sm:$0xff]
    %v3545 = vld [vmem:[%s4 + $0x6e8] sm:$0xff]
    %v3546 = vld [vmem:[%s4 + $0x6f0] sm:$0xff]
    %v3547 = vld [vmem:[%s4 + $0x6f8] sm:$0xff]
    %v3564 = vunpack.c.l.b16 %v3532
    %v3565 = vunpack.c.h.b16 %v3532
    %v3566 = vunpack.c.l.b16 %v3533
    %v3567 = vunpack.c.h.b16 %v3533
    %v3568 = vunpack.c.l.b16 %v3534
    %v3569 = vunpack.c.h.b16 %v3534
    %v3570 = vunpack.c.l.b16 %v3535
    %v3571 = vunpack.c.h.b16 %v3535
    %v3572 = vunpack.c.l.b16 %v3536
    %v3573 = vunpack.c.h.b16 %v3536
    %v3574 = vunpack.c.l.b16 %v3537
    %v3575 = vunpack.c.h.b16 %v3537
    %v3576 = vunpack.c.l.b16 %v3538
    %v3577 = vunpack.c.h.b16 %v3538
    %v3578 = vunpack.c.l.b16 %v3539
    %v3579 = vunpack.c.h.b16 %v3539
    %v3580 = vunpack.c.l.b16 %v3540
    %v3581 = vunpack.c.h.b16 %v3540
    %v3582 = vunpack.c.l.b16 %v3541
    %v3583 = vunpack.c.h.b16 %v3541
    %v3584 = vunpack.c.l.b16 %v3542
    %v3585 = vunpack.c.h.b16 %v3542
    %v3586 = vunpack.c.l.b16 %v3543
    %v3587 = vunpack.c.h.b16 %v3543
    %v3588 = vunpack.c.l.b16 %v3544
    %v3589 = vunpack.c.h.b16 %v3544
    %v3590 = vunpack.c.l.b16 %v3545
    %v3591 = vunpack.c.h.b16 %v3545
    %v3592 = vunpack.c.l.b16 %v3546
    %v3593 = vunpack.c.h.b16 %v3546
    %v3594 = vunpack.c.l.b16 %v3547
    %v3595 = vunpack.c.h.b16 %v3547
    %v3596 = vpack.c.b16 %v3568, %v3564
    %v3597 = vpack.c.b16 %v3569, %v3565
    %v3598 = vpack.c.b16 %v3570, %v3566
    %v3599 = vpack.c.b16 %v3571, %v3567
    %v3600 = vpack.c.b16 %v3576, %v3572
    %v3601 = vpack.c.b16 %v3577, %v3573
    %v3602 = vpack.c.b16 %v3578, %v3574
    %v3603 = vpack.c.b16 %v3579, %v3575
    %v3604 = vpack.c.b16 %v3584, %v3580
    %v3605 = vpack.c.b16 %v3585, %v3581
    %v3606 = vpack.c.b16 %v3586, %v3582
    %v3607 = vpack.c.b16 %v3587, %v3583
    %v3608 = vpack.c.b16 %v3592, %v3588
    %v3609 = vpack.c.b16 %v3593, %v3589
    %v3610 = vpack.c.b16 %v3594, %v3590
    %v3611 = vpack.c.b16 %v3595, %v3591
    %v3629 = vsel %vm1098, %v3531, 0
    %3631 = vmatprep.subr.bf16.mxu0 %v3597
    %3632 = vmatpush1.bf16.msra.mxu0 %v3596
    %3633 = vmatprep.subr.bf16.mxu0 %v3601
    %3634 = vmatpush1.bf16.msra.mxu0 %v3600
    %3635 = vmatprep.subr.bf16.mxu0 %v3605
    %3636 = vmatpush1.bf16.msra.mxu0 %v3604
    %3637 = vmatprep.subr.bf16.mxu0 %v3609
    %3638 = vmatpush1.bf16.msra.mxu0 %v3608
    %3639 = vmatprep.subr.bf16.mxu0 0
    %3640 = vmatpush1.bf16.msra.mxu0 0
    %3641 = vmatprep.subr.bf16.mxu0 0
    %3642 = vmatpush1.bf16.msra.mxu0 0
    %3643 = vmatprep.subr.bf16.mxu0 0
    %3644 = vmatpush1.bf16.msra.mxu0 0
    %3645 = vmatprep.subr.bf16.mxu0 0
    %3646 = vmatpush1.bf16.msra.mxu0 0
    %3647 = vmatprep.subr.bf16.mxu0 0
    %3648 = vmatpush1.bf16.msra.mxu0 0
    %3649 = vmatprep.subr.bf16.mxu0 0
    %3650 = vmatpush1.bf16.msra.mxu0 0
    %3651 = vmatprep.subr.bf16.mxu0 0
    %3652 = vmatpush1.bf16.msra.mxu0 0
    %3653 = vmatprep.subr.bf16.mxu0 0
    %3654 = vmatpush1.bf16.msra.mxu0 0
    %3655 = vmatprep.subr.bf16.mxu0 0
    %3656 = vmatpush1.bf16.msra.mxu0 0
    %3657 = vmatprep.subr.bf16.mxu0 0
    %3658 = vmatpush1.bf16.msra.mxu0 0
    %3659 = vmatprep.subr.bf16.mxu0 0
    %3660 = vmatpush1.bf16.msra.mxu0 0
    %3661 = vmatprep.subr.bf16.mxu0 0
    %3662 = vmatpush1.bf16.msra.mxu0 0
    %3663 = vmatprep.mubr.bf16.mxu0 0
    %3664 = vmatmul.mubr.bf16.gmra.mrb[0].mxu0 %v3629
    %v3665 = vpop.f32.mrb[0].mxu0
    %v3666 = vadd.f32 0.0, %v3665
    %v3667 = vpop.f32.mrb[0].mxu0
    %v3668 = vadd.f32 0.0, %v3667
    %v3669 = vpop.f32.mrb[0].mxu0
    %v3670 = vpop.f32.mrb[0].mxu0
    %3671 = vdwg.mxu0
    %3672 = vmatprep.subr.bf16.mxu0 %v3599
    %3673 = vmatpush1.bf16.msra.mxu0 %v3598
    %3674 = vmatprep.subr.bf16.mxu0 %v3603
    %3675 = vmatpush1.bf16.msra.mxu0 %v3602
    %3676 = vmatprep.subr.bf16.mxu0 %v3607
    %3677 = vmatpush1.bf16.msra.mxu0 %v3606
    %3678 = vmatprep.subr.bf16.mxu0 %v3611
    %3679 = vmatpush1.bf16.msra.mxu0 %v3610
    %3680 = vmatprep.subr.bf16.mxu0 0
    %3681 = vmatpush1.bf16.msra.mxu0 0
    %3682 = vmatprep.subr.bf16.mxu0 0
    %3683 = vmatpush1.bf16.msra.mxu0 0
    %3684 = vmatprep.subr.bf16.mxu0 0
    %3685 = vmatpush1.bf16.msra.mxu0 0
    %3686 = vmatprep.subr.bf16.mxu0 0
    %3687 = vmatpush1.bf16.msra.mxu0 0
    %3688 = vmatprep.subr.bf16.mxu0 0
    %3689 = vmatpush1.bf16.msra.mxu0 0
    %3690 = vmatprep.subr.bf16.mxu0 0
    %3691 = vmatpush1.bf16.msra.mxu0 0
    %3692 = vmatprep.subr.bf16.mxu0 0
    %3693 = vmatpush1.bf16.msra.mxu0 0
    %3694 = vmatprep.subr.bf16.mxu0 0
    %3695 = vmatpush1.bf16.msra.mxu0 0
    %3696 = vmatprep.subr.bf16.mxu0 0
    %3697 = vmatpush1.bf16.msra.mxu0 0
    %3698 = vmatprep.subr.bf16.mxu0 0
    %3699 = vmatpush1.bf16.msra.mxu0 0
    %3700 = vmatprep.subr.bf16.mxu0 0
    %3701 = vmatpush1.bf16.msra.mxu0 0
    %3702 = vmatprep.subr.bf16.mxu0 0
    %3703 = vmatpush1.bf16.msra.mxu0 0
    %3704 = vmatprep.mubr.bf16.mxu0 0
    %3705 = vmatmul.mubr.bf16.gmra.mrb[0].mxu0 %v3629
    %v3706 = vpop.f32.mrb[0].mxu0
    %v3707 = vadd.f32 0.0, %v3706
    %v3708 = vpop.f32.mrb[0].mxu0
    %v3709 = vadd.f32 0.0, %v3708
    %v3710 = vpop.f32.mrb[0].mxu0
    %v3711 = vpop.f32.mrb[0].mxu0
    %3712 = vdwg.mxu0
    %v3713 = vadd.f32 %v3526, %v3666
    %v3714 = vadd.f32 %v3527, %v3668
    %v3715 = vadd.f32 %v3528, %v3707
    %v3716 = vadd.f32 %v3529, %v3709
    %v3717 = vld [vmem:[#allocation2 + $0x1c] sm:$0x3]
    %v3718 = vpack.c.bf16 %v3717, %v3717
    %v3719 = vld [vmem:[%s4 + $0x700] sm:$0xff]
    %v3720 = vld [vmem:[%s4 + $0x708] sm:$0xff]
    %v3721 = vld [vmem:[%s4 + $0x710] sm:$0xff]
    %v3722 = vld [vmem:[%s4 + $0x718] sm:$0xff]
    %v3723 = vld [vmem:[%s4 + $0x720] sm:$0xff]
    %v3724 = vld [vmem:[%s4 + $0x728] sm:$0xff]
    %v3725 = vld [vmem:[%s4 + $0x730] sm:$0xff]
    %v3726 = vld [vmem:[%s4 + $0x738] sm:$0xff]
    %v3727 = vld [vmem:[%s4 + $0x740] sm:$0xff]
    %v3728 = vld [vmem:[%s4 + $0x748] sm:$0xff]
    %v3729 = vld [vmem:[%s4 + $0x750] sm:$0xff]
    %v3730 = vld [vmem:[%s4 + $0x758] sm:$0xff]
    %v3731 = vld [vmem:[%s4 + $0x760] sm:$0xff]
    %v3732 = vld [vmem:[%s4 + $0x768] sm:$0xff]
    %v3733 = vld [vmem:[%s4 + $0x770] sm:$0xff]
    %v3734 = vld [vmem:[%s4 + $0x778] sm:$0xff]
    %v3751 = vunpack.c.l.b16 %v3719
    %v3752 = vunpack.c.h.b16 %v3719
    %v3753 = vunpack.c.l.b16 %v3720
    %v3754 = vunpack.c.h.b16 %v3720
    %v3755 = vunpack.c.l.b16 %v3721
    %v3756 = vunpack.c.h.b16 %v3721
    %v3757 = vunpack.c.l.b16 %v3722
    %v3758 = vunpack.c.h.b16 %v3722
    %v3759 = vunpack.c.l.b16 %v3723
    %v3760 = vunpack.c.h.b16 %v3723
    %v3761 = vunpack.c.l.b16 %v3724
    %v3762 = vunpack.c.h.b16 %v3724
    %v3763 = vunpack.c.l.b16 %v3725
    %v3764 = vunpack.c.h.b16 %v3725
    %v3765 = vunpack.c.l.b16 %v3726
    %v3766 = vunpack.c.h.b16 %v3726
    %v3767 = vunpack.c.l.b16 %v3727
    %v3768 = vunpack.c.h.b16 %v3727
    %v3769 = vunpack.c.l.b16 %v3728
    %v3770 = vunpack.c.h.b16 %v3728
    %v3771 = vunpack.c.l.b16 %v3729
    %v3772 = vunpack.c.h.b16 %v3729
    %v3773 = vunpack.c.l.b16 %v3730
    %v3774 = vunpack.c.h.b16 %v3730
    %v3775 = vunpack.c.l.b16 %v3731
    %v3776 = vunpack.c.h.b16 %v3731
    %v3777 = vunpack.c.l.b16 %v3732
    %v3778 = vunpack.c.h.b16 %v3732
    %v3779 = vunpack.c.l.b16 %v3733
    %v3780 = vunpack.c.h.b16 %v3733
    %v3781 = vunpack.c.l.b16 %v3734
    %v3782 = vunpack.c.h.b16 %v3734
    %v3783 = vpack.c.b16 %v3755, %v3751
    %v3784 = vpack.c.b16 %v3756, %v3752
    %v3785 = vpack.c.b16 %v3757, %v3753
    %v3786 = vpack.c.b16 %v3758, %v3754
    %v3787 = vpack.c.b16 %v3763, %v3759
    %v3788 = vpack.c.b16 %v3764, %v3760
    %v3789 = vpack.c.b16 %v3765, %v3761
    %v3790 = vpack.c.b16 %v3766, %v3762
    %v3791 = vpack.c.b16 %v3771, %v3767
    %v3792 = vpack.c.b16 %v3772, %v3768
    %v3793 = vpack.c.b16 %v3773, %v3769
    %v3794 = vpack.c.b16 %v3774, %v3770
    %v3795 = vpack.c.b16 %v3779, %v3775
    %v3796 = vpack.c.b16 %v3780, %v3776
    %v3797 = vpack.c.b16 %v3781, %v3777
    %v3798 = vpack.c.b16 %v3782, %v3778
    %v3816 = vsel %vm1098, %v3718, 0
    %3818 = vmatprep.subr.bf16.mxu0 %v3784
    %3819 = vmatpush1.bf16.msra.mxu0 %v3783
    %3820 = vmatprep.subr.bf16.mxu0 %v3788
    %3821 = vmatpush1.bf16.msra.mxu0 %v3787
    %3822 = vmatprep.subr.bf16.mxu0 %v3792
    %3823 = vmatpush1.bf16.msra.mxu0 %v3791
    %3824 = vmatprep.subr.bf16.mxu0 %v3796
    %3825 = vmatpush1.bf16.msra.mxu0 %v3795
    %3826 = vmatprep.subr.bf16.mxu0 0
    %3827 = vmatpush1.bf16.msra.mxu0 0
    %3828 = vmatprep.subr.bf16.mxu0 0
    %3829 = vmatpush1.bf16.msra.mxu0 0
    %3830 = vmatprep.subr.bf16.mxu0 0
    %3831 = vmatpush1.bf16.msra.mxu0 0
    %3832 = vmatprep.subr.bf16.mxu0 0
    %3833 = vmatpush1.bf16.msra.mxu0 0
    %3834 = vmatprep.subr.bf16.mxu0 0
    %3835 = vmatpush1.bf16.msra.mxu0 0
    %3836 = vmatprep.subr.bf16.mxu0 0
    %3837 = vmatpush1.bf16.msra.mxu0 0
    %3838 = vmatprep.subr.bf16.mxu0 0
    %3839 = vmatpush1.bf16.msra.mxu0 0
    %3840 = vmatprep.subr.bf16.mxu0 0
    %3841 = vmatpush1.bf16.msra.mxu0 0
    %3842 = vmatprep.subr.bf16.mxu0 0
    %3843 = vmatpush1.bf16.msra.mxu0 0
    %3844 = vmatprep.subr.bf16.mxu0 0
    %3845 = vmatpush1.bf16.msra.mxu0 0
    %3846 = vmatprep.subr.bf16.mxu0 0
    %3847 = vmatpush1.bf16.msra.mxu0 0
    %3848 = vmatprep.subr.bf16.mxu0 0
    %3849 = vmatpush1.bf16.msra.mxu0 0
    %3850 = vmatprep.mubr.bf16.mxu0 0
    %3851 = vmatmul.mubr.bf16.gmra.mrb[0].mxu0 %v3816
    %v3852 = vpop.f32.mrb[0].mxu0
    %v3853 = vadd.f32 0.0, %v3852
    %v3854 = vpop.f32.mrb[0].mxu0
    %v3855 = vadd.f32 0.0, %v3854
    %v3856 = vpop.f32.mrb[0].mxu0
    %v3857 = vpop.f32.mrb[0].mxu0
    %3858 = vdwg.mxu0
    %3859 = vmatprep.subr.bf16.mxu0 %v3786
    %3860 = vmatpush1.bf16.msra.mxu0 %v3785
    %3861 = vmatprep.subr.bf16.mxu0 %v3790
    %3862 = vmatpush1.bf16.msra.mxu0 %v3789
    %3863 = vmatprep.subr.bf16.mxu0 %v3794
    %3864 = vmatpush1.bf16.msra.mxu0 %v3793
    %3865 = vmatprep.subr.bf16.mxu0 %v3798
    %3866 = vmatpush1.bf16.msra.mxu0 %v3797
    %3867 = vmatprep.subr.bf16.mxu0 0
    %3868 = vmatpush1.bf16.msra.mxu0 0
    %3869 = vmatprep.subr.bf16.mxu0 0
    %3870 = vmatpush1.bf16.msra.mxu0 0
    %3871 = vmatprep.subr.bf16.mxu0 0
    %3872 = vmatpush1.bf16.msra.mxu0 0
    %3873 = vmatprep.subr.bf16.mxu0 0
    %3874 = vmatpush1.bf16.msra.mxu0 0
    %3875 = vmatprep.subr.bf16.mxu0 0
    %3876 = vmatpush1.bf16.msra.mxu0 0
    %3877 = vmatprep.subr.bf16.mxu0 0
    %3878 = vmatpush1.bf16.msra.mxu0 0
    %3879 = vmatprep.subr.bf16.mxu0 0
    %3880 = vmatpush1.bf16.msra.mxu0 0
    %3881 = vmatprep.subr.bf16.mxu0 0
    %3882 = vmatpush1.bf16.msra.mxu0 0
    %3883 = vmatprep.subr.bf16.mxu0 0
    %3884 = vmatpush1.bf16.msra.mxu0 0
    %3885 = vmatprep.subr.bf16.mxu0 0
    %3886 = vmatpush1.bf16.msra.mxu0 0
    %3887 = vmatprep.subr.bf16.mxu0 0
    %3888 = vmatpush1.bf16.msra.mxu0 0
    %3889 = vmatprep.subr.bf16.mxu0 0
    %3890 = vmatpush1.bf16.msra.mxu0 0
    %3891 = vmatprep.mubr.bf16.mxu0 0
    %3892 = vmatmul.mubr.bf16.gmra.mrb[0].mxu0 %v3816
    %v3893 = vpop.f32.mrb[0].mxu0
    %v3894 = vadd.f32 0.0, %v3893
    %v3895 = vpop.f32.mrb[0].mxu0
    %v3896 = vadd.f32 0.0, %v3895
    %v3897 = vpop.f32.mrb[0].mxu0
    %v3898 = vpop.f32.mrb[0].mxu0
    %3899 = vdwg.mxu0
    %v3900 = vadd.f32 %v3713, %v3853
    %v3901 = vadd.f32 %v3714, %v3855
    %v3902 = vadd.f32 %v3715, %v3894
    %v3903 = vadd.f32 %v3716, %v3896
    %v3904 = vld [vmem:[#allocation2 + $0x1e] sm:$0x3]
    %v3905 = vpack.c.bf16 %v3904, %v3904
    %v3906 = vld [vmem:[%s4 + $0x780] sm:$0xff]
    %v3907 = vld [vmem:[%s4 + $0x788] sm:$0xff]
    %v3908 = vld [vmem:[%s4 + $0x790] sm:$0xff]
    %v3909 = vld [vmem:[%s4 + $0x798] sm:$0xff]
    %v3910 = vld [vmem:[%s4 + $0x7a0] sm:$0xff]
    %v3911 = vld [vmem:[%s4 + $0x7a8] sm:$0xff]
    %v3912 = vld [vmem:[%s4 + $0x7b0] sm:$0xff]
    %v3913 = vld [vmem:[%s4 + $0x7b8] sm:$0xff]
    %v3914 = vld [vmem:[%s4 + $0x7c0] sm:$0xff]
    %v3915 = vld [vmem:[%s4 + $0x7c8] sm:$0xff]
    %v3916 = vld [vmem:[%s4 + $0x7d0] sm:$0xff]
    %v3917 = vld [vmem:[%s4 + $0x7d8] sm:$0xff]
    %v3918 = vld [vmem:[%s4 + $0x7e0] sm:$0xff]
    %v3919 = vld [vmem:[%s4 + $0x7e8] sm:$0xff]
    %v3920 = vld [vmem:[%s4 + $0x7f0] sm:$0xff]
    %v3921 = vld [vmem:[%s4 + $0x7f8] sm:$0xff]
    %v3938 = vunpack.c.l.b16 %v3906
    %v3939 = vunpack.c.h.b16 %v3906
    %v3940 = vunpack.c.l.b16 %v3907
    %v3941 = vunpack.c.h.b16 %v3907
    %v3942 = vunpack.c.l.b16 %v3908
    %v3943 = vunpack.c.h.b16 %v3908
    %v3944 = vunpack.c.l.b16 %v3909
    %v3945 = vunpack.c.h.b16 %v3909
    %v3946 = vunpack.c.l.b16 %v3910
    %v3947 = vunpack.c.h.b16 %v3910
    %v3948 = vunpack.c.l.b16 %v3911
    %v3949 = vunpack.c.h.b16 %v3911
    %v3950 = vunpack.c.l.b16 %v3912
    %v3951 = vunpack.c.h.b16 %v3912
    %v3952 = vunpack.c.l.b16 %v3913
    %v3953 = vunpack.c.h.b16 %v3913
    %v3954 = vunpack.c.l.b16 %v3914
    %v3955 = vunpack.c.h.b16 %v3914
    %v3956 = vunpack.c.l.b16 %v3915
    %v3957 = vunpack.c.h.b16 %v3915
    %v3958 = vunpack.c.l.b16 %v3916
    %v3959 = vunpack.c.h.b16 %v3916
    %v3960 = vunpack.c.l.b16 %v3917
    %v3961 = vunpack.c.h.b16 %v3917
    %v3962 = vunpack.c.l.b16 %v3918
    %v3963 = vunpack.c.h.b16 %v3918
    %v3964 = vunpack.c.l.b16 %v3919
    %v3965 = vunpack.c.h.b16 %v3919
    %v3966 = vunpack.c.l.b16 %v3920
    %v3967 = vunpack.c.h.b16 %v3920
    %v3968 = vunpack.c.l.b16 %v3921
    %v3969 = vunpack.c.h.b16 %v3921
    %v3970 = vpack.c.b16 %v3942, %v3938
    %v3971 = vpack.c.b16 %v3943, %v3939
    %v3972 = vpack.c.b16 %v3944, %v3940
    %v3973 = vpack.c.b16 %v3945, %v3941
    %v3974 = vpack.c.b16 %v3950, %v3946
    %v3975 = vpack.c.b16 %v3951, %v3947
    %v3976 = vpack.c.b16 %v3952, %v3948
    %v3977 = vpack.c.b16 %v3953, %v3949
    %v3978 = vpack.c.b16 %v3958, %v3954
    %v3979 = vpack.c.b16 %v3959, %v3955
    %v3980 = vpack.c.b16 %v3960, %v3956
    %v3981 = vpack.c.b16 %v3961, %v3957
    %v3982 = vpack.c.b16 %v3966, %v3962
    %v3983 = vpack.c.b16 %v3967, %v3963
    %v3984 = vpack.c.b16 %v3968, %v3964
    %v3985 = vpack.c.b16 %v3969, %v3965
    %v4003 = vsel %vm1098, %v3905, 0
    %4005 = vmatprep.subr.bf16.mxu0 %v3971
    %4006 = vmatpush1.bf16.msra.mxu0 %v3970
    %4007 = vmatprep.subr.bf16.mxu0 %v3975
    %4008 = vmatpush1.bf16.msra.mxu0 %v3974
    %4009 = vmatprep.subr.bf16.mxu0 %v3979
    %4010 = vmatpush1.bf16.msra.mxu0 %v3978
    %4011 = vmatprep.subr.bf16.mxu0 %v3983
    %4012 = vmatpush1.bf16.msra.mxu0 %v3982
    %4013 = vmatprep.subr.bf16.mxu0 0
    %4014 = vmatpush1.bf16.msra.mxu0 0
    %4015 = vmatprep.subr.bf16.mxu0 0
    %4016 = vmatpush1.bf16.msra.mxu0 0
    %4017 = vmatprep.subr.bf16.mxu0 0
    %4018 = vmatpush1.bf16.msra.mxu0 0
    %4019 = vmatprep.subr.bf16.mxu0 0
    %4020 = vmatpush1.bf16.msra.mxu0 0
    %4021 = vmatprep.subr.bf16.mxu0 0
    %4022 = vmatpush1.bf16.msra.mxu0 0
    %4023 = vmatprep.subr.bf16.mxu0 0
    %4024 = vmatpush1.bf16.msra.mxu0 0
    %4025 = vmatprep.subr.bf16.mxu0 0
    %4026 = vmatpush1.bf16.msra.mxu0 0
    %4027 = vmatprep.subr.bf16.mxu0 0
    %4028 = vmatpush1.bf16.msra.mxu0 0
    %4029 = vmatprep.subr.bf16.mxu0 0
    %4030 = vmatpush1.bf16.msra.mxu0 0
    %4031 = vmatprep.subr.bf16.mxu0 0
    %4032 = vmatpush1.bf16.msra.mxu0 0
    %4033 = vmatprep.subr.bf16.mxu0 0
    %4034 = vmatpush1.bf16.msra.mxu0 0
    %4035 = vmatprep.subr.bf16.mxu0 0
    %4036 = vmatpush1.bf16.msra.mxu0 0
    %4037 = vmatprep.mubr.bf16.mxu0 0
    %4038 = vmatmul.mubr.bf16.gmra.mrb[0].mxu0 %v4003
    %v4039 = vpop.f32.mrb[0].mxu0
    %v4040 = vadd.f32 0.0, %v4039
    %v4041 = vpop.f32.mrb[0].mxu0
    %v4042 = vadd.f32 0.0, %v4041
    %v4043 = vpop.f32.mrb[0].mxu0
    %v4044 = vpop.f32.mrb[0].mxu0
    %4045 = vdwg.mxu0
    %4046 = vmatprep.subr.bf16.mxu0 %v3973
    %4047 = vmatpush1.bf16.msra.mxu0 %v3972
    %4048 = vmatprep.subr.bf16.mxu0 %v3977
    %4049 = vmatpush1.bf16.msra.mxu0 %v3976
    %4050 = vmatprep.subr.bf16.mxu0 %v3981
    %4051 = vmatpush1.bf16.msra.mxu0 %v3980
    %4052 = vmatprep.subr.bf16.mxu0 %v3985
    %4053 = vmatpush1.bf16.msra.mxu0 %v3984
    %4054 = vmatprep.subr.bf16.mxu0 0
    %4055 = vmatpush1.bf16.msra.mxu0 0
    %4056 = vmatprep.subr.bf16.mxu0 0
    %4057 = vmatpush1.bf16.msra.mxu0 0
    %4058 = vmatprep.subr.bf16.mxu0 0
    %4059 = vmatpush1.bf16.msra.mxu0 0
    %4060 = vmatprep.subr.bf16.mxu0 0
    %4061 = vmatpush1.bf16.msra.mxu0 0
    %4062 = vmatprep.subr.bf16.mxu0 0
    %4063 = vmatpush1.bf16.msra.mxu0 0
    %4064 = vmatprep.subr.bf16.mxu0 0
    %4065 = vmatpush1.bf16.msra.mxu0 0
    %4066 = vmatprep.subr.bf16.mxu0 0
    %4067 = vmatpush1.bf16.msra.mxu0 0
    %4068 = vmatprep.subr.bf16.mxu0 0
    %4069 = vmatpush1.bf16.msra.mxu0 0
    %4070 = vmatprep.subr.bf16.mxu0 0
    %4071 = vmatpush1.bf16.msra.mxu0 0
    %4072 = vmatprep.subr.bf16.mxu0 0
    %4073 = vmatpush1.bf16.msra.mxu0 0
    %4074 = vmatprep.subr.bf16.mxu0 0
    %4075 = vmatpush1.bf16.msra.mxu0 0
    %4076 = vmatprep.subr.bf16.mxu0 0
    %4077 = vmatpush1.bf16.msra.mxu0 0
    %4078 = vmatprep.mubr.bf16.mxu0 0
    %4079 = vmatmul.mubr.bf16.gmra.mrb[0].mxu0 %v4003
    %v4080 = vpop.f32.mrb[0].mxu0
    %v4081 = vadd.f32 0.0, %v4080
    %v4082 = vpop.f32.mrb[0].mxu0
    %v4083 = vadd.f32 0.0, %v4082
    %v4084 = vpop.f32.mrb[0].mxu0
    %v4085 = vpop.f32.mrb[0].mxu0
    %4086 = vdwg.mxu0
    %v4087 = vadd.f32 %v3900, %v4040
    %v4088 = vadd.f32 %v3901, %v4042
    %v4089 = vadd.f32 %v3902, %v4081
    %v4090 = vadd.f32 %v3903, %v4083
    %v4091 = vld [vmem:[#allocation2 + $0x20] sm:$0x3]
    %v4092 = vpack.c.bf16 %v4091, %v4091
    %v4093 = vld [vmem:[%s4 + $0x800] sm:$0xff]
    %v4094 = vld [vmem:[%s4 + $0x808] sm:$0xff]
    %v4095 = vld [vmem:[%s4 + $0x810] sm:$0xff]
    %v4096 = vld [vmem:[%s4 + $0x818] sm:$0xff]
    %v4097 = vld [vmem:[%s4 + $0x820] sm:$0xff]
    %v4098 = vld [vmem:[%s4 + $0x828] sm:$0xff]
    %v4099 = vld [vmem:[%s4 + $0x830] sm:$0xff]
    %v4100 = vld [vmem:[%s4 + $0x838] sm:$0xff]
    %v4101 = vld [vmem:[%s4 + $0x840] sm:$0xff]
    %v4102 = vld [vmem:[%s4 + $0x848] sm:$0xff]
    %v4103 = vld [vmem:[%s4 + $0x850] sm:$0xff]
    %v4104 = vld [vmem:[%s4 + $0x858] sm:$0xff]
    %v4105 = vld [vmem:[%s4 + $0x860] sm:$0xff]
    %v4106 = vld [vmem:[%s4 + $0x868] sm:$0xff]
    %v4107 = vld [vmem:[%s4 + $0x870] sm:$0xff]
    %v4108 = vld [vmem:[%s4 + $0x878] sm:$0xff]
    %v4125 = vunpack.c.l.b16 %v4093
    %v4126 = vunpack.c.h.b16 %v4093
    %v4127 = vunpack.c.l.b16 %v4094
    %v4128 = vunpack.c.h.b16 %v4094
    %v4129 = vunpack.c.l.b16 %v4095
    %v4130 = vunpack.c.h.b16 %v4095
    %v4131 = vunpack.c.l.b16 %v4096
    %v4132 = vunpack.c.h.b16 %v4096
    %v4133 = vunpack.c.l.b16 %v4097
    %v4134 = vunpack.c.h.b16 %v4097
    %v4135 = vunpack.c.l.b16 %v4098
    %v4136 = vunpack.c.h.b16 %v4098
    %v4137 = vunpack.c.l.b16 %v4099
    %v4138 = vunpack.c.h.b16 %v4099
    %v4139 = vunpack.c.l.b16 %v4100
    %v4140 = vunpack.c.h.b16 %v4100
    %v4141 = vunpack.c.l.b16 %v4101
    %v4142 = vunpack.c.h.b16 %v4101
    %v4143 = vunpack.c.l.b16 %v4102
    %v4144 = vunpack.c.h.b16 %v4102
    %v4145 = vunpack.c.l.b16 %v4103
    %v4146 = vunpack.c.h.b16 %v4103
    %v4147 = vunpack.c.l.b16 %v4104
    %v4148 = vunpack.c.h.b16 %v4104
    %v4149 = vunpack.c.l.b16 %v4105
    %v4150 = vunpack.c.h.b16 %v4105
    %v4151 = vunpack.c.l.b16 %v4106
    %v4152 = vunpack.c.h.b16 %v4106
    %v4153 = vunpack.c.l.b16 %v4107
    %v4154 = vunpack.c.h.b16 %v4107
    %v4155 = vunpack.c.l.b16 %v4108
    %v4156 = vunpack.c.h.b16 %v4108
    %v4157 = vpack.c.b16 %v4129, %v4125
    %v4158 = vpack.c.b16 %v4130, %v4126
    %v4159 = vpack.c.b16 %v4131, %v4127
    %v4160 = vpack.c.b16 %v4132, %v4128
    %v4161 = vpack.c.b16 %v4137, %v4133
    %v4162 = vpack.c.b16 %v4138, %v4134
    %v4163 = vpack.c.b16 %v4139, %v4135
    %v4164 = vpack.c.b16 %v4140, %v4136
    %v4165 = vpack.c.b16 %v4145, %v4141
    %v4166 = vpack.c.b16 %v4146, %v4142
    %v4167 = vpack.c.b16 %v4147, %v4143
    %v4168 = vpack.c.b16 %v4148, %v4144
    %v4169 = vpack.c.b16 %v4153, %v4149
    %v4170 = vpack.c.b16 %v4154, %v4150
    %v4171 = vpack.c.b16 %v4155, %v4151
    %v4172 = vpack.c.b16 %v4156, %v4152
    %v4190 = vsel %vm1098, %v4092, 0
    %4192 = vmatprep.subr.bf16.mxu0 %v4158
    %4193 = vmatpush1.bf16.msra.mxu0 %v4157
    %4194 = vmatprep.subr.bf16.mxu0 %v4162
    %4195 = vmatpush1.bf16.msra.mxu0 %v4161
    %4196 = vmatprep.subr.bf16.mxu0 %v4166
    %4197 = vmatpush1.bf16.msra.mxu0 %v4165
    %4198 = vmatprep.subr.bf16.mxu0 %v4170
    %4199 = vmatpush1.bf16.msra.mxu0 %v4169
    %4200 = vmatprep.subr.bf16.mxu0 0
    %4201 = vmatpush1.bf16.msra.mxu0 0
    %4202 = vmatprep.subr.bf16.mxu0 0
    %4203 = vmatpush1.bf16.msra.mxu0 0
    %4204 = vmatprep.subr.bf16.mxu0 0
    %4205 = vmatpush1.bf16.msra.mxu0 0
    %4206 = vmatprep.subr.bf16.mxu0 0
    %4207 = vmatpush1.bf16.msra.mxu0 0
    %4208 = vmatprep.subr.bf16.mxu0 0
    %4209 = vmatpush1.bf16.msra.mxu0 0
    %4210 = vmatprep.subr.bf16.mxu0 0
    %4211 = vmatpush1.bf16.msra.mxu0 0
    %4212 = vmatprep.subr.bf16.mxu0 0
    %4213 = vmatpush1.bf16.msra.mxu0 0
    %4214 = vmatprep.subr.bf16.mxu0 0
    %4215 = vmatpush1.bf16.msra.mxu0 0
    %4216 = vmatprep.subr.bf16.mxu0 0
    %4217 = vmatpush1.bf16.msra.mxu0 0
    %4218 = vmatprep.subr.bf16.mxu0 0
    %4219 = vmatpush1.bf16.msra.mxu0 0
    %4220 = vmatprep.subr.bf16.mxu0 0
    %4221 = vmatpush1.bf16.msra.mxu0 0
    %4222 = vmatprep.subr.bf16.mxu0 0
    %4223 = vmatpush1.bf16.msra.mxu0 0
    %4224 = vmatprep.mubr.bf16.mxu0 0
    %4225 = vmatmul.mubr.bf16.gmra.mrb[0].mxu0 %v4190
    %v4226 = vpop.f32.mrb[0].mxu0
    %v4227 = vadd.f32 0.0, %v4226
    %v4228 = vpop.f32.mrb[0].mxu0
    %v4229 = vadd.f32 0.0, %v4228
    %v4230 = vpop.f32.mrb[0].mxu0
    %v4231 = vpop.f32.mrb[0].mxu0
    %4232 = vdwg.mxu0
    %4233 = vmatprep.subr.bf16.mxu0 %v4160
    %4234 = vmatpush1.bf16.msra.mxu0 %v4159
    %4235 = vmatprep.subr.bf16.mxu0 %v4164
    %4236 = vmatpush1.bf16.msra.mxu0 %v4163
    %4237 = vmatprep.subr.bf16.mxu0 %v4168
    %4238 = vmatpush1.bf16.msra.mxu0 %v4167
    %4239 = vmatprep.subr.bf16.mxu0 %v4172
    %4240 = vmatpush1.bf16.msra.mxu0 %v4171
    %4241 = vmatprep.subr.bf16.mxu0 0
    %4242 = vmatpush1.bf16.msra.mxu0 0
    %4243 = vmatprep.subr.bf16.mxu0 0
    %4244 = vmatpush1.bf16.msra.mxu0 0
    %4245 = vmatprep.subr.bf16.mxu0 0
    %4246 = vmatpush1.bf16.msra.mxu0 0
    %4247 = vmatprep.subr.bf16.mxu0 0
    %4248 = vmatpush1.bf16.msra.mxu0 0
    %4249 = vmatprep.subr.bf16.mxu0 0
    %4250 = vmatpush1.bf16.msra.mxu0 0
    %4251 = vmatprep.subr.bf16.mxu0 0
    %4252 = vmatpush1.bf16.msra.mxu0 0
    %4253 = vmatprep.subr.bf16.mxu0 0
    %4254 = vmatpush1.bf16.msra.mxu0 0
    %4255 = vmatprep.subr.bf16.mxu0 0
    %4256 = vmatpush1.bf16.msra.mxu0 0
    %4257 = vmatprep.subr.bf16.mxu0 0
    %4258 = vmatpush1.bf16.msra.mxu0 0
    %4259 = vmatprep.subr.bf16.mxu0 0
    %4260 = vmatpush1.bf16.msra.mxu0 0
    %4261 = vmatprep.subr.bf16.mxu0 0
    %4262 = vmatpush1.bf16.msra.mxu0 0
    %4263 = vmatprep.subr.bf16.mxu0 0
    %4264 = vmatpush1.bf16.msra.mxu0 0
    %4265 = vmatprep.mubr.bf16.mxu0 0
    %4266 = vmatmul.mubr.bf16.gmra.mrb[0].mxu0 %v4190
    %v4267 = vpop.f32.mrb[0].mxu0
    %v4268 = vadd.f32 0.0, %v4267
    %v4269 = vpop.f32.mrb[0].mxu0
    %v4270 = vadd.f32 0.0, %v4269
    %v4271 = vpop.f32.mrb[0].mxu0
    %v4272 = vpop.f32.mrb[0].mxu0
    %4273 = vdwg.mxu0
    %v4274 = vadd.f32 %v4087, %v4227
    %v4275 = vadd.f32 %v4088, %v4229
    %v4276 = vadd.f32 %v4089, %v4268
    %v4277 = vadd.f32 %v4090, %v4270
    %v4278 = vld [vmem:[#allocation2 + $0x22] sm:$0x3]
    %v4279 = vpack.c.bf16 %v4278, %v4278
    %v4280 = vld [vmem:[%s4 + $0x880] sm:$0xff]
    %v4281 = vld [vmem:[%s4 + $0x888] sm:$0xff]
    %v4282 = vld [vmem:[%s4 + $0x890] sm:$0xff]
    %v4283 = vld [vmem:[%s4 + $0x898] sm:$0xff]
    %v4284 = vld [vmem:[%s4 + $0x8a0] sm:$0xff]
    %v4285 = vld [vmem:[%s4 + $0x8a8] sm:$0xff]
    %v4286 = vld [vmem:[%s4 + $0x8b0] sm:$0xff]
    %v4287 = vld [vmem:[%s4 + $0x8b8] sm:$0xff]
    %v4288 = vld [vmem:[%s4 + $0x8c0] sm:$0xff]
    %v4289 = vld [vmem:[%s4 + $0x8c8] sm:$0xff]
    %v4290 = vld [vmem:[%s4 + $0x8d0] sm:$0xff]
    %v4291 = vld [vmem:[%s4 + $0x8d8] sm:$0xff]
    %v4292 = vld [vmem:[%s4 + $0x8e0] sm:$0xff]
    %v4293 = vld [vmem:[%s4 + $0x8e8] sm:$0xff]
    %v4294 = vld [vmem:[%s4 + $0x8f0] sm:$0xff]
    %v4295 = vld [vmem:[%s4 + $0x8f8] sm:$0xff]
    %v4312 = vunpack.c.l.b16 %v4280
    %v4313 = vunpack.c.h.b16 %v4280
    %v4314 = vunpack.c.l.b16 %v4281
    %v4315 = vunpack.c.h.b16 %v4281
    %v4316 = vunpack.c.l.b16 %v4282
    %v4317 = vunpack.c.h.b16 %v4282
    %v4318 = vunpack.c.l.b16 %v4283
    %v4319 = vunpack.c.h.b16 %v4283
    %v4320 = vunpack.c.l.b16 %v4284
    %v4321 = vunpack.c.h.b16 %v4284
    %v4322 = vunpack.c.l.b16 %v4285
    %v4323 = vunpack.c.h.b16 %v4285
    %v4324 = vunpack.c.l.b16 %v4286
    %v4325 = vunpack.c.h.b16 %v4286
    %v4326 = vunpack.c.l.b16 %v4287
    %v4327 = vunpack.c.h.b16 %v4287
    %v4328 = vunpack.c.l.b16 %v4288
    %v4329 = vunpack.c.h.b16 %v4288
    %v4330 = vunpack.c.l.b16 %v4289
    %v4331 = vunpack.c.h.b16 %v4289
    %v4332 = vunpack.c.l.b16 %v4290
    %v4333 = vunpack.c.h.b16 %v4290
    %v4334 = vunpack.c.l.b16 %v4291
    %v4335 = vunpack.c.h.b16 %v4291
    %v4336 = vunpack.c.l.b16 %v4292
    %v4337 = vunpack.c.h.b16 %v4292
    %v4338 = vunpack.c.l.b16 %v4293
    %v4339 = vunpack.c.h.b16 %v4293
    %v4340 = vunpack.c.l.b16 %v4294
    %v4341 = vunpack.c.h.b16 %v4294
    %v4342 = vunpack.c.l.b16 %v4295
    %v4343 = vunpack.c.h.b16 %v4295
    %v4344 = vpack.c.b16 %v4316, %v4312
    %v4345 = vpack.c.b16 %v4317, %v4313
    %v4346 = vpack.c.b16 %v4318, %v4314
    %v4347 = vpack.c.b16 %v4319, %v4315
    %v4348 = vpack.c.b16 %v4324, %v4320
    %v4349 = vpack.c.b16 %v4325, %v4321
    %v4350 = vpack.c.b16 %v4326, %v4322
    %v4351 = vpack.c.b16 %v4327, %v4323
    %v4352 = vpack.c.b16 %v4332, %v4328
    %v4353 = vpack.c.b16 %v4333, %v4329
    %v4354 = vpack.c.b16 %v4334, %v4330
    %v4355 = vpack.c.b16 %v4335, %v4331
    %v4356 = vpack.c.b16 %v4340, %v4336
    %v4357 = vpack.c.b16 %v4341, %v4337
    %v4358 = vpack.c.b16 %v4342, %v4338
    %v4359 = vpack.c.b16 %v4343, %v4339
    %v4377 = vsel %vm1098, %v4279, 0
    %4379 = vmatprep.subr.bf16.mxu0 %v4345
    %4380 = vmatpush1.bf16.msra.mxu0 %v4344
    %4381 = vmatprep.subr.bf16.mxu0 %v4349
    %4382 = vmatpush1.bf16.msra.mxu0 %v4348
    %4383 = vmatprep.subr.bf16.mxu0 %v4353
    %4384 = vmatpush1.bf16.msra.mxu0 %v4352
    %4385 = vmatprep.subr.bf16.mxu0 %v4357
    %4386 = vmatpush1.bf16.msra.mxu0 %v4356
    %4387 = vmatprep.subr.bf16.mxu0 0
    %4388 = vmatpush1.bf16.msra.mxu0 0
    %4389 = vmatprep.subr.bf16.mxu0 0
    %4390 = vmatpush1.bf16.msra.mxu0 0
    %4391 = vmatprep.subr.bf16.mxu0 0
    %4392 = vmatpush1.bf16.msra.mxu0 0
    %4393 = vmatprep.subr.bf16.mxu0 0
    %4394 = vmatpush1.bf16.msra.mxu0 0
    %4395 = vmatprep.subr.bf16.mxu0 0
    %4396 = vmatpush1.bf16.msra.mxu0 0
    %4397 = vmatprep.subr.bf16.mxu0 0
    %4398 = vmatpush1.bf16.msra.mxu0 0
    %4399 = vmatprep.subr.bf16.mxu0 0
    %4400 = vmatpush1.bf16.msra.mxu0 0
    %4401 = vmatprep.subr.bf16.mxu0 0
    %4402 = vmatpush1.bf16.msra.mxu0 0
    %4403 = vmatprep.subr.bf16.mxu0 0
    %4404 = vmatpush1.bf16.msra.mxu0 0
    %4405 = vmatprep.subr.bf16.mxu0 0
    %4406 = vmatpush1.bf16.msra.mxu0 0
    %4407 = vmatprep.subr.bf16.mxu0 0
    %4408 = vmatpush1.bf16.msra.mxu0 0
    %4409 = vmatprep.subr.bf16.mxu0 0
    %4410 = vmatpush1.bf16.msra.mxu0 0
    %4411 = vmatprep.mubr.bf16.mxu0 0
    %4412 = vmatmul.mubr.bf16.gmra.mrb[0].mxu0 %v4377
    %v4413 = vpop.f32.mrb[0].mxu0
    %v4414 = vadd.f32 0.0, %v4413
    %v4415 = vpop.f32.mrb[0].mxu0
    %v4416 = vadd.f32 0.0, %v4415
    %v4417 = vpop.f32.mrb[0].mxu0
    %v4418 = vpop.f32.mrb[0].mxu0
    %4419 = vdwg.mxu0
    %4420 = vmatprep.subr.bf16.mxu0 %v4347
    %4421 = vmatpush1.bf16.msra.mxu0 %v4346
    %4422 = vmatprep.subr.bf16.mxu0 %v4351
    %4423 = vmatpush1.bf16.msra.mxu0 %v4350
    %4424 = vmatprep.subr.bf16.mxu0 %v4355
    %4425 = vmatpush1.bf16.msra.mxu0 %v4354
    %4426 = vmatprep.subr.bf16.mxu0 %v4359
    %4427 = vmatpush1.bf16.msra.mxu0 %v4358
    %4428 = vmatprep.subr.bf16.mxu0 0
    %4429 = vmatpush1.bf16.msra.mxu0 0
    %4430 = vmatprep.subr.bf16.mxu0 0
    %4431 = vmatpush1.bf16.msra.mxu0 0
    %4432 = vmatprep.subr.bf16.mxu0 0
    %4433 = vmatpush1.bf16.msra.mxu0 0
    %4434 = vmatprep.subr.bf16.mxu0 0
    %4435 = vmatpush1.bf16.msra.mxu0 0
    %4436 = vmatprep.subr.bf16.mxu0 0
    %4437 = vmatpush1.bf16.msra.mxu0 0
    %4438 = vmatprep.subr.bf16.mxu0 0
    %4439 = vmatpush1.bf16.msra.mxu0 0
    %4440 = vmatprep.subr.bf16.mxu0 0
    %4441 = vmatpush1.bf16.msra.mxu0 0
    %4442 = vmatprep.subr.bf16.mxu0 0
    %4443 = vmatpush1.bf16.msra.mxu0 0
    %4444 = vmatprep.subr.bf16.mxu0 0
    %4445 = vmatpush1.bf16.msra.mxu0 0
    %4446 = vmatprep.subr.bf16.mxu0 0
    %4447 = vmatpush1.bf16.msra.mxu0 0
    %4448 = vmatprep.subr.bf16.mxu0 0
    %4449 = vmatpush1.bf16.msra.mxu0 0
    %4450 = vmatprep.subr.bf16.mxu0 0
    %4451 = vmatpush1.bf16.msra.mxu0 0
    %4452 = vmatprep.mubr.bf16.mxu0 0
    %4453 = vmatmul.mubr.bf16.gmra.mrb[0].mxu0 %v4377
    %v4454 = vpop.f32.mrb[0].mxu0
    %v4455 = vadd.f32 0.0, %v4454
    %v4456 = vpop.f32.mrb[0].mxu0
    %v4457 = vadd.f32 0.0, %v4456
    %v4458 = vpop.f32.mrb[0].mxu0
    %v4459 = vpop.f32.mrb[0].mxu0
    %4460 = vdwg.mxu0
    %v4461 = vadd.f32 %v4274, %v4414
    %v4462 = vadd.f32 %v4275, %v4416
    %v4463 = vadd.f32 %v4276, %v4455
    %v4464 = vadd.f32 %v4277, %v4457
    %v4465 = vld [vmem:[#allocation2 + $0x24] sm:$0x3]
    %v4466 = vpack.c.bf16 %v4465, %v4465
    %v4467 = vld [vmem:[%s4 + $0x900] sm:$0xff]
    %v4468 = vld [vmem:[%s4 + $0x908] sm:$0xff]
    %v4469 = vld [vmem:[%s4 + $0x910] sm:$0xff]
    %v4470 = vld [vmem:[%s4 + $0x918] sm:$0xff]
    %v4471 = vld [vmem:[%s4 + $0x920] sm:$0xff]
    %v4472 = vld [vmem:[%s4 + $0x928] sm:$0xff]
    %v4473 = vld [vmem:[%s4 + $0x930] sm:$0xff]
    %v4474 = vld [vmem:[%s4 + $0x938] sm:$0xff]
    %v4475 = vld [vmem:[%s4 + $0x940] sm:$0xff]
    %v4476 = vld [vmem:[%s4 + $0x948] sm:$0xff]
    %v4477 = vld [vmem:[%s4 + $0x950] sm:$0xff]
    %v4478 = vld [vmem:[%s4 + $0x958] sm:$0xff]
    %v4479 = vld [vmem:[%s4 + $0x960] sm:$0xff]
    %v4480 = vld [vmem:[%s4 + $0x968] sm:$0xff]
    %v4481 = vld [vmem:[%s4 + $0x970] sm:$0xff]
    %v4482 = vld [vmem:[%s4 + $0x978] sm:$0xff]
    %v4499 = vunpack.c.l.b16 %v4467
    %v4500 = vunpack.c.h.b16 %v4467
    %v4501 = vunpack.c.l.b16 %v4468
    %v4502 = vunpack.c.h.b16 %v4468
    %v4503 = vunpack.c.l.b16 %v4469
    %v4504 = vunpack.c.h.b16 %v4469
    %v4505 = vunpack.c.l.b16 %v4470
    %v4506 = vunpack.c.h.b16 %v4470
    %v4507 = vunpack.c.l.b16 %v4471
    %v4508 = vunpack.c.h.b16 %v4471
    %v4509 = vunpack.c.l.b16 %v4472
    %v4510 = vunpack.c.h.b16 %v4472
    %v4511 = vunpack.c.l.b16 %v4473
    %v4512 = vunpack.c.h.b16 %v4473
    %v4513 = vunpack.c.l.b16 %v4474
    %v4514 = vunpack.c.h.b16 %v4474
    %v4515 = vunpack.c.l.b16 %v4475
    %v4516 = vunpack.c.h.b16 %v4475
    %v4517 = vunpack.c.l.b16 %v4476
    %v4518 = vunpack.c.h.b16 %v4476
    %v4519 = vunpack.c.l.b16 %v4477
    %v4520 = vunpack.c.h.b16 %v4477
    %v4521 = vunpack.c.l.b16 %v4478
    %v4522 = vunpack.c.h.b16 %v4478
    %v4523 = vunpack.c.l.b16 %v4479
    %v4524 = vunpack.c.h.b16 %v4479
    %v4525 = vunpack.c.l.b16 %v4480
    %v4526 = vunpack.c.h.b16 %v4480
    %v4527 = vunpack.c.l.b16 %v4481
    %v4528 = vunpack.c.h.b16 %v4481
    %v4529 = vunpack.c.l.b16 %v4482
    %v4530 = vunpack.c.h.b16 %v4482
    %v4531 = vpack.c.b16 %v4503, %v4499
    %v4532 = vpack.c.b16 %v4504, %v4500
    %v4533 = vpack.c.b16 %v4505, %v4501
    %v4534 = vpack.c.b16 %v4506, %v4502
    %v4535 = vpack.c.b16 %v4511, %v4507
    %v4536 = vpack.c.b16 %v4512, %v4508
    %v4537 = vpack.c.b16 %v4513, %v4509
    %v4538 = vpack.c.b16 %v4514, %v4510
    %v4539 = vpack.c.b16 %v4519, %v4515
    %v4540 = vpack.c.b16 %v4520, %v4516
    %v4541 = vpack.c.b16 %v4521, %v4517
    %v4542 = vpack.c.b16 %v4522, %v4518
    %v4543 = vpack.c.b16 %v4527, %v4523
    %v4544 = vpack.c.b16 %v4528, %v4524
    %v4545 = vpack.c.b16 %v4529, %v4525
    %v4546 = vpack.c.b16 %v4530, %v4526
    %v4564 = vsel %vm1098, %v4466, 0
    %4566 = vmatprep.subr.bf16.mxu0 %v4532
    %4567 = vmatpush1.bf16.msra.mxu0 %v4531
    %4568 = vmatprep.subr.bf16.mxu0 %v4536
    %4569 = vmatpush1.bf16.msra.mxu0 %v4535
    %4570 = vmatprep.subr.bf16.mxu0 %v4540
    %4571 = vmatpush1.bf16.msra.mxu0 %v4539
    %4572 = vmatprep.subr.bf16.mxu0 %v4544
    %4573 = vmatpush1.bf16.msra.mxu0 %v4543
    %4574 = vmatprep.subr.bf16.mxu0 0
    %4575 = vmatpush1.bf16.msra.mxu0 0
    %4576 = vmatprep.subr.bf16.mxu0 0
    %4577 = vmatpush1.bf16.msra.mxu0 0
    %4578 = vmatprep.subr.bf16.mxu0 0
    %4579 = vmatpush1.bf16.msra.mxu0 0
    %4580 = vmatprep.subr.bf16.mxu0 0
    %4581 = vmatpush1.bf16.msra.mxu0 0
    %4582 = vmatprep.subr.bf16.mxu0 0
    %4583 = vmatpush1.bf16.msra.mxu0 0
    %4584 = vmatprep.subr.bf16.mxu0 0
    %4585 = vmatpush1.bf16.msra.mxu0 0
    %4586 = vmatprep.subr.bf16.mxu0 0
    %4587 = vmatpush1.bf16.msra.mxu0 0
    %4588 = vmatprep.subr.bf16.mxu0 0
    %4589 = vmatpush1.bf16.msra.mxu0 0
    %4590 = vmatprep.subr.bf16.mxu0 0
    %4591 = vmatpush1.bf16.msra.mxu0 0
    %4592 = vmatprep.subr.bf16.mxu0 0
    %4593 = vmatpush1.bf16.msra.mxu0 0
    %4594 = vmatprep.subr.bf16.mxu0 0
    %4595 = vmatpush1.bf16.msra.mxu0 0
    %4596 = vmatprep.subr.bf16.mxu0 0
    %4597 = vmatpush1.bf16.msra.mxu0 0
    %4598 = vmatprep.mubr.bf16.mxu0 0
    %4599 = vmatmul.mubr.bf16.gmra.mrb[0].mxu0 %v4564
    %v4600 = vpop.f32.mrb[0].mxu0
    %v4601 = vadd.f32 0.0, %v4600
    %v4602 = vpop.f32.mrb[0].mxu0
    %v4603 = vadd.f32 0.0, %v4602
    %v4604 = vpop.f32.mrb[0].mxu0
    %v4605 = vpop.f32.mrb[0].mxu0
    %4606 = vdwg.mxu0
    %4607 = vmatprep.subr.bf16.mxu0 %v4534
    %4608 = vmatpush1.bf16.msra.mxu0 %v4533
    %4609 = vmatprep.subr.bf16.mxu0 %v4538
    %4610 = vmatpush1.bf16.msra.mxu0 %v4537
    %4611 = vmatprep.subr.bf16.mxu0 %v4542
    %4612 = vmatpush1.bf16.msra.mxu0 %v4541
    %4613 = vmatprep.subr.bf16.mxu0 %v4546
    %4614 = vmatpush1.bf16.msra.mxu0 %v4545
    %4615 = vmatprep.subr.bf16.mxu0 0
    %4616 = vmatpush1.bf16.msra.mxu0 0
    %4617 = vmatprep.subr.bf16.mxu0 0
    %4618 = vmatpush1.bf16.msra.mxu0 0
    %4619 = vmatprep.subr.bf16.mxu0 0
    %4620 = vmatpush1.bf16.msra.mxu0 0
    %4621 = vmatprep.subr.bf16.mxu0 0
    %4622 = vmatpush1.bf16.msra.mxu0 0
    %4623 = vmatprep.subr.bf16.mxu0 0
    %4624 = vmatpush1.bf16.msra.mxu0 0
    %4625 = vmatprep.subr.bf16.mxu0 0
    %4626 = vmatpush1.bf16.msra.mxu0 0
    %4627 = vmatprep.subr.bf16.mxu0 0
    %4628 = vmatpush1.bf16.msra.mxu0 0
    %4629 = vmatprep.subr.bf16.mxu0 0
    %4630 = vmatpush1.bf16.msra.mxu0 0
    %4631 = vmatprep.subr.bf16.mxu0 0
    %4632 = vmatpush1.bf16.msra.mxu0 0
    %4633 = vmatprep.subr.bf16.mxu0 0
    %4634 = vmatpush1.bf16.msra.mxu0 0
    %4635 = vmatprep.subr.bf16.mxu0 0
    %4636 = vmatpush1.bf16.msra.mxu0 0
    %4637 = vmatprep.subr.bf16.mxu0 0
    %4638 = vmatpush1.bf16.msra.mxu0 0
    %4639 = vmatprep.mubr.bf16.mxu0 0
    %4640 = vmatmul.mubr.bf16.gmra.mrb[0].mxu0 %v4564
    %v4641 = vpop.f32.mrb[0].mxu0
    %v4642 = vadd.f32 0.0, %v4641
    %v4643 = vpop.f32.mrb[0].mxu0
    %v4644 = vadd.f32 0.0, %v4643
    %v4645 = vpop.f32.mrb[0].mxu0
    %v4646 = vpop.f32.mrb[0].mxu0
    %4647 = vdwg.mxu0
    %v4648 = vadd.f32 %v4461, %v4601
    %v4649 = vadd.f32 %v4462, %v4603
    %v4650 = vadd.f32 %v4463, %v4642
    %v4651 = vadd.f32 %v4464, %v4644
    %v4652 = vld [vmem:[#allocation2 + $0x26] sm:$0x3]
    %v4653 = vpack.c.bf16 %v4652, %v4652
    %v4654 = vld [vmem:[%s4 + $0x980] sm:$0xff]
    %v4655 = vld [vmem:[%s4 + $0x988] sm:$0xff]
    %v4656 = vld [vmem:[%s4 + $0x990] sm:$0xff]
    %v4657 = vld [vmem:[%s4 + $0x998] sm:$0xff]
    %v4658 = vld [vmem:[%s4 + $0x9a0] sm:$0xff]
    %v4659 = vld [vmem:[%s4 + $0x9a8] sm:$0xff]
    %v4660 = vld [vmem:[%s4 + $0x9b0] sm:$0xff]
    %v4661 = vld [vmem:[%s4 + $0x9b8] sm:$0xff]
    %v4662 = vld [vmem:[%s4 + $0x9c0] sm:$0xff]
    %v4663 = vld [vmem:[%s4 + $0x9c8] sm:$0xff]
    %v4664 = vld [vmem:[%s4 + $0x9d0] sm:$0xff]
    %v4665 = vld [vmem:[%s4 + $0x9d8] sm:$0xff]
    %v4666 = vld [vmem:[%s4 + $0x9e0] sm:$0xff]
    %v4667 = vld [vmem:[%s4 + $0x9e8] sm:$0xff]
    %v4668 = vld [vmem:[%s4 + $0x9f0] sm:$0xff]
    %v4669 = vld [vmem:[%s4 + $0x9f8] sm:$0xff]
    %v4686 = vunpack.c.l.b16 %v4654
    %v4687 = vunpack.c.h.b16 %v4654
    %v4688 = vunpack.c.l.b16 %v4655
    %v4689 = vunpack.c.h.b16 %v4655
    %v4690 = vunpack.c.l.b16 %v4656
    %v4691 = vunpack.c.h.b16 %v4656
    %v4692 = vunpack.c.l.b16 %v4657
    %v4693 = vunpack.c.h.b16 %v4657
    %v4694 = vunpack.c.l.b16 %v4658
    %v4695 = vunpack.c.h.b16 %v4658
    %v4696 = vunpack.c.l.b16 %v4659
    %v4697 = vunpack.c.h.b16 %v4659
    %v4698 = vunpack.c.l.b16 %v4660
    %v4699 = vunpack.c.h.b16 %v4660
    %v4700 = vunpack.c.l.b16 %v4661
    %v4701 = vunpack.c.h.b16 %v4661
    %v4702 = vunpack.c.l.b16 %v4662
    %v4703 = vunpack.c.h.b16 %v4662
    %v4704 = vunpack.c.l.b16 %v4663
    %v4705 = vunpack.c.h.b16 %v4663
    %v4706 = vunpack.c.l.b16 %v4664
    %v4707 = vunpack.c.h.b16 %v4664
    %v4708 = vunpack.c.l.b16 %v4665
    %v4709 = vunpack.c.h.b16 %v4665
    %v4710 = vunpack.c.l.b16 %v4666
    %v4711 = vunpack.c.h.b16 %v4666
    %v4712 = vunpack.c.l.b16 %v4667
    %v4713 = vunpack.c.h.b16 %v4667
    %v4714 = vunpack.c.l.b16 %v4668
    %v4715 = vunpack.c.h.b16 %v4668
    %v4716 = vunpack.c.l.b16 %v4669
    %v4717 = vunpack.c.h.b16 %v4669
    %v4718 = vpack.c.b16 %v4690, %v4686
    %v4719 = vpack.c.b16 %v4691, %v4687
    %v4720 = vpack.c.b16 %v4692, %v4688
    %v4721 = vpack.c.b16 %v4693, %v4689
    %v4722 = vpack.c.b16 %v4698, %v4694
    %v4723 = vpack.c.b16 %v4699, %v4695
    %v4724 = vpack.c.b16 %v4700, %v4696
    %v4725 = vpack.c.b16 %v4701, %v4697
    %v4726 = vpack.c.b16 %v4706, %v4702
    %v4727 = vpack.c.b16 %v4707, %v4703
    %v4728 = vpack.c.b16 %v4708, %v4704
    %v4729 = vpack.c.b16 %v4709, %v4705
    %v4730 = vpack.c.b16 %v4714, %v4710
    %v4731 = vpack.c.b16 %v4715, %v4711
    %v4732 = vpack.c.b16 %v4716, %v4712
    %v4733 = vpack.c.b16 %v4717, %v4713
    %v4751 = vsel %vm1098, %v4653, 0
    %4753 = vmatprep.subr.bf16.mxu0 %v4719
    %4754 = vmatpush1.bf16.msra.mxu0 %v4718
    %4755 = vmatprep.subr.bf16.mxu0 %v4723
    %4756 = vmatpush1.bf16.msra.mxu0 %v4722
    %4757 = vmatprep.subr.bf16.mxu0 %v4727
    %4758 = vmatpush1.bf16.msra.mxu0 %v4726
    %4759 = vmatprep.subr.bf16.mxu0 %v4731
    %4760 = vmatpush1.bf16.msra.mxu0 %v4730
    %4761 = vmatprep.subr.bf16.mxu0 0
    %4762 = vmatpush1.bf16.msra.mxu0 0
    %4763 = vmatprep.subr.bf16.mxu0 0
    %4764 = vmatpush1.bf16.msra.mxu0 0
    %4765 = vmatprep.subr.bf16.mxu0 0
    %4766 = vmatpush1.bf16.msra.mxu0 0
    %4767 = vmatprep.subr.bf16.mxu0 0
    %4768 = vmatpush1.bf16.msra.mxu0 0
    %4769 = vmatprep.subr.bf16.mxu0 0
    %4770 = vmatpush1.bf16.msra.mxu0 0
    %4771 = vmatprep.subr.bf16.mxu0 0
    %4772 = vmatpush1.bf16.msra.mxu0 0
    %4773 = vmatprep.subr.bf16.mxu0 0
    %4774 = vmatpush1.bf16.msra.mxu0 0
    %4775 = vmatprep.subr.bf16.mxu0 0
    %4776 = vmatpush1.bf16.msra.mxu0 0
    %4777 = vmatprep.subr.bf16.mxu0 0
    %4778 = vmatpush1.bf16.msra.mxu0 0
    %4779 = vmatprep.subr.bf16.mxu0 0
    %4780 = vmatpush1.bf16.msra.mxu0 0
    %4781 = vmatprep.subr.bf16.mxu0 0
    %4782 = vmatpush1.bf16.msra.mxu0 0
    %4783 = vmatprep.subr.bf16.mxu0 0
    %4784 = vmatpush1.bf16.msra.mxu0 0
    %4785 = vmatprep.mubr.bf16.mxu0 0
    %4786 = vmatmul.mubr.bf16.gmra.mrb[0].mxu0 %v4751
    %v4787 = vpop.f32.mrb[0].mxu0
    %v4788 = vadd.f32 0.0, %v4787
    %v4789 = vpop.f32.mrb[0].mxu0
    %v4790 = vadd.f32 0.0, %v4789
    %v4791 = vpop.f32.mrb[0].mxu0
    %v4792 = vpop.f32.mrb[0].mxu0
    %4793 = vdwg.mxu0
    %4794 = vmatprep.subr.bf16.mxu0 %v4721
    %4795 = vmatpush1.bf16.msra.mxu0 %v4720
    %4796 = vmatprep.subr.bf16.mxu0 %v4725
    %4797 = vmatpush1.bf16.msra.mxu0 %v4724
    %4798 = vmatprep.subr.bf16.mxu0 %v4729
    %4799 = vmatpush1.bf16.msra.mxu0 %v4728
    %4800 = vmatprep.subr.bf16.mxu0 %v4733
    %4801 = vmatpush1.bf16.msra.mxu0 %v4732
    %4802 = vmatprep.subr.bf16.mxu0 0
    %4803 = vmatpush1.bf16.msra.mxu0 0
    %4804 = vmatprep.subr.bf16.mxu0 0
    %4805 = vmatpush1.bf16.msra.mxu0 0
    %4806 = vmatprep.subr.bf16.mxu0 0
    %4807 = vmatpush1.bf16.msra.mxu0 0
    %4808 = vmatprep.subr.bf16.mxu0 0
    %4809 = vmatpush1.bf16.msra.mxu0 0
    %4810 = vmatprep.subr.bf16.mxu0 0
    %4811 = vmatpush1.bf16.msra.mxu0 0
    %4812 = vmatprep.subr.bf16.mxu0 0
    %4813 = vmatpush1.bf16.msra.mxu0 0
    %4814 = vmatprep.subr.bf16.mxu0 0
    %4815 = vmatpush1.bf16.msra.mxu0 0
    %4816 = vmatprep.subr.bf16.mxu0 0
    %4817 = vmatpush1.bf16.msra.mxu0 0
    %4818 = vmatprep.subr.bf16.mxu0 0
    %4819 = vmatpush1.bf16.msra.mxu0 0
    %4820 = vmatprep.subr.bf16.mxu0 0
    %4821 = vmatpush1.bf16.msra.mxu0 0
    %4822 = vmatprep.subr.bf16.mxu0 0
    %4823 = vmatpush1.bf16.msra.mxu0 0
    %4824 = vmatprep.subr.bf16.mxu0 0
    %4825 = vmatpush1.bf16.msra.mxu0 0
    %4826 = vmatprep.mubr.bf16.mxu0 0
    %4827 = vmatmul.mubr.bf16.gmra.mrb[0].mxu0 %v4751
    %v4828 = vpop.f32.mrb[0].mxu0
    %v4829 = vadd.f32 0.0, %v4828
    %v4830 = vpop.f32.mrb[0].mxu0
    %v4831 = vadd.f32 0.0, %v4830
    %v4832 = vpop.f32.mrb[0].mxu0
    %v4833 = vpop.f32.mrb[0].mxu0
    %4834 = vdwg.mxu0
    %v4835 = vadd.f32 %v4648, %v4788
    %v4836 = vadd.f32 %v4649, %v4790
    %v4837 = vadd.f32 %v4650, %v4829
    %v4838 = vadd.f32 %v4651, %v4831
    %v4839 = vld [vmem:[#allocation2 + $0x28] sm:$0x3]
    %v4840 = vpack.c.bf16 %v4839, %v4839
    %v4841 = vld [vmem:[%s4 + $0xa00] sm:$0xff]
    %v4842 = vld [vmem:[%s4 + $0xa08] sm:$0xff]
    %v4843 = vld [vmem:[%s4 + $0xa10] sm:$0xff]
    %v4844 = vld [vmem:[%s4 + $0xa18] sm:$0xff]
    %v4845 = vld [vmem:[%s4 + $0xa20] sm:$0xff]
    %v4846 = vld [vmem:[%s4 + $0xa28] sm:$0xff]
    %v4847 = vld [vmem:[%s4 + $0xa30] sm:$0xff]
    %v4848 = vld [vmem:[%s4 + $0xa38] sm:$0xff]
    %v4849 = vld [vmem:[%s4 + $0xa40] sm:$0xff]
    %v4850 = vld [vmem:[%s4 + $0xa48] sm:$0xff]
    %v4851 = vld [vmem:[%s4 + $0xa50] sm:$0xff]
    %v4852 = vld [vmem:[%s4 + $0xa58] sm:$0xff]
    %v4853 = vld [vmem:[%s4 + $0xa60] sm:$0xff]
    %v4854 = vld [vmem:[%s4 + $0xa68] sm:$0xff]
    %v4855 = vld [vmem:[%s4 + $0xa70] sm:$0xff]
    %v4856 = vld [vmem:[%s4 + $0xa78] sm:$0xff]
    %v4873 = vunpack.c.l.b16 %v4841
    %v4874 = vunpack.c.h.b16 %v4841
    %v4875 = vunpack.c.l.b16 %v4842
    %v4876 = vunpack.c.h.b16 %v4842
    %v4877 = vunpack.c.l.b16 %v4843
    %v4878 = vunpack.c.h.b16 %v4843
    %v4879 = vunpack.c.l.b16 %v4844
    %v4880 = vunpack.c.h.b16 %v4844
    %v4881 = vunpack.c.l.b16 %v4845
    %v4882 = vunpack.c.h.b16 %v4845
    %v4883 = vunpack.c.l.b16 %v4846
    %v4884 = vunpack.c.h.b16 %v4846
    %v4885 = vunpack.c.l.b16 %v4847
    %v4886 = vunpack.c.h.b16 %v4847
    %v4887 = vunpack.c.l.b16 %v4848
    %v4888 = vunpack.c.h.b16 %v4848
    %v4889 = vunpack.c.l.b16 %v4849
    %v4890 = vunpack.c.h.b16 %v4849
    %v4891 = vunpack.c.l.b16 %v4850
    %v4892 = vunpack.c.h.b16 %v4850
    %v4893 = vunpack.c.l.b16 %v4851
    %v4894 = vunpack.c.h.b16 %v4851
    %v4895 = vunpack.c.l.b16 %v4852
    %v4896 = vunpack.c.h.b16 %v4852
    %v4897 = vunpack.c.l.b16 %v4853
    %v4898 = vunpack.c.h.b16 %v4853
    %v4899 = vunpack.c.l.b16 %v4854
    %v4900 = vunpack.c.h.b16 %v4854
    %v4901 = vunpack.c.l.b16 %v4855
    %v4902 = vunpack.c.h.b16 %v4855
    %v4903 = vunpack.c.l.b16 %v4856
    %v4904 = vunpack.c.h.b16 %v4856
    %v4905 = vpack.c.b16 %v4877, %v4873
    %v4906 = vpack.c.b16 %v4878, %v4874
    %v4907 = vpack.c.b16 %v4879, %v4875
    %v4908 = vpack.c.b16 %v4880, %v4876
    %v4909 = vpack.c.b16 %v4885, %v4881
    %v4910 = vpack.c.b16 %v4886, %v4882
    %v4911 = vpack.c.b16 %v4887, %v4883
    %v4912 = vpack.c.b16 %v4888, %v4884
    %v4913 = vpack.c.b16 %v4893, %v4889
    %v4914 = vpack.c.b16 %v4894, %v4890
    %v4915 = vpack.c.b16 %v4895, %v4891
    %v4916 = vpack.c.b16 %v4896, %v4892
    %v4917 = vpack.c.b16 %v4901, %v4897
    %v4918 = vpack.c.b16 %v4902, %v4898
    %v4919 = vpack.c.b16 %v4903, %v4899
    %v4920 = vpack.c.b16 %v4904, %v4900
    %v4938 = vsel %vm1098, %v4840, 0
    %4940 = vmatprep.subr.bf16.mxu0 %v4906
    %4941 = vmatpush1.bf16.msra.mxu0 %v4905
    %4942 = vmatprep.subr.bf16.mxu0 %v4910
    %4943 = vmatpush1.bf16.msra.mxu0 %v4909
    %4944 = vmatprep.subr.bf16.mxu0 %v4914
    %4945 = vmatpush1.bf16.msra.mxu0 %v4913
    %4946 = vmatprep.subr.bf16.mxu0 %v4918
    %4947 = vmatpush1.bf16.msra.mxu0 %v4917
    %4948 = vmatprep.subr.bf16.mxu0 0
    %4949 = vmatpush1.bf16.msra.mxu0 0
    %4950 = vmatprep.subr.bf16.mxu0 0
    %4951 = vmatpush1.bf16.msra.mxu0 0
    %4952 = vmatprep.subr.bf16.mxu0 0
    %4953 = vmatpush1.bf16.msra.mxu0 0
    %4954 = vmatprep.subr.bf16.mxu0 0
    %4955 = vmatpush1.bf16.msra.mxu0 0
    %4956 = vmatprep.subr.bf16.mxu0 0
    %4957 = vmatpush1.bf16.msra.mxu0 0
    %4958 = vmatprep.subr.bf16.mxu0 0
    %4959 = vmatpush1.bf16.msra.mxu0 0
    %4960 = vmatprep.subr.bf16.mxu0 0
    %4961 = vmatpush1.bf16.msra.mxu0 0
    %4962 = vmatprep.subr.bf16.mxu0 0
    %4963 = vmatpush1.bf16.msra.mxu0 0
    %4964 = vmatprep.subr.bf16.mxu0 0
    %4965 = vmatpush1.bf16.msra.mxu0 0
    %4966 = vmatprep.subr.bf16.mxu0 0
    %4967 = vmatpush1.bf16.msra.mxu0 0
    %4968 = vmatprep.subr.bf16.mxu0 0
    %4969 = vmatpush1.bf16.msra.mxu0 0
    %4970 = vmatprep.subr.bf16.mxu0 0
    %4971 = vmatpush1.bf16.msra.mxu0 0
    %4972 = vmatprep.mubr.bf16.mxu0 0
    %4973 = vmatmul.mubr.bf16.gmra.mrb[0].mxu0 %v4938
    %v4974 = vpop.f32.mrb[0].mxu0
    %v4975 = vadd.f32 0.0, %v4974
    %v4976 = vpop.f32.mrb[0].mxu0
    %v4977 = vadd.f32 0.0, %v4976
    %v4978 = vpop.f32.mrb[0].mxu0
    %v4979 = vpop.f32.mrb[0].mxu0
    %4980 = vdwg.mxu0
    %4981 = vmatprep.subr.bf16.mxu0 %v4908
    %4982 = vmatpush1.bf16.msra.mxu0 %v4907
    %4983 = vmatprep.subr.bf16.mxu0 %v4912
    %4984 = vmatpush1.bf16.msra.mxu0 %v4911
    %4985 = vmatprep.subr.bf16.mxu0 %v4916
    %4986 = vmatpush1.bf16.msra.mxu0 %v4915
    %4987 = vmatprep.subr.bf16.mxu0 %v4920
    %4988 = vmatpush1.bf16.msra.mxu0 %v4919
    %4989 = vmatprep.subr.bf16.mxu0 0
    %4990 = vmatpush1.bf16.msra.mxu0 0
    %4991 = vmatprep.subr.bf16.mxu0 0
    %4992 = vmatpush1.bf16.msra.mxu0 0
    %4993 = vmatprep.subr.bf16.mxu0 0
    %4994 = vmatpush1.bf16.msra.mxu0 0
    %4995 = vmatprep.subr.bf16.mxu0 0
    %4996 = vmatpush1.bf16.msra.mxu0 0
    %4997 = vmatprep.subr.bf16.mxu0 0
    %4998 = vmatpush1.bf16.msra.mxu0 0
    %4999 = vmatprep.subr.bf16.mxu0 0
    %5000 = vmatpush1.bf16.msra.mxu0 0
    %5001 = vmatprep.subr.bf16.mxu0 0
    %5002 = vmatpush1.bf16.msra.mxu0 0
    %5003 = vmatprep.subr.bf16.mxu0 0
    %5004 = vmatpush1.bf16.msra.mxu0 0
    %5005 = vmatprep.subr.bf16.mxu0 0
    %5006 = vmatpush1.bf16.msra.mxu0 0
    %5007 = vmatprep.subr.bf16.mxu0 0
    %5008 = vmatpush1.bf16.msra.mxu0 0
    %5009 = vmatprep.subr.bf16.mxu0 0
    %5010 = vmatpush1.bf16.msra.mxu0 0
    %5011 = vmatprep.subr.bf16.mxu0 0
    %5012 = vmatpush1.bf16.msra.mxu0 0
    %5013 = vmatprep.mubr.bf16.mxu0 0
    %5014 = vmatmul.mubr.bf16.gmra.mrb[0].mxu0 %v4938
    %v5015 = vpop.f32.mrb[0].mxu0
    %v5016 = vadd.f32 0.0, %v5015
    %v5017 = vpop.f32.mrb[0].mxu0
    %v5018 = vadd.f32 0.0, %v5017
    %v5019 = vpop.f32.mrb[0].mxu0
    %v5020 = vpop.f32.mrb[0].mxu0
    %5021 = vdwg.mxu0
    %v5022 = vadd.f32 %v4835, %v4975
    %v5023 = vadd.f32 %v4836, %v4977
    %v5024 = vadd.f32 %v4837, %v5016
    %v5025 = vadd.f32 %v4838, %v5018
    %v5026 = vld [vmem:[#allocation2 + $0x2a] sm:$0x3]
    %v5027 = vpack.c.bf16 %v5026, %v5026
    %v5028 = vld [vmem:[%s4 + $0xa80] sm:$0xff]
    %v5029 = vld [vmem:[%s4 + $0xa88] sm:$0xff]
    %v5030 = vld [vmem:[%s4 + $0xa90] sm:$0xff]
    %v5031 = vld [vmem:[%s4 + $0xa98] sm:$0xff]
    %v5032 = vld [vmem:[%s4 + $0xaa0] sm:$0xff]
    %v5033 = vld [vmem:[%s4 + $0xaa8] sm:$0xff]
    %v5034 = vld [vmem:[%s4 + $0xab0] sm:$0xff]
    %v5035 = vld [vmem:[%s4 + $0xab8] sm:$0xff]
    %v5036 = vld [vmem:[%s4 + $0xac0] sm:$0xff]
    %v5037 = vld [vmem:[%s4 + $0xac8] sm:$0xff]
    %v5038 = vld [vmem:[%s4 + $0xad0] sm:$0xff]
    %v5039 = vld [vmem:[%s4 + $0xad8] sm:$0xff]
    %v5040 = vld [vmem:[%s4 + $0xae0] sm:$0xff]
    %v5041 = vld [vmem:[%s4 + $0xae8] sm:$0xff]
    %v5042 = vld [vmem:[%s4 + $0xaf0] sm:$0xff]
    %v5043 = vld [vmem:[%s4 + $0xaf8] sm:$0xff]
    %v5060 = vunpack.c.l.b16 %v5028
    %v5061 = vunpack.c.h.b16 %v5028
    %v5062 = vunpack.c.l.b16 %v5029
    %v5063 = vunpack.c.h.b16 %v5029
    %v5064 = vunpack.c.l.b16 %v5030
    %v5065 = vunpack.c.h.b16 %v5030
    %v5066 = vunpack.c.l.b16 %v5031
    %v5067 = vunpack.c.h.b16 %v5031
    %v5068 = vunpack.c.l.b16 %v5032
    %v5069 = vunpack.c.h.b16 %v5032
    %v5070 = vunpack.c.l.b16 %v5033
    %v5071 = vunpack.c.h.b16 %v5033
    %v5072 = vunpack.c.l.b16 %v5034
    %v5073 = vunpack.c.h.b16 %v5034
    %v5074 = vunpack.c.l.b16 %v5035
    %v5075 = vunpack.c.h.b16 %v5035
    %v5076 = vunpack.c.l.b16 %v5036
    %v5077 = vunpack.c.h.b16 %v5036
    %v5078 = vunpack.c.l.b16 %v5037
    %v5079 = vunpack.c.h.b16 %v5037
    %v5080 = vunpack.c.l.b16 %v5038
    %v5081 = vunpack.c.h.b16 %v5038
    %v5082 = vunpack.c.l.b16 %v5039
    %v5083 = vunpack.c.h.b16 %v5039
    %v5084 = vunpack.c.l.b16 %v5040
    %v5085 = vunpack.c.h.b16 %v5040
    %v5086 = vunpack.c.l.b16 %v5041
    %v5087 = vunpack.c.h.b16 %v5041
    %v5088 = vunpack.c.l.b16 %v5042
    %v5089 = vunpack.c.h.b16 %v5042
    %v5090 = vunpack.c.l.b16 %v5043
    %v5091 = vunpack.c.h.b16 %v5043
    %v5092 = vpack.c.b16 %v5064, %v5060
    %v5093 = vpack.c.b16 %v5065, %v5061
    %v5094 = vpack.c.b16 %v5066, %v5062
    %v5095 = vpack.c.b16 %v5067, %v5063
    %v5096 = vpack.c.b16 %v5072, %v5068
    %v5097 = vpack.c.b16 %v5073, %v5069
    %v5098 = vpack.c.b16 %v5074, %v5070
    %v5099 = vpack.c.b16 %v5075, %v5071
    %v5100 = vpack.c.b16 %v5080, %v5076
    %v5101 = vpack.c.b16 %v5081, %v5077
    %v5102 = vpack.c.b16 %v5082, %v5078
    %v5103 = vpack.c.b16 %v5083, %v5079
    %v5104 = vpack.c.b16 %v5088, %v5084
    %v5105 = vpack.c.b16 %v5089, %v5085
    %v5106 = vpack.c.b16 %v5090, %v5086
    %v5107 = vpack.c.b16 %v5091, %v5087
    %v5125 = vsel %vm1098, %v5027, 0
    %5127 = vmatprep.subr.bf16.mxu0 %v5093
    %5128 = vmatpush1.bf16.msra.mxu0 %v5092
    %5129 = vmatprep.subr.bf16.mxu0 %v5097
    %5130 = vmatpush1.bf16.msra.mxu0 %v5096
    %5131 = vmatprep.subr.bf16.mxu0 %v5101
    %5132 = vmatpush1.bf16.msra.mxu0 %v5100
    %5133 = vmatprep.subr.bf16.mxu0 %v5105
    %5134 = vmatpush1.bf16.msra.mxu0 %v5104
    %5135 = vmatprep.subr.bf16.mxu0 0
    %5136 = vmatpush1.bf16.msra.mxu0 0
    %5137 = vmatprep.subr.bf16.mxu0 0
    %5138 = vmatpush1.bf16.msra.mxu0 0
    %5139 = vmatprep.subr.bf16.mxu0 0
    %5140 = vmatpush1.bf16.msra.mxu0 0
    %5141 = vmatprep.subr.bf16.mxu0 0
    %5142 = vmatpush1.bf16.msra.mxu0 0
    %5143 = vmatprep.subr.bf16.mxu0 0
    %5144 = vmatpush1.bf16.msra.mxu0 0
    %5145 = vmatprep.subr.bf16.mxu0 0
    %5146 = vmatpush1.bf16.msra.mxu0 0
    %5147 = vmatprep.subr.bf16.mxu0 0
    %5148 = vmatpush1.bf16.msra.mxu0 0
    %5149 = vmatprep.subr.bf16.mxu0 0
    %5150 = vmatpush1.bf16.msra.mxu0 0
    %5151 = vmatprep.subr.bf16.mxu0 0
    %5152 = vmatpush1.bf16.msra.mxu0 0
    %5153 = vmatprep.subr.bf16.mxu0 0
    %5154 = vmatpush1.bf16.msra.mxu0 0
    %5155 = vmatprep.subr.bf16.mxu0 0
    %5156 = vmatpush1.bf16.msra.mxu0 0
    %5157 = vmatprep.subr.bf16.mxu0 0
    %5158 = vmatpush1.bf16.msra.mxu0 0
    %5159 = vmatprep.mubr.bf16.mxu0 0
    %5160 = vmatmul.mubr.bf16.gmra.mrb[0].mxu0 %v5125
    %v5161 = vpop.f32.mrb[0].mxu0
    %v5162 = vadd.f32 0.0, %v5161
    %v5163 = vpop.f32.mrb[0].mxu0
    %v5164 = vadd.f32 0.0, %v5163
    %v5165 = vpop.f32.mrb[0].mxu0
    %v5166 = vpop.f32.mrb[0].mxu0
    %5167 = vdwg.mxu0
    %5168 = vmatprep.subr.bf16.mxu0 %v5095
    %5169 = vmatpush1.bf16.msra.mxu0 %v5094
    %5170 = vmatprep.subr.bf16.mxu0 %v5099
    %5171 = vmatpush1.bf16.msra.mxu0 %v5098
    %5172 = vmatprep.subr.bf16.mxu0 %v5103
    %5173 = vmatpush1.bf16.msra.mxu0 %v5102
    %5174 = vmatprep.subr.bf16.mxu0 %v5107
    %5175 = vmatpush1.bf16.msra.mxu0 %v5106
    %5176 = vmatprep.subr.bf16.mxu0 0
    %5177 = vmatpush1.bf16.msra.mxu0 0
    %5178 = vmatprep.subr.bf16.mxu0 0
    %5179 = vmatpush1.bf16.msra.mxu0 0
    %5180 = vmatprep.subr.bf16.mxu0 0
    %5181 = vmatpush1.bf16.msra.mxu0 0
    %5182 = vmatprep.subr.bf16.mxu0 0
    %5183 = vmatpush1.bf16.msra.mxu0 0
    %5184 = vmatprep.subr.bf16.mxu0 0
    %5185 = vmatpush1.bf16.msra.mxu0 0
    %5186 = vmatprep.subr.bf16.mxu0 0
    %5187 = vmatpush1.bf16.msra.mxu0 0
    %5188 = vmatprep.subr.bf16.mxu0 0
    %5189 = vmatpush1.bf16.msra.mxu0 0
    %5190 = vmatprep.subr.bf16.mxu0 0
    %5191 = vmatpush1.bf16.msra.mxu0 0
    %5192 = vmatprep.subr.bf16.mxu0 0
    %5193 = vmatpush1.bf16.msra.mxu0 0
    %5194 = vmatprep.subr.bf16.mxu0 0
    %5195 = vmatpush1.bf16.msra.mxu0 0
    %5196 = vmatprep.subr.bf16.mxu0 0
    %5197 = vmatpush1.bf16.msra.mxu0 0
    %5198 = vmatprep.subr.bf16.mxu0 0
    %5199 = vmatpush1.bf16.msra.mxu0 0
    %5200 = vmatprep.mubr.bf16.mxu0 0
    %5201 = vmatmul.mubr.bf16.gmra.mrb[0].mxu0 %v5125
    %v5202 = vpop.f32.mrb[0].mxu0
    %v5203 = vadd.f32 0.0, %v5202
    %v5204 = vpop.f32.mrb[0].mxu0
    %v5205 = vadd.f32 0.0, %v5204
    %v5206 = vpop.f32.mrb[0].mxu0
    %v5207 = vpop.f32.mrb[0].mxu0
    %5208 = vdwg.mxu0
    %v5209 = vadd.f32 %v5022, %v5162
    %v5210 = vadd.f32 %v5023, %v5164
    %v5211 = vadd.f32 %v5024, %v5203
    %v5212 = vadd.f32 %v5025, %v5205
    %v5213 = vld [vmem:[#allocation2 + $0x2c] sm:$0x3]
    %v5214 = vpack.c.bf16 %v5213, %v5213
    %v5215 = vld [vmem:[%s4 + $0xb00] sm:$0xff]
    %v5216 = vld [vmem:[%s4 + $0xb08] sm:$0xff]
    %v5217 = vld [vmem:[%s4 + $0xb10] sm:$0xff]
    %v5218 = vld [vmem:[%s4 + $0xb18] sm:$0xff]
    %v5219 = vld [vmem:[%s4 + $0xb20] sm:$0xff]
    %v5220 = vld [vmem:[%s4 + $0xb28] sm:$0xff]
    %v5221 = vld [vmem:[%s4 + $0xb30] sm:$0xff]
    %v5222 = vld [vmem:[%s4 + $0xb38] sm:$0xff]
    %v5223 = vld [vmem:[%s4 + $0xb40] sm:$0xff]
    %v5224 = vld [vmem:[%s4 + $0xb48] sm:$0xff]
    %v5225 = vld [vmem:[%s4 + $0xb50] sm:$0xff]
    %v5226 = vld [vmem:[%s4 + $0xb58] sm:$0xff]
    %v5227 = vld [vmem:[%s4 + $0xb60] sm:$0xff]
    %v5228 = vld [vmem:[%s4 + $0xb68] sm:$0xff]
    %v5229 = vld [vmem:[%s4 + $0xb70] sm:$0xff]
    %v5230 = vld [vmem:[%s4 + $0xb78] sm:$0xff]
    %v5247 = vunpack.c.l.b16 %v5215
    %v5248 = vunpack.c.h.b16 %v5215
    %v5249 = vunpack.c.l.b16 %v5216
    %v5250 = vunpack.c.h.b16 %v5216
    %v5251 = vunpack.c.l.b16 %v5217
    %v5252 = vunpack.c.h.b16 %v5217
    %v5253 = vunpack.c.l.b16 %v5218
    %v5254 = vunpack.c.h.b16 %v5218
    %v5255 = vunpack.c.l.b16 %v5219
    %v5256 = vunpack.c.h.b16 %v5219
    %v5257 = vunpack.c.l.b16 %v5220
    %v5258 = vunpack.c.h.b16 %v5220
    %v5259 = vunpack.c.l.b16 %v5221
    %v5260 = vunpack.c.h.b16 %v5221
    %v5261 = vunpack.c.l.b16 %v5222
    %v5262 = vunpack.c.h.b16 %v5222
    %v5263 = vunpack.c.l.b16 %v5223
    %v5264 = vunpack.c.h.b16 %v5223
    %v5265 = vunpack.c.l.b16 %v5224
    %v5266 = vunpack.c.h.b16 %v5224
    %v5267 = vunpack.c.l.b16 %v5225
    %v5268 = vunpack.c.h.b16 %v5225
    %v5269 = vunpack.c.l.b16 %v5226
    %v5270 = vunpack.c.h.b16 %v5226
    %v5271 = vunpack.c.l.b16 %v5227
    %v5272 = vunpack.c.h.b16 %v5227
    %v5273 = vunpack.c.l.b16 %v5228
    %v5274 = vunpack.c.h.b16 %v5228
    %v5275 = vunpack.c.l.b16 %v5229
    %v5276 = vunpack.c.h.b16 %v5229
    %v5277 = vunpack.c.l.b16 %v5230
    %v5278 = vunpack.c.h.b16 %v5230
    %v5279 = vpack.c.b16 %v5251, %v5247
    %v5280 = vpack.c.b16 %v5252, %v5248
    %v5281 = vpack.c.b16 %v5253, %v5249
    %v5282 = vpack.c.b16 %v5254, %v5250
    %v5283 = vpack.c.b16 %v5259, %v5255
    %v5284 = vpack.c.b16 %v5260, %v5256
    %v5285 = vpack.c.b16 %v5261, %v5257
    %v5286 = vpack.c.b16 %v5262, %v5258
    %v5287 = vpack.c.b16 %v5267, %v5263
    %v5288 = vpack.c.b16 %v5268, %v5264
    %v5289 = vpack.c.b16 %v5269, %v5265
    %v5290 = vpack.c.b16 %v5270, %v5266
    %v5291 = vpack.c.b16 %v5275, %v5271
    %v5292 = vpack.c.b16 %v5276, %v5272
    %v5293 = vpack.c.b16 %v5277, %v5273
    %v5294 = vpack.c.b16 %v5278, %v5274
    %v5312 = vsel %vm1098, %v5214, 0
    %5314 = vmatprep.subr.bf16.mxu0 %v5280
    %5315 = vmatpush1.bf16.msra.mxu0 %v5279
    %5316 = vmatprep.subr.bf16.mxu0 %v5284
    %5317 = vmatpush1.bf16.msra.mxu0 %v5283
    %5318 = vmatprep.subr.bf16.mxu0 %v5288
    %5319 = vmatpush1.bf16.msra.mxu0 %v5287
    %5320 = vmatprep.subr.bf16.mxu0 %v5292
    %5321 = vmatpush1.bf16.msra.mxu0 %v5291
    %5322 = vmatprep.subr.bf16.mxu0 0
    %5323 = vmatpush1.bf16.msra.mxu0 0
    %5324 = vmatprep.subr.bf16.mxu0 0
    %5325 = vmatpush1.bf16.msra.mxu0 0
    %5326 = vmatprep.subr.bf16.mxu0 0
    %5327 = vmatpush1.bf16.msra.mxu0 0
    %5328 = vmatprep.subr.bf16.mxu0 0
    %5329 = vmatpush1.bf16.msra.mxu0 0
    %5330 = vmatprep.subr.bf16.mxu0 0
    %5331 = vmatpush1.bf16.msra.mxu0 0
    %5332 = vmatprep.subr.bf16.mxu0 0
    %5333 = vmatpush1.bf16.msra.mxu0 0
    %5334 = vmatprep.subr.bf16.mxu0 0
    %5335 = vmatpush1.bf16.msra.mxu0 0
    %5336 = vmatprep.subr.bf16.mxu0 0
    %5337 = vmatpush1.bf16.msra.mxu0 0
    %5338 = vmatprep.subr.bf16.mxu0 0
    %5339 = vmatpush1.bf16.msra.mxu0 0
    %5340 = vmatprep.subr.bf16.mxu0 0
    %5341 = vmatpush1.bf16.msra.mxu0 0
    %5342 = vmatprep.subr.bf16.mxu0 0
    %5343 = vmatpush1.bf16.msra.mxu0 0
    %5344 = vmatprep.subr.bf16.mxu0 0
    %5345 = vmatpush1.bf16.msra.mxu0 0
    %5346 = vmatprep.mubr.bf16.mxu0 0
    %5347 = vmatmul.mubr.bf16.gmra.mrb[0].mxu0 %v5312
    %v5348 = vpop.f32.mrb[0].mxu0
    %v5349 = vadd.f32 0.0, %v5348
    %v5350 = vpop.f32.mrb[0].mxu0
    %v5351 = vadd.f32 0.0, %v5350
    %v5352 = vpop.f32.mrb[0].mxu0
    %v5353 = vpop.f32.mrb[0].mxu0
    %5354 = vdwg.mxu0
    %5355 = vmatprep.subr.bf16.mxu0 %v5282
    %5356 = vmatpush1.bf16.msra.mxu0 %v5281
    %5357 = vmatprep.subr.bf16.mxu0 %v5286
    %5358 = vmatpush1.bf16.msra.mxu0 %v5285
    %5359 = vmatprep.subr.bf16.mxu0 %v5290
    %5360 = vmatpush1.bf16.msra.mxu0 %v5289
    %5361 = vmatprep.subr.bf16.mxu0 %v5294
    %5362 = vmatpush1.bf16.msra.mxu0 %v5293
    %5363 = vmatprep.subr.bf16.mxu0 0
    %5364 = vmatpush1.bf16.msra.mxu0 0
    %5365 = vmatprep.subr.bf16.mxu0 0
    %5366 = vmatpush1.bf16.msra.mxu0 0
    %5367 = vmatprep.subr.bf16.mxu0 0
    %5368 = vmatpush1.bf16.msra.mxu0 0
    %5369 = vmatprep.subr.bf16.mxu0 0
    %5370 = vmatpush1.bf16.msra.mxu0 0
    %5371 = vmatprep.subr.bf16.mxu0 0
    %5372 = vmatpush1.bf16.msra.mxu0 0
    %5373 = vmatprep.subr.bf16.mxu0 0
    %5374 = vmatpush1.bf16.msra.mxu0 0
    %5375 = vmatprep.subr.bf16.mxu0 0
    %5376 = vmatpush1.bf16.msra.mxu0 0
    %5377 = vmatprep.subr.bf16.mxu0 0
    %5378 = vmatpush1.bf16.msra.mxu0 0
    %5379 = vmatprep.subr.bf16.mxu0 0
    %5380 = vmatpush1.bf16.msra.mxu0 0
    %5381 = vmatprep.subr.bf16.mxu0 0
    %5382 = vmatpush1.bf16.msra.mxu0 0
    %5383 = vmatprep.subr.bf16.mxu0 0
    %5384 = vmatpush1.bf16.msra.mxu0 0
    %5385 = vmatprep.subr.bf16.mxu0 0
    %5386 = vmatpush1.bf16.msra.mxu0 0
    %5387 = vmatprep.mubr.bf16.mxu0 0
    %5388 = vmatmul.mubr.bf16.gmra.mrb[0].mxu0 %v5312
    %v5389 = vpop.f32.mrb[0].mxu0
    %v5390 = vadd.f32 0.0, %v5389
    %v5391 = vpop.f32.mrb[0].mxu0
    %v5392 = vadd.f32 0.0, %v5391
    %v5393 = vpop.f32.mrb[0].mxu0
    %v5394 = vpop.f32.mrb[0].mxu0
    %5395 = vdwg.mxu0
    %v5396 = vadd.f32 %v5209, %v5349
    %v5397 = vadd.f32 %v5210, %v5351
    %v5398 = vadd.f32 %v5211, %v5390
    %v5399 = vadd.f32 %v5212, %v5392
    %v5400 = vld [vmem:[#allocation2 + $0x2e] sm:$0x3]
    %v5401 = vpack.c.bf16 %v5400, %v5400
    %v5402 = vld [vmem:[%s4 + $0xb80] sm:$0xff]
    %v5403 = vld [vmem:[%s4 + $0xb88] sm:$0xff]
    %v5404 = vld [vmem:[%s4 + $0xb90] sm:$0xff]
    %v5405 = vld [vmem:[%s4 + $0xb98] sm:$0xff]
    %v5406 = vld [vmem:[%s4 + $0xba0] sm:$0xff]
    %v5407 = vld [vmem:[%s4 + $0xba8] sm:$0xff]
    %v5408 = vld [vmem:[%s4 + $0xbb0] sm:$0xff]
    %v5409 = vld [vmem:[%s4 + $0xbb8] sm:$0xff]
    %v5410 = vld [vmem:[%s4 + $0xbc0] sm:$0xff]
    %v5411 = vld [vmem:[%s4 + $0xbc8] sm:$0xff]
    %v5412 = vld [vmem:[%s4 + $0xbd0] sm:$0xff]
    %v5413 = vld [vmem:[%s4 + $0xbd8] sm:$0xff]
    %v5414 = vld [vmem:[%s4 + $0xbe0] sm:$0xff]
    %v5415 = vld [vmem:[%s4 + $0xbe8] sm:$0xff]
    %v5416 = vld [vmem:[%s4 + $0xbf0] sm:$0xff]
    %v5417 = vld [vmem:[%s4 + $0xbf8] sm:$0xff]
    %v5434 = vunpack.c.l.b16 %v5402
    %v5435 = vunpack.c.h.b16 %v5402
    %v5436 = vunpack.c.l.b16 %v5403
    %v5437 = vunpack.c.h.b16 %v5403
    %v5438 = vunpack.c.l.b16 %v5404
    %v5439 = vunpack.c.h.b16 %v5404
    %v5440 = vunpack.c.l.b16 %v5405
    %v5441 = vunpack.c.h.b16 %v5405
    %v5442 = vunpack.c.l.b16 %v5406
    %v5443 = vunpack.c.h.b16 %v5406
    %v5444 = vunpack.c.l.b16 %v5407
    %v5445 = vunpack.c.h.b16 %v5407
    %v5446 = vunpack.c.l.b16 %v5408
    %v5447 = vunpack.c.h.b16 %v5408
    %v5448 = vunpack.c.l.b16 %v5409
    %v5449 = vunpack.c.h.b16 %v5409
    %v5450 = vunpack.c.l.b16 %v5410
    %v5451 = vunpack.c.h.b16 %v5410
    %v5452 = vunpack.c.l.b16 %v5411
    %v5453 = vunpack.c.h.b16 %v5411
    %v5454 = vunpack.c.l.b16 %v5412
    %v5455 = vunpack.c.h.b16 %v5412
    %v5456 = vunpack.c.l.b16 %v5413
    %v5457 = vunpack.c.h.b16 %v5413
    %v5458 = vunpack.c.l.b16 %v5414
    %v5459 = vunpack.c.h.b16 %v5414
    %v5460 = vunpack.c.l.b16 %v5415
    %v5461 = vunpack.c.h.b16 %v5415
    %v5462 = vunpack.c.l.b16 %v5416
    %v5463 = vunpack.c.h.b16 %v5416
    %v5464 = vunpack.c.l.b16 %v5417
    %v5465 = vunpack.c.h.b16 %v5417
    %v5466 = vpack.c.b16 %v5438, %v5434
    %v5467 = vpack.c.b16 %v5439, %v5435
    %v5468 = vpack.c.b16 %v5440, %v5436
    %v5469 = vpack.c.b16 %v5441, %v5437
    %v5470 = vpack.c.b16 %v5446, %v5442
    %v5471 = vpack.c.b16 %v5447, %v5443
    %v5472 = vpack.c.b16 %v5448, %v5444
    %v5473 = vpack.c.b16 %v5449, %v5445
    %v5474 = vpack.c.b16 %v5454, %v5450
    %v5475 = vpack.c.b16 %v5455, %v5451
    %v5476 = vpack.c.b16 %v5456, %v5452
    %v5477 = vpack.c.b16 %v5457, %v5453
    %v5478 = vpack.c.b16 %v5462, %v5458
    %v5479 = vpack.c.b16 %v5463, %v5459
    %v5480 = vpack.c.b16 %v5464, %v5460
    %v5481 = vpack.c.b16 %v5465, %v5461
    %v5499 = vsel %vm1098, %v5401, 0
    %5501 = vmatprep.subr.bf16.mxu0 %v5467
    %5502 = vmatpush1.bf16.msra.mxu0 %v5466
    %5503 = vmatprep.subr.bf16.mxu0 %v5471
    %5504 = vmatpush1.bf16.msra.mxu0 %v5470
    %5505 = vmatprep.subr.bf16.mxu0 %v5475
    %5506 = vmatpush1.bf16.msra.mxu0 %v5474
    %5507 = vmatprep.subr.bf16.mxu0 %v5479
    %5508 = vmatpush1.bf16.msra.mxu0 %v5478
    %5509 = vmatprep.subr.bf16.mxu0 0
    %5510 = vmatpush1.bf16.msra.mxu0 0
    %5511 = vmatprep.subr.bf16.mxu0 0
    %5512 = vmatpush1.bf16.msra.mxu0 0
    %5513 = vmatprep.subr.bf16.mxu0 0
    %5514 = vmatpush1.bf16.msra.mxu0 0
    %5515 = vmatprep.subr.bf16.mxu0 0
    %5516 = vmatpush1.bf16.msra.mxu0 0
    %5517 = vmatprep.subr.bf16.mxu0 0
    %5518 = vmatpush1.bf16.msra.mxu0 0
    %5519 = vmatprep.subr.bf16.mxu0 0
    %5520 = vmatpush1.bf16.msra.mxu0 0
    %5521 = vmatprep.subr.bf16.mxu0 0
    %5522 = vmatpush1.bf16.msra.mxu0 0
    %5523 = vmatprep.subr.bf16.mxu0 0
    %5524 = vmatpush1.bf16.msra.mxu0 0
    %5525 = vmatprep.subr.bf16.mxu0 0
    %5526 = vmatpush1.bf16.msra.mxu0 0
    %5527 = vmatprep.subr.bf16.mxu0 0
    %5528 = vmatpush1.bf16.msra.mxu0 0
    %5529 = vmatprep.subr.bf16.mxu0 0
    %5530 = vmatpush1.bf16.msra.mxu0 0
    %5531 = vmatprep.subr.bf16.mxu0 0
    %5532 = vmatpush1.bf16.msra.mxu0 0
    %5533 = vmatprep.mubr.bf16.mxu0 0
    %5534 = vmatmul.mubr.bf16.gmra.mrb[0].mxu0 %v5499
    %v5535 = vpop.f32.mrb[0].mxu0
    %v5536 = vadd.f32 0.0, %v5535
    %v5537 = vpop.f32.mrb[0].mxu0
    %v5538 = vadd.f32 0.0, %v5537
    %v5539 = vpop.f32.mrb[0].mxu0
    %v5540 = vpop.f32.mrb[0].mxu0
    %5541 = vdwg.mxu0
    %5542 = vmatprep.subr.bf16.mxu0 %v5469
    %5543 = vmatpush1.bf16.msra.mxu0 %v5468
    %5544 = vmatprep.subr.bf16.mxu0 %v5473
    %5545 = vmatpush1.bf16.msra.mxu0 %v5472
    %5546 = vmatprep.subr.bf16.mxu0 %v5477
    %5547 = vmatpush1.bf16.msra.mxu0 %v5476
    %5548 = vmatprep.subr.bf16.mxu0 %v5481
    %5549 = vmatpush1.bf16.msra.mxu0 %v5480
    %5550 = vmatprep.subr.bf16.mxu0 0
    %5551 = vmatpush1.bf16.msra.mxu0 0
    %5552 = vmatprep.subr.bf16.mxu0 0
    %5553 = vmatpush1.bf16.msra.mxu0 0
    %5554 = vmatprep.subr.bf16.mxu0 0
    %5555 = vmatpush1.bf16.msra.mxu0 0
    %5556 = vmatprep.subr.bf16.mxu0 0
    %5557 = vmatpush1.bf16.msra.mxu0 0
    %5558 = vmatprep.subr.bf16.mxu0 0
    %5559 = vmatpush1.bf16.msra.mxu0 0
    %5560 = vmatprep.subr.bf16.mxu0 0
    %5561 = vmatpush1.bf16.msra.mxu0 0
    %5562 = vmatprep.subr.bf16.mxu0 0
    %5563 = vmatpush1.bf16.msra.mxu0 0
    %5564 = vmatprep.subr.bf16.mxu0 0
    %5565 = vmatpush1.bf16.msra.mxu0 0
    %5566 = vmatprep.subr.bf16.mxu0 0
    %5567 = vmatpush1.bf16.msra.mxu0 0
    %5568 = vmatprep.subr.bf16.mxu0 0
    %5569 = vmatpush1.bf16.msra.mxu0 0
    %5570 = vmatprep.subr.bf16.mxu0 0
    %5571 = vmatpush1.bf16.msra.mxu0 0
    %5572 = vmatprep.subr.bf16.mxu0 0
    %5573 = vmatpush1.bf16.msra.mxu0 0
    %5574 = vmatprep.mubr.bf16.mxu0 0
    %5575 = vmatmul.mubr.bf16.gmra.mrb[0].mxu0 %v5499
    %v5576 = vpop.f32.mrb[0].mxu0
    %v5577 = vadd.f32 0.0, %v5576
    %v5578 = vpop.f32.mrb[0].mxu0
    %v5579 = vadd.f32 0.0, %v5578
    %v5580 = vpop.f32.mrb[0].mxu0
    %v5581 = vpop.f32.mrb[0].mxu0
    %5582 = vdwg.mxu0
    %v5583 = vadd.f32 %v5396, %v5536
    %v5584 = vadd.f32 %v5397, %v5538
    %v5585 = vadd.f32 %v5398, %v5577
    %v5586 = vadd.f32 %v5399, %v5579
    %v5587 = vld [vmem:[#allocation2 + $0x30] sm:$0x3]
    %v5588 = vpack.c.bf16 %v5587, %v5587
    %v5589 = vld [vmem:[%s4 + $0xc00] sm:$0xff]
    %v5590 = vld [vmem:[%s4 + $0xc08] sm:$0xff]
    %v5591 = vld [vmem:[%s4 + $0xc10] sm:$0xff]
    %v5592 = vld [vmem:[%s4 + $0xc18] sm:$0xff]
    %v5593 = vld [vmem:[%s4 + $0xc20] sm:$0xff]
    %v5594 = vld [vmem:[%s4 + $0xc28] sm:$0xff]
    %v5595 = vld [vmem:[%s4 + $0xc30] sm:$0xff]
    %v5596 = vld [vmem:[%s4 + $0xc38] sm:$0xff]
    %v5597 = vld [vmem:[%s4 + $0xc40] sm:$0xff]
    %v5598 = vld [vmem:[%s4 + $0xc48] sm:$0xff]
    %v5599 = vld [vmem:[%s4 + $0xc50] sm:$0xff]
    %v5600 = vld [vmem:[%s4 + $0xc58] sm:$0xff]
    %v5601 = vld [vmem:[%s4 + $0xc60] sm:$0xff]
    %v5602 = vld [vmem:[%s4 + $0xc68] sm:$0xff]
    %v5603 = vld [vmem:[%s4 + $0xc70] sm:$0xff]
    %v5604 = vld [vmem:[%s4 + $0xc78] sm:$0xff]
    %v5621 = vunpack.c.l.b16 %v5589
    %v5622 = vunpack.c.h.b16 %v5589
    %v5623 = vunpack.c.l.b16 %v5590
    %v5624 = vunpack.c.h.b16 %v5590
    %v5625 = vunpack.c.l.b16 %v5591
    %v5626 = vunpack.c.h.b16 %v5591
    %v5627 = vunpack.c.l.b16 %v5592
    %v5628 = vunpack.c.h.b16 %v5592
    %v5629 = vunpack.c.l.b16 %v5593
    %v5630 = vunpack.c.h.b16 %v5593
    %v5631 = vunpack.c.l.b16 %v5594
    %v5632 = vunpack.c.h.b16 %v5594
    %v5633 = vunpack.c.l.b16 %v5595
    %v5634 = vunpack.c.h.b16 %v5595
    %v5635 = vunpack.c.l.b16 %v5596
    %v5636 = vunpack.c.h.b16 %v5596
    %v5637 = vunpack.c.l.b16 %v5597
    %v5638 = vunpack.c.h.b16 %v5597
    %v5639 = vunpack.c.l.b16 %v5598
    %v5640 = vunpack.c.h.b16 %v5598
    %v5641 = vunpack.c.l.b16 %v5599
    %v5642 = vunpack.c.h.b16 %v5599
    %v5643 = vunpack.c.l.b16 %v5600
    %v5644 = vunpack.c.h.b16 %v5600
    %v5645 = vunpack.c.l.b16 %v5601
    %v5646 = vunpack.c.h.b16 %v5601
    %v5647 = vunpack.c.l.b16 %v5602
    %v5648 = vunpack.c.h.b16 %v5602
    %v5649 = vunpack.c.l.b16 %v5603
    %v5650 = vunpack.c.h.b16 %v5603
    %v5651 = vunpack.c.l.b16 %v5604
    %v5652 = vunpack.c.h.b16 %v5604
    %v5653 = vpack.c.b16 %v5625, %v5621
    %v5654 = vpack.c.b16 %v5626, %v5622
    %v5655 = vpack.c.b16 %v5627, %v5623
    %v5656 = vpack.c.b16 %v5628, %v5624
    %v5657 = vpack.c.b16 %v5633, %v5629
    %v5658 = vpack.c.b16 %v5634, %v5630
    %v5659 = vpack.c.b16 %v5635, %v5631
    %v5660 = vpack.c.b16 %v5636, %v5632
    %v5661 = vpack.c.b16 %v5641, %v5637
    %v5662 = vpack.c.b16 %v5642, %v5638
    %v5663 = vpack.c.b16 %v5643, %v5639
    %v5664 = vpack.c.b16 %v5644, %v5640
    %v5665 = vpack.c.b16 %v5649, %v5645
    %v5666 = vpack.c.b16 %v5650, %v5646
    %v5667 = vpack.c.b16 %v5651, %v5647
    %v5668 = vpack.c.b16 %v5652, %v5648
    %v5686 = vsel %vm1098, %v5588, 0
    %5688 = vmatprep.subr.bf16.mxu0 %v5654
    %5689 = vmatpush1.bf16.msra.mxu0 %v5653
    %5690 = vmatprep.subr.bf16.mxu0 %v5658
    %5691 = vmatpush1.bf16.msra.mxu0 %v5657
    %5692 = vmatprep.subr.bf16.mxu0 %v5662
    %5693 = vmatpush1.bf16.msra.mxu0 %v5661
    %5694 = vmatprep.subr.bf16.mxu0 %v5666
    %5695 = vmatpush1.bf16.msra.mxu0 %v5665
    %5696 = vmatprep.subr.bf16.mxu0 0
    %5697 = vmatpush1.bf16.msra.mxu0 0
    %5698 = vmatprep.subr.bf16.mxu0 0
    %5699 = vmatpush1.bf16.msra.mxu0 0
    %5700 = vmatprep.subr.bf16.mxu0 0
    %5701 = vmatpush1.bf16.msra.mxu0 0
    %5702 = vmatprep.subr.bf16.mxu0 0
    %5703 = vmatpush1.bf16.msra.mxu0 0
    %5704 = vmatprep.subr.bf16.mxu0 0
    %5705 = vmatpush1.bf16.msra.mxu0 0
    %5706 = vmatprep.subr.bf16.mxu0 0
    %5707 = vmatpush1.bf16.msra.mxu0 0
    %5708 = vmatprep.subr.bf16.mxu0 0
    %5709 = vmatpush1.bf16.msra.mxu0 0
    %5710 = vmatprep.subr.bf16.mxu0 0
    %5711 = vmatpush1.bf16.msra.mxu0 0
    %5712 = vmatprep.subr.bf16.mxu0 0
    %5713 = vmatpush1.bf16.msra.mxu0 0
    %5714 = vmatprep.subr.bf16.mxu0 0
    %5715 = vmatpush1.bf16.msra.mxu0 0
    %5716 = vmatprep.subr.bf16.mxu0 0
    %5717 = vmatpush1.bf16.msra.mxu0 0
    %5718 = vmatprep.subr.bf16.mxu0 0
    %5719 = vmatpush1.bf16.msra.mxu0 0
    %5720 = vmatprep.mubr.bf16.mxu0 0
    %5721 = vmatmul.mubr.bf16.gmra.mrb[0].mxu0 %v5686
    %v5722 = vpop.f32.mrb[0].mxu0
    %v5723 = vadd.f32 0.0, %v5722
    %v5724 = vpop.f32.mrb[0].mxu0
    %v5725 = vadd.f32 0.0, %v5724
    %v5726 = vpop.f32.mrb[0].mxu0
    %v5727 = vpop.f32.mrb[0].mxu0
    %5728 = vdwg.mxu0
    %5729 = vmatprep.subr.bf16.mxu0 %v5656
    %5730 = vmatpush1.bf16.msra.mxu0 %v5655
    %5731 = vmatprep.subr.bf16.mxu0 %v5660
    %5732 = vmatpush1.bf16.msra.mxu0 %v5659
    %5733 = vmatprep.subr.bf16.mxu0 %v5664
    %5734 = vmatpush1.bf16.msra.mxu0 %v5663
    %5735 = vmatprep.subr.bf16.mxu0 %v5668
    %5736 = vmatpush1.bf16.msra.mxu0 %v5667
    %5737 = vmatprep.subr.bf16.mxu0 0
    %5738 = vmatpush1.bf16.msra.mxu0 0
    %5739 = vmatprep.subr.bf16.mxu0 0
    %5740 = vmatpush1.bf16.msra.mxu0 0
    %5741 = vmatprep.subr.bf16.mxu0 0
    %5742 = vmatpush1.bf16.msra.mxu0 0
    %5743 = vmatprep.subr.bf16.mxu0 0
    %5744 = vmatpush1.bf16.msra.mxu0 0
    %5745 = vmatprep.subr.bf16.mxu0 0
    %5746 = vmatpush1.bf16.msra.mxu0 0
    %5747 = vmatprep.subr.bf16.mxu0 0
    %5748 = vmatpush1.bf16.msra.mxu0 0
    %5749 = vmatprep.subr.bf16.mxu0 0
    %5750 = vmatpush1.bf16.msra.mxu0 0
    %5751 = vmatprep.subr.bf16.mxu0 0
    %5752 = vmatpush1.bf16.msra.mxu0 0
    %5753 = vmatprep.subr.bf16.mxu0 0
    %5754 = vmatpush1.bf16.msra.mxu0 0
    %5755 = vmatprep.subr.bf16.mxu0 0
    %5756 = vmatpush1.bf16.msra.mxu0 0
    %5757 = vmatprep.subr.bf16.mxu0 0
    %5758 = vmatpush1.bf16.msra.mxu0 0
    %5759 = vmatprep.subr.bf16.mxu0 0
    %5760 = vmatpush1.bf16.msra.mxu0 0
    %5761 = vmatprep.mubr.bf16.mxu0 0
    %5762 = vmatmul.mubr.bf16.gmra.mrb[0].mxu0 %v5686
    %v5763 = vpop.f32.mrb[0].mxu0
    %v5764 = vadd.f32 0.0, %v5763
    %v5765 = vpop.f32.mrb[0].mxu0
    %v5766 = vadd.f32 0.0, %v5765
    %v5767 = vpop.f32.mrb[0].mxu0
    %v5768 = vpop.f32.mrb[0].mxu0
    %5769 = vdwg.mxu0
    %v5770 = vadd.f32 %v5583, %v5723
    %v5771 = vadd.f32 %v5584, %v5725
    %v5772 = vadd.f32 %v5585, %v5764
    %v5773 = vadd.f32 %v5586, %v5766
    %v5774 = vld [vmem:[%s5] sm:$0xf]
    %v5776 = vlaneseq
    %v5777 = vshrl.u32 %v5776, 7
    %v5778 = vsub.s32 0, %v5777
    %v5779 = vrot.slane %v5774, %v5778
    %v5780 = vlaneseq
    %v5781 = vshrl.u32 %v5780, 7
    %v5782 = vsub.s32 1, %v5781
    %v5783 = vrot.slane %v5774, %v5782
    %v5784 = vlaneseq
    %v5785 = vshrl.u32 %v5784, 7
    %v5786 = vsub.s32 2, %v5785
    %v5787 = vrot.slane %v5774, %v5786
    %v5788 = vlaneseq
    %v5789 = vshrl.u32 %v5788, 7
    %v5790 = vsub.s32 3, %v5789
    %v5791 = vrot.slane %v5774, %v5790
    %v5796 = vadd.f32 %v5770, %v5779
    %v5797 = vadd.f32 %v5771, %v5783
    %v5798 = vadd.f32 %v5772, %v5787
    %v5799 = vadd.f32 %v5773, %v5791
    %v5800 = vmax.f32 %v5796, 0.0
    %v5801 = vmax.f32 %v5797, 0.0
    %v5802 = vmax.f32 %v5798, 0.0
    %v5803 = vmax.f32 %v5799, 0.0
    %v5804 = vld [vmem:[%s6] sm:$0xf]
    %v5806 = vlaneseq
    %v5807 = vshrl.u32 %v5806, 7
    %v5808 = vsub.s32 0, %v5807
    %v5809 = vrot.slane %v5804, %v5808
    %v5810 = vlaneseq
    %v5811 = vshrl.u32 %v5810, 7
    %v5812 = vsub.s32 1, %v5811
    %v5813 = vrot.slane %v5804, %v5812
    %v5814 = vlaneseq
    %v5815 = vshrl.u32 %v5814, 7
    %v5816 = vsub.s32 2, %v5815
    %v5817 = vrot.slane %v5804, %v5816
    %v5818 = vlaneseq
    %v5819 = vshrl.u32 %v5818, 7
    %v5820 = vsub.s32 3, %v5819
    %v5821 = vrot.slane %v5804, %v5820
    %v5826 = vmul.f32 %v5800, %v5809
    %v5827 = vmul.f32 %v5801, %v5813
    %v5828 = vmul.f32 %v5802, %v5817
    %v5829 = vmul.f32 %v5803, %v5821
    %v5830 = vpack.c.bf16 %v5826, %v5826
    %v5831 = vpack.c.bf16 %v5827, %v5827
    %v5832 = vpack.c.bf16 %v5828, %v5828
    %v5833 = vpack.c.bf16 %v5829, %v5829
    %v5834 = vld [vmem:[%s7] sm:$0xf]
    %v5835 = vld [vmem:[%s7 + $0x4] sm:$0xf]
    %v5836 = vld [vmem:[%s7 + $0x8] sm:$0xf]
    %v5837 = vld [vmem:[%s7 + $0xc] sm:$0xf]
    %v5838 = vld [vmem:[%s7 + $0x10] sm:$0xf]
    %v5839 = vld [vmem:[%s7 + $0x14] sm:$0xf]
    %v5840 = vld [vmem:[%s7 + $0x18] sm:$0xf]
    %v5841 = vld [vmem:[%s7 + $0x1c] sm:$0xf]
    %v5842 = vld [vmem:[%s7 + $0x20] sm:$0xf]
    %v5843 = vld [vmem:[%s7 + $0x24] sm:$0xf]
    %v5844 = vld [vmem:[%s7 + $0x28] sm:$0xf]
    %v5845 = vld [vmem:[%s7 + $0x2c] sm:$0xf]
    %v5846 = vld [vmem:[%s7 + $0x30] sm:$0xf]
    %v5847 = vld [vmem:[%s7 + $0x34] sm:$0xf]
    %v5848 = vld [vmem:[%s7 + $0x38] sm:$0xf]
    %v5849 = vld [vmem:[%s7 + $0x3c] sm:$0xf]
    %v5850 = vld [vmem:[%s7 + $0x40] sm:$0xf]
    %v5851 = vld [vmem:[%s7 + $0x44] sm:$0xf]
    %v5852 = vld [vmem:[%s7 + $0x48] sm:$0xf]
    %v5853 = vld [vmem:[%s7 + $0x4c] sm:$0xf]
    %v5854 = vld [vmem:[%s7 + $0x50] sm:$0xf]
    %v5855 = vld [vmem:[%s7 + $0x54] sm:$0xf]
    %v5856 = vld [vmem:[%s7 + $0x58] sm:$0xf]
    %v5857 = vld [vmem:[%s7 + $0x5c] sm:$0xf]
    %v5858 = vld [vmem:[%s7 + $0x60] sm:$0xf]
    %v5859 = vld [vmem:[%s7 + $0x64] sm:$0xf]
    %v5860 = vld [vmem:[%s7 + $0x68] sm:$0xf]
    %v5861 = vld [vmem:[%s7 + $0x6c] sm:$0xf]
    %v5862 = vld [vmem:[%s7 + $0x70] sm:$0xf]
    %v5863 = vld [vmem:[%s7 + $0x74] sm:$0xf]
    %v5864 = vld [vmem:[%s7 + $0x78] sm:$0xf]
    %v5865 = vld [vmem:[%s7 + $0x7c] sm:$0xf]
    %v5866 = vld [vmem:[%s7 + $0x80] sm:$0xf]
    %v5867 = vld [vmem:[%s7 + $0x84] sm:$0xf]
    %v5868 = vld [vmem:[%s7 + $0x88] sm:$0xf]
    %v5869 = vld [vmem:[%s7 + $0x8c] sm:$0xf]
    %v5870 = vld [vmem:[%s7 + $0x90] sm:$0xf]
    %v5871 = vld [vmem:[%s7 + $0x94] sm:$0xf]
    %v5872 = vld [vmem:[%s7 + $0x98] sm:$0xf]
    %v5873 = vld [vmem:[%s7 + $0x9c] sm:$0xf]
    %v5874 = vld [vmem:[%s7 + $0xa0] sm:$0xf]
    %v5875 = vld [vmem:[%s7 + $0xa4] sm:$0xf]
    %v5876 = vld [vmem:[%s7 + $0xa8] sm:$0xf]
    %v5877 = vld [vmem:[%s7 + $0xac] sm:$0xf]
    %v5878 = vld [vmem:[%s7 + $0xb0] sm:$0xf]
    %v5879 = vld [vmem:[%s7 + $0xb4] sm:$0xf]
    %v5880 = vld [vmem:[%s7 + $0xb8] sm:$0xf]
    %v5881 = vld [vmem:[%s7 + $0xbc] sm:$0xf]
    %v5882 = vld [vmem:[%s7 + $0xc0] sm:$0xf]
    %v5883 = vld [vmem:[%s7 + $0xc4] sm:$0xf]
    %v5884 = vld [vmem:[%s7 + $0xc8] sm:$0xf]
    %v5885 = vld [vmem:[%s7 + $0xcc] sm:$0xf]
    %v5886 = vld [vmem:[%s7 + $0xd0] sm:$0xf]
    %v5887 = vld [vmem:[%s7 + $0xd4] sm:$0xf]
    %v5888 = vld [vmem:[%s7 + $0xd8] sm:$0xf]
    %v5889 = vld [vmem:[%s7 + $0xdc] sm:$0xf]
    %v5890 = vld [vmem:[%s7 + $0xe0] sm:$0xf]
    %v5891 = vld [vmem:[%s7 + $0xe4] sm:$0xf]
    %v5892 = vld [vmem:[%s7 + $0xe8] sm:$0xf]
    %v5893 = vld [vmem:[%s7 + $0xec] sm:$0xf]
    %v5894 = vld [vmem:[%s7 + $0xf0] sm:$0xf]
    %v5895 = vld [vmem:[%s7 + $0xf4] sm:$0xf]
    %v5896 = vld [vmem:[%s7 + $0xf8] sm:$0xf]
    %v5897 = vld [vmem:[%s7 + $0xfc] sm:$0xf]
    %v5898 = vld [vmem:[%s8] sm:$0x1]
    %v5900 = vlaneseq
    %v5901 = vshrl.u32 %v5900, 7
    %v5902 = vsub.s32 0, %v5901
    %v5903 = vrot.slane %v5898, %v5902
    %v5969 = vunpack.c.l.b16 %v5834
    %v5970 = vunpack.c.l.b16 %v5835
    %v5971 = vunpack.c.l.b16 %v5836
    %v5972 = vunpack.c.l.b16 %v5837
    %v5973 = vunpack.c.l.b16 %v5838
    %v5974 = vunpack.c.l.b16 %v5839
    %v5975 = vunpack.c.l.b16 %v5840
    %v5976 = vunpack.c.l.b16 %v5841
    %v5977 = vunpack.c.l.b16 %v5842
    %v5978 = vunpack.c.l.b16 %v5843
    %v5979 = vunpack.c.l.b16 %v5844
    %v5980 = vunpack.c.l.b16 %v5845
    %v5981 = vunpack.c.l.b16 %v5846
    %v5982 = vunpack.c.l.b16 %v5847
    %v5983 = vunpack.c.l.b16 %v5848
    %v5984 = vunpack.c.l.b16 %v5849
    %v5985 = vunpack.c.l.b16 %v5850
    %v5986 = vunpack.c.l.b16 %v5851
    %v5987 = vunpack.c.l.b16 %v5852
    %v5988 = vunpack.c.l.b16 %v5853
    %v5989 = vunpack.c.l.b16 %v5854
    %v5990 = vunpack.c.l.b16 %v5855
    %v5991 = vunpack.c.l.b16 %v5856
    %v5992 = vunpack.c.l.b16 %v5857
    %v5993 = vunpack.c.l.b16 %v5858
    %v5994 = vunpack.c.l.b16 %v5859
    %v5995 = vunpack.c.l.b16 %v5860
    %v5996 = vunpack.c.l.b16 %v5861
    %v5997 = vunpack.c.l.b16 %v5862
    %v5998 = vunpack.c.l.b16 %v5863
    %v5999 = vunpack.c.l.b16 %v5864
    %v6000 = vunpack.c.l.b16 %v5865
    %v6001 = vunpack.c.l.b16 %v5866
    %v6002 = vunpack.c.l.b16 %v5867
    %v6003 = vunpack.c.l.b16 %v5868
    %v6004 = vunpack.c.l.b16 %v5869
    %v6005 = vunpack.c.l.b16 %v5870
    %v6006 = vunpack.c.l.b16 %v5871
    %v6007 = vunpack.c.l.b16 %v5872
    %v6008 = vunpack.c.l.b16 %v5873
    %v6009 = vunpack.c.l.b16 %v5874
    %v6010 = vunpack.c.l.b16 %v5875
    %v6011 = vunpack.c.l.b16 %v5876
    %v6012 = vunpack.c.l.b16 %v5877
    %v6013 = vunpack.c.l.b16 %v5878
    %v6014 = vunpack.c.l.b16 %v5879
    %v6015 = vunpack.c.l.b16 %v5880
    %v6016 = vunpack.c.l.b16 %v5881
    %v6017 = vunpack.c.l.b16 %v5882
    %v6018 = vunpack.c.l.b16 %v5883
    %v6019 = vunpack.c.l.b16 %v5884
    %v6020 = vunpack.c.l.b16 %v5885
    %v6021 = vunpack.c.l.b16 %v5886
    %v6022 = vunpack.c.l.b16 %v5887
    %v6023 = vunpack.c.l.b16 %v5888
    %v6024 = vunpack.c.l.b16 %v5889
    %v6025 = vunpack.c.l.b16 %v5890
    %v6026 = vunpack.c.l.b16 %v5891
    %v6027 = vunpack.c.l.b16 %v5892
    %v6028 = vunpack.c.l.b16 %v5893
    %v6029 = vunpack.c.l.b16 %v5894
    %v6030 = vunpack.c.l.b16 %v5895
    %v6031 = vunpack.c.l.b16 %v5896
    %v6032 = vunpack.c.l.b16 %v5897
    %v6033 = vpack.c.b16 %v5970, %v5969
    %v6034 = vpack.c.b16 %v5972, %v5971
    %v6035 = vpack.c.b16 %v5974, %v5973
    %v6036 = vpack.c.b16 %v5976, %v5975
    %v6037 = vpack.c.b16 %v5978, %v5977
    %v6038 = vpack.c.b16 %v5980, %v5979
    %v6039 = vpack.c.b16 %v5982, %v5981
    %v6040 = vpack.c.b16 %v5984, %v5983
    %v6041 = vpack.c.b16 %v5986, %v5985
    %v6042 = vpack.c.b16 %v5988, %v5987
    %v6043 = vpack.c.b16 %v5990, %v5989
    %v6044 = vpack.c.b16 %v5992, %v5991
    %v6045 = vpack.c.b16 %v5994, %v5993
    %v6046 = vpack.c.b16 %v5996, %v5995
    %v6047 = vpack.c.b16 %v5998, %v5997
    %v6048 = vpack.c.b16 %v6000, %v5999
    %v6049 = vpack.c.b16 %v6002, %v6001
    %v6050 = vpack.c.b16 %v6004, %v6003
    %v6051 = vpack.c.b16 %v6006, %v6005
    %v6052 = vpack.c.b16 %v6008, %v6007
    %v6053 = vpack.c.b16 %v6010, %v6009
    %v6054 = vpack.c.b16 %v6012, %v6011
    %v6055 = vpack.c.b16 %v6014, %v6013
    %v6056 = vpack.c.b16 %v6016, %v6015
    %v6057 = vpack.c.b16 %v6018, %v6017
    %v6058 = vpack.c.b16 %v6020, %v6019
    %v6059 = vpack.c.b16 %v6022, %v6021
    %v6060 = vpack.c.b16 %v6024, %v6023
    %v6061 = vpack.c.b16 %v6026, %v6025
    %v6062 = vpack.c.b16 %v6028, %v6027
    %v6063 = vpack.c.b16 %v6030, %v6029
    %v6064 = vpack.c.b16 %v6032, %v6031
    %6097 = vmatprep.subr.bf16.mxu0 0
    %6098 = vmatpush1.bf16.msra.mxu0 %v6033
    %6099 = vmatprep.subr.bf16.mxu0 0
    %6100 = vmatpush1.bf16.msra.mxu0 %v6034
    %6101 = vmatprep.subr.bf16.mxu0 0
    %6102 = vmatpush1.bf16.msra.mxu0 %v6035
    %6103 = vmatprep.subr.bf16.mxu0 0
    %6104 = vmatpush1.bf16.msra.mxu0 %v6036
    %6105 = vmatprep.subr.bf16.mxu0 0
    %6106 = vmatpush1.bf16.msra.mxu0 %v6037
    %6107 = vmatprep.subr.bf16.mxu0 0
    %6108 = vmatpush1.bf16.msra.mxu0 %v6038
    %6109 = vmatprep.subr.bf16.mxu0 0
    %6110 = vmatpush1.bf16.msra.mxu0 %v6039
    %6111 = vmatprep.subr.bf16.mxu0 0
    %6112 = vmatpush1.bf16.msra.mxu0 %v6040
    %6113 = vmatprep.subr.bf16.mxu0 0
    %6114 = vmatpush1.bf16.msra.mxu0 %v6041
    %6115 = vmatprep.subr.bf16.mxu0 0
    %6116 = vmatpush1.bf16.msra.mxu0 %v6042
    %6117 = vmatprep.subr.bf16.mxu0 0
    %6118 = vmatpush1.bf16.msra.mxu0 %v6043
    %6119 = vmatprep.subr.bf16.mxu0 0
    %6120 = vmatpush1.bf16.msra.mxu0 %v6044
    %6121 = vmatprep.subr.bf16.mxu0 0
    %6122 = vmatpush1.bf16.msra.mxu0 %v6045
    %6123 = vmatprep.subr.bf16.mxu0 0
    %6124 = vmatpush1.bf16.msra.mxu0 %v6046
    %6125 = vmatprep.subr.bf16.mxu0 0
    %6126 = vmatpush1.bf16.msra.mxu0 %v6047
    %6127 = vmatprep.subr.bf16.mxu0 0
    %6128 = vmatpush1.bf16.msra.mxu0 %v6048
    %6129 = vmatprep.mubr.bf16.mxu0 %v5831
    %6130 = vmatmul.mubr.bf16.gmra.mrb[0].mxu0 %v5830
    %v6131 = vpop.f32.mrb[0].mxu0
    %v6132 = vadd.f32 %v5903, %v6131
    %v6133 = vpop.f32.mrb[0].mxu0
    %v6134 = vpop.f32.mrb[0].mxu0
    %v6135 = vpop.f32.mrb[0].mxu0
    %6136 = vdwg.mxu0
    %6137 = vmatprep.subr.bf16.mxu0 0
    %6138 = vmatpush1.bf16.msra.mxu0 %v6049
    %6139 = vmatprep.subr.bf16.mxu0 0
    %6140 = vmatpush1.bf16.msra.mxu0 %v6050
    %6141 = vmatprep.subr.bf16.mxu0 0
    %6142 = vmatpush1.bf16.msra.mxu0 %v6051
    %6143 = vmatprep.subr.bf16.mxu0 0
    %6144 = vmatpush1.bf16.msra.mxu0 %v6052
    %6145 = vmatprep.subr.bf16.mxu0 0
    %6146 = vmatpush1.bf16.msra.mxu0 %v6053
    %6147 = vmatprep.subr.bf16.mxu0 0
    %6148 = vmatpush1.bf16.msra.mxu0 %v6054
    %6149 = vmatprep.subr.bf16.mxu0 0
    %6150 = vmatpush1.bf16.msra.mxu0 %v6055
    %6151 = vmatprep.subr.bf16.mxu0 0
    %6152 = vmatpush1.bf16.msra.mxu0 %v6056
    %6153 = vmatprep.subr.bf16.mxu0 0
    %6154 = vmatpush1.bf16.msra.mxu0 %v6057
    %6155 = vmatprep.subr.bf16.mxu0 0
    %6156 = vmatpush1.bf16.msra.mxu0 %v6058
    %6157 = vmatprep.subr.bf16.mxu0 0
    %6158 = vmatpush1.bf16.msra.mxu0 %v6059
    %6159 = vmatprep.subr.bf16.mxu0 0
    %6160 = vmatpush1.bf16.msra.mxu0 %v6060
    %6161 = vmatprep.subr.bf16.mxu0 0
    %6162 = vmatpush1.bf16.msra.mxu0 %v6061
    %6163 = vmatprep.subr.bf16.mxu0 0
    %6164 = vmatpush1.bf16.msra.mxu0 %v6062
    %6165 = vmatprep.subr.bf16.mxu0 0
    %6166 = vmatpush1.bf16.msra.mxu0 %v6063
    %6167 = vmatprep.subr.bf16.mxu0 0
    %6168 = vmatpush1.bf16.msra.mxu0 %v6064
    %6169 = vmatprep.mubr.bf16.mxu0 %v5833
    %6170 = vmatmul.mubr.bf16.gmra.mrb[0].mxu0 %v5832
    %v6171 = vpop.f32.mrb[0].mxu0
    %v6172 = vadd.f32 %v6132, %v6171
    %v6173 = vpop.f32.mrb[0].mxu0
    %v6174 = vpop.f32.mrb[0].mxu0
    %v6175 = vpop.f32.mrb[0].mxu0
    %6176 = vdwg.mxu0
    %6177 = vst [vmem:[#allocation3] sm:$0x3] %v6172
    // Predicated region
    $region38: #{lenet_forward.3} parent=1 // pred_check
      _
    $region39: #{lenet_forward.3} parent=1 // pred_check_branch
      %6179 = sbr.rel (0) target = $region41
    $region40: #{lenet_forward.3} parent=1 // pred_region
      %s6181 = ssub.s32 32, 32
      %6182 = vsyncadd [#allocation4], %s6181
      %s6184 = sshll.u32 [#allocation3], 4
      %s6185 = int_to_ptr.vmem [resolvable:$true] %s6184
      %6187 = dma.vmem_to_hbm [thread:$0]  %s6185, 32, %s9, [#allocation4]
    $region41: #{lenet_forward.3} parent=1 // pred_fallthru
      _
    // Predicated region
    $region42: #{lenet_forward.3} parent=1 // pred_check
      _
    $region43: #{lenet_forward.3} parent=1 // pred_check_branch
      %6189 = sbr.rel (0) target = $region45
    $region44: #{lenet_forward.3} parent=1 // pred_region
      %6190 = dma.done [#allocation4], 32
    $region45: #{lenet_forward.3} parent=1 // pred_fallthru
      _
    %6191 = vsyncpa [#allocation4], 1

</llo_original>
